<compile_context>
chip_gen: v5e
topology: v5e:2x2
jax: 0.10.0
libtpu: 0.0.40
codegen_flags: <defaults>
</compile_context>

<pallas_src>
import functools
import math

import jax
import jax.numpy as jnp
from jax import lax
from jax.experimental import pallas as pl
from jax.experimental.pallas import tpu as pltpu

EPS = 1e-6  # nn.LayerNorm eps used by build_norm_layer
_GELU_C = math.sqrt(2.0 / math.pi)


# --------------------------------------------------------------------------
# One-time hardware / feature probes (hoisted out of the per-call path).
# --------------------------------------------------------------------------
@functools.lru_cache(maxsize=1)
def _tpu_budget():
    """(physical VMEM bytes, #TensorCores sharing the grid, vmem_limit)."""
    vmem = 128 * 1024 * 1024
    try:
        vmem = int(pltpu.get_tpu_info().vmem_capacity_bytes)
    except Exception:
        pass
    # v7x: 64 MiB / TC, 2 TCs per chip; v5e/v6e: 128 MiB, 1 TC.
    n_cores = 2 if vmem <= 64 * 1024 * 1024 else 1
    # Leave headroom for compiler scratch / spills / DMA descriptors:
    # ~48 MiB on v7x, ~96 MiB on v5e/v6e.
    vmem_limit = int(vmem * 0.75)
    return vmem, n_cores, vmem_limit


def _probe_pipeline_mode():
    """One-time check that this jax build supports pipeline_mode=pl.Buffered."""
    if not hasattr(pl, "Buffered"):
        return False
    try:
        def _k(c_ref, x_ref, o_ref):
            o_ref[...] = x_ref[...] + c_ref[...]

        f = pl.pallas_call(
            _k,
            out_shape=jax.ShapeDtypeStruct((16, 128), jnp.float32),
            grid=(2,),
            in_specs=[
                pl.BlockSpec((1, 128), lambda i: (0, 0),
                             pipeline_mode=pl.Buffered(1)),
                pl.BlockSpec((8, 128), lambda i: (i, 0)),
            ],
            out_specs=pl.BlockSpec((8, 128), lambda i: (i, 0)),
        )
        jax.jit(f).lower(jnp.zeros((1, 128), jnp.float32),
                         jnp.zeros((16, 128), jnp.float32))
        return True
    except Exception:
        return False


_SINGLE_BUFFER_CONSTS = _probe_pipeline_mode()


# --------------------------------------------------------------------------
# Kernel math helpers.
# --------------------------------------------------------------------------
def _layernorm(x, g, b):
    mu = jnp.mean(x, axis=-1, keepdims=True)
    xc = x - mu
    var = jnp.mean(xc * xc, axis=-1, keepdims=True)
    return xc * lax.rsqrt(var + EPS) * g + b


def _gelu_tanh(x):
    # tanh-approx GELU: tanh runs on the EUP slot instead of a long exact-erf
    # VALU polynomial, freeing the VALU while the MXU is underfed at K=C on
    # v6e/v7x. (Small numerics change vs nn.GELU's exact erf.)
    return 0.5 * x * (1.0 + jnp.tanh(_GELU_C * (x + 0.044715 * (x * x * x))))


def _make_kernel(hidden_chunk):
    def intern_image_layer_kernel(x_ref, cp_ref, b1_ref, w1_ref, w2_ref,
                                  o_ref, acc_ref):
        # Activation tile in f32 for LN / residual math regardless of I/O dtype.
        x = x_ref[...].astype(jnp.float32)
        cp = cp_ref[...]               # (5, C) f32: ln1_g, ln1_b, ln2_g, ln2_b, b2

        # ---- branch 1: x = x + drop_path(dcn(norm1(x))) ----
        # TODO(synk): dcn (DCNv3 core_op) unavailable in source -> identity.
        y = x + _layernorm(x, cp[0:1, :], cp[1:2, :])

        # ---- branch 2: x = x + drop_path(mlp(norm2(x))) ----
        h = _layernorm(y, cp[2:3, :], cp[3:4, :]).astype(w1_ref.dtype)

        # f32 VMEM accumulator seeded with residual + fc2 bias; the hidden dim
        # is processed in `hidden_chunk`-wide slices so the (tile_rows, hidden)
        # f32 intermediate is never materialized (cuts VMEM working set and
        # vld/vst pressure; on v7x the chunked dot chain accumulates via MRB,
        # on v5e/v6e the explicit scratch avoids repeated result re-pops).
        acc_ref[...] = y + cp[4:5, :]
        hidden = w1_ref.shape[1]
        for c0 in range(0, hidden, hidden_chunk):      # static unrolled loop
            sl = pl.ds(c0, hidden_chunk)
            t = jnp.dot(h, w1_ref[:, sl], preferred_element_type=jnp.float32)
            t = _gelu_tanh(t + b1_ref[:, sl])
            acc_ref[...] += jnp.dot(t.astype(w2_ref.dtype), w2_ref[sl, :],
                                    preferred_element_type=jnp.float32)

        o_ref[...] = acc_ref[...].astype(o_ref.dtype)

    return intern_image_layer_kernel


# --------------------------------------------------------------------------
# Tiling policy.
# --------------------------------------------------------------------------
def _pick_hidden_chunk(hidden, requested=256):
    for hc in (requested, 256, 128):
        if hc <= hidden and hidden % hc == 0:
            return hc
    return hidden


def _pick_tile_rows(rows, c, hidden, hc, io_bytes, w_bytes, requested,
                    n_cores, budget, single_buf_w, stream_bufs):
    """Largest multiple-of-8 row tile that fits the VMEM budget. On 2-TC chips
    (v7x) prefer >= 2 grid steps per core so each core double-buffers its
    x/out DMAs; on single-TC chips just take the biggest tile."""
    w_mult = 1 if single_buf_w else 2
    const_bytes = ((c * hidden + hidden * c) * w_bytes * w_mult
                   + hidden * 4 * w_mult + 5 * c * 4 * w_mult)

    def fits(t):
        streams = t * c * io_bytes * stream_bufs * 2      # x in + out stream
        acc = t * c * 4                                    # f32 accumulator
        mid = t * hc * 4 * 2                               # fc1-chunk working set
        return const_bytes + streams + acc + mid <= budget

    rows8 = ((rows + 7) // 8) * 8
    cands, seen = [], set()
    for t in (1024, 768, 512, 384, 256, 192, 128, 96, 64, 32, 16, 8):
        if t > requested:
            continue
        t = min(t, rows8)
        if t not in seen:
            seen.add(t)
            cands.append(t)
    if not cands:
        cands = [min(8, rows8)]

    fallback = None
    for t in cands:
        if not fits(t):
            continue
        if n_cores <= 1:
            return t
        if pl.cdiv(rows, t) >= 2 * n_cores:
            return t
        if fallback is None:
            fallback = t
    return fallback if fallback is not None else cands[-1]


# --------------------------------------------------------------------------
# Host-side wrapper.
# --------------------------------------------------------------------------
def pack_params(params, *, weight_dtype=jnp.bfloat16):
    """One-time packing (hoisted out of the forward): collapse the five tiny
    per-channel vectors into one (5, C) f32 array and cast MLP weights once."""
    cparams = jnp.concatenate(
        [params["ln1_g"], params["ln1_b"],
         params["ln2_g"], params["ln2_b"], params["b2"]],
        axis=0).astype(jnp.float32)                        # (5, C)
    return {
        "cparams": cparams,
        "b1": params["b1"].astype(jnp.float32),            # (1, hidden)
        "w1": params["w1"].astype(weight_dtype),           # (C, hidden)
        "w2": params["w2"].astype(weight_dtype),           # (hidden, C)
    }


@functools.partial(jax.jit, static_argnames=("tile_rows", "hidden_chunk"))
def intern_image_layer(x_nhwc, packed, *, tile_rows=1024, hidden_chunk=256):
    N, H, W, C = x_nhwc.shape
    rows = N * H * W
    hidden = packed["w1"].shape[1]
    hc = _pick_hidden_chunk(hidden, hidden_chunk)

    io_dtype = x_nhwc.dtype
    io_bytes = jnp.dtype(io_dtype).itemsize
    w_bytes = jnp.dtype(packed["w1"].dtype).itemsize
    _, n_cores, vmem_limit = _tpu_budget()

    # `stream_bufs` can be swept to 3 (pl.Buffered(3) on the x in_spec) once
    # VMEM headroom is confirmed; default Pallas depth of 2 is kept here.
    stream_bufs = 2
    tr = _pick_tile_rows(rows, C, hidden, hc, io_bytes, w_bytes, tile_rows,
                         n_cores, vmem_limit, _SINGLE_BUFFER_CONSTS,
                         stream_bufs)

    x2d = x_nhwc.reshape(rows, C)
    grid = (pl.cdiv(rows, tr),)   # partial last block OK: rows independent,
                                  # padded rows are never written back.

    def const_spec(shape):
        # Constant index_map across the grid -> double-buffering these is pure
        # VMEM waste; keep a single resident copy when the build supports it.
        if _SINGLE_BUFFER_CONSTS:
            return pl.BlockSpec(shape, lambda i: (0,) * len(shape),
                                pipeline_mode=pl.Buffered(1))
        return pl.BlockSpec(shape, lambda i: (0,) * len(shape))

    out = pl.pallas_call(
        _make_kernel(hc),
        out_shape=jax.ShapeDtypeStruct((rows, C), io_dtype),
        grid_spec=pltpu.PrefetchScalarGridSpec(
            num_scalar_prefetch=0,
            grid=grid,
            in_specs=[
                pl.BlockSpec((tr, C), lambda i: (i, 0)),  # x rows (streamed)
                const_spec((5, C)),                       # LN params + b2
                const_spec((1, hidden)),                  # b1
                const_spec((C, hidden)),                  # w1 (bf16)
                const_spec((hidden, C)),                  # w2 (bf16)
            ],
            out_specs=pl.BlockSpec((tr, C), lambda i: (i, 0)),
            scratch_shapes=[pltpu.VMEM((tr, C), jnp.float32)],
        ),
        compiler_params=pltpu.CompilerParams(
            dimension_semantics=("parallel",),
            vmem_limit_bytes=vmem_limit,
        ),
    )(x2d, packed["cparams"], packed["b1"], packed["w1"], packed["w2"])

    return out.reshape(N, H, W, C)


# --------------------------------------------------------------------------
# Pure-JAX reference mirroring the kernel's dtype / GELU policy.
# --------------------------------------------------------------------------
def reference(x_nhwc, params, *, weight_dtype=jnp.bfloat16):
    x = x_nhwc.astype(jnp.float32)

    def ln(v, g, b):
        mu = v.mean(-1, keepdims=True)
        var = ((v - mu) ** 2).mean(-1, keepdims=True)
        return (v - mu) * lax.rsqrt(var + EPS) * g + b

    w1 = params["w1"].astype(weight_dtype)
    w2 = params["w2"].astype(weight_dtype)

    y = x + ln(x, params["ln1_g"][0], params["ln1_b"][0])
    h = ln(y, params["ln2_g"][0], params["ln2_b"][0])
    h = jnp.dot(h.astype(weight_dtype), w1,
                preferred_element_type=jnp.float32) + params["b1"][0]
    h = _gelu_tanh(h)
    h = jnp.dot(h.astype(weight_dtype), w2,
                preferred_element_type=jnp.float32) + params["b2"][0]
    return y + h


def init_params(key, channels, mlp_ratio=4.0):
    hidden = int(channels * mlp_ratio)
    ks = jax.random.split(key, 8)
    s = 0.05
    return {
        "ln1_g": 1.0 + s * jax.random.normal(ks[0], (1, channels), jnp.float32),
        "ln1_b": s * jax.random.normal(ks[1], (1, channels), jnp.float32),
        "ln2_g": 1.0 + s * jax.random.normal(ks[2], (1, channels), jnp.float32),
        "ln2_b": s * jax.random.normal(ks[3], (1, channels), jnp.float32),
        "w1": s * jax.random.normal(ks[4], (channels, hidden), jnp.float32),
        "b1": s * jax.random.normal(ks[5], (1, hidden), jnp.float32),
        "w2": s * jax.random.normal(ks[6], (hidden, channels), jnp.float32),
        "b2": s * jax.random.normal(ks[7], (1, channels), jnp.float32),
    }


if __name__ == "__main__":
    key = jax.random.PRNGKey(0)
    k_x, k_p = jax.random.split(key)

    # Lane-dense config: C=128 is a real InternImage stage width (unmasked
    # full-lane output stores); hidden = 512.
    N, H, W, C = 2, 16, 16, 128
    mlp_ratio = 4.0

    params = init_params(k_p, C, mlp_ratio)
    packed = pack_params(params)          # weight casts / packing done once

    # bf16 activation I/O: at C=128/hidden=512 the layer is HBM-bound on every
    # TPU generation, so halving activation read+write bytes is the main
    # lever; LN / residual / GELU math stays f32 inside the kernel.
    x = jax.random.normal(k_x, (N, H, W, C), jnp.float32).astype(jnp.bfloat16)

    out = jax.block_until_ready(intern_image_layer(x, packed))
    assert out.shape == x.shape and out.dtype == x.dtype

    ref = reference(x, params)
    assert jnp.allclose(out.astype(jnp.float32), ref, atol=2e-2, rtol=2e-2), \
        "mismatch vs matched JAX reference"

    # Non-divisible row count: grid = cdiv(rows, tile) with a partial last
    # block (padded rows are independent and never written back).
    x2 = jax.random.normal(jax.random.PRNGKey(1), (1, 10, 16, C),
                           jnp.float32).astype(jnp.bfloat16)
    out2 = jax.block_until_ready(intern_image_layer(x2, packed, tile_rows=128))
    ref2 = reference(x2, params)
    assert out2.shape == x2.shape
    assert jnp.allclose(out2.astype(jnp.float32), ref2, atol=2e-2, rtol=2e-2), \
        "mismatch vs matched JAX reference (partial last block)"

    print("KERNEL_OK")
</pallas_src>

<mosaic_0001>
module attributes {stable_mosaic.version = 11 : i64} {
  func.func @intern_image_layer_kernel(%arg0: i32, %arg1: memref<512x128xbf16, #tpu.memory_space<vmem>>, %arg2: memref<5x128xf32, #tpu.memory_space<vmem>>, %arg3: memref<1x512xf32, #tpu.memory_space<vmem>>, %arg4: memref<128x512xbf16, #tpu.memory_space<vmem>>, %arg5: memref<512x128xbf16, #tpu.memory_space<vmem>>, %arg6: memref<512x128xbf16, #tpu.memory_space<vmem>>, %arg7: memref<512x128xf32, #tpu.memory_space<vmem>>) attributes {dimension_semantics = [#tpu.dimension_semantics<parallel>], iteration_bounds = array<i64: 1>, scalar_prefetch = 0 : i64, scratch_operands = 1 : i64, tpu.core_type = #tpu.core_type<tc>, window_params = [{transform_indices = @transform_0, window_bounds = array<i64: 512, 128>}, {pipeline_mode = #tpu.pipeline_mode<synchronous>, transform_indices = @transform_1, window_bounds = array<i64: 5, 128>}, {pipeline_mode = #tpu.pipeline_mode<synchronous>, transform_indices = @transform_2, window_bounds = array<i64: 1, 512>}, {pipeline_mode = #tpu.pipeline_mode<synchronous>, transform_indices = @transform_3, window_bounds = array<i64: 128, 512>}, {pipeline_mode = #tpu.pipeline_mode<synchronous>, transform_indices = @transform_4, window_bounds = array<i64: 512, 128>}, {transform_indices = @transform_5, window_bounds = array<i64: 512, 128>}]} {
    %c0 = arith.constant 0 : index
    %c0_0 = arith.constant 0 : index
    %0 = vector.load %arg1[%c0, %c0_0] : memref<512x128xbf16, #tpu.memory_space<vmem>>, vector<512x128xbf16>
    %1 = arith.extf %0 : vector<512x128xbf16> to vector<512x128xf32>
    %c0_1 = arith.constant 0 : index
    %c0_2 = arith.constant 0 : index
    %2 = vector.load %arg2[%c0_1, %c0_2] : memref<5x128xf32, #tpu.memory_space<vmem>>, vector<5x128xf32>
    %3 = vector.extract_strided_slice %2 {offsets = [0, 0], sizes = [1, 128], strides = [1, 1]} : vector<5x128xf32> to vector<1x128xf32>
    %4 = vector.extract_strided_slice %2 {offsets = [1, 0], sizes = [1, 128], strides = [1, 1]} : vector<5x128xf32> to vector<1x128xf32>
    %cst = arith.constant dense<0.000000e+00> : vector<512xf32>
    %5 = vector.multi_reduction <add>, %1, %cst [1] : vector<512x128xf32> to vector<512xf32>
    %6 = vector.shape_cast %5 : vector<512xf32> to vector<512x1xf32>
    %cst_3 = arith.constant 1.280000e+02 : f32
    %7 = vector.broadcast %cst_3 : f32 to vector<512x1xf32>
    %8 = arith.divf %6, %7 : vector<512x1xf32>
    %9 = vector.broadcast %8 : vector<512x1xf32> to vector<512x128xf32>
    %10 = arith.subf %1, %9 : vector<512x128xf32>
    %11 = arith.mulf %10, %10 : vector<512x128xf32>
    %cst_4 = arith.constant dense<0.000000e+00> : vector<512xf32>
    %12 = vector.multi_reduction <add>, %11, %cst_4 [1] : vector<512x128xf32> to vector<512xf32>
    %13 = vector.shape_cast %12 : vector<512xf32> to vector<512x1xf32>
    %cst_5 = arith.constant 1.280000e+02 : f32
    %14 = vector.broadcast %cst_5 : f32 to vector<512x1xf32>
    %15 = arith.divf %13, %14 : vector<512x1xf32>
    %cst_6 = arith.constant 9.99999997E-7 : f32
    %16 = vector.broadcast %cst_6 : f32 to vector<512x1xf32>
    %17 = arith.addf %15, %16 : vector<512x1xf32>
    %18 = math.rsqrt %17 : vector<512x1xf32>
    %19 = vector.broadcast %18 : vector<512x1xf32> to vector<512x128xf32>
    %20 = arith.mulf %10, %19 : vector<512x128xf32>
    %21 = vector.broadcast %3 : vector<1x128xf32> to vector<512x128xf32>
    %22 = arith.mulf %20, %21 : vector<512x128xf32>
    %23 = vector.broadcast %4 : vector<1x128xf32> to vector<512x128xf32>
    %24 = arith.addf %22, %23 : vector<512x128xf32>
    %25 = arith.addf %1, %24 : vector<512x128xf32>
    %26 = vector.extract_strided_slice %2 {offsets = [2, 0], sizes = [1, 128], strides = [1, 1]} : vector<5x128xf32> to vector<1x128xf32>
    %27 = vector.extract_strided_slice %2 {offsets = [3, 0], sizes = [1, 128], strides = [1, 1]} : vector<5x128xf32> to vector<1x128xf32>
    %cst_7 = arith.constant dense<0.000000e+00> : vector<512xf32>
    %28 = vector.multi_reduction <add>, %25, %cst_7 [1] : vector<512x128xf32> to vector<512xf32>
    %29 = vector.shape_cast %28 : vector<512xf32> to vector<512x1xf32>
    %cst_8 = arith.constant 1.280000e+02 : f32
    %30 = vector.broadcast %cst_8 : f32 to vector<512x1xf32>
    %31 = arith.divf %29, %30 : vector<512x1xf32>
    %32 = vector.broadcast %31 : vector<512x1xf32> to vector<512x128xf32>
    %33 = arith.subf %25, %32 : vector<512x128xf32>
    %34 = arith.mulf %33, %33 : vector<512x128xf32>
    %cst_9 = arith.constant dense<0.000000e+00> : vector<512xf32>
    %35 = vector.multi_reduction <add>, %34, %cst_9 [1] : vector<512x128xf32> to vector<512xf32>
    %36 = vector.shape_cast %35 : vector<512xf32> to vector<512x1xf32>
    %cst_10 = arith.constant 1.280000e+02 : f32
    %37 = vector.broadcast %cst_10 : f32 to vector<512x1xf32>
    %38 = arith.divf %36, %37 : vector<512x1xf32>
    %cst_11 = arith.constant 9.99999997E-7 : f32
    %39 = vector.broadcast %cst_11 : f32 to vector<512x1xf32>
    %40 = arith.addf %38, %39 : vector<512x1xf32>
    %41 = math.rsqrt %40 : vector<512x1xf32>
    %42 = vector.broadcast %41 : vector<512x1xf32> to vector<512x128xf32>
    %43 = arith.mulf %33, %42 : vector<512x128xf32>
    %44 = vector.broadcast %26 : vector<1x128xf32> to vector<512x128xf32>
    %45 = arith.mulf %43, %44 : vector<512x128xf32>
    %46 = vector.broadcast %27 : vector<1x128xf32> to vector<512x128xf32>
    %47 = arith.addf %45, %46 : vector<512x128xf32>
    %48 = arith.truncf %47 : vector<512x128xf32> to vector<512x128xbf16>
    %49 = vector.extract_strided_slice %2 {offsets = [4, 0], sizes = [1, 128], strides = [1, 1]} : vector<5x128xf32> to vector<1x128xf32>
    %50 = vector.broadcast %49 : vector<1x128xf32> to vector<512x128xf32>
    %51 = arith.addf %25, %50 : vector<512x128xf32>
    %c0_12 = arith.constant 0 : index
    %c0_13 = arith.constant 0 : index
    %52 = vector.load %arg7[%c0_12, %c0_13] : memref<512x128xf32, #tpu.memory_space<vmem>>, vector<512x128xf32>
    tpu.vector_store %arg7[%c0_12, %c0_13], %51 {strides = array<i32>} : memref<512x128xf32, #tpu.memory_space<vmem>>, vector<512x128xf32>,
    %c0_14 = arith.constant 0 : index
    %c0_15 = arith.constant 0 : index
    %53 = vector.load %arg4[%c0_14, %c0_15] : memref<128x512xbf16, #tpu.memory_space<vmem>>, vector<128x256xbf16>
    %cst_16 = arith.constant dense<0.000000e+00> : vector<512x256xf32>
    %54 = tpu.matmul %48, %53, %cst_16 {dimension_numbers = #tpu.dot_dimension_numbers<[1], [0], [0], [1], [0, 0, 1, 1], [], []>} : vector<512x128xbf16>, vector<128x256xbf16>, vector<512x256xf32> -> vector<512x256xf32>
    %c0_17 = arith.constant 0 : index
    %c0_18 = arith.constant 0 : index
    %55 = vector.load %arg3[%c0_17, %c0_18] : memref<1x512xf32, #tpu.memory_space<vmem>>, vector<1x256xf32>
    %56 = vector.broadcast %55 : vector<1x256xf32> to vector<512x256xf32>
    %57 = arith.addf %54, %56 : vector<512x256xf32>
    %cst_19 = arith.constant 5.000000e-01 : f32
    %58 = vector.broadcast %cst_19 : f32 to vector<512x256xf32>
    %59 = arith.mulf %58, %57 : vector<512x256xf32>
    %60 = arith.mulf %57, %57 : vector<512x256xf32>
    %61 = arith.mulf %60, %57 : vector<512x256xf32>
    %cst_20 = arith.constant 4.471500e-02 : f32
    %62 = vector.broadcast %cst_20 : f32 to vector<512x256xf32>
    %63 = arith.mulf %62, %61 : vector<512x256xf32>
    %64 = arith.addf %57, %63 : vector<512x256xf32>
    %cst_21 = arith.constant 0.797884583 : f32
    %65 = vector.broadcast %cst_21 : f32 to vector<512x256xf32>
    %66 = arith.mulf %65, %64 : vector<512x256xf32>
    %67 = math.tanh %66 : vector<512x256xf32>
    %cst_22 = arith.constant 1.000000e+00 : f32
    %68 = vector.broadcast %cst_22 : f32 to vector<512x256xf32>
    %69 = arith.addf %68, %67 : vector<512x256xf32>
    %70 = arith.mulf %59, %69 : vector<512x256xf32>
    %c0_23 = arith.constant 0 : index
    %c0_24 = arith.constant 0 : index
    %71 = vector.load %arg7[%c0_23, %c0_24] : memref<512x128xf32, #tpu.memory_space<vmem>>, vector<512x128xf32>
    %72 = arith.truncf %70 : vector<512x256xf32> to vector<512x256xbf16>
    %c0_25 = arith.constant 0 : index
    %c0_26 = arith.constant 0 : index
    %73 = vector.load %arg5[%c0_25, %c0_26] : memref<512x128xbf16, #tpu.memory_space<vmem>>, vector<256x128xbf16>
    %cst_27 = arith.constant dense<0.000000e+00> : vector<512x128xf32>
    %74 = tpu.matmul %72, %73, %cst_27 {dimension_numbers = #tpu.dot_dimension_numbers<[1], [0], [0], [1], [0, 0, 1, 1], [], []>} : vector<512x256xbf16>, vector<256x128xbf16>, vector<512x128xf32> -> vector<512x128xf32>
    %75 = arith.addf %71, %74 : vector<512x128xf32>
    %c0_28 = arith.constant 0 : index
    %c0_29 = arith.constant 0 : index
    %76 = vector.load %arg7[%c0_28, %c0_29] : memref<512x128xf32, #tpu.memory_space<vmem>>, vector<512x128xf32>
    tpu.vector_store %arg7[%c0_28, %c0_29], %75 {strides = array<i32>} : memref<512x128xf32, #tpu.memory_space<vmem>>, vector<512x128xf32>,
    %c0_30 = arith.constant 0 : index
    %c256 = arith.constant 256 : index
    %77 = vector.load %arg4[%c0_30, %c256] : memref<128x512xbf16, #tpu.memory_space<vmem>>, vector<128x256xbf16>
    %cst_31 = arith.constant dense<0.000000e+00> : vector<512x256xf32>
    %78 = tpu.matmul %48, %77, %cst_31 {dimension_numbers = #tpu.dot_dimension_numbers<[1], [0], [0], [1], [0, 0, 1, 1], [], []>} : vector<512x128xbf16>, vector<128x256xbf16>, vector<512x256xf32> -> vector<512x256xf32>
    %c0_32 = arith.constant 0 : index
    %c256_33 = arith.constant 256 : index
    %79 = vector.load %arg3[%c0_32, %c256_33] : memref<1x512xf32, #tpu.memory_space<vmem>>, vector<1x256xf32>
    %80 = vector.broadcast %79 : vector<1x256xf32> to vector<512x256xf32>
    %81 = arith.addf %78, %80 : vector<512x256xf32>
    %cst_34 = arith.constant 5.000000e-01 : f32
    %82 = vector.broadcast %cst_34 : f32 to vector<512x256xf32>
    %83 = arith.mulf %82, %81 : vector<512x256xf32>
    %84 = arith.mulf %81, %81 : vector<512x256xf32>
    %85 = arith.mulf %84, %81 : vector<512x256xf32>
    %cst_35 = arith.constant 4.471500e-02 : f32
    %86 = vector.broadcast %cst_35 : f32 to vector<512x256xf32>
    %87 = arith.mulf %86, %85 : vector<512x256xf32>
    %88 = arith.addf %81, %87 : vector<512x256xf32>
    %cst_36 = arith.constant 0.797884583 : f32
    %89 = vector.broadcast %cst_36 : f32 to vector<512x256xf32>
    %90 = arith.mulf %89, %88 : vector<512x256xf32>
    %91 = math.tanh %90 : vector<512x256xf32>
    %cst_37 = arith.constant 1.000000e+00 : f32
    %92 = vector.broadcast %cst_37 : f32 to vector<512x256xf32>
    %93 = arith.addf %92, %91 : vector<512x256xf32>
    %94 = arith.mulf %83, %93 : vector<512x256xf32>
    %c0_38 = arith.constant 0 : index
    %c0_39 = arith.constant 0 : index
    %95 = vector.load %arg7[%c0_38, %c0_39] : memref<512x128xf32, #tpu.memory_space<vmem>>, vector<512x128xf32>
    %96 = arith.truncf %94 : vector<512x256xf32> to vector<512x256xbf16>
    %c256_40 = arith.constant 256 : index
    %c0_41 = arith.constant 0 : index
    %97 = vector.load %arg5[%c256_40, %c0_41] : memref<512x128xbf16, #tpu.memory_space<vmem>>, vector<256x128xbf16>
    %cst_42 = arith.constant dense<0.000000e+00> : vector<512x128xf32>
    %98 = tpu.matmul %96, %97, %cst_42 {dimension_numbers = #tpu.dot_dimension_numbers<[1], [0], [0], [1], [0, 0, 1, 1], [], []>} : vector<512x256xbf16>, vector<256x128xbf16>, vector<512x128xf32> -> vector<512x128xf32>
    %99 = arith.addf %95, %98 : vector<512x128xf32>
    %c0_43 = arith.constant 0 : index
    %c0_44 = arith.constant 0 : index
    %100 = vector.load %arg7[%c0_43, %c0_44] : memref<512x128xf32, #tpu.memory_space<vmem>>, vector<512x128xf32>
    tpu.vector_store %arg7[%c0_43, %c0_44], %99 {strides = array<i32>} : memref<512x128xf32, #tpu.memory_space<vmem>>, vector<512x128xf32>,
    %c0_45 = arith.constant 0 : index
    %c0_46 = arith.constant 0 : index
    %101 = vector.load %arg7[%c0_45, %c0_46] : memref<512x128xf32, #tpu.memory_space<vmem>>, vector<512x128xf32>
    %102 = arith.truncf %101 : vector<512x128xf32> to vector<512x128xbf16>
    %c0_47 = arith.constant 0 : index
    %c0_48 = arith.constant 0 : index
    %103 = vector.load %arg6[%c0_47, %c0_48] : memref<512x128xbf16, #tpu.memory_space<vmem>>, vector<512x128xbf16>
    tpu.vector_store %arg6[%c0_47, %c0_48], %102 {strides = array<i32>} : memref<512x128xbf16, #tpu.memory_space<vmem>>, vector<512x128xbf16>,
    return
  }
  func.func @transform_0(%arg0: i32) -> (i32, i32) {
    %c0_i32 = arith.constant 0 : i32
    %c0_i32_0 = arith.constant 0 : i32
    return %arg0, %c0_i32 : i32, i32
  }
  func.func @transform_1(%arg0: i32) -> (i32, i32) {
    %c0_i32 = arith.constant 0 : i32
    %c0_i32_0 = arith.constant 0 : i32
    %c0_i32_1 = arith.constant 0 : i32
    return %c0_i32, %c0_i32_0 : i32, i32
  }
  func.func @transform_2(%arg0: i32) -> (i32, i32) {
    %c0_i32 = arith.constant 0 : i32
    %c0_i32_0 = arith.constant 0 : i32
    %c0_i32_1 = arith.constant 0 : i32
    return %c0_i32, %c0_i32_0 : i32, i32
  }
  func.func @transform_3(%arg0: i32) -> (i32, i32) {
    %c0_i32 = arith.constant 0 : i32
    %c0_i32_0 = arith.constant 0 : i32
    %c0_i32_1 = arith.constant 0 : i32
    return %c0_i32, %c0_i32_0 : i32, i32
  }
  func.func @transform_4(%arg0: i32) -> (i32, i32) {
    %c0_i32 = arith.constant 0 : i32
    %c0_i32_0 = arith.constant 0 : i32
    %c0_i32_1 = arith.constant 0 : i32
    return %c0_i32, %c0_i32_0 : i32, i32
  }
  func.func @transform_5(%arg0: i32) -> (i32, i32) {
    %c0_i32 = arith.constant 0 : i32
    %c0_i32_0 = arith.constant 0 : i32
    return %arg0, %c0_i32 : i32, i32
  }
}

</mosaic_0001>

<llo_original>
// kernel: intern_image_layer.1
$region0: #{intern_image_layer.1}
  #allocation0 [shape = 'u32[]', space=smem, size = 0x4, offset = 0x4, fixed_abs, tag = 'smem constant byte address 0x4 - core index']
  #allocation1 [shape = 'u32[72,128]{1,0:T(1,128)}', space=vmem, size = 0x9000, scoped, tag = 'internal scratch']
  #allocation2 [shape = 'f32[512,128]{1,0:T(8,128)}', space=vmem, size = 0x40000, scoped, tag = 'scratch operand']
  %s0 = inlined_call_operand.hbm [shape: bf16[512,128], index: 0, kind: input, shape index: {}]
  %s1 = inlined_call_operand.hbm [shape: f32[5,128], index: 1, kind: input, shape index: {}]
  %s2 = inlined_call_operand.hbm [shape: f32[1,512], index: 2, kind: input, shape index: {}]
  %s3 = inlined_call_operand.hbm [shape: bf16[128,512], index: 3, kind: input, shape index: {}]
  %s4 = inlined_call_operand.hbm [shape: bf16[512,128], index: 4, kind: input, shape index: {}]
  %s5 = inlined_call_operand.hbm [shape: bf16[512,128], index: 5, kind: output, shape index: {}]
  %s6 = sld [smem:[#allocation0]]
  $region50: #{intern_image_layer.1} parent=0
    _
  %s8 = ssub.s32 1, %s6
  %s9 = scalar_select 0, %s8, %s6
  $region1: #{intern_image_layer.1} parent=0
    #allocation3 [shape = 'u8[131072]{0}', space=vmem, size = 0x20000, scoped, tag = 'input window, operand 0, single buffered']
    #allocation4 [shape = 's32[1]{0}', space=sflag, size = 0x4, scoped, tag = 'scoped memory for intern_image_layer.1']
    #allocation5 [shape = 's32[1]{0}', space=sflag, size = 0x4, scoped, tag = 'scoped memory for intern_image_layer.1']
    #allocation6 [shape = 'u8[4096]{0}', space=vmem, size = 0x1000, scoped, tag = 'input window, operand 1, single buffered']
    #allocation7 [shape = 's32[1]{0}', space=sflag, size = 0x4, scoped, tag = 'scoped memory for intern_image_layer.1']
    #allocation8 [shape = 'u8[2048]{0}', space=vmem, size = 0x800, scoped, tag = 'input window, operand 2, single buffered']
    #allocation9 [shape = 'u8[131072]{0}', space=vmem, size = 0x20000, scoped, tag = 'input window, operand 3, single buffered']
    #allocation10 [shape = 's32[1]{0}', space=sflag, size = 0x4, scoped, tag = 'scoped memory for intern_image_layer.1']
    #allocation11 [shape = 'u8[131072]{0}', space=vmem, size = 0x20000, scoped, tag = 'input window, operand 4, single buffered']
    #allocation12 [shape = 'u8[131072]{0}', space=vmem, size = 0x20000, scoped, tag = 'output window, operand 0, single buffered']
    %10 = vsyncpa [#allocation4], 0
    %11 = vsyncpa [#allocation7], 0
    %12 = vsyncpa [#allocation10], 0
    %13 = vsyncpa [#allocation5], 0
    // Predicated region
    $region2: #{intern_image_layer.1} parent=1 // pred_check
      _
    $region3: #{intern_image_layer.1} parent=1 // pred_check_branch
      %15 = sbr.rel (0) target = $region5
    $region4: #{intern_image_layer.1} parent=1 // pred_region
      %17 = vsyncadd [#allocation4], 0
      %s18 = sshll.u32 %s0, 4
      %s19 = int_to_ptr.hbm [resolvable:$true] %s18
      %s20 = sshll.u32 [#allocation3], 4
      %s21 = int_to_ptr.vmem [resolvable:$true] %s20
      %26 = dma.hbm_to_vmem [thread:$0]  %s19, 4096, %s21, [#allocation4], 64, 64, 4
    $region5: #{intern_image_layer.1} parent=1 // pred_fallthru
      _
    // Predicated region
    $region6: #{intern_image_layer.1} parent=1 // pred_check
      _
    $region7: #{intern_image_layer.1} parent=1 // pred_check_branch
      %28 = sbr.rel (0) target = $region9
    $region8: #{intern_image_layer.1} parent=1 // pred_region
      %30 = vsyncadd [#allocation7], 0
      %s32 = sshll.u32 %s1, 4
      %s33 = int_to_ptr.hbm [resolvable:$true] %s32
      %s34 = sshll.u32 [#allocation6], 4
      %s35 = int_to_ptr.vmem [resolvable:$true] %s34
      %37 = dma.hbm_to_vmem [thread:$0]  %s33, 128, %s35, [#allocation7]
    $region9: #{intern_image_layer.1} parent=1 // pred_fallthru
      _
    // Predicated region
    $region10: #{intern_image_layer.1} parent=1 // pred_check
      _
    $region11: #{intern_image_layer.1} parent=1 // pred_check_branch
      %39 = sbr.rel (0) target = $region13
    $region12: #{intern_image_layer.1} parent=1 // pred_region
      %41 = vsyncadd [#allocation7], 0
      %s43 = sshll.u32 %s2, 4
      %s44 = int_to_ptr.hbm [resolvable:$true] %s43
      %s45 = sshll.u32 [#allocation8], 4
      %s46 = int_to_ptr.vmem [resolvable:$true] %s45
      %48 = dma.hbm_to_vmem [thread:$0]  %s44, 64, %s46, [#allocation7]
    $region13: #{intern_image_layer.1} parent=1 // pred_fallthru
      _
    // Predicated region
    $region14: #{intern_image_layer.1} parent=1 // pred_check
      _
    $region15: #{intern_image_layer.1} parent=1 // pred_check_branch
      %50 = sbr.rel (0) target = $region17
    $region16: #{intern_image_layer.1} parent=1 // pred_region
      %52 = vsyncadd [#allocation10], 0
      %s53 = sshll.u32 %s3, 4
      %s54 = int_to_ptr.hbm [resolvable:$true] %s53
      %s55 = sshll.u32 [#allocation9], 4
      %s56 = int_to_ptr.vmem [resolvable:$true] %s55
      %61 = dma.hbm_to_vmem [thread:$0]  %s54, 4096, %s56, [#allocation10], 256, 256, 16
    $region17: #{intern_image_layer.1} parent=1 // pred_fallthru
      _
    // Predicated region
    $region18: #{intern_image_layer.1} parent=1 // pred_check
      _
    $region19: #{intern_image_layer.1} parent=1 // pred_check_branch
      %63 = sbr.rel (0) target = $region21
    $region20: #{intern_image_layer.1} parent=1 // pred_region
      %65 = vsyncadd [#allocation10], 0
      %s66 = sshll.u32 %s4, 4
      %s67 = int_to_ptr.hbm [resolvable:$true] %s66
      %s68 = sshll.u32 [#allocation11], 4
      %s69 = int_to_ptr.vmem [resolvable:$true] %s68
      %74 = dma.hbm_to_vmem [thread:$0]  %s67, 4096, %s69, [#allocation10], 64, 64, 4
    $region21: #{intern_image_layer.1} parent=1 // pred_fallthru
      _
    // Predicated region
    $region22: #{intern_image_layer.1} parent=1 // pred_check
      _
    $region23: #{intern_image_layer.1} parent=1 // pred_check_branch
      %76 = sbr.rel (0) target = $region25
    $region24: #{intern_image_layer.1} parent=1 // pred_region
      %78 = dma.done [#allocation4], 4096
    $region25: #{intern_image_layer.1} parent=1 // pred_fallthru
      _
    // Predicated region
    $region26: #{intern_image_layer.1} parent=1 // pred_check
      _
    $region27: #{intern_image_layer.1} parent=1 // pred_check_branch
      %80 = sbr.rel (0) target = $region29
    $region28: #{intern_image_layer.1} parent=1 // pred_region
      %82 = dma.done [#allocation7], 128
    $region29: #{intern_image_layer.1} parent=1 // pred_fallthru
      _
    // Predicated region
    $region30: #{intern_image_layer.1} parent=1 // pred_check
      _
    $region31: #{intern_image_layer.1} parent=1 // pred_check_branch
      %84 = sbr.rel (0) target = $region33
    $region32: #{intern_image_layer.1} parent=1 // pred_region
      %86 = dma.done [#allocation7], 64
    $region33: #{intern_image_layer.1} parent=1 // pred_fallthru
      _
    // Predicated region
    $region34: #{intern_image_layer.1} parent=1 // pred_check
      _
    $region35: #{intern_image_layer.1} parent=1 // pred_check_branch
      %88 = sbr.rel (0) target = $region37
    $region36: #{intern_image_layer.1} parent=1 // pred_region
      %90 = dma.done [#allocation10], 4096
    $region37: #{intern_image_layer.1} parent=1 // pred_fallthru
      _
    // Predicated region
    $region38: #{intern_image_layer.1} parent=1 // pred_check
      _
    $region39: #{intern_image_layer.1} parent=1 // pred_check_branch
      %92 = sbr.rel (0) target = $region41
    $region40: #{intern_image_layer.1} parent=1 // pred_region
      %94 = dma.done [#allocation10], 4096
    $region41: #{intern_image_layer.1} parent=1 // pred_fallthru
      _
    %v95 = vld [vmem:[#allocation3] sm:$0xf]
    %v96 = vld [vmem:[#allocation3 + $0x4] sm:$0xf]
    %v97 = vld [vmem:[#allocation3 + $0x8] sm:$0xf]
    %v98 = vld [vmem:[#allocation3 + $0xc] sm:$0xf]
    %v99 = vld [vmem:[#allocation3 + $0x10] sm:$0xf]
    %v100 = vld [vmem:[#allocation3 + $0x14] sm:$0xf]
    %v101 = vld [vmem:[#allocation3 + $0x18] sm:$0xf]
    %v102 = vld [vmem:[#allocation3 + $0x1c] sm:$0xf]
    %v103 = vld [vmem:[#allocation3 + $0x20] sm:$0xf]
    %v104 = vld [vmem:[#allocation3 + $0x24] sm:$0xf]
    %v105 = vld [vmem:[#allocation3 + $0x28] sm:$0xf]
    %v106 = vld [vmem:[#allocation3 + $0x2c] sm:$0xf]
    %v107 = vld [vmem:[#allocation3 + $0x30] sm:$0xf]
    %v108 = vld [vmem:[#allocation3 + $0x34] sm:$0xf]
    %v109 = vld [vmem:[#allocation3 + $0x38] sm:$0xf]
    %v110 = vld [vmem:[#allocation3 + $0x3c] sm:$0xf]
    %v111 = vld [vmem:[#allocation3 + $0x40] sm:$0xf]
    %v112 = vld [vmem:[#allocation3 + $0x44] sm:$0xf]
    %v113 = vld [vmem:[#allocation3 + $0x48] sm:$0xf]
    %v114 = vld [vmem:[#allocation3 + $0x4c] sm:$0xf]
    %v115 = vld [vmem:[#allocation3 + $0x50] sm:$0xf]
    %v116 = vld [vmem:[#allocation3 + $0x54] sm:$0xf]
    %v117 = vld [vmem:[#allocation3 + $0x58] sm:$0xf]
    %v118 = vld [vmem:[#allocation3 + $0x5c] sm:$0xf]
    %v119 = vld [vmem:[#allocation3 + $0x60] sm:$0xf]
    %v120 = vld [vmem:[#allocation3 + $0x64] sm:$0xf]
    %v121 = vld [vmem:[#allocation3 + $0x68] sm:$0xf]
    %v122 = vld [vmem:[#allocation3 + $0x6c] sm:$0xf]
    %v123 = vld [vmem:[#allocation3 + $0x70] sm:$0xf]
    %v124 = vld [vmem:[#allocation3 + $0x74] sm:$0xf]
    %v125 = vld [vmem:[#allocation3 + $0x78] sm:$0xf]
    %v126 = vld [vmem:[#allocation3 + $0x7c] sm:$0xf]
    %v127 = vld [vmem:[#allocation3 + $0x80] sm:$0xf]
    %v128 = vld [vmem:[#allocation3 + $0x84] sm:$0xf]
    %v129 = vld [vmem:[#allocation3 + $0x88] sm:$0xf]
    %v130 = vld [vmem:[#allocation3 + $0x8c] sm:$0xf]
    %v131 = vld [vmem:[#allocation3 + $0x90] sm:$0xf]
    %v132 = vld [vmem:[#allocation3 + $0x94] sm:$0xf]
    %v133 = vld [vmem:[#allocation3 + $0x98] sm:$0xf]
    %v134 = vld [vmem:[#allocation3 + $0x9c] sm:$0xf]
    %v135 = vld [vmem:[#allocation3 + $0xa0] sm:$0xf]
    %v136 = vld [vmem:[#allocation3 + $0xa4] sm:$0xf]
    %v137 = vld [vmem:[#allocation3 + $0xa8] sm:$0xf]
    %v138 = vld [vmem:[#allocation3 + $0xac] sm:$0xf]
    %v139 = vld [vmem:[#allocation3 + $0xb0] sm:$0xf]
    %v140 = vld [vmem:[#allocation3 + $0xb4] sm:$0xf]
    %v141 = vld [vmem:[#allocation3 + $0xb8] sm:$0xf]
    %v142 = vld [vmem:[#allocation3 + $0xbc] sm:$0xf]
    %v143 = vld [vmem:[#allocation3 + $0xc0] sm:$0xf]
    %v144 = vld [vmem:[#allocation3 + $0xc4] sm:$0xf]
    %v145 = vld [vmem:[#allocation3 + $0xc8] sm:$0xf]
    %v146 = vld [vmem:[#allocation3 + $0xcc] sm:$0xf]
    %v147 = vld [vmem:[#allocation3 + $0xd0] sm:$0xf]
    %v148 = vld [vmem:[#allocation3 + $0xd4] sm:$0xf]
    %v149 = vld [vmem:[#allocation3 + $0xd8] sm:$0xf]
    %v150 = vld [vmem:[#allocation3 + $0xdc] sm:$0xf]
    %v151 = vld [vmem:[#allocation3 + $0xe0] sm:$0xf]
    %v152 = vld [vmem:[#allocation3 + $0xe4] sm:$0xf]
    %v153 = vld [vmem:[#allocation3 + $0xe8] sm:$0xf]
    %v154 = vld [vmem:[#allocation3 + $0xec] sm:$0xf]
    %v155 = vld [vmem:[#allocation3 + $0xf0] sm:$0xf]
    %v156 = vld [vmem:[#allocation3 + $0xf4] sm:$0xf]
    %v157 = vld [vmem:[#allocation3 + $0xf8] sm:$0xf]
    %v158 = vld [vmem:[#allocation3 + $0xfc] sm:$0xf]
    %v159 = vunpack.c.l.bf16 %v95
    %v160 = vunpack.c.l.bf16 %v96
    %v161 = vunpack.c.l.bf16 %v97
    %v162 = vunpack.c.l.bf16 %v98
    %v163 = vunpack.c.l.bf16 %v99
    %v164 = vunpack.c.l.bf16 %v100
    %v165 = vunpack.c.l.bf16 %v101
    %v166 = vunpack.c.l.bf16 %v102
    %v167 = vunpack.c.l.bf16 %v103
    %v168 = vunpack.c.l.bf16 %v104
    %v169 = vunpack.c.l.bf16 %v105
    %v170 = vunpack.c.l.bf16 %v106
    %v171 = vunpack.c.l.bf16 %v107
    %v172 = vunpack.c.l.bf16 %v108
    %v173 = vunpack.c.l.bf16 %v109
    %v174 = vunpack.c.l.bf16 %v110
    %v175 = vunpack.c.l.bf16 %v111
    %v176 = vunpack.c.l.bf16 %v112
    %v177 = vunpack.c.l.bf16 %v113
    %v178 = vunpack.c.l.bf16 %v114
    %v179 = vunpack.c.l.bf16 %v115
    %v180 = vunpack.c.l.bf16 %v116
    %v181 = vunpack.c.l.bf16 %v117
    %v182 = vunpack.c.l.bf16 %v118
    %v183 = vunpack.c.l.bf16 %v119
    %v184 = vunpack.c.l.bf16 %v120
    %v185 = vunpack.c.l.bf16 %v121
    %v186 = vunpack.c.l.bf16 %v122
    %v187 = vunpack.c.l.bf16 %v123
    %v188 = vunpack.c.l.bf16 %v124
    %v189 = vunpack.c.l.bf16 %v125
    %v190 = vunpack.c.l.bf16 %v126
    %v191 = vunpack.c.l.bf16 %v127
    %v192 = vunpack.c.l.bf16 %v128
    %v193 = vunpack.c.l.bf16 %v129
    %v194 = vunpack.c.l.bf16 %v130
    %v195 = vunpack.c.l.bf16 %v131
    %v196 = vunpack.c.l.bf16 %v132
    %v197 = vunpack.c.l.bf16 %v133
    %v198 = vunpack.c.l.bf16 %v134
    %v199 = vunpack.c.l.bf16 %v135
    %v200 = vunpack.c.l.bf16 %v136
    %v201 = vunpack.c.l.bf16 %v137
    %v202 = vunpack.c.l.bf16 %v138
    %v203 = vunpack.c.l.bf16 %v139
    %v204 = vunpack.c.l.bf16 %v140
    %v205 = vunpack.c.l.bf16 %v141
    %v206 = vunpack.c.l.bf16 %v142
    %v207 = vunpack.c.l.bf16 %v143
    %v208 = vunpack.c.l.bf16 %v144
    %v209 = vunpack.c.l.bf16 %v145
    %v210 = vunpack.c.l.bf16 %v146
    %v211 = vunpack.c.l.bf16 %v147
    %v212 = vunpack.c.l.bf16 %v148
    %v213 = vunpack.c.l.bf16 %v149
    %v214 = vunpack.c.l.bf16 %v150
    %v215 = vunpack.c.l.bf16 %v151
    %v216 = vunpack.c.l.bf16 %v152
    %v217 = vunpack.c.l.bf16 %v153
    %v218 = vunpack.c.l.bf16 %v154
    %v219 = vunpack.c.l.bf16 %v155
    %v220 = vunpack.c.l.bf16 %v156
    %v221 = vunpack.c.l.bf16 %v157
    %v222 = vunpack.c.l.bf16 %v158
    %v223 = vld [vmem:[#allocation6] sm:$0x1f]
    %224 = vadd.xlane.f32.xlu0 %v159
    %v225 = vpop.xlane.xlu0 %224
    %226 = vadd.xlane.f32.xlu0 %v160
    %v227 = vpop.xlane.xlu0 %226
    %228 = vadd.xlane.f32.xlu0 %v161
    %v229 = vpop.xlane.xlu0 %228
    %230 = vadd.xlane.f32.xlu0 %v162
    %v231 = vpop.xlane.xlu0 %230
    %232 = vadd.xlane.f32.xlu0 %v163
    %v233 = vpop.xlane.xlu0 %232
    %234 = vadd.xlane.f32.xlu0 %v164
    %v235 = vpop.xlane.xlu0 %234
    %236 = vadd.xlane.f32.xlu0 %v165
    %v237 = vpop.xlane.xlu0 %236
    %238 = vadd.xlane.f32.xlu0 %v166
    %v239 = vpop.xlane.xlu0 %238
    %240 = vadd.xlane.f32.xlu0 %v167
    %v241 = vpop.xlane.xlu0 %240
    %242 = vadd.xlane.f32.xlu0 %v168
    %v243 = vpop.xlane.xlu0 %242
    %244 = vadd.xlane.f32.xlu0 %v169
    %v245 = vpop.xlane.xlu0 %244
    %246 = vadd.xlane.f32.xlu0 %v170
    %v247 = vpop.xlane.xlu0 %246
    %248 = vadd.xlane.f32.xlu0 %v171
    %v249 = vpop.xlane.xlu0 %248
    %250 = vadd.xlane.f32.xlu0 %v172
    %v251 = vpop.xlane.xlu0 %250
    %252 = vadd.xlane.f32.xlu0 %v173
    %v253 = vpop.xlane.xlu0 %252
    %254 = vadd.xlane.f32.xlu0 %v174
    %v255 = vpop.xlane.xlu0 %254
    %256 = vadd.xlane.f32.xlu0 %v175
    %v257 = vpop.xlane.xlu0 %256
    %258 = vadd.xlane.f32.xlu0 %v176
    %v259 = vpop.xlane.xlu0 %258
    %260 = vadd.xlane.f32.xlu0 %v177
    %v261 = vpop.xlane.xlu0 %260
    %262 = vadd.xlane.f32.xlu0 %v178
    %v263 = vpop.xlane.xlu0 %262
    %264 = vadd.xlane.f32.xlu0 %v179
    %v265 = vpop.xlane.xlu0 %264
    %266 = vadd.xlane.f32.xlu0 %v180
    %v267 = vpop.xlane.xlu0 %266
    %268 = vadd.xlane.f32.xlu0 %v181
    %v269 = vpop.xlane.xlu0 %268
    %270 = vadd.xlane.f32.xlu0 %v182
    %v271 = vpop.xlane.xlu0 %270
    %272 = vadd.xlane.f32.xlu0 %v183
    %v273 = vpop.xlane.xlu0 %272
    %274 = vadd.xlane.f32.xlu0 %v184
    %v275 = vpop.xlane.xlu0 %274
    %276 = vadd.xlane.f32.xlu0 %v185
    %v277 = vpop.xlane.xlu0 %276
    %278 = vadd.xlane.f32.xlu0 %v186
    %v279 = vpop.xlane.xlu0 %278
    %280 = vadd.xlane.f32.xlu0 %v187
    %v281 = vpop.xlane.xlu0 %280
    %282 = vadd.xlane.f32.xlu0 %v188
    %v283 = vpop.xlane.xlu0 %282
    %284 = vadd.xlane.f32.xlu0 %v189
    %v285 = vpop.xlane.xlu0 %284
    %286 = vadd.xlane.f32.xlu0 %v190
    %v287 = vpop.xlane.xlu0 %286
    %288 = vadd.xlane.f32.xlu0 %v191
    %v289 = vpop.xlane.xlu0 %288
    %290 = vadd.xlane.f32.xlu0 %v192
    %v291 = vpop.xlane.xlu0 %290
    %292 = vadd.xlane.f32.xlu0 %v193
    %v293 = vpop.xlane.xlu0 %292
    %294 = vadd.xlane.f32.xlu0 %v194
    %v295 = vpop.xlane.xlu0 %294
    %296 = vadd.xlane.f32.xlu0 %v195
    %v297 = vpop.xlane.xlu0 %296
    %298 = vadd.xlane.f32.xlu0 %v196
    %v299 = vpop.xlane.xlu0 %298
    %300 = vadd.xlane.f32.xlu0 %v197
    %v301 = vpop.xlane.xlu0 %300
    %302 = vadd.xlane.f32.xlu0 %v198
    %v303 = vpop.xlane.xlu0 %302
    %304 = vadd.xlane.f32.xlu0 %v199
    %v305 = vpop.xlane.xlu0 %304
    %306 = vadd.xlane.f32.xlu0 %v200
    %v307 = vpop.xlane.xlu0 %306
    %308 = vadd.xlane.f32.xlu0 %v201
    %v309 = vpop.xlane.xlu0 %308
    %310 = vadd.xlane.f32.xlu0 %v202
    %v311 = vpop.xlane.xlu0 %310
    %312 = vadd.xlane.f32.xlu0 %v203
    %v313 = vpop.xlane.xlu0 %312
    %314 = vadd.xlane.f32.xlu0 %v204
    %v315 = vpop.xlane.xlu0 %314
    %316 = vadd.xlane.f32.xlu0 %v205
    %v317 = vpop.xlane.xlu0 %316
    %318 = vadd.xlane.f32.xlu0 %v206
    %v319 = vpop.xlane.xlu0 %318
    %320 = vadd.xlane.f32.xlu0 %v207
    %v321 = vpop.xlane.xlu0 %320
    %322 = vadd.xlane.f32.xlu0 %v208
    %v323 = vpop.xlane.xlu0 %322
    %324 = vadd.xlane.f32.xlu0 %v209
    %v325 = vpop.xlane.xlu0 %324
    %326 = vadd.xlane.f32.xlu0 %v210
    %v327 = vpop.xlane.xlu0 %326
    %328 = vadd.xlane.f32.xlu0 %v211
    %v329 = vpop.xlane.xlu0 %328
    %330 = vadd.xlane.f32.xlu0 %v212
    %v331 = vpop.xlane.xlu0 %330
    %332 = vadd.xlane.f32.xlu0 %v213
    %v333 = vpop.xlane.xlu0 %332
    %334 = vadd.xlane.f32.xlu0 %v214
    %v335 = vpop.xlane.xlu0 %334
    %336 = vadd.xlane.f32.xlu0 %v215
    %v337 = vpop.xlane.xlu0 %336
    %338 = vadd.xlane.f32.xlu0 %v216
    %v339 = vpop.xlane.xlu0 %338
    %340 = vadd.xlane.f32.xlu0 %v217
    %v341 = vpop.xlane.xlu0 %340
    %342 = vadd.xlane.f32.xlu0 %v218
    %v343 = vpop.xlane.xlu0 %342
    %344 = vadd.xlane.f32.xlu0 %v219
    %v345 = vpop.xlane.xlu0 %344
    %346 = vadd.xlane.f32.xlu0 %v220
    %v347 = vpop.xlane.xlu0 %346
    %348 = vadd.xlane.f32.xlu0 %v221
    %v349 = vpop.xlane.xlu0 %348
    %350 = vadd.xlane.f32.xlu0 %v222
    %v351 = vpop.xlane.xlu0 %350
    %v352 = vrcp.pop 128.0
    %v353 = vmul.f32 128.0, %v352
    %v354 = vsub.f32 1.0, %v353
    %v355 = vmul.f32 %v352, %v354
    %v356 = vadd.f32 %v352, %v355
    %vm357 = vweird.f32 %v352
    %v358 = vsel %vm357, %v352, %v356
    %v359 = vmul.f32 %v225, %v358
    %v360 = vmul.f32 %v227, %v358
    %v361 = vmul.f32 %v229, %v358
    %v362 = vmul.f32 %v231, %v358
    %v363 = vmul.f32 %v233, %v358
    %v364 = vmul.f32 %v235, %v358
    %v365 = vmul.f32 %v237, %v358
    %v366 = vmul.f32 %v239, %v358
    %v367 = vmul.f32 %v241, %v358
    %v368 = vmul.f32 %v243, %v358
    %v369 = vmul.f32 %v245, %v358
    %v370 = vmul.f32 %v247, %v358
    %v371 = vmul.f32 %v249, %v358
    %v372 = vmul.f32 %v251, %v358
    %v373 = vmul.f32 %v253, %v358
    %v374 = vmul.f32 %v255, %v358
    %v375 = vmul.f32 %v257, %v358
    %v376 = vmul.f32 %v259, %v358
    %v377 = vmul.f32 %v261, %v358
    %v378 = vmul.f32 %v263, %v358
    %v379 = vmul.f32 %v265, %v358
    %v380 = vmul.f32 %v267, %v358
    %v381 = vmul.f32 %v269, %v358
    %v382 = vmul.f32 %v271, %v358
    %v383 = vmul.f32 %v273, %v358
    %v384 = vmul.f32 %v275, %v358
    %v385 = vmul.f32 %v277, %v358
    %v386 = vmul.f32 %v279, %v358
    %v387 = vmul.f32 %v281, %v358
    %v388 = vmul.f32 %v283, %v358
    %v389 = vmul.f32 %v285, %v358
    %v390 = vmul.f32 %v287, %v358
    %v391 = vmul.f32 %v289, %v358
    %v392 = vmul.f32 %v291, %v358
    %v393 = vmul.f32 %v293, %v358
    %v394 = vmul.f32 %v295, %v358
    %v395 = vmul.f32 %v297, %v358
    %v396 = vmul.f32 %v299, %v358
    %v397 = vmul.f32 %v301, %v358
    %v398 = vmul.f32 %v303, %v358
    %v399 = vmul.f32 %v305, %v358
    %v400 = vmul.f32 %v307, %v358
    %v401 = vmul.f32 %v309, %v358
    %v402 = vmul.f32 %v311, %v358
    %v403 = vmul.f32 %v313, %v358
    %v404 = vmul.f32 %v315, %v358
    %v405 = vmul.f32 %v317, %v358
    %v406 = vmul.f32 %v319, %v358
    %v407 = vmul.f32 %v321, %v358
    %v408 = vmul.f32 %v323, %v358
    %v409 = vmul.f32 %v325, %v358
    %v410 = vmul.f32 %v327, %v358
    %v411 = vmul.f32 %v329, %v358
    %v412 = vmul.f32 %v331, %v358
    %v413 = vmul.f32 %v333, %v358
    %v414 = vmul.f32 %v335, %v358
    %v415 = vmul.f32 %v337, %v358
    %v416 = vmul.f32 %v339, %v358
    %v417 = vmul.f32 %v341, %v358
    %v418 = vmul.f32 %v343, %v358
    %v419 = vmul.f32 %v345, %v358
    %v420 = vmul.f32 %v347, %v358
    %v421 = vmul.f32 %v349, %v358
    %v422 = vmul.f32 %v351, %v358
    %v423 = vsub.f32 %v159, %v359
    %v424 = vsub.f32 %v160, %v360
    %v425 = vsub.f32 %v161, %v361
    %v426 = vsub.f32 %v162, %v362
    %v427 = vsub.f32 %v163, %v363
    %v428 = vsub.f32 %v164, %v364
    %v429 = vsub.f32 %v165, %v365
    %v430 = vsub.f32 %v166, %v366
    %v431 = vsub.f32 %v167, %v367
    %v432 = vsub.f32 %v168, %v368
    %v433 = vsub.f32 %v169, %v369
    %v434 = vsub.f32 %v170, %v370
    %v435 = vsub.f32 %v171, %v371
    %v436 = vsub.f32 %v172, %v372
    %v437 = vsub.f32 %v173, %v373
    %v438 = vsub.f32 %v174, %v374
    %v439 = vsub.f32 %v175, %v375
    %v440 = vsub.f32 %v176, %v376
    %v441 = vsub.f32 %v177, %v377
    %v442 = vsub.f32 %v178, %v378
    %v443 = vsub.f32 %v179, %v379
    %v444 = vsub.f32 %v180, %v380
    %v445 = vsub.f32 %v181, %v381
    %v446 = vsub.f32 %v182, %v382
    %v447 = vsub.f32 %v183, %v383
    %v448 = vsub.f32 %v184, %v384
    %v449 = vsub.f32 %v185, %v385
    %v450 = vsub.f32 %v186, %v386
    %v451 = vsub.f32 %v187, %v387
    %v452 = vsub.f32 %v188, %v388
    %v453 = vsub.f32 %v189, %v389
    %v454 = vsub.f32 %v190, %v390
    %v455 = vsub.f32 %v191, %v391
    %v456 = vsub.f32 %v192, %v392
    %v457 = vsub.f32 %v193, %v393
    %v458 = vsub.f32 %v194, %v394
    %v459 = vsub.f32 %v195, %v395
    %v460 = vsub.f32 %v196, %v396
    %v461 = vsub.f32 %v197, %v397
    %v462 = vsub.f32 %v198, %v398
    %v463 = vsub.f32 %v199, %v399
    %v464 = vsub.f32 %v200, %v400
    %v465 = vsub.f32 %v201, %v401
    %v466 = vsub.f32 %v202, %v402
    %v467 = vsub.f32 %v203, %v403
    %v468 = vsub.f32 %v204, %v404
    %v469 = vsub.f32 %v205, %v405
    %v470 = vsub.f32 %v206, %v406
    %v471 = vsub.f32 %v207, %v407
    %v472 = vsub.f32 %v208, %v408
    %v473 = vsub.f32 %v209, %v409
    %v474 = vsub.f32 %v210, %v410
    %v475 = vsub.f32 %v211, %v411
    %v476 = vsub.f32 %v212, %v412
    %v477 = vsub.f32 %v213, %v413
    %v478 = vsub.f32 %v214, %v414
    %v479 = vsub.f32 %v215, %v415
    %v480 = vsub.f32 %v216, %v416
    %v481 = vsub.f32 %v217, %v417
    %v482 = vsub.f32 %v218, %v418
    %v483 = vsub.f32 %v219, %v419
    %v484 = vsub.f32 %v220, %v420
    %v485 = vsub.f32 %v221, %v421
    %v486 = vsub.f32 %v222, %v422
    %v487 = vmul.f32 %v423, %v423
    %v488 = vmul.f32 %v424, %v424
    %v489 = vmul.f32 %v425, %v425
    %v490 = vmul.f32 %v426, %v426
    %v491 = vmul.f32 %v427, %v427
    %v492 = vmul.f32 %v428, %v428
    %v493 = vmul.f32 %v429, %v429
    %v494 = vmul.f32 %v430, %v430
    %v495 = vmul.f32 %v431, %v431
    %v496 = vmul.f32 %v432, %v432
    %v497 = vmul.f32 %v433, %v433
    %v498 = vmul.f32 %v434, %v434
    %v499 = vmul.f32 %v435, %v435
    %v500 = vmul.f32 %v436, %v436
    %v501 = vmul.f32 %v437, %v437
    %v502 = vmul.f32 %v438, %v438
    %v503 = vmul.f32 %v439, %v439
    %v504 = vmul.f32 %v440, %v440
    %v505 = vmul.f32 %v441, %v441
    %v506 = vmul.f32 %v442, %v442
    %v507 = vmul.f32 %v443, %v443
    %v508 = vmul.f32 %v444, %v444
    %v509 = vmul.f32 %v445, %v445
    %v510 = vmul.f32 %v446, %v446
    %v511 = vmul.f32 %v447, %v447
    %v512 = vmul.f32 %v448, %v448
    %v513 = vmul.f32 %v449, %v449
    %v514 = vmul.f32 %v450, %v450
    %v515 = vmul.f32 %v451, %v451
    %v516 = vmul.f32 %v452, %v452
    %v517 = vmul.f32 %v453, %v453
    %v518 = vmul.f32 %v454, %v454
    %v519 = vmul.f32 %v455, %v455
    %v520 = vmul.f32 %v456, %v456
    %v521 = vmul.f32 %v457, %v457
    %v522 = vmul.f32 %v458, %v458
    %v523 = vmul.f32 %v459, %v459
    %v524 = vmul.f32 %v460, %v460
    %v525 = vmul.f32 %v461, %v461
    %v526 = vmul.f32 %v462, %v462
    %v527 = vmul.f32 %v463, %v463
    %v528 = vmul.f32 %v464, %v464
    %v529 = vmul.f32 %v465, %v465
    %v530 = vmul.f32 %v466, %v466
    %v531 = vmul.f32 %v467, %v467
    %v532 = vmul.f32 %v468, %v468
    %v533 = vmul.f32 %v469, %v469
    %v534 = vmul.f32 %v470, %v470
    %v535 = vmul.f32 %v471, %v471
    %v536 = vmul.f32 %v472, %v472
    %v537 = vmul.f32 %v473, %v473
    %v538 = vmul.f32 %v474, %v474
    %v539 = vmul.f32 %v475, %v475
    %v540 = vmul.f32 %v476, %v476
    %v541 = vmul.f32 %v477, %v477
    %v542 = vmul.f32 %v478, %v478
    %v543 = vmul.f32 %v479, %v479
    %v544 = vmul.f32 %v480, %v480
    %v545 = vmul.f32 %v481, %v481
    %v546 = vmul.f32 %v482, %v482
    %v547 = vmul.f32 %v483, %v483
    %v548 = vmul.f32 %v484, %v484
    %v549 = vmul.f32 %v485, %v485
    %v550 = vmul.f32 %v486, %v486
    %551 = vadd.xlane.f32.xlu0 %v487
    %v552 = vpop.xlane.xlu0 %551
    %553 = vadd.xlane.f32.xlu0 %v488
    %v554 = vpop.xlane.xlu0 %553
    %555 = vadd.xlane.f32.xlu0 %v489
    %v556 = vpop.xlane.xlu0 %555
    %557 = vadd.xlane.f32.xlu0 %v490
    %v558 = vpop.xlane.xlu0 %557
    %559 = vadd.xlane.f32.xlu0 %v491
    %v560 = vpop.xlane.xlu0 %559
    %561 = vadd.xlane.f32.xlu0 %v492
    %v562 = vpop.xlane.xlu0 %561
    %563 = vadd.xlane.f32.xlu0 %v493
    %v564 = vpop.xlane.xlu0 %563
    %565 = vadd.xlane.f32.xlu0 %v494
    %v566 = vpop.xlane.xlu0 %565
    %567 = vadd.xlane.f32.xlu0 %v495
    %v568 = vpop.xlane.xlu0 %567
    %569 = vadd.xlane.f32.xlu0 %v496
    %v570 = vpop.xlane.xlu0 %569
    %571 = vadd.xlane.f32.xlu0 %v497
    %v572 = vpop.xlane.xlu0 %571
    %573 = vadd.xlane.f32.xlu0 %v498
    %v574 = vpop.xlane.xlu0 %573
    %575 = vadd.xlane.f32.xlu0 %v499
    %v576 = vpop.xlane.xlu0 %575
    %577 = vadd.xlane.f32.xlu0 %v500
    %v578 = vpop.xlane.xlu0 %577
    %579 = vadd.xlane.f32.xlu0 %v501
    %v580 = vpop.xlane.xlu0 %579
    %581 = vadd.xlane.f32.xlu0 %v502
    %v582 = vpop.xlane.xlu0 %581
    %583 = vadd.xlane.f32.xlu0 %v503
    %v584 = vpop.xlane.xlu0 %583
    %585 = vadd.xlane.f32.xlu0 %v504
    %v586 = vpop.xlane.xlu0 %585
    %587 = vadd.xlane.f32.xlu0 %v505
    %v588 = vpop.xlane.xlu0 %587
    %589 = vadd.xlane.f32.xlu0 %v506
    %v590 = vpop.xlane.xlu0 %589
    %591 = vadd.xlane.f32.xlu0 %v507
    %v592 = vpop.xlane.xlu0 %591
    %593 = vadd.xlane.f32.xlu0 %v508
    %v594 = vpop.xlane.xlu0 %593
    %595 = vadd.xlane.f32.xlu0 %v509
    %v596 = vpop.xlane.xlu0 %595
    %597 = vadd.xlane.f32.xlu0 %v510
    %v598 = vpop.xlane.xlu0 %597
    %599 = vadd.xlane.f32.xlu0 %v511
    %v600 = vpop.xlane.xlu0 %599
    %601 = vadd.xlane.f32.xlu0 %v512
    %v602 = vpop.xlane.xlu0 %601
    %603 = vadd.xlane.f32.xlu0 %v513
    %v604 = vpop.xlane.xlu0 %603
    %605 = vadd.xlane.f32.xlu0 %v514
    %v606 = vpop.xlane.xlu0 %605
    %607 = vadd.xlane.f32.xlu0 %v515
    %v608 = vpop.xlane.xlu0 %607
    %609 = vadd.xlane.f32.xlu0 %v516
    %v610 = vpop.xlane.xlu0 %609
    %611 = vadd.xlane.f32.xlu0 %v517
    %v612 = vpop.xlane.xlu0 %611
    %613 = vadd.xlane.f32.xlu0 %v518
    %v614 = vpop.xlane.xlu0 %613
    %615 = vadd.xlane.f32.xlu0 %v519
    %v616 = vpop.xlane.xlu0 %615
    %617 = vadd.xlane.f32.xlu0 %v520
    %v618 = vpop.xlane.xlu0 %617
    %619 = vadd.xlane.f32.xlu0 %v521
    %v620 = vpop.xlane.xlu0 %619
    %621 = vadd.xlane.f32.xlu0 %v522
    %v622 = vpop.xlane.xlu0 %621
    %623 = vadd.xlane.f32.xlu0 %v523
    %v624 = vpop.xlane.xlu0 %623
    %625 = vadd.xlane.f32.xlu0 %v524
    %v626 = vpop.xlane.xlu0 %625
    %627 = vadd.xlane.f32.xlu0 %v525
    %v628 = vpop.xlane.xlu0 %627
    %629 = vadd.xlane.f32.xlu0 %v526
    %v630 = vpop.xlane.xlu0 %629
    %631 = vadd.xlane.f32.xlu0 %v527
    %v632 = vpop.xlane.xlu0 %631
    %633 = vadd.xlane.f32.xlu0 %v528
    %v634 = vpop.xlane.xlu0 %633
    %635 = vadd.xlane.f32.xlu0 %v529
    %v636 = vpop.xlane.xlu0 %635
    %637 = vadd.xlane.f32.xlu0 %v530
    %v638 = vpop.xlane.xlu0 %637
    %639 = vadd.xlane.f32.xlu0 %v531
    %v640 = vpop.xlane.xlu0 %639
    %641 = vadd.xlane.f32.xlu0 %v532
    %v642 = vpop.xlane.xlu0 %641
    %643 = vadd.xlane.f32.xlu0 %v533
    %v644 = vpop.xlane.xlu0 %643
    %645 = vadd.xlane.f32.xlu0 %v534
    %v646 = vpop.xlane.xlu0 %645
    %647 = vadd.xlane.f32.xlu0 %v535
    %v648 = vpop.xlane.xlu0 %647
    %649 = vadd.xlane.f32.xlu0 %v536
    %v650 = vpop.xlane.xlu0 %649
    %651 = vadd.xlane.f32.xlu0 %v537
    %v652 = vpop.xlane.xlu0 %651
    %653 = vadd.xlane.f32.xlu0 %v538
    %v654 = vpop.xlane.xlu0 %653
    %655 = vadd.xlane.f32.xlu0 %v539
    %v656 = vpop.xlane.xlu0 %655
    %657 = vadd.xlane.f32.xlu0 %v540
    %v658 = vpop.xlane.xlu0 %657
    %659 = vadd.xlane.f32.xlu0 %v541
    %v660 = vpop.xlane.xlu0 %659
    %661 = vadd.xlane.f32.xlu0 %v542
    %v662 = vpop.xlane.xlu0 %661
    %663 = vadd.xlane.f32.xlu0 %v543
    %v664 = vpop.xlane.xlu0 %663
    %665 = vadd.xlane.f32.xlu0 %v544
    %v666 = vpop.xlane.xlu0 %665
    %667 = vadd.xlane.f32.xlu0 %v545
    %v668 = vpop.xlane.xlu0 %667
    %669 = vadd.xlane.f32.xlu0 %v546
    %v670 = vpop.xlane.xlu0 %669
    %671 = vadd.xlane.f32.xlu0 %v547
    %v672 = vpop.xlane.xlu0 %671
    %673 = vadd.xlane.f32.xlu0 %v548
    %v674 = vpop.xlane.xlu0 %673
    %675 = vadd.xlane.f32.xlu0 %v549
    %v676 = vpop.xlane.xlu0 %675
    %677 = vadd.xlane.f32.xlu0 %v550
    %v678 = vpop.xlane.xlu0 %677
    %v679 = vmul.f32 %v552, %v358
    %v680 = vmul.f32 %v554, %v358
    %v681 = vmul.f32 %v556, %v358
    %v682 = vmul.f32 %v558, %v358
    %v683 = vmul.f32 %v560, %v358
    %v684 = vmul.f32 %v562, %v358
    %v685 = vmul.f32 %v564, %v358
    %v686 = vmul.f32 %v566, %v358
    %v687 = vmul.f32 %v568, %v358
    %v688 = vmul.f32 %v570, %v358
    %v689 = vmul.f32 %v572, %v358
    %v690 = vmul.f32 %v574, %v358
    %v691 = vmul.f32 %v576, %v358
    %v692 = vmul.f32 %v578, %v358
    %v693 = vmul.f32 %v580, %v358
    %v694 = vmul.f32 %v582, %v358
    %v695 = vmul.f32 %v584, %v358
    %v696 = vmul.f32 %v586, %v358
    %v697 = vmul.f32 %v588, %v358
    %v698 = vmul.f32 %v590, %v358
    %v699 = vmul.f32 %v592, %v358
    %v700 = vmul.f32 %v594, %v358
    %v701 = vmul.f32 %v596, %v358
    %v702 = vmul.f32 %v598, %v358
    %v703 = vmul.f32 %v600, %v358
    %v704 = vmul.f32 %v602, %v358
    %v705 = vmul.f32 %v604, %v358
    %v706 = vmul.f32 %v606, %v358
    %v707 = vmul.f32 %v608, %v358
    %v708 = vmul.f32 %v610, %v358
    %v709 = vmul.f32 %v612, %v358
    %v710 = vmul.f32 %v614, %v358
    %v711 = vmul.f32 %v616, %v358
    %v712 = vmul.f32 %v618, %v358
    %v713 = vmul.f32 %v620, %v358
    %v714 = vmul.f32 %v622, %v358
    %v715 = vmul.f32 %v624, %v358
    %v716 = vmul.f32 %v626, %v358
    %v717 = vmul.f32 %v628, %v358
    %v718 = vmul.f32 %v630, %v358
    %v719 = vmul.f32 %v632, %v358
    %v720 = vmul.f32 %v634, %v358
    %v721 = vmul.f32 %v636, %v358
    %v722 = vmul.f32 %v638, %v358
    %v723 = vmul.f32 %v640, %v358
    %v724 = vmul.f32 %v642, %v358
    %v725 = vmul.f32 %v644, %v358
    %v726 = vmul.f32 %v646, %v358
    %v727 = vmul.f32 %v648, %v358
    %v728 = vmul.f32 %v650, %v358
    %v729 = vmul.f32 %v652, %v358
    %v730 = vmul.f32 %v654, %v358
    %v731 = vmul.f32 %v656, %v358
    %v732 = vmul.f32 %v658, %v358
    %v733 = vmul.f32 %v660, %v358
    %v734 = vmul.f32 %v662, %v358
    %v735 = vmul.f32 %v664, %v358
    %v736 = vmul.f32 %v666, %v358
    %v737 = vmul.f32 %v668, %v358
    %v738 = vmul.f32 %v670, %v358
    %v739 = vmul.f32 %v672, %v358
    %v740 = vmul.f32 %v674, %v358
    %v741 = vmul.f32 %v676, %v358
    %v742 = vmul.f32 %v678, %v358
    %v743 = vadd.f32 %v679, 1e-06
    %v744 = vadd.f32 %v680, 1e-06
    %v745 = vadd.f32 %v681, 1e-06
    %v746 = vadd.f32 %v682, 1e-06
    %v747 = vadd.f32 %v683, 1e-06
    %v748 = vadd.f32 %v684, 1e-06
    %v749 = vadd.f32 %v685, 1e-06
    %v750 = vadd.f32 %v686, 1e-06
    %v751 = vadd.f32 %v687, 1e-06
    %v752 = vadd.f32 %v688, 1e-06
    %v753 = vadd.f32 %v689, 1e-06
    %v754 = vadd.f32 %v690, 1e-06
    %v755 = vadd.f32 %v691, 1e-06
    %v756 = vadd.f32 %v692, 1e-06
    %v757 = vadd.f32 %v693, 1e-06
    %v758 = vadd.f32 %v694, 1e-06
    %v759 = vadd.f32 %v695, 1e-06
    %v760 = vadd.f32 %v696, 1e-06
    %v761 = vadd.f32 %v697, 1e-06
    %v762 = vadd.f32 %v698, 1e-06
    %v763 = vadd.f32 %v699, 1e-06
    %v764 = vadd.f32 %v700, 1e-06
    %v765 = vadd.f32 %v701, 1e-06
    %v766 = vadd.f32 %v702, 1e-06
    %v767 = vadd.f32 %v703, 1e-06
    %v768 = vadd.f32 %v704, 1e-06
    %v769 = vadd.f32 %v705, 1e-06
    %v770 = vadd.f32 %v706, 1e-06
    %v771 = vadd.f32 %v707, 1e-06
    %v772 = vadd.f32 %v708, 1e-06
    %v773 = vadd.f32 %v709, 1e-06
    %v774 = vadd.f32 %v710, 1e-06
    %v775 = vadd.f32 %v711, 1e-06
    %v776 = vadd.f32 %v712, 1e-06
    %v777 = vadd.f32 %v713, 1e-06
    %v778 = vadd.f32 %v714, 1e-06
    %v779 = vadd.f32 %v715, 1e-06
    %v780 = vadd.f32 %v716, 1e-06
    %v781 = vadd.f32 %v717, 1e-06
    %v782 = vadd.f32 %v718, 1e-06
    %v783 = vadd.f32 %v719, 1e-06
    %v784 = vadd.f32 %v720, 1e-06
    %v785 = vadd.f32 %v721, 1e-06
    %v786 = vadd.f32 %v722, 1e-06
    %v787 = vadd.f32 %v723, 1e-06
    %v788 = vadd.f32 %v724, 1e-06
    %v789 = vadd.f32 %v725, 1e-06
    %v790 = vadd.f32 %v726, 1e-06
    %v791 = vadd.f32 %v727, 1e-06
    %v792 = vadd.f32 %v728, 1e-06
    %v793 = vadd.f32 %v729, 1e-06
    %v794 = vadd.f32 %v730, 1e-06
    %v795 = vadd.f32 %v731, 1e-06
    %v796 = vadd.f32 %v732, 1e-06
    %v797 = vadd.f32 %v733, 1e-06
    %v798 = vadd.f32 %v734, 1e-06
    %v799 = vadd.f32 %v735, 1e-06
    %v800 = vadd.f32 %v736, 1e-06
    %v801 = vadd.f32 %v737, 1e-06
    %v802 = vadd.f32 %v738, 1e-06
    %v803 = vadd.f32 %v739, 1e-06
    %v804 = vadd.f32 %v740, 1e-06
    %v805 = vadd.f32 %v741, 1e-06
    %v806 = vadd.f32 %v742, 1e-06
    %v807 = vrsqrt.pop %v743
    %v808 = vmul.f32 %v807, %v743
    %v809 = vmul.f32 %v808, %v807
    %v810 = vmul.f32 0.5, %v809
    %v811 = vsub.f32 1.5, %v810
    %v812 = vmul.f32 %v807, %v811
    %vm813 = vweird.f32 %v743
    %vm814 = vweird.f32 %v807
    %vm815 = vmor %vm813, %vm814
    %v816 = vsel %vm815, %v807, %v812
    %v817 = vrsqrt.pop %v744
    %v818 = vmul.f32 %v817, %v744
    %v819 = vmul.f32 %v818, %v817
    %v820 = vmul.f32 0.5, %v819
    %v821 = vsub.f32 1.5, %v820
    %v822 = vmul.f32 %v817, %v821
    %vm823 = vweird.f32 %v744
    %vm824 = vweird.f32 %v817
    %vm825 = vmor %vm823, %vm824
    %v826 = vsel %vm825, %v817, %v822
    %v827 = vrsqrt.pop %v745
    %v828 = vmul.f32 %v827, %v745
    %v829 = vmul.f32 %v828, %v827
    %v830 = vmul.f32 0.5, %v829
    %v831 = vsub.f32 1.5, %v830
    %v832 = vmul.f32 %v827, %v831
    %vm833 = vweird.f32 %v745
    %vm834 = vweird.f32 %v827
    %vm835 = vmor %vm833, %vm834
    %v836 = vsel %vm835, %v827, %v832
    %v837 = vrsqrt.pop %v746
    %v838 = vmul.f32 %v837, %v746
    %v839 = vmul.f32 %v838, %v837
    %v840 = vmul.f32 0.5, %v839
    %v841 = vsub.f32 1.5, %v840
    %v842 = vmul.f32 %v837, %v841
    %vm843 = vweird.f32 %v746
    %vm844 = vweird.f32 %v837
    %vm845 = vmor %vm843, %vm844
    %v846 = vsel %vm845, %v837, %v842
    %v847 = vrsqrt.pop %v747
    %v848 = vmul.f32 %v847, %v747
    %v849 = vmul.f32 %v848, %v847
    %v850 = vmul.f32 0.5, %v849
    %v851 = vsub.f32 1.5, %v850
    %v852 = vmul.f32 %v847, %v851
    %vm853 = vweird.f32 %v747
    %vm854 = vweird.f32 %v847
    %vm855 = vmor %vm853, %vm854
    %v856 = vsel %vm855, %v847, %v852
    %v857 = vrsqrt.pop %v748
    %v858 = vmul.f32 %v857, %v748
    %v859 = vmul.f32 %v858, %v857
    %v860 = vmul.f32 0.5, %v859
    %v861 = vsub.f32 1.5, %v860
    %v862 = vmul.f32 %v857, %v861
    %vm863 = vweird.f32 %v748
    %vm864 = vweird.f32 %v857
    %vm865 = vmor %vm863, %vm864
    %v866 = vsel %vm865, %v857, %v862
    %v867 = vrsqrt.pop %v749
    %v868 = vmul.f32 %v867, %v749
    %v869 = vmul.f32 %v868, %v867
    %v870 = vmul.f32 0.5, %v869
    %v871 = vsub.f32 1.5, %v870
    %v872 = vmul.f32 %v867, %v871
    %vm873 = vweird.f32 %v749
    %vm874 = vweird.f32 %v867
    %vm875 = vmor %vm873, %vm874
    %v876 = vsel %vm875, %v867, %v872
    %v877 = vrsqrt.pop %v750
    %v878 = vmul.f32 %v877, %v750
    %v879 = vmul.f32 %v878, %v877
    %v880 = vmul.f32 0.5, %v879
    %v881 = vsub.f32 1.5, %v880
    %v882 = vmul.f32 %v877, %v881
    %vm883 = vweird.f32 %v750
    %vm884 = vweird.f32 %v877
    %vm885 = vmor %vm883, %vm884
    %v886 = vsel %vm885, %v877, %v882
    %v887 = vrsqrt.pop %v751
    %v888 = vmul.f32 %v887, %v751
    %v889 = vmul.f32 %v888, %v887
    %v890 = vmul.f32 0.5, %v889
    %v891 = vsub.f32 1.5, %v890
    %v892 = vmul.f32 %v887, %v891
    %vm893 = vweird.f32 %v751
    %vm894 = vweird.f32 %v887
    %vm895 = vmor %vm893, %vm894
    %v896 = vsel %vm895, %v887, %v892
    %v897 = vrsqrt.pop %v752
    %v898 = vmul.f32 %v897, %v752
    %v899 = vmul.f32 %v898, %v897
    %v900 = vmul.f32 0.5, %v899
    %v901 = vsub.f32 1.5, %v900
    %v902 = vmul.f32 %v897, %v901
    %vm903 = vweird.f32 %v752
    %vm904 = vweird.f32 %v897
    %vm905 = vmor %vm903, %vm904
    %v906 = vsel %vm905, %v897, %v902
    %v907 = vrsqrt.pop %v753
    %v908 = vmul.f32 %v907, %v753
    %v909 = vmul.f32 %v908, %v907
    %v910 = vmul.f32 0.5, %v909
    %v911 = vsub.f32 1.5, %v910
    %v912 = vmul.f32 %v907, %v911
    %vm913 = vweird.f32 %v753
    %vm914 = vweird.f32 %v907
    %vm915 = vmor %vm913, %vm914
    %v916 = vsel %vm915, %v907, %v912
    %v917 = vrsqrt.pop %v754
    %v918 = vmul.f32 %v917, %v754
    %v919 = vmul.f32 %v918, %v917
    %v920 = vmul.f32 0.5, %v919
    %v921 = vsub.f32 1.5, %v920
    %v922 = vmul.f32 %v917, %v921
    %vm923 = vweird.f32 %v754
    %vm924 = vweird.f32 %v917
    %vm925 = vmor %vm923, %vm924
    %v926 = vsel %vm925, %v917, %v922
    %v927 = vrsqrt.pop %v755
    %v928 = vmul.f32 %v927, %v755
    %v929 = vmul.f32 %v928, %v927
    %v930 = vmul.f32 0.5, %v929
    %v931 = vsub.f32 1.5, %v930
    %v932 = vmul.f32 %v927, %v931
    %vm933 = vweird.f32 %v755
    %vm934 = vweird.f32 %v927
    %vm935 = vmor %vm933, %vm934
    %v936 = vsel %vm935, %v927, %v932
    %v937 = vrsqrt.pop %v756
    %v938 = vmul.f32 %v937, %v756
    %v939 = vmul.f32 %v938, %v937
    %v940 = vmul.f32 0.5, %v939
    %v941 = vsub.f32 1.5, %v940
    %v942 = vmul.f32 %v937, %v941
    %vm943 = vweird.f32 %v756
    %vm944 = vweird.f32 %v937
    %vm945 = vmor %vm943, %vm944
    %v946 = vsel %vm945, %v937, %v942
    %v947 = vrsqrt.pop %v757
    %v948 = vmul.f32 %v947, %v757
    %v949 = vmul.f32 %v948, %v947
    %v950 = vmul.f32 0.5, %v949
    %v951 = vsub.f32 1.5, %v950
    %v952 = vmul.f32 %v947, %v951
    %vm953 = vweird.f32 %v757
    %vm954 = vweird.f32 %v947
    %vm955 = vmor %vm953, %vm954
    %v956 = vsel %vm955, %v947, %v952
    %v957 = vrsqrt.pop %v758
    %v958 = vmul.f32 %v957, %v758
    %v959 = vmul.f32 %v958, %v957
    %v960 = vmul.f32 0.5, %v959
    %v961 = vsub.f32 1.5, %v960
    %v962 = vmul.f32 %v957, %v961
    %vm963 = vweird.f32 %v758
    %vm964 = vweird.f32 %v957
    %vm965 = vmor %vm963, %vm964
    %v966 = vsel %vm965, %v957, %v962
    %v967 = vrsqrt.pop %v759
    %v968 = vmul.f32 %v967, %v759
    %v969 = vmul.f32 %v968, %v967
    %v970 = vmul.f32 0.5, %v969
    %v971 = vsub.f32 1.5, %v970
    %v972 = vmul.f32 %v967, %v971
    %vm973 = vweird.f32 %v759
    %vm974 = vweird.f32 %v967
    %vm975 = vmor %vm973, %vm974
    %v976 = vsel %vm975, %v967, %v972
    %v977 = vrsqrt.pop %v760
    %v978 = vmul.f32 %v977, %v760
    %v979 = vmul.f32 %v978, %v977
    %v980 = vmul.f32 0.5, %v979
    %v981 = vsub.f32 1.5, %v980
    %v982 = vmul.f32 %v977, %v981
    %vm983 = vweird.f32 %v760
    %vm984 = vweird.f32 %v977
    %vm985 = vmor %vm983, %vm984
    %v986 = vsel %vm985, %v977, %v982
    %v987 = vrsqrt.pop %v761
    %v988 = vmul.f32 %v987, %v761
    %v989 = vmul.f32 %v988, %v987
    %v990 = vmul.f32 0.5, %v989
    %v991 = vsub.f32 1.5, %v990
    %v992 = vmul.f32 %v987, %v991
    %vm993 = vweird.f32 %v761
    %vm994 = vweird.f32 %v987
    %vm995 = vmor %vm993, %vm994
    %v996 = vsel %vm995, %v987, %v992
    %v997 = vrsqrt.pop %v762
    %v998 = vmul.f32 %v997, %v762
    %v999 = vmul.f32 %v998, %v997
    %v1000 = vmul.f32 0.5, %v999
    %v1001 = vsub.f32 1.5, %v1000
    %v1002 = vmul.f32 %v997, %v1001
    %vm1003 = vweird.f32 %v762
    %vm1004 = vweird.f32 %v997
    %vm1005 = vmor %vm1003, %vm1004
    %v1006 = vsel %vm1005, %v997, %v1002
    %v1007 = vrsqrt.pop %v763
    %v1008 = vmul.f32 %v1007, %v763
    %v1009 = vmul.f32 %v1008, %v1007
    %v1010 = vmul.f32 0.5, %v1009
    %v1011 = vsub.f32 1.5, %v1010
    %v1012 = vmul.f32 %v1007, %v1011
    %vm1013 = vweird.f32 %v763
    %vm1014 = vweird.f32 %v1007
    %vm1015 = vmor %vm1013, %vm1014
    %v1016 = vsel %vm1015, %v1007, %v1012
    %v1017 = vrsqrt.pop %v764
    %v1018 = vmul.f32 %v1017, %v764
    %v1019 = vmul.f32 %v1018, %v1017
    %v1020 = vmul.f32 0.5, %v1019
    %v1021 = vsub.f32 1.5, %v1020
    %v1022 = vmul.f32 %v1017, %v1021
    %vm1023 = vweird.f32 %v764
    %vm1024 = vweird.f32 %v1017
    %vm1025 = vmor %vm1023, %vm1024
    %v1026 = vsel %vm1025, %v1017, %v1022
    %v1027 = vrsqrt.pop %v765
    %v1028 = vmul.f32 %v1027, %v765
    %v1029 = vmul.f32 %v1028, %v1027
    %v1030 = vmul.f32 0.5, %v1029
    %v1031 = vsub.f32 1.5, %v1030
    %v1032 = vmul.f32 %v1027, %v1031
    %vm1033 = vweird.f32 %v765
    %vm1034 = vweird.f32 %v1027
    %vm1035 = vmor %vm1033, %vm1034
    %v1036 = vsel %vm1035, %v1027, %v1032
    %v1037 = vrsqrt.pop %v766
    %v1038 = vmul.f32 %v1037, %v766
    %v1039 = vmul.f32 %v1038, %v1037
    %v1040 = vmul.f32 0.5, %v1039
    %v1041 = vsub.f32 1.5, %v1040
    %v1042 = vmul.f32 %v1037, %v1041
    %vm1043 = vweird.f32 %v766
    %vm1044 = vweird.f32 %v1037
    %vm1045 = vmor %vm1043, %vm1044
    %v1046 = vsel %vm1045, %v1037, %v1042
    %v1047 = vrsqrt.pop %v767
    %v1048 = vmul.f32 %v1047, %v767
    %v1049 = vmul.f32 %v1048, %v1047
    %v1050 = vmul.f32 0.5, %v1049
    %v1051 = vsub.f32 1.5, %v1050
    %v1052 = vmul.f32 %v1047, %v1051
    %vm1053 = vweird.f32 %v767
    %vm1054 = vweird.f32 %v1047
    %vm1055 = vmor %vm1053, %vm1054
    %v1056 = vsel %vm1055, %v1047, %v1052
    %v1057 = vrsqrt.pop %v768
    %v1058 = vmul.f32 %v1057, %v768
    %v1059 = vmul.f32 %v1058, %v1057
    %v1060 = vmul.f32 0.5, %v1059
    %v1061 = vsub.f32 1.5, %v1060
    %v1062 = vmul.f32 %v1057, %v1061
    %vm1063 = vweird.f32 %v768
    %vm1064 = vweird.f32 %v1057
    %vm1065 = vmor %vm1063, %vm1064
    %v1066 = vsel %vm1065, %v1057, %v1062
    %v1067 = vrsqrt.pop %v769
    %v1068 = vmul.f32 %v1067, %v769
    %v1069 = vmul.f32 %v1068, %v1067
    %v1070 = vmul.f32 0.5, %v1069
    %v1071 = vsub.f32 1.5, %v1070
    %v1072 = vmul.f32 %v1067, %v1071
    %vm1073 = vweird.f32 %v769
    %vm1074 = vweird.f32 %v1067
    %vm1075 = vmor %vm1073, %vm1074
    %v1076 = vsel %vm1075, %v1067, %v1072
    %v1077 = vrsqrt.pop %v770
    %v1078 = vmul.f32 %v1077, %v770
    %v1079 = vmul.f32 %v1078, %v1077
    %v1080 = vmul.f32 0.5, %v1079
    %v1081 = vsub.f32 1.5, %v1080
    %v1082 = vmul.f32 %v1077, %v1081
    %vm1083 = vweird.f32 %v770
    %vm1084 = vweird.f32 %v1077
    %vm1085 = vmor %vm1083, %vm1084
    %v1086 = vsel %vm1085, %v1077, %v1082
    %v1087 = vrsqrt.pop %v771
    %v1088 = vmul.f32 %v1087, %v771
    %v1089 = vmul.f32 %v1088, %v1087
    %v1090 = vmul.f32 0.5, %v1089
    %v1091 = vsub.f32 1.5, %v1090
    %v1092 = vmul.f32 %v1087, %v1091
    %vm1093 = vweird.f32 %v771
    %vm1094 = vweird.f32 %v1087
    %vm1095 = vmor %vm1093, %vm1094
    %v1096 = vsel %vm1095, %v1087, %v1092
    %v1097 = vrsqrt.pop %v772
    %v1098 = vmul.f32 %v1097, %v772
    %v1099 = vmul.f32 %v1098, %v1097
    %v1100 = vmul.f32 0.5, %v1099
    %v1101 = vsub.f32 1.5, %v1100
    %v1102 = vmul.f32 %v1097, %v1101
    %vm1103 = vweird.f32 %v772
    %vm1104 = vweird.f32 %v1097
    %vm1105 = vmor %vm1103, %vm1104
    %v1106 = vsel %vm1105, %v1097, %v1102
    %v1107 = vrsqrt.pop %v773
    %v1108 = vmul.f32 %v1107, %v773
    %v1109 = vmul.f32 %v1108, %v1107
    %v1110 = vmul.f32 0.5, %v1109
    %v1111 = vsub.f32 1.5, %v1110
    %v1112 = vmul.f32 %v1107, %v1111
    %vm1113 = vweird.f32 %v773
    %vm1114 = vweird.f32 %v1107
    %vm1115 = vmor %vm1113, %vm1114
    %v1116 = vsel %vm1115, %v1107, %v1112
    %v1117 = vrsqrt.pop %v774
    %v1118 = vmul.f32 %v1117, %v774
    %v1119 = vmul.f32 %v1118, %v1117
    %v1120 = vmul.f32 0.5, %v1119
    %v1121 = vsub.f32 1.5, %v1120
    %v1122 = vmul.f32 %v1117, %v1121
    %vm1123 = vweird.f32 %v774
    %vm1124 = vweird.f32 %v1117
    %vm1125 = vmor %vm1123, %vm1124
    %v1126 = vsel %vm1125, %v1117, %v1122
    %v1127 = vrsqrt.pop %v775
    %v1128 = vmul.f32 %v1127, %v775
    %v1129 = vmul.f32 %v1128, %v1127
    %v1130 = vmul.f32 0.5, %v1129
    %v1131 = vsub.f32 1.5, %v1130
    %v1132 = vmul.f32 %v1127, %v1131
    %vm1133 = vweird.f32 %v775
    %vm1134 = vweird.f32 %v1127
    %vm1135 = vmor %vm1133, %vm1134
    %v1136 = vsel %vm1135, %v1127, %v1132
    %v1137 = vrsqrt.pop %v776
    %v1138 = vmul.f32 %v1137, %v776
    %v1139 = vmul.f32 %v1138, %v1137
    %v1140 = vmul.f32 0.5, %v1139
    %v1141 = vsub.f32 1.5, %v1140
    %v1142 = vmul.f32 %v1137, %v1141
    %vm1143 = vweird.f32 %v776
    %vm1144 = vweird.f32 %v1137
    %vm1145 = vmor %vm1143, %vm1144
    %v1146 = vsel %vm1145, %v1137, %v1142
    %v1147 = vrsqrt.pop %v777
    %v1148 = vmul.f32 %v1147, %v777
    %v1149 = vmul.f32 %v1148, %v1147
    %v1150 = vmul.f32 0.5, %v1149
    %v1151 = vsub.f32 1.5, %v1150
    %v1152 = vmul.f32 %v1147, %v1151
    %vm1153 = vweird.f32 %v777
    %vm1154 = vweird.f32 %v1147
    %vm1155 = vmor %vm1153, %vm1154
    %v1156 = vsel %vm1155, %v1147, %v1152
    %v1157 = vrsqrt.pop %v778
    %v1158 = vmul.f32 %v1157, %v778
    %v1159 = vmul.f32 %v1158, %v1157
    %v1160 = vmul.f32 0.5, %v1159
    %v1161 = vsub.f32 1.5, %v1160
    %v1162 = vmul.f32 %v1157, %v1161
    %vm1163 = vweird.f32 %v778
    %vm1164 = vweird.f32 %v1157
    %vm1165 = vmor %vm1163, %vm1164
    %v1166 = vsel %vm1165, %v1157, %v1162
    %v1167 = vrsqrt.pop %v779
    %v1168 = vmul.f32 %v1167, %v779
    %v1169 = vmul.f32 %v1168, %v1167
    %v1170 = vmul.f32 0.5, %v1169
    %v1171 = vsub.f32 1.5, %v1170
    %v1172 = vmul.f32 %v1167, %v1171
    %vm1173 = vweird.f32 %v779
    %vm1174 = vweird.f32 %v1167
    %vm1175 = vmor %vm1173, %vm1174
    %v1176 = vsel %vm1175, %v1167, %v1172
    %v1177 = vrsqrt.pop %v780
    %v1178 = vmul.f32 %v1177, %v780
    %v1179 = vmul.f32 %v1178, %v1177
    %v1180 = vmul.f32 0.5, %v1179
    %v1181 = vsub.f32 1.5, %v1180
    %v1182 = vmul.f32 %v1177, %v1181
    %vm1183 = vweird.f32 %v780
    %vm1184 = vweird.f32 %v1177
    %vm1185 = vmor %vm1183, %vm1184
    %v1186 = vsel %vm1185, %v1177, %v1182
    %v1187 = vrsqrt.pop %v781
    %v1188 = vmul.f32 %v1187, %v781
    %v1189 = vmul.f32 %v1188, %v1187
    %v1190 = vmul.f32 0.5, %v1189
    %v1191 = vsub.f32 1.5, %v1190
    %v1192 = vmul.f32 %v1187, %v1191
    %vm1193 = vweird.f32 %v781
    %vm1194 = vweird.f32 %v1187
    %vm1195 = vmor %vm1193, %vm1194
    %v1196 = vsel %vm1195, %v1187, %v1192
    %v1197 = vrsqrt.pop %v782
    %v1198 = vmul.f32 %v1197, %v782
    %v1199 = vmul.f32 %v1198, %v1197
    %v1200 = vmul.f32 0.5, %v1199
    %v1201 = vsub.f32 1.5, %v1200
    %v1202 = vmul.f32 %v1197, %v1201
    %vm1203 = vweird.f32 %v782
    %vm1204 = vweird.f32 %v1197
    %vm1205 = vmor %vm1203, %vm1204
    %v1206 = vsel %vm1205, %v1197, %v1202
    %v1207 = vrsqrt.pop %v783
    %v1208 = vmul.f32 %v1207, %v783
    %v1209 = vmul.f32 %v1208, %v1207
    %v1210 = vmul.f32 0.5, %v1209
    %v1211 = vsub.f32 1.5, %v1210
    %v1212 = vmul.f32 %v1207, %v1211
    %vm1213 = vweird.f32 %v783
    %vm1214 = vweird.f32 %v1207
    %vm1215 = vmor %vm1213, %vm1214
    %v1216 = vsel %vm1215, %v1207, %v1212
    %v1217 = vrsqrt.pop %v784
    %v1218 = vmul.f32 %v1217, %v784
    %v1219 = vmul.f32 %v1218, %v1217
    %v1220 = vmul.f32 0.5, %v1219
    %v1221 = vsub.f32 1.5, %v1220
    %v1222 = vmul.f32 %v1217, %v1221
    %vm1223 = vweird.f32 %v784
    %vm1224 = vweird.f32 %v1217
    %vm1225 = vmor %vm1223, %vm1224
    %v1226 = vsel %vm1225, %v1217, %v1222
    %v1227 = vrsqrt.pop %v785
    %v1228 = vmul.f32 %v1227, %v785
    %v1229 = vmul.f32 %v1228, %v1227
    %v1230 = vmul.f32 0.5, %v1229
    %v1231 = vsub.f32 1.5, %v1230
    %v1232 = vmul.f32 %v1227, %v1231
    %vm1233 = vweird.f32 %v785
    %vm1234 = vweird.f32 %v1227
    %vm1235 = vmor %vm1233, %vm1234
    %v1236 = vsel %vm1235, %v1227, %v1232
    %v1237 = vrsqrt.pop %v786
    %v1238 = vmul.f32 %v1237, %v786
    %v1239 = vmul.f32 %v1238, %v1237
    %v1240 = vmul.f32 0.5, %v1239
    %v1241 = vsub.f32 1.5, %v1240
    %v1242 = vmul.f32 %v1237, %v1241
    %vm1243 = vweird.f32 %v786
    %vm1244 = vweird.f32 %v1237
    %vm1245 = vmor %vm1243, %vm1244
    %v1246 = vsel %vm1245, %v1237, %v1242
    %v1247 = vrsqrt.pop %v787
    %v1248 = vmul.f32 %v1247, %v787
    %v1249 = vmul.f32 %v1248, %v1247
    %v1250 = vmul.f32 0.5, %v1249
    %v1251 = vsub.f32 1.5, %v1250
    %v1252 = vmul.f32 %v1247, %v1251
    %vm1253 = vweird.f32 %v787
    %vm1254 = vweird.f32 %v1247
    %vm1255 = vmor %vm1253, %vm1254
    %v1256 = vsel %vm1255, %v1247, %v1252
    %v1257 = vrsqrt.pop %v788
    %v1258 = vmul.f32 %v1257, %v788
    %v1259 = vmul.f32 %v1258, %v1257
    %v1260 = vmul.f32 0.5, %v1259
    %v1261 = vsub.f32 1.5, %v1260
    %v1262 = vmul.f32 %v1257, %v1261
    %vm1263 = vweird.f32 %v788
    %vm1264 = vweird.f32 %v1257
    %vm1265 = vmor %vm1263, %vm1264
    %v1266 = vsel %vm1265, %v1257, %v1262
    %v1267 = vrsqrt.pop %v789
    %v1268 = vmul.f32 %v1267, %v789
    %v1269 = vmul.f32 %v1268, %v1267
    %v1270 = vmul.f32 0.5, %v1269
    %v1271 = vsub.f32 1.5, %v1270
    %v1272 = vmul.f32 %v1267, %v1271
    %vm1273 = vweird.f32 %v789
    %vm1274 = vweird.f32 %v1267
    %vm1275 = vmor %vm1273, %vm1274
    %v1276 = vsel %vm1275, %v1267, %v1272
    %v1277 = vrsqrt.pop %v790
    %v1278 = vmul.f32 %v1277, %v790
    %v1279 = vmul.f32 %v1278, %v1277
    %v1280 = vmul.f32 0.5, %v1279
    %v1281 = vsub.f32 1.5, %v1280
    %v1282 = vmul.f32 %v1277, %v1281
    %vm1283 = vweird.f32 %v790
    %vm1284 = vweird.f32 %v1277
    %vm1285 = vmor %vm1283, %vm1284
    %v1286 = vsel %vm1285, %v1277, %v1282
    %v1287 = vrsqrt.pop %v791
    %v1288 = vmul.f32 %v1287, %v791
    %v1289 = vmul.f32 %v1288, %v1287
    %v1290 = vmul.f32 0.5, %v1289
    %v1291 = vsub.f32 1.5, %v1290
    %v1292 = vmul.f32 %v1287, %v1291
    %vm1293 = vweird.f32 %v791
    %vm1294 = vweird.f32 %v1287
    %vm1295 = vmor %vm1293, %vm1294
    %v1296 = vsel %vm1295, %v1287, %v1292
    %v1297 = vrsqrt.pop %v792
    %v1298 = vmul.f32 %v1297, %v792
    %v1299 = vmul.f32 %v1298, %v1297
    %v1300 = vmul.f32 0.5, %v1299
    %v1301 = vsub.f32 1.5, %v1300
    %v1302 = vmul.f32 %v1297, %v1301
    %vm1303 = vweird.f32 %v792
    %vm1304 = vweird.f32 %v1297
    %vm1305 = vmor %vm1303, %vm1304
    %v1306 = vsel %vm1305, %v1297, %v1302
    %v1307 = vrsqrt.pop %v793
    %v1308 = vmul.f32 %v1307, %v793
    %v1309 = vmul.f32 %v1308, %v1307
    %v1310 = vmul.f32 0.5, %v1309
    %v1311 = vsub.f32 1.5, %v1310
    %v1312 = vmul.f32 %v1307, %v1311
    %vm1313 = vweird.f32 %v793
    %vm1314 = vweird.f32 %v1307
    %vm1315 = vmor %vm1313, %vm1314
    %v1316 = vsel %vm1315, %v1307, %v1312
    %v1317 = vrsqrt.pop %v794
    %v1318 = vmul.f32 %v1317, %v794
    %v1319 = vmul.f32 %v1318, %v1317
    %v1320 = vmul.f32 0.5, %v1319
    %v1321 = vsub.f32 1.5, %v1320
    %v1322 = vmul.f32 %v1317, %v1321
    %vm1323 = vweird.f32 %v794
    %vm1324 = vweird.f32 %v1317
    %vm1325 = vmor %vm1323, %vm1324
    %v1326 = vsel %vm1325, %v1317, %v1322
    %v1327 = vrsqrt.pop %v795
    %v1328 = vmul.f32 %v1327, %v795
    %v1329 = vmul.f32 %v1328, %v1327
    %v1330 = vmul.f32 0.5, %v1329
    %v1331 = vsub.f32 1.5, %v1330
    %v1332 = vmul.f32 %v1327, %v1331
    %vm1333 = vweird.f32 %v795
    %vm1334 = vweird.f32 %v1327
    %vm1335 = vmor %vm1333, %vm1334
    %v1336 = vsel %vm1335, %v1327, %v1332
    %v1337 = vrsqrt.pop %v796
    %v1338 = vmul.f32 %v1337, %v796
    %v1339 = vmul.f32 %v1338, %v1337
    %v1340 = vmul.f32 0.5, %v1339
    %v1341 = vsub.f32 1.5, %v1340
    %v1342 = vmul.f32 %v1337, %v1341
    %vm1343 = vweird.f32 %v796
    %vm1344 = vweird.f32 %v1337
    %vm1345 = vmor %vm1343, %vm1344
    %v1346 = vsel %vm1345, %v1337, %v1342
    %v1347 = vrsqrt.pop %v797
    %v1348 = vmul.f32 %v1347, %v797
    %v1349 = vmul.f32 %v1348, %v1347
    %v1350 = vmul.f32 0.5, %v1349
    %v1351 = vsub.f32 1.5, %v1350
    %v1352 = vmul.f32 %v1347, %v1351
    %vm1353 = vweird.f32 %v797
    %vm1354 = vweird.f32 %v1347
    %vm1355 = vmor %vm1353, %vm1354
    %v1356 = vsel %vm1355, %v1347, %v1352
    %v1357 = vrsqrt.pop %v798
    %v1358 = vmul.f32 %v1357, %v798
    %v1359 = vmul.f32 %v1358, %v1357
    %v1360 = vmul.f32 0.5, %v1359
    %v1361 = vsub.f32 1.5, %v1360
    %v1362 = vmul.f32 %v1357, %v1361
    %vm1363 = vweird.f32 %v798
    %vm1364 = vweird.f32 %v1357
    %vm1365 = vmor %vm1363, %vm1364
    %v1366 = vsel %vm1365, %v1357, %v1362
    %v1367 = vrsqrt.pop %v799
    %v1368 = vmul.f32 %v1367, %v799
    %v1369 = vmul.f32 %v1368, %v1367
    %v1370 = vmul.f32 0.5, %v1369
    %v1371 = vsub.f32 1.5, %v1370
    %v1372 = vmul.f32 %v1367, %v1371
    %vm1373 = vweird.f32 %v799
    %vm1374 = vweird.f32 %v1367
    %vm1375 = vmor %vm1373, %vm1374
    %v1376 = vsel %vm1375, %v1367, %v1372
    %v1377 = vrsqrt.pop %v800
    %v1378 = vmul.f32 %v1377, %v800
    %v1379 = vmul.f32 %v1378, %v1377
    %v1380 = vmul.f32 0.5, %v1379
    %v1381 = vsub.f32 1.5, %v1380
    %v1382 = vmul.f32 %v1377, %v1381
    %vm1383 = vweird.f32 %v800
    %vm1384 = vweird.f32 %v1377
    %vm1385 = vmor %vm1383, %vm1384
    %v1386 = vsel %vm1385, %v1377, %v1382
    %v1387 = vrsqrt.pop %v801
    %v1388 = vmul.f32 %v1387, %v801
    %v1389 = vmul.f32 %v1388, %v1387
    %v1390 = vmul.f32 0.5, %v1389
    %v1391 = vsub.f32 1.5, %v1390
    %v1392 = vmul.f32 %v1387, %v1391
    %vm1393 = vweird.f32 %v801
    %vm1394 = vweird.f32 %v1387
    %vm1395 = vmor %vm1393, %vm1394
    %v1396 = vsel %vm1395, %v1387, %v1392
    %v1397 = vrsqrt.pop %v802
    %v1398 = vmul.f32 %v1397, %v802
    %v1399 = vmul.f32 %v1398, %v1397
    %v1400 = vmul.f32 0.5, %v1399
    %v1401 = vsub.f32 1.5, %v1400
    %v1402 = vmul.f32 %v1397, %v1401
    %vm1403 = vweird.f32 %v802
    %vm1404 = vweird.f32 %v1397
    %vm1405 = vmor %vm1403, %vm1404
    %v1406 = vsel %vm1405, %v1397, %v1402
    %v1407 = vrsqrt.pop %v803
    %v1408 = vmul.f32 %v1407, %v803
    %v1409 = vmul.f32 %v1408, %v1407
    %v1410 = vmul.f32 0.5, %v1409
    %v1411 = vsub.f32 1.5, %v1410
    %v1412 = vmul.f32 %v1407, %v1411
    %vm1413 = vweird.f32 %v803
    %vm1414 = vweird.f32 %v1407
    %vm1415 = vmor %vm1413, %vm1414
    %v1416 = vsel %vm1415, %v1407, %v1412
    %v1417 = vrsqrt.pop %v804
    %v1418 = vmul.f32 %v1417, %v804
    %v1419 = vmul.f32 %v1418, %v1417
    %v1420 = vmul.f32 0.5, %v1419
    %v1421 = vsub.f32 1.5, %v1420
    %v1422 = vmul.f32 %v1417, %v1421
    %vm1423 = vweird.f32 %v804
    %vm1424 = vweird.f32 %v1417
    %vm1425 = vmor %vm1423, %vm1424
    %v1426 = vsel %vm1425, %v1417, %v1422
    %v1427 = vrsqrt.pop %v805
    %v1428 = vmul.f32 %v1427, %v805
    %v1429 = vmul.f32 %v1428, %v1427
    %v1430 = vmul.f32 0.5, %v1429
    %v1431 = vsub.f32 1.5, %v1430
    %v1432 = vmul.f32 %v1427, %v1431
    %vm1433 = vweird.f32 %v805
    %vm1434 = vweird.f32 %v1427
    %vm1435 = vmor %vm1433, %vm1434
    %v1436 = vsel %vm1435, %v1427, %v1432
    %v1437 = vrsqrt.pop %v806
    %v1438 = vmul.f32 %v1437, %v806
    %v1439 = vmul.f32 %v1438, %v1437
    %v1440 = vmul.f32 0.5, %v1439
    %v1441 = vsub.f32 1.5, %v1440
    %v1442 = vmul.f32 %v1437, %v1441
    %vm1443 = vweird.f32 %v806
    %vm1444 = vweird.f32 %v1437
    %vm1445 = vmor %vm1443, %vm1444
    %v1446 = vsel %vm1445, %v1437, %v1442
    %v1447 = vmul.f32 %v423, %v816
    %v1448 = vmul.f32 %v424, %v826
    %v1449 = vmul.f32 %v425, %v836
    %v1450 = vmul.f32 %v426, %v846
    %v1451 = vmul.f32 %v427, %v856
    %v1452 = vmul.f32 %v428, %v866
    %v1453 = vmul.f32 %v429, %v876
    %v1454 = vmul.f32 %v430, %v886
    %v1455 = vmul.f32 %v431, %v896
    %v1456 = vmul.f32 %v432, %v906
    %v1457 = vmul.f32 %v433, %v916
    %v1458 = vmul.f32 %v434, %v926
    %v1459 = vmul.f32 %v435, %v936
    %v1460 = vmul.f32 %v436, %v946
    %v1461 = vmul.f32 %v437, %v956
    %v1462 = vmul.f32 %v438, %v966
    %v1463 = vmul.f32 %v439, %v976
    %v1464 = vmul.f32 %v440, %v986
    %v1465 = vmul.f32 %v441, %v996
    %v1466 = vmul.f32 %v442, %v1006
    %v1467 = vmul.f32 %v443, %v1016
    %v1468 = vmul.f32 %v444, %v1026
    %v1469 = vmul.f32 %v445, %v1036
    %v1470 = vmul.f32 %v446, %v1046
    %v1471 = vmul.f32 %v447, %v1056
    %v1472 = vmul.f32 %v448, %v1066
    %v1473 = vmul.f32 %v449, %v1076
    %v1474 = vmul.f32 %v450, %v1086
    %v1475 = vmul.f32 %v451, %v1096
    %v1476 = vmul.f32 %v452, %v1106
    %v1477 = vmul.f32 %v453, %v1116
    %v1478 = vmul.f32 %v454, %v1126
    %v1479 = vmul.f32 %v455, %v1136
    %v1480 = vmul.f32 %v456, %v1146
    %v1481 = vmul.f32 %v457, %v1156
    %v1482 = vmul.f32 %v458, %v1166
    %v1483 = vmul.f32 %v459, %v1176
    %v1484 = vmul.f32 %v460, %v1186
    %v1485 = vmul.f32 %v461, %v1196
    %v1486 = vmul.f32 %v462, %v1206
    %v1487 = vmul.f32 %v463, %v1216
    %v1488 = vmul.f32 %v464, %v1226
    %v1489 = vmul.f32 %v465, %v1236
    %v1490 = vmul.f32 %v466, %v1246
    %v1491 = vmul.f32 %v467, %v1256
    %v1492 = vmul.f32 %v468, %v1266
    %v1493 = vmul.f32 %v469, %v1276
    %v1494 = vmul.f32 %v470, %v1286
    %v1495 = vmul.f32 %v471, %v1296
    %v1496 = vmul.f32 %v472, %v1306
    %v1497 = vmul.f32 %v473, %v1316
    %v1498 = vmul.f32 %v474, %v1326
    %v1499 = vmul.f32 %v475, %v1336
    %v1500 = vmul.f32 %v476, %v1346
    %v1501 = vmul.f32 %v477, %v1356
    %v1502 = vmul.f32 %v478, %v1366
    %v1503 = vmul.f32 %v479, %v1376
    %v1504 = vmul.f32 %v480, %v1386
    %v1505 = vmul.f32 %v481, %v1396
    %v1506 = vmul.f32 %v482, %v1406
    %v1507 = vmul.f32 %v483, %v1416
    %v1508 = vmul.f32 %v484, %v1426
    %v1509 = vmul.f32 %v485, %v1436
    %v1510 = vmul.f32 %v486, %v1446
    %v1511 = vperm.slane %v223, 0
    %v1512 = vmul.f32 %v1447, %v1511
    %v1513 = vmul.f32 %v1448, %v1511
    %v1514 = vmul.f32 %v1449, %v1511
    %v1515 = vmul.f32 %v1450, %v1511
    %v1516 = vmul.f32 %v1451, %v1511
    %v1517 = vmul.f32 %v1452, %v1511
    %v1518 = vmul.f32 %v1453, %v1511
    %v1519 = vmul.f32 %v1454, %v1511
    %v1520 = vmul.f32 %v1455, %v1511
    %v1521 = vmul.f32 %v1456, %v1511
    %v1522 = vmul.f32 %v1457, %v1511
    %v1523 = vmul.f32 %v1458, %v1511
    %v1524 = vmul.f32 %v1459, %v1511
    %v1525 = vmul.f32 %v1460, %v1511
    %v1526 = vmul.f32 %v1461, %v1511
    %v1527 = vmul.f32 %v1462, %v1511
    %v1528 = vmul.f32 %v1463, %v1511
    %v1529 = vmul.f32 %v1464, %v1511
    %v1530 = vmul.f32 %v1465, %v1511
    %v1531 = vmul.f32 %v1466, %v1511
    %v1532 = vmul.f32 %v1467, %v1511
    %v1533 = vmul.f32 %v1468, %v1511
    %v1534 = vmul.f32 %v1469, %v1511
    %v1535 = vmul.f32 %v1470, %v1511
    %v1536 = vmul.f32 %v1471, %v1511
    %v1537 = vmul.f32 %v1472, %v1511
    %v1538 = vmul.f32 %v1473, %v1511
    %v1539 = vmul.f32 %v1474, %v1511
    %v1540 = vmul.f32 %v1475, %v1511
    %v1541 = vmul.f32 %v1476, %v1511
    %v1542 = vmul.f32 %v1477, %v1511
    %v1543 = vmul.f32 %v1478, %v1511
    %v1544 = vmul.f32 %v1479, %v1511
    %v1545 = vmul.f32 %v1480, %v1511
    %v1546 = vmul.f32 %v1481, %v1511
    %v1547 = vmul.f32 %v1482, %v1511
    %v1548 = vmul.f32 %v1483, %v1511
    %v1549 = vmul.f32 %v1484, %v1511
    %v1550 = vmul.f32 %v1485, %v1511
    %v1551 = vmul.f32 %v1486, %v1511
    %v1552 = vmul.f32 %v1487, %v1511
    %v1553 = vmul.f32 %v1488, %v1511
    %v1554 = vmul.f32 %v1489, %v1511
    %v1555 = vmul.f32 %v1490, %v1511
    %v1556 = vmul.f32 %v1491, %v1511
    %v1557 = vmul.f32 %v1492, %v1511
    %v1558 = vmul.f32 %v1493, %v1511
    %v1559 = vmul.f32 %v1494, %v1511
    %v1560 = vmul.f32 %v1495, %v1511
    %v1561 = vmul.f32 %v1496, %v1511
    %v1562 = vmul.f32 %v1497, %v1511
    %v1563 = vmul.f32 %v1498, %v1511
    %v1564 = vmul.f32 %v1499, %v1511
    %v1565 = vmul.f32 %v1500, %v1511
    %v1566 = vmul.f32 %v1501, %v1511
    %v1567 = vmul.f32 %v1502, %v1511
    %v1568 = vmul.f32 %v1503, %v1511
    %v1569 = vmul.f32 %v1504, %v1511
    %v1570 = vmul.f32 %v1505, %v1511
    %v1571 = vmul.f32 %v1506, %v1511
    %v1572 = vmul.f32 %v1507, %v1511
    %v1573 = vmul.f32 %v1508, %v1511
    %v1574 = vmul.f32 %v1509, %v1511
    %v1575 = vmul.f32 %v1510, %v1511
    %v1576 = vperm.slane %v223, 1
    %v1577 = vadd.f32 %v1512, %v1576
    %v1578 = vadd.f32 %v1513, %v1576
    %v1579 = vadd.f32 %v1514, %v1576
    %v1580 = vadd.f32 %v1515, %v1576
    %v1581 = vadd.f32 %v1516, %v1576
    %v1582 = vadd.f32 %v1517, %v1576
    %v1583 = vadd.f32 %v1518, %v1576
    %v1584 = vadd.f32 %v1519, %v1576
    %v1585 = vadd.f32 %v1520, %v1576
    %v1586 = vadd.f32 %v1521, %v1576
    %v1587 = vadd.f32 %v1522, %v1576
    %v1588 = vadd.f32 %v1523, %v1576
    %v1589 = vadd.f32 %v1524, %v1576
    %v1590 = vadd.f32 %v1525, %v1576
    %v1591 = vadd.f32 %v1526, %v1576
    %v1592 = vadd.f32 %v1527, %v1576
    %v1593 = vadd.f32 %v1528, %v1576
    %v1594 = vadd.f32 %v1529, %v1576
    %v1595 = vadd.f32 %v1530, %v1576
    %v1596 = vadd.f32 %v1531, %v1576
    %v1597 = vadd.f32 %v1532, %v1576
    %v1598 = vadd.f32 %v1533, %v1576
    %v1599 = vadd.f32 %v1534, %v1576
    %v1600 = vadd.f32 %v1535, %v1576
    %v1601 = vadd.f32 %v1536, %v1576
    %v1602 = vadd.f32 %v1537, %v1576
    %v1603 = vadd.f32 %v1538, %v1576
    %v1604 = vadd.f32 %v1539, %v1576
    %v1605 = vadd.f32 %v1540, %v1576
    %v1606 = vadd.f32 %v1541, %v1576
    %v1607 = vadd.f32 %v1542, %v1576
    %v1608 = vadd.f32 %v1543, %v1576
    %v1609 = vadd.f32 %v1544, %v1576
    %v1610 = vadd.f32 %v1545, %v1576
    %v1611 = vadd.f32 %v1546, %v1576
    %v1612 = vadd.f32 %v1547, %v1576
    %v1613 = vadd.f32 %v1548, %v1576
    %v1614 = vadd.f32 %v1549, %v1576
    %v1615 = vadd.f32 %v1550, %v1576
    %v1616 = vadd.f32 %v1551, %v1576
    %v1617 = vadd.f32 %v1552, %v1576
    %v1618 = vadd.f32 %v1553, %v1576
    %v1619 = vadd.f32 %v1554, %v1576
    %v1620 = vadd.f32 %v1555, %v1576
    %v1621 = vadd.f32 %v1556, %v1576
    %v1622 = vadd.f32 %v1557, %v1576
    %v1623 = vadd.f32 %v1558, %v1576
    %v1624 = vadd.f32 %v1559, %v1576
    %v1625 = vadd.f32 %v1560, %v1576
    %v1626 = vadd.f32 %v1561, %v1576
    %v1627 = vadd.f32 %v1562, %v1576
    %v1628 = vadd.f32 %v1563, %v1576
    %v1629 = vadd.f32 %v1564, %v1576
    %v1630 = vadd.f32 %v1565, %v1576
    %v1631 = vadd.f32 %v1566, %v1576
    %v1632 = vadd.f32 %v1567, %v1576
    %v1633 = vadd.f32 %v1568, %v1576
    %v1634 = vadd.f32 %v1569, %v1576
    %v1635 = vadd.f32 %v1570, %v1576
    %v1636 = vadd.f32 %v1571, %v1576
    %v1637 = vadd.f32 %v1572, %v1576
    %v1638 = vadd.f32 %v1573, %v1576
    %v1639 = vadd.f32 %v1574, %v1576
    %v1640 = vadd.f32 %v1575, %v1576
    %v1641 = vadd.f32 %v159, %v1577
    %v1642 = vadd.f32 %v160, %v1578
    %v1643 = vadd.f32 %v161, %v1579
    %v1644 = vadd.f32 %v162, %v1580
    %v1645 = vadd.f32 %v163, %v1581
    %v1646 = vadd.f32 %v164, %v1582
    %v1647 = vadd.f32 %v165, %v1583
    %v1648 = vadd.f32 %v166, %v1584
    %v1649 = vadd.f32 %v167, %v1585
    %v1650 = vadd.f32 %v168, %v1586
    %v1651 = vadd.f32 %v169, %v1587
    %v1652 = vadd.f32 %v170, %v1588
    %v1653 = vadd.f32 %v171, %v1589
    %v1654 = vadd.f32 %v172, %v1590
    %v1655 = vadd.f32 %v173, %v1591
    %v1656 = vadd.f32 %v174, %v1592
    %v1657 = vadd.f32 %v175, %v1593
    %v1658 = vadd.f32 %v176, %v1594
    %v1659 = vadd.f32 %v177, %v1595
    %v1660 = vadd.f32 %v178, %v1596
    %v1661 = vadd.f32 %v179, %v1597
    %v1662 = vadd.f32 %v180, %v1598
    %v1663 = vadd.f32 %v181, %v1599
    %v1664 = vadd.f32 %v182, %v1600
    %v1665 = vadd.f32 %v183, %v1601
    %v1666 = vadd.f32 %v184, %v1602
    %v1667 = vadd.f32 %v185, %v1603
    %v1668 = vadd.f32 %v186, %v1604
    %v1669 = vadd.f32 %v187, %v1605
    %v1670 = vadd.f32 %v188, %v1606
    %v1671 = vadd.f32 %v189, %v1607
    %v1672 = vadd.f32 %v190, %v1608
    %v1673 = vadd.f32 %v191, %v1609
    %v1674 = vadd.f32 %v192, %v1610
    %v1675 = vadd.f32 %v193, %v1611
    %v1676 = vadd.f32 %v194, %v1612
    %v1677 = vadd.f32 %v195, %v1613
    %v1678 = vadd.f32 %v196, %v1614
    %v1679 = vadd.f32 %v197, %v1615
    %v1680 = vadd.f32 %v198, %v1616
    %v1681 = vadd.f32 %v199, %v1617
    %v1682 = vadd.f32 %v200, %v1618
    %v1683 = vadd.f32 %v201, %v1619
    %v1684 = vadd.f32 %v202, %v1620
    %v1685 = vadd.f32 %v203, %v1621
    %v1686 = vadd.f32 %v204, %v1622
    %v1687 = vadd.f32 %v205, %v1623
    %v1688 = vadd.f32 %v206, %v1624
    %v1689 = vadd.f32 %v207, %v1625
    %v1690 = vadd.f32 %v208, %v1626
    %v1691 = vadd.f32 %v209, %v1627
    %v1692 = vadd.f32 %v210, %v1628
    %v1693 = vadd.f32 %v211, %v1629
    %v1694 = vadd.f32 %v212, %v1630
    %v1695 = vadd.f32 %v213, %v1631
    %v1696 = vadd.f32 %v214, %v1632
    %v1697 = vadd.f32 %v215, %v1633
    %v1698 = vadd.f32 %v216, %v1634
    %v1699 = vadd.f32 %v217, %v1635
    %v1700 = vadd.f32 %v218, %v1636
    %v1701 = vadd.f32 %v219, %v1637
    %v1702 = vadd.f32 %v220, %v1638
    %v1703 = vadd.f32 %v221, %v1639
    %v1704 = vadd.f32 %v222, %v1640
    %1705 = vadd.xlane.f32.xlu0 %v1641
    %v1706 = vpop.xlane.xlu0 %1705
    %1707 = vadd.xlane.f32.xlu0 %v1642
    %v1708 = vpop.xlane.xlu0 %1707
    %1709 = vadd.xlane.f32.xlu0 %v1643
    %v1710 = vpop.xlane.xlu0 %1709
    %1711 = vadd.xlane.f32.xlu0 %v1644
    %v1712 = vpop.xlane.xlu0 %1711
    %1713 = vadd.xlane.f32.xlu0 %v1645
    %v1714 = vpop.xlane.xlu0 %1713
    %1715 = vadd.xlane.f32.xlu0 %v1646
    %v1716 = vpop.xlane.xlu0 %1715
    %1717 = vadd.xlane.f32.xlu0 %v1647
    %v1718 = vpop.xlane.xlu0 %1717
    %1719 = vadd.xlane.f32.xlu0 %v1648
    %v1720 = vpop.xlane.xlu0 %1719
    %1721 = vadd.xlane.f32.xlu0 %v1649
    %v1722 = vpop.xlane.xlu0 %1721
    %1723 = vadd.xlane.f32.xlu0 %v1650
    %v1724 = vpop.xlane.xlu0 %1723
    %1725 = vadd.xlane.f32.xlu0 %v1651
    %v1726 = vpop.xlane.xlu0 %1725
    %1727 = vadd.xlane.f32.xlu0 %v1652
    %v1728 = vpop.xlane.xlu0 %1727
    %1729 = vadd.xlane.f32.xlu0 %v1653
    %v1730 = vpop.xlane.xlu0 %1729
    %1731 = vadd.xlane.f32.xlu0 %v1654
    %v1732 = vpop.xlane.xlu0 %1731
    %1733 = vadd.xlane.f32.xlu0 %v1655
    %v1734 = vpop.xlane.xlu0 %1733
    %1735 = vadd.xlane.f32.xlu0 %v1656
    %v1736 = vpop.xlane.xlu0 %1735
    %1737 = vadd.xlane.f32.xlu0 %v1657
    %v1738 = vpop.xlane.xlu0 %1737
    %1739 = vadd.xlane.f32.xlu0 %v1658
    %v1740 = vpop.xlane.xlu0 %1739
    %1741 = vadd.xlane.f32.xlu0 %v1659
    %v1742 = vpop.xlane.xlu0 %1741
    %1743 = vadd.xlane.f32.xlu0 %v1660
    %v1744 = vpop.xlane.xlu0 %1743
    %1745 = vadd.xlane.f32.xlu0 %v1661
    %v1746 = vpop.xlane.xlu0 %1745
    %1747 = vadd.xlane.f32.xlu0 %v1662
    %v1748 = vpop.xlane.xlu0 %1747
    %1749 = vadd.xlane.f32.xlu0 %v1663
    %v1750 = vpop.xlane.xlu0 %1749
    %1751 = vadd.xlane.f32.xlu0 %v1664
    %v1752 = vpop.xlane.xlu0 %1751
    %1753 = vadd.xlane.f32.xlu0 %v1665
    %v1754 = vpop.xlane.xlu0 %1753
    %1755 = vadd.xlane.f32.xlu0 %v1666
    %v1756 = vpop.xlane.xlu0 %1755
    %1757 = vadd.xlane.f32.xlu0 %v1667
    %v1758 = vpop.xlane.xlu0 %1757
    %1759 = vadd.xlane.f32.xlu0 %v1668
    %v1760 = vpop.xlane.xlu0 %1759
    %1761 = vadd.xlane.f32.xlu0 %v1669
    %v1762 = vpop.xlane.xlu0 %1761
    %1763 = vadd.xlane.f32.xlu0 %v1670
    %v1764 = vpop.xlane.xlu0 %1763
    %1765 = vadd.xlane.f32.xlu0 %v1671
    %v1766 = vpop.xlane.xlu0 %1765
    %1767 = vadd.xlane.f32.xlu0 %v1672
    %v1768 = vpop.xlane.xlu0 %1767
    %1769 = vadd.xlane.f32.xlu0 %v1673
    %v1770 = vpop.xlane.xlu0 %1769
    %1771 = vadd.xlane.f32.xlu0 %v1674
    %v1772 = vpop.xlane.xlu0 %1771
    %1773 = vadd.xlane.f32.xlu0 %v1675
    %v1774 = vpop.xlane.xlu0 %1773
    %1775 = vadd.xlane.f32.xlu0 %v1676
    %v1776 = vpop.xlane.xlu0 %1775
    %1777 = vadd.xlane.f32.xlu0 %v1677
    %v1778 = vpop.xlane.xlu0 %1777
    %1779 = vadd.xlane.f32.xlu0 %v1678
    %v1780 = vpop.xlane.xlu0 %1779
    %1781 = vadd.xlane.f32.xlu0 %v1679
    %v1782 = vpop.xlane.xlu0 %1781
    %1783 = vadd.xlane.f32.xlu0 %v1680
    %v1784 = vpop.xlane.xlu0 %1783
    %1785 = vadd.xlane.f32.xlu0 %v1681
    %v1786 = vpop.xlane.xlu0 %1785
    %1787 = vadd.xlane.f32.xlu0 %v1682
    %v1788 = vpop.xlane.xlu0 %1787
    %1789 = vadd.xlane.f32.xlu0 %v1683
    %v1790 = vpop.xlane.xlu0 %1789
    %1791 = vadd.xlane.f32.xlu0 %v1684
    %v1792 = vpop.xlane.xlu0 %1791
    %1793 = vadd.xlane.f32.xlu0 %v1685
    %v1794 = vpop.xlane.xlu0 %1793
    %1795 = vadd.xlane.f32.xlu0 %v1686
    %v1796 = vpop.xlane.xlu0 %1795
    %1797 = vadd.xlane.f32.xlu0 %v1687
    %v1798 = vpop.xlane.xlu0 %1797
    %1799 = vadd.xlane.f32.xlu0 %v1688
    %v1800 = vpop.xlane.xlu0 %1799
    %1801 = vadd.xlane.f32.xlu0 %v1689
    %v1802 = vpop.xlane.xlu0 %1801
    %1803 = vadd.xlane.f32.xlu0 %v1690
    %v1804 = vpop.xlane.xlu0 %1803
    %1805 = vadd.xlane.f32.xlu0 %v1691
    %v1806 = vpop.xlane.xlu0 %1805
    %1807 = vadd.xlane.f32.xlu0 %v1692
    %v1808 = vpop.xlane.xlu0 %1807
    %1809 = vadd.xlane.f32.xlu0 %v1693
    %v1810 = vpop.xlane.xlu0 %1809
    %1811 = vadd.xlane.f32.xlu0 %v1694
    %v1812 = vpop.xlane.xlu0 %1811
    %1813 = vadd.xlane.f32.xlu0 %v1695
    %v1814 = vpop.xlane.xlu0 %1813
    %1815 = vadd.xlane.f32.xlu0 %v1696
    %v1816 = vpop.xlane.xlu0 %1815
    %1817 = vadd.xlane.f32.xlu0 %v1697
    %v1818 = vpop.xlane.xlu0 %1817
    %1819 = vadd.xlane.f32.xlu0 %v1698
    %v1820 = vpop.xlane.xlu0 %1819
    %1821 = vadd.xlane.f32.xlu0 %v1699
    %v1822 = vpop.xlane.xlu0 %1821
    %1823 = vadd.xlane.f32.xlu0 %v1700
    %v1824 = vpop.xlane.xlu0 %1823
    %1825 = vadd.xlane.f32.xlu0 %v1701
    %v1826 = vpop.xlane.xlu0 %1825
    %1827 = vadd.xlane.f32.xlu0 %v1702
    %v1828 = vpop.xlane.xlu0 %1827
    %1829 = vadd.xlane.f32.xlu0 %v1703
    %v1830 = vpop.xlane.xlu0 %1829
    %1831 = vadd.xlane.f32.xlu0 %v1704
    %v1832 = vpop.xlane.xlu0 %1831
    %v1833 = vmul.f32 %v1706, %v358
    %v1834 = vmul.f32 %v1708, %v358
    %v1835 = vmul.f32 %v1710, %v358
    %v1836 = vmul.f32 %v1712, %v358
    %v1837 = vmul.f32 %v1714, %v358
    %v1838 = vmul.f32 %v1716, %v358
    %v1839 = vmul.f32 %v1718, %v358
    %v1840 = vmul.f32 %v1720, %v358
    %v1841 = vmul.f32 %v1722, %v358
    %v1842 = vmul.f32 %v1724, %v358
    %v1843 = vmul.f32 %v1726, %v358
    %v1844 = vmul.f32 %v1728, %v358
    %v1845 = vmul.f32 %v1730, %v358
    %v1846 = vmul.f32 %v1732, %v358
    %v1847 = vmul.f32 %v1734, %v358
    %v1848 = vmul.f32 %v1736, %v358
    %v1849 = vmul.f32 %v1738, %v358
    %v1850 = vmul.f32 %v1740, %v358
    %v1851 = vmul.f32 %v1742, %v358
    %v1852 = vmul.f32 %v1744, %v358
    %v1853 = vmul.f32 %v1746, %v358
    %v1854 = vmul.f32 %v1748, %v358
    %v1855 = vmul.f32 %v1750, %v358
    %v1856 = vmul.f32 %v1752, %v358
    %v1857 = vmul.f32 %v1754, %v358
    %v1858 = vmul.f32 %v1756, %v358
    %v1859 = vmul.f32 %v1758, %v358
    %v1860 = vmul.f32 %v1760, %v358
    %v1861 = vmul.f32 %v1762, %v358
    %v1862 = vmul.f32 %v1764, %v358
    %v1863 = vmul.f32 %v1766, %v358
    %v1864 = vmul.f32 %v1768, %v358
    %v1865 = vmul.f32 %v1770, %v358
    %v1866 = vmul.f32 %v1772, %v358
    %v1867 = vmul.f32 %v1774, %v358
    %v1868 = vmul.f32 %v1776, %v358
    %v1869 = vmul.f32 %v1778, %v358
    %v1870 = vmul.f32 %v1780, %v358
    %v1871 = vmul.f32 %v1782, %v358
    %v1872 = vmul.f32 %v1784, %v358
    %v1873 = vmul.f32 %v1786, %v358
    %v1874 = vmul.f32 %v1788, %v358
    %v1875 = vmul.f32 %v1790, %v358
    %v1876 = vmul.f32 %v1792, %v358
    %v1877 = vmul.f32 %v1794, %v358
    %v1878 = vmul.f32 %v1796, %v358
    %v1879 = vmul.f32 %v1798, %v358
    %v1880 = vmul.f32 %v1800, %v358
    %v1881 = vmul.f32 %v1802, %v358
    %v1882 = vmul.f32 %v1804, %v358
    %v1883 = vmul.f32 %v1806, %v358
    %v1884 = vmul.f32 %v1808, %v358
    %v1885 = vmul.f32 %v1810, %v358
    %v1886 = vmul.f32 %v1812, %v358
    %v1887 = vmul.f32 %v1814, %v358
    %v1888 = vmul.f32 %v1816, %v358
    %v1889 = vmul.f32 %v1818, %v358
    %v1890 = vmul.f32 %v1820, %v358
    %v1891 = vmul.f32 %v1822, %v358
    %v1892 = vmul.f32 %v1824, %v358
    %v1893 = vmul.f32 %v1826, %v358
    %v1894 = vmul.f32 %v1828, %v358
    %v1895 = vmul.f32 %v1830, %v358
    %v1896 = vmul.f32 %v1832, %v358
    %v1897 = vsub.f32 %v1641, %v1833
    %v1898 = vsub.f32 %v1642, %v1834
    %v1899 = vsub.f32 %v1643, %v1835
    %v1900 = vsub.f32 %v1644, %v1836
    %v1901 = vsub.f32 %v1645, %v1837
    %v1902 = vsub.f32 %v1646, %v1838
    %v1903 = vsub.f32 %v1647, %v1839
    %v1904 = vsub.f32 %v1648, %v1840
    %v1905 = vsub.f32 %v1649, %v1841
    %v1906 = vsub.f32 %v1650, %v1842
    %v1907 = vsub.f32 %v1651, %v1843
    %v1908 = vsub.f32 %v1652, %v1844
    %v1909 = vsub.f32 %v1653, %v1845
    %v1910 = vsub.f32 %v1654, %v1846
    %v1911 = vsub.f32 %v1655, %v1847
    %v1912 = vsub.f32 %v1656, %v1848
    %v1913 = vsub.f32 %v1657, %v1849
    %v1914 = vsub.f32 %v1658, %v1850
    %v1915 = vsub.f32 %v1659, %v1851
    %v1916 = vsub.f32 %v1660, %v1852
    %v1917 = vsub.f32 %v1661, %v1853
    %v1918 = vsub.f32 %v1662, %v1854
    %v1919 = vsub.f32 %v1663, %v1855
    %v1920 = vsub.f32 %v1664, %v1856
    %v1921 = vsub.f32 %v1665, %v1857
    %v1922 = vsub.f32 %v1666, %v1858
    %v1923 = vsub.f32 %v1667, %v1859
    %v1924 = vsub.f32 %v1668, %v1860
    %v1925 = vsub.f32 %v1669, %v1861
    %v1926 = vsub.f32 %v1670, %v1862
    %v1927 = vsub.f32 %v1671, %v1863
    %v1928 = vsub.f32 %v1672, %v1864
    %v1929 = vsub.f32 %v1673, %v1865
    %v1930 = vsub.f32 %v1674, %v1866
    %v1931 = vsub.f32 %v1675, %v1867
    %v1932 = vsub.f32 %v1676, %v1868
    %v1933 = vsub.f32 %v1677, %v1869
    %v1934 = vsub.f32 %v1678, %v1870
    %v1935 = vsub.f32 %v1679, %v1871
    %v1936 = vsub.f32 %v1680, %v1872
    %v1937 = vsub.f32 %v1681, %v1873
    %v1938 = vsub.f32 %v1682, %v1874
    %v1939 = vsub.f32 %v1683, %v1875
    %v1940 = vsub.f32 %v1684, %v1876
    %v1941 = vsub.f32 %v1685, %v1877
    %v1942 = vsub.f32 %v1686, %v1878
    %v1943 = vsub.f32 %v1687, %v1879
    %v1944 = vsub.f32 %v1688, %v1880
    %v1945 = vsub.f32 %v1689, %v1881
    %v1946 = vsub.f32 %v1690, %v1882
    %v1947 = vsub.f32 %v1691, %v1883
    %v1948 = vsub.f32 %v1692, %v1884
    %v1949 = vsub.f32 %v1693, %v1885
    %v1950 = vsub.f32 %v1694, %v1886
    %v1951 = vsub.f32 %v1695, %v1887
    %v1952 = vsub.f32 %v1696, %v1888
    %v1953 = vsub.f32 %v1697, %v1889
    %v1954 = vsub.f32 %v1698, %v1890
    %v1955 = vsub.f32 %v1699, %v1891
    %v1956 = vsub.f32 %v1700, %v1892
    %v1957 = vsub.f32 %v1701, %v1893
    %v1958 = vsub.f32 %v1702, %v1894
    %v1959 = vsub.f32 %v1703, %v1895
    %v1960 = vsub.f32 %v1704, %v1896
    %v1961 = vmul.f32 %v1897, %v1897
    %v1962 = vmul.f32 %v1898, %v1898
    %v1963 = vmul.f32 %v1899, %v1899
    %v1964 = vmul.f32 %v1900, %v1900
    %v1965 = vmul.f32 %v1901, %v1901
    %v1966 = vmul.f32 %v1902, %v1902
    %v1967 = vmul.f32 %v1903, %v1903
    %v1968 = vmul.f32 %v1904, %v1904
    %v1969 = vmul.f32 %v1905, %v1905
    %v1970 = vmul.f32 %v1906, %v1906
    %v1971 = vmul.f32 %v1907, %v1907
    %v1972 = vmul.f32 %v1908, %v1908
    %v1973 = vmul.f32 %v1909, %v1909
    %v1974 = vmul.f32 %v1910, %v1910
    %v1975 = vmul.f32 %v1911, %v1911
    %v1976 = vmul.f32 %v1912, %v1912
    %v1977 = vmul.f32 %v1913, %v1913
    %v1978 = vmul.f32 %v1914, %v1914
    %v1979 = vmul.f32 %v1915, %v1915
    %v1980 = vmul.f32 %v1916, %v1916
    %v1981 = vmul.f32 %v1917, %v1917
    %v1982 = vmul.f32 %v1918, %v1918
    %v1983 = vmul.f32 %v1919, %v1919
    %v1984 = vmul.f32 %v1920, %v1920
    %v1985 = vmul.f32 %v1921, %v1921
    %v1986 = vmul.f32 %v1922, %v1922
    %v1987 = vmul.f32 %v1923, %v1923
    %v1988 = vmul.f32 %v1924, %v1924
    %v1989 = vmul.f32 %v1925, %v1925
    %v1990 = vmul.f32 %v1926, %v1926
    %v1991 = vmul.f32 %v1927, %v1927
    %v1992 = vmul.f32 %v1928, %v1928
    %v1993 = vmul.f32 %v1929, %v1929
    %v1994 = vmul.f32 %v1930, %v1930
    %v1995 = vmul.f32 %v1931, %v1931
    %v1996 = vmul.f32 %v1932, %v1932
    %v1997 = vmul.f32 %v1933, %v1933
    %v1998 = vmul.f32 %v1934, %v1934
    %v1999 = vmul.f32 %v1935, %v1935
    %v2000 = vmul.f32 %v1936, %v1936
    %v2001 = vmul.f32 %v1937, %v1937
    %v2002 = vmul.f32 %v1938, %v1938
    %v2003 = vmul.f32 %v1939, %v1939
    %v2004 = vmul.f32 %v1940, %v1940
    %v2005 = vmul.f32 %v1941, %v1941
    %v2006 = vmul.f32 %v1942, %v1942
    %v2007 = vmul.f32 %v1943, %v1943
    %v2008 = vmul.f32 %v1944, %v1944
    %v2009 = vmul.f32 %v1945, %v1945
    %v2010 = vmul.f32 %v1946, %v1946
    %v2011 = vmul.f32 %v1947, %v1947
    %v2012 = vmul.f32 %v1948, %v1948
    %v2013 = vmul.f32 %v1949, %v1949
    %v2014 = vmul.f32 %v1950, %v1950
    %v2015 = vmul.f32 %v1951, %v1951
    %v2016 = vmul.f32 %v1952, %v1952
    %v2017 = vmul.f32 %v1953, %v1953
    %v2018 = vmul.f32 %v1954, %v1954
    %v2019 = vmul.f32 %v1955, %v1955
    %v2020 = vmul.f32 %v1956, %v1956
    %v2021 = vmul.f32 %v1957, %v1957
    %v2022 = vmul.f32 %v1958, %v1958
    %v2023 = vmul.f32 %v1959, %v1959
    %v2024 = vmul.f32 %v1960, %v1960
    %2025 = vadd.xlane.f32.xlu0 %v1961
    %v2026 = vpop.xlane.xlu0 %2025
    %2027 = vadd.xlane.f32.xlu0 %v1962
    %v2028 = vpop.xlane.xlu0 %2027
    %2029 = vadd.xlane.f32.xlu0 %v1963
    %v2030 = vpop.xlane.xlu0 %2029
    %2031 = vadd.xlane.f32.xlu0 %v1964
    %v2032 = vpop.xlane.xlu0 %2031
    %2033 = vadd.xlane.f32.xlu0 %v1965
    %v2034 = vpop.xlane.xlu0 %2033
    %2035 = vadd.xlane.f32.xlu0 %v1966
    %v2036 = vpop.xlane.xlu0 %2035
    %2037 = vadd.xlane.f32.xlu0 %v1967
    %v2038 = vpop.xlane.xlu0 %2037
    %2039 = vadd.xlane.f32.xlu0 %v1968
    %v2040 = vpop.xlane.xlu0 %2039
    %2041 = vadd.xlane.f32.xlu0 %v1969
    %v2042 = vpop.xlane.xlu0 %2041
    %2043 = vadd.xlane.f32.xlu0 %v1970
    %v2044 = vpop.xlane.xlu0 %2043
    %2045 = vadd.xlane.f32.xlu0 %v1971
    %v2046 = vpop.xlane.xlu0 %2045
    %2047 = vadd.xlane.f32.xlu0 %v1972
    %v2048 = vpop.xlane.xlu0 %2047
    %2049 = vadd.xlane.f32.xlu0 %v1973
    %v2050 = vpop.xlane.xlu0 %2049
    %2051 = vadd.xlane.f32.xlu0 %v1974
    %v2052 = vpop.xlane.xlu0 %2051
    %2053 = vadd.xlane.f32.xlu0 %v1975
    %v2054 = vpop.xlane.xlu0 %2053
    %2055 = vadd.xlane.f32.xlu0 %v1976
    %v2056 = vpop.xlane.xlu0 %2055
    %2057 = vadd.xlane.f32.xlu0 %v1977
    %v2058 = vpop.xlane.xlu0 %2057
    %2059 = vadd.xlane.f32.xlu0 %v1978
    %v2060 = vpop.xlane.xlu0 %2059
    %2061 = vadd.xlane.f32.xlu0 %v1979
    %v2062 = vpop.xlane.xlu0 %2061
    %2063 = vadd.xlane.f32.xlu0 %v1980
    %v2064 = vpop.xlane.xlu0 %2063
    %2065 = vadd.xlane.f32.xlu0 %v1981
    %v2066 = vpop.xlane.xlu0 %2065
    %2067 = vadd.xlane.f32.xlu0 %v1982
    %v2068 = vpop.xlane.xlu0 %2067
    %2069 = vadd.xlane.f32.xlu0 %v1983
    %v2070 = vpop.xlane.xlu0 %2069
    %2071 = vadd.xlane.f32.xlu0 %v1984
    %v2072 = vpop.xlane.xlu0 %2071
    %2073 = vadd.xlane.f32.xlu0 %v1985
    %v2074 = vpop.xlane.xlu0 %2073
    %2075 = vadd.xlane.f32.xlu0 %v1986
    %v2076 = vpop.xlane.xlu0 %2075
    %2077 = vadd.xlane.f32.xlu0 %v1987
    %v2078 = vpop.xlane.xlu0 %2077
    %2079 = vadd.xlane.f32.xlu0 %v1988
    %v2080 = vpop.xlane.xlu0 %2079
    %2081 = vadd.xlane.f32.xlu0 %v1989
    %v2082 = vpop.xlane.xlu0 %2081
    %2083 = vadd.xlane.f32.xlu0 %v1990
    %v2084 = vpop.xlane.xlu0 %2083
    %2085 = vadd.xlane.f32.xlu0 %v1991
    %v2086 = vpop.xlane.xlu0 %2085
    %2087 = vadd.xlane.f32.xlu0 %v1992
    %v2088 = vpop.xlane.xlu0 %2087
    %2089 = vadd.xlane.f32.xlu0 %v1993
    %v2090 = vpop.xlane.xlu0 %2089
    %2091 = vadd.xlane.f32.xlu0 %v1994
    %v2092 = vpop.xlane.xlu0 %2091
    %2093 = vadd.xlane.f32.xlu0 %v1995
    %v2094 = vpop.xlane.xlu0 %2093
    %2095 = vadd.xlane.f32.xlu0 %v1996
    %v2096 = vpop.xlane.xlu0 %2095
    %2097 = vadd.xlane.f32.xlu0 %v1997
    %v2098 = vpop.xlane.xlu0 %2097
    %2099 = vadd.xlane.f32.xlu0 %v1998
    %v2100 = vpop.xlane.xlu0 %2099
    %2101 = vadd.xlane.f32.xlu0 %v1999
    %v2102 = vpop.xlane.xlu0 %2101
    %2103 = vadd.xlane.f32.xlu0 %v2000
    %v2104 = vpop.xlane.xlu0 %2103
    %2105 = vadd.xlane.f32.xlu0 %v2001
    %v2106 = vpop.xlane.xlu0 %2105
    %2107 = vadd.xlane.f32.xlu0 %v2002
    %v2108 = vpop.xlane.xlu0 %2107
    %2109 = vadd.xlane.f32.xlu0 %v2003
    %v2110 = vpop.xlane.xlu0 %2109
    %2111 = vadd.xlane.f32.xlu0 %v2004
    %v2112 = vpop.xlane.xlu0 %2111
    %2113 = vadd.xlane.f32.xlu0 %v2005
    %v2114 = vpop.xlane.xlu0 %2113
    %2115 = vadd.xlane.f32.xlu0 %v2006
    %v2116 = vpop.xlane.xlu0 %2115
    %2117 = vadd.xlane.f32.xlu0 %v2007
    %v2118 = vpop.xlane.xlu0 %2117
    %2119 = vadd.xlane.f32.xlu0 %v2008
    %v2120 = vpop.xlane.xlu0 %2119
    %2121 = vadd.xlane.f32.xlu0 %v2009
    %v2122 = vpop.xlane.xlu0 %2121
    %2123 = vadd.xlane.f32.xlu0 %v2010
    %v2124 = vpop.xlane.xlu0 %2123
    %2125 = vadd.xlane.f32.xlu0 %v2011
    %v2126 = vpop.xlane.xlu0 %2125
    %2127 = vadd.xlane.f32.xlu0 %v2012
    %v2128 = vpop.xlane.xlu0 %2127
    %2129 = vadd.xlane.f32.xlu0 %v2013
    %v2130 = vpop.xlane.xlu0 %2129
    %2131 = vadd.xlane.f32.xlu0 %v2014
    %v2132 = vpop.xlane.xlu0 %2131
    %2133 = vadd.xlane.f32.xlu0 %v2015
    %v2134 = vpop.xlane.xlu0 %2133
    %2135 = vadd.xlane.f32.xlu0 %v2016
    %v2136 = vpop.xlane.xlu0 %2135
    %2137 = vadd.xlane.f32.xlu0 %v2017
    %v2138 = vpop.xlane.xlu0 %2137
    %2139 = vadd.xlane.f32.xlu0 %v2018
    %v2140 = vpop.xlane.xlu0 %2139
    %2141 = vadd.xlane.f32.xlu0 %v2019
    %v2142 = vpop.xlane.xlu0 %2141
    %2143 = vadd.xlane.f32.xlu0 %v2020
    %v2144 = vpop.xlane.xlu0 %2143
    %2145 = vadd.xlane.f32.xlu0 %v2021
    %v2146 = vpop.xlane.xlu0 %2145
    %2147 = vadd.xlane.f32.xlu0 %v2022
    %v2148 = vpop.xlane.xlu0 %2147
    %2149 = vadd.xlane.f32.xlu0 %v2023
    %v2150 = vpop.xlane.xlu0 %2149
    %2151 = vadd.xlane.f32.xlu0 %v2024
    %v2152 = vpop.xlane.xlu0 %2151
    %v2153 = vmul.f32 %v2026, %v358
    %v2154 = vmul.f32 %v2028, %v358
    %v2155 = vmul.f32 %v2030, %v358
    %v2156 = vmul.f32 %v2032, %v358
    %v2157 = vmul.f32 %v2034, %v358
    %v2158 = vmul.f32 %v2036, %v358
    %v2159 = vmul.f32 %v2038, %v358
    %v2160 = vmul.f32 %v2040, %v358
    %v2161 = vmul.f32 %v2042, %v358
    %v2162 = vmul.f32 %v2044, %v358
    %v2163 = vmul.f32 %v2046, %v358
    %v2164 = vmul.f32 %v2048, %v358
    %v2165 = vmul.f32 %v2050, %v358
    %v2166 = vmul.f32 %v2052, %v358
    %v2167 = vmul.f32 %v2054, %v358
    %v2168 = vmul.f32 %v2056, %v358
    %v2169 = vmul.f32 %v2058, %v358
    %v2170 = vmul.f32 %v2060, %v358
    %v2171 = vmul.f32 %v2062, %v358
    %v2172 = vmul.f32 %v2064, %v358
    %v2173 = vmul.f32 %v2066, %v358
    %v2174 = vmul.f32 %v2068, %v358
    %v2175 = vmul.f32 %v2070, %v358
    %v2176 = vmul.f32 %v2072, %v358
    %v2177 = vmul.f32 %v2074, %v358
    %v2178 = vmul.f32 %v2076, %v358
    %v2179 = vmul.f32 %v2078, %v358
    %v2180 = vmul.f32 %v2080, %v358
    %v2181 = vmul.f32 %v2082, %v358
    %v2182 = vmul.f32 %v2084, %v358
    %v2183 = vmul.f32 %v2086, %v358
    %v2184 = vmul.f32 %v2088, %v358
    %v2185 = vmul.f32 %v2090, %v358
    %v2186 = vmul.f32 %v2092, %v358
    %v2187 = vmul.f32 %v2094, %v358
    %v2188 = vmul.f32 %v2096, %v358
    %v2189 = vmul.f32 %v2098, %v358
    %v2190 = vmul.f32 %v2100, %v358
    %v2191 = vmul.f32 %v2102, %v358
    %v2192 = vmul.f32 %v2104, %v358
    %v2193 = vmul.f32 %v2106, %v358
    %v2194 = vmul.f32 %v2108, %v358
    %v2195 = vmul.f32 %v2110, %v358
    %v2196 = vmul.f32 %v2112, %v358
    %v2197 = vmul.f32 %v2114, %v358
    %v2198 = vmul.f32 %v2116, %v358
    %v2199 = vmul.f32 %v2118, %v358
    %v2200 = vmul.f32 %v2120, %v358
    %v2201 = vmul.f32 %v2122, %v358
    %v2202 = vmul.f32 %v2124, %v358
    %v2203 = vmul.f32 %v2126, %v358
    %v2204 = vmul.f32 %v2128, %v358
    %v2205 = vmul.f32 %v2130, %v358
    %v2206 = vmul.f32 %v2132, %v358
    %v2207 = vmul.f32 %v2134, %v358
    %v2208 = vmul.f32 %v2136, %v358
    %v2209 = vmul.f32 %v2138, %v358
    %v2210 = vmul.f32 %v2140, %v358
    %v2211 = vmul.f32 %v2142, %v358
    %v2212 = vmul.f32 %v2144, %v358
    %v2213 = vmul.f32 %v2146, %v358
    %v2214 = vmul.f32 %v2148, %v358
    %v2215 = vmul.f32 %v2150, %v358
    %v2216 = vmul.f32 %v2152, %v358
    %v2217 = vadd.f32 %v2153, 1e-06
    %v2218 = vadd.f32 %v2154, 1e-06
    %v2219 = vadd.f32 %v2155, 1e-06
    %v2220 = vadd.f32 %v2156, 1e-06
    %v2221 = vadd.f32 %v2157, 1e-06
    %v2222 = vadd.f32 %v2158, 1e-06
    %v2223 = vadd.f32 %v2159, 1e-06
    %v2224 = vadd.f32 %v2160, 1e-06
    %v2225 = vadd.f32 %v2161, 1e-06
    %v2226 = vadd.f32 %v2162, 1e-06
    %v2227 = vadd.f32 %v2163, 1e-06
    %v2228 = vadd.f32 %v2164, 1e-06
    %v2229 = vadd.f32 %v2165, 1e-06
    %v2230 = vadd.f32 %v2166, 1e-06
    %v2231 = vadd.f32 %v2167, 1e-06
    %v2232 = vadd.f32 %v2168, 1e-06
    %v2233 = vadd.f32 %v2169, 1e-06
    %v2234 = vadd.f32 %v2170, 1e-06
    %v2235 = vadd.f32 %v2171, 1e-06
    %v2236 = vadd.f32 %v2172, 1e-06
    %v2237 = vadd.f32 %v2173, 1e-06
    %v2238 = vadd.f32 %v2174, 1e-06
    %v2239 = vadd.f32 %v2175, 1e-06
    %v2240 = vadd.f32 %v2176, 1e-06
    %v2241 = vadd.f32 %v2177, 1e-06
    %v2242 = vadd.f32 %v2178, 1e-06
    %v2243 = vadd.f32 %v2179, 1e-06
    %v2244 = vadd.f32 %v2180, 1e-06
    %v2245 = vadd.f32 %v2181, 1e-06
    %v2246 = vadd.f32 %v2182, 1e-06
    %v2247 = vadd.f32 %v2183, 1e-06
    %v2248 = vadd.f32 %v2184, 1e-06
    %v2249 = vadd.f32 %v2185, 1e-06
    %v2250 = vadd.f32 %v2186, 1e-06
    %v2251 = vadd.f32 %v2187, 1e-06
    %v2252 = vadd.f32 %v2188, 1e-06
    %v2253 = vadd.f32 %v2189, 1e-06
    %v2254 = vadd.f32 %v2190, 1e-06
    %v2255 = vadd.f32 %v2191, 1e-06
    %v2256 = vadd.f32 %v2192, 1e-06
    %v2257 = vadd.f32 %v2193, 1e-06
    %v2258 = vadd.f32 %v2194, 1e-06
    %v2259 = vadd.f32 %v2195, 1e-06
    %v2260 = vadd.f32 %v2196, 1e-06
    %v2261 = vadd.f32 %v2197, 1e-06
    %v2262 = vadd.f32 %v2198, 1e-06
    %v2263 = vadd.f32 %v2199, 1e-06
    %v2264 = vadd.f32 %v2200, 1e-06
    %v2265 = vadd.f32 %v2201, 1e-06
    %v2266 = vadd.f32 %v2202, 1e-06
    %v2267 = vadd.f32 %v2203, 1e-06
    %v2268 = vadd.f32 %v2204, 1e-06
    %v2269 = vadd.f32 %v2205, 1e-06
    %v2270 = vadd.f32 %v2206, 1e-06
    %v2271 = vadd.f32 %v2207, 1e-06
    %v2272 = vadd.f32 %v2208, 1e-06
    %v2273 = vadd.f32 %v2209, 1e-06
    %v2274 = vadd.f32 %v2210, 1e-06
    %v2275 = vadd.f32 %v2211, 1e-06
    %v2276 = vadd.f32 %v2212, 1e-06
    %v2277 = vadd.f32 %v2213, 1e-06
    %v2278 = vadd.f32 %v2214, 1e-06
    %v2279 = vadd.f32 %v2215, 1e-06
    %v2280 = vadd.f32 %v2216, 1e-06
    %v2281 = vrsqrt.pop %v2217
    %v2282 = vmul.f32 %v2281, %v2217
    %v2283 = vmul.f32 %v2282, %v2281
    %v2284 = vmul.f32 0.5, %v2283
    %v2285 = vsub.f32 1.5, %v2284
    %v2286 = vmul.f32 %v2281, %v2285
    %vm2287 = vweird.f32 %v2217
    %vm2288 = vweird.f32 %v2281
    %vm2289 = vmor %vm2287, %vm2288
    %v2290 = vsel %vm2289, %v2281, %v2286
    %v2291 = vrsqrt.pop %v2218
    %v2292 = vmul.f32 %v2291, %v2218
    %v2293 = vmul.f32 %v2292, %v2291
    %v2294 = vmul.f32 0.5, %v2293
    %v2295 = vsub.f32 1.5, %v2294
    %v2296 = vmul.f32 %v2291, %v2295
    %vm2297 = vweird.f32 %v2218
    %vm2298 = vweird.f32 %v2291
    %vm2299 = vmor %vm2297, %vm2298
    %v2300 = vsel %vm2299, %v2291, %v2296
    %v2301 = vrsqrt.pop %v2219
    %v2302 = vmul.f32 %v2301, %v2219
    %v2303 = vmul.f32 %v2302, %v2301
    %v2304 = vmul.f32 0.5, %v2303
    %v2305 = vsub.f32 1.5, %v2304
    %v2306 = vmul.f32 %v2301, %v2305
    %vm2307 = vweird.f32 %v2219
    %vm2308 = vweird.f32 %v2301
    %vm2309 = vmor %vm2307, %vm2308
    %v2310 = vsel %vm2309, %v2301, %v2306
    %v2311 = vrsqrt.pop %v2220
    %v2312 = vmul.f32 %v2311, %v2220
    %v2313 = vmul.f32 %v2312, %v2311
    %v2314 = vmul.f32 0.5, %v2313
    %v2315 = vsub.f32 1.5, %v2314
    %v2316 = vmul.f32 %v2311, %v2315
    %vm2317 = vweird.f32 %v2220
    %vm2318 = vweird.f32 %v2311
    %vm2319 = vmor %vm2317, %vm2318
    %v2320 = vsel %vm2319, %v2311, %v2316
    %v2321 = vrsqrt.pop %v2221
    %v2322 = vmul.f32 %v2321, %v2221
    %v2323 = vmul.f32 %v2322, %v2321
    %v2324 = vmul.f32 0.5, %v2323
    %v2325 = vsub.f32 1.5, %v2324
    %v2326 = vmul.f32 %v2321, %v2325
    %vm2327 = vweird.f32 %v2221
    %vm2328 = vweird.f32 %v2321
    %vm2329 = vmor %vm2327, %vm2328
    %v2330 = vsel %vm2329, %v2321, %v2326
    %v2331 = vrsqrt.pop %v2222
    %v2332 = vmul.f32 %v2331, %v2222
    %v2333 = vmul.f32 %v2332, %v2331
    %v2334 = vmul.f32 0.5, %v2333
    %v2335 = vsub.f32 1.5, %v2334
    %v2336 = vmul.f32 %v2331, %v2335
    %vm2337 = vweird.f32 %v2222
    %vm2338 = vweird.f32 %v2331
    %vm2339 = vmor %vm2337, %vm2338
    %v2340 = vsel %vm2339, %v2331, %v2336
    %v2341 = vrsqrt.pop %v2223
    %v2342 = vmul.f32 %v2341, %v2223
    %v2343 = vmul.f32 %v2342, %v2341
    %v2344 = vmul.f32 0.5, %v2343
    %v2345 = vsub.f32 1.5, %v2344
    %v2346 = vmul.f32 %v2341, %v2345
    %vm2347 = vweird.f32 %v2223
    %vm2348 = vweird.f32 %v2341
    %vm2349 = vmor %vm2347, %vm2348
    %v2350 = vsel %vm2349, %v2341, %v2346
    %v2351 = vrsqrt.pop %v2224
    %v2352 = vmul.f32 %v2351, %v2224
    %v2353 = vmul.f32 %v2352, %v2351
    %v2354 = vmul.f32 0.5, %v2353
    %v2355 = vsub.f32 1.5, %v2354
    %v2356 = vmul.f32 %v2351, %v2355
    %vm2357 = vweird.f32 %v2224
    %vm2358 = vweird.f32 %v2351
    %vm2359 = vmor %vm2357, %vm2358
    %v2360 = vsel %vm2359, %v2351, %v2356
    %v2361 = vrsqrt.pop %v2225
    %v2362 = vmul.f32 %v2361, %v2225
    %v2363 = vmul.f32 %v2362, %v2361
    %v2364 = vmul.f32 0.5, %v2363
    %v2365 = vsub.f32 1.5, %v2364
    %v2366 = vmul.f32 %v2361, %v2365
    %vm2367 = vweird.f32 %v2225
    %vm2368 = vweird.f32 %v2361
    %vm2369 = vmor %vm2367, %vm2368
    %v2370 = vsel %vm2369, %v2361, %v2366
    %v2371 = vrsqrt.pop %v2226
    %v2372 = vmul.f32 %v2371, %v2226
    %v2373 = vmul.f32 %v2372, %v2371
    %v2374 = vmul.f32 0.5, %v2373
    %v2375 = vsub.f32 1.5, %v2374
    %v2376 = vmul.f32 %v2371, %v2375
    %vm2377 = vweird.f32 %v2226
    %vm2378 = vweird.f32 %v2371
    %vm2379 = vmor %vm2377, %vm2378
    %v2380 = vsel %vm2379, %v2371, %v2376
    %v2381 = vrsqrt.pop %v2227
    %v2382 = vmul.f32 %v2381, %v2227
    %v2383 = vmul.f32 %v2382, %v2381
    %v2384 = vmul.f32 0.5, %v2383
    %v2385 = vsub.f32 1.5, %v2384
    %v2386 = vmul.f32 %v2381, %v2385
    %vm2387 = vweird.f32 %v2227
    %vm2388 = vweird.f32 %v2381
    %vm2389 = vmor %vm2387, %vm2388
    %v2390 = vsel %vm2389, %v2381, %v2386
    %v2391 = vrsqrt.pop %v2228
    %v2392 = vmul.f32 %v2391, %v2228
    %v2393 = vmul.f32 %v2392, %v2391
    %v2394 = vmul.f32 0.5, %v2393
    %v2395 = vsub.f32 1.5, %v2394
    %v2396 = vmul.f32 %v2391, %v2395
    %vm2397 = vweird.f32 %v2228
    %vm2398 = vweird.f32 %v2391
    %vm2399 = vmor %vm2397, %vm2398
    %v2400 = vsel %vm2399, %v2391, %v2396
    %v2401 = vrsqrt.pop %v2229
    %v2402 = vmul.f32 %v2401, %v2229
    %v2403 = vmul.f32 %v2402, %v2401
    %v2404 = vmul.f32 0.5, %v2403
    %v2405 = vsub.f32 1.5, %v2404
    %v2406 = vmul.f32 %v2401, %v2405
    %vm2407 = vweird.f32 %v2229
    %vm2408 = vweird.f32 %v2401
    %vm2409 = vmor %vm2407, %vm2408
    %v2410 = vsel %vm2409, %v2401, %v2406
    %v2411 = vrsqrt.pop %v2230
    %v2412 = vmul.f32 %v2411, %v2230
    %v2413 = vmul.f32 %v2412, %v2411
    %v2414 = vmul.f32 0.5, %v2413
    %v2415 = vsub.f32 1.5, %v2414
    %v2416 = vmul.f32 %v2411, %v2415
    %vm2417 = vweird.f32 %v2230
    %vm2418 = vweird.f32 %v2411
    %vm2419 = vmor %vm2417, %vm2418
    %v2420 = vsel %vm2419, %v2411, %v2416
    %v2421 = vrsqrt.pop %v2231
    %v2422 = vmul.f32 %v2421, %v2231
    %v2423 = vmul.f32 %v2422, %v2421
    %v2424 = vmul.f32 0.5, %v2423
    %v2425 = vsub.f32 1.5, %v2424
    %v2426 = vmul.f32 %v2421, %v2425
    %vm2427 = vweird.f32 %v2231
    %vm2428 = vweird.f32 %v2421
    %vm2429 = vmor %vm2427, %vm2428
    %v2430 = vsel %vm2429, %v2421, %v2426
    %v2431 = vrsqrt.pop %v2232
    %v2432 = vmul.f32 %v2431, %v2232
    %v2433 = vmul.f32 %v2432, %v2431
    %v2434 = vmul.f32 0.5, %v2433
    %v2435 = vsub.f32 1.5, %v2434
    %v2436 = vmul.f32 %v2431, %v2435
    %vm2437 = vweird.f32 %v2232
    %vm2438 = vweird.f32 %v2431
    %vm2439 = vmor %vm2437, %vm2438
    %v2440 = vsel %vm2439, %v2431, %v2436
    %v2441 = vrsqrt.pop %v2233
    %v2442 = vmul.f32 %v2441, %v2233
    %v2443 = vmul.f32 %v2442, %v2441
    %v2444 = vmul.f32 0.5, %v2443
    %v2445 = vsub.f32 1.5, %v2444
    %v2446 = vmul.f32 %v2441, %v2445
    %vm2447 = vweird.f32 %v2233
    %vm2448 = vweird.f32 %v2441
    %vm2449 = vmor %vm2447, %vm2448
    %v2450 = vsel %vm2449, %v2441, %v2446
    %v2451 = vrsqrt.pop %v2234
    %v2452 = vmul.f32 %v2451, %v2234
    %v2453 = vmul.f32 %v2452, %v2451
    %v2454 = vmul.f32 0.5, %v2453
    %v2455 = vsub.f32 1.5, %v2454
    %v2456 = vmul.f32 %v2451, %v2455
    %vm2457 = vweird.f32 %v2234
    %vm2458 = vweird.f32 %v2451
    %vm2459 = vmor %vm2457, %vm2458
    %v2460 = vsel %vm2459, %v2451, %v2456
    %v2461 = vrsqrt.pop %v2235
    %v2462 = vmul.f32 %v2461, %v2235
    %v2463 = vmul.f32 %v2462, %v2461
    %v2464 = vmul.f32 0.5, %v2463
    %v2465 = vsub.f32 1.5, %v2464
    %v2466 = vmul.f32 %v2461, %v2465
    %vm2467 = vweird.f32 %v2235
    %vm2468 = vweird.f32 %v2461
    %vm2469 = vmor %vm2467, %vm2468
    %v2470 = vsel %vm2469, %v2461, %v2466
    %v2471 = vrsqrt.pop %v2236
    %v2472 = vmul.f32 %v2471, %v2236
    %v2473 = vmul.f32 %v2472, %v2471
    %v2474 = vmul.f32 0.5, %v2473
    %v2475 = vsub.f32 1.5, %v2474
    %v2476 = vmul.f32 %v2471, %v2475
    %vm2477 = vweird.f32 %v2236
    %vm2478 = vweird.f32 %v2471
    %vm2479 = vmor %vm2477, %vm2478
    %v2480 = vsel %vm2479, %v2471, %v2476
    %v2481 = vrsqrt.pop %v2237
    %v2482 = vmul.f32 %v2481, %v2237
    %v2483 = vmul.f32 %v2482, %v2481
    %v2484 = vmul.f32 0.5, %v2483
    %v2485 = vsub.f32 1.5, %v2484
    %v2486 = vmul.f32 %v2481, %v2485
    %vm2487 = vweird.f32 %v2237
    %vm2488 = vweird.f32 %v2481
    %vm2489 = vmor %vm2487, %vm2488
    %v2490 = vsel %vm2489, %v2481, %v2486
    %v2491 = vrsqrt.pop %v2238
    %v2492 = vmul.f32 %v2491, %v2238
    %v2493 = vmul.f32 %v2492, %v2491
    %v2494 = vmul.f32 0.5, %v2493
    %v2495 = vsub.f32 1.5, %v2494
    %v2496 = vmul.f32 %v2491, %v2495
    %vm2497 = vweird.f32 %v2238
    %vm2498 = vweird.f32 %v2491
    %vm2499 = vmor %vm2497, %vm2498
    %v2500 = vsel %vm2499, %v2491, %v2496
    %v2501 = vrsqrt.pop %v2239
    %v2502 = vmul.f32 %v2501, %v2239
    %v2503 = vmul.f32 %v2502, %v2501
    %v2504 = vmul.f32 0.5, %v2503
    %v2505 = vsub.f32 1.5, %v2504
    %v2506 = vmul.f32 %v2501, %v2505
    %vm2507 = vweird.f32 %v2239
    %vm2508 = vweird.f32 %v2501
    %vm2509 = vmor %vm2507, %vm2508
    %v2510 = vsel %vm2509, %v2501, %v2506
    %v2511 = vrsqrt.pop %v2240
    %v2512 = vmul.f32 %v2511, %v2240
    %v2513 = vmul.f32 %v2512, %v2511
    %v2514 = vmul.f32 0.5, %v2513
    %v2515 = vsub.f32 1.5, %v2514
    %v2516 = vmul.f32 %v2511, %v2515
    %vm2517 = vweird.f32 %v2240
    %vm2518 = vweird.f32 %v2511
    %vm2519 = vmor %vm2517, %vm2518
    %v2520 = vsel %vm2519, %v2511, %v2516
    %v2521 = vrsqrt.pop %v2241
    %v2522 = vmul.f32 %v2521, %v2241
    %v2523 = vmul.f32 %v2522, %v2521
    %v2524 = vmul.f32 0.5, %v2523
    %v2525 = vsub.f32 1.5, %v2524
    %v2526 = vmul.f32 %v2521, %v2525
    %vm2527 = vweird.f32 %v2241
    %vm2528 = vweird.f32 %v2521
    %vm2529 = vmor %vm2527, %vm2528
    %v2530 = vsel %vm2529, %v2521, %v2526
    %v2531 = vrsqrt.pop %v2242
    %v2532 = vmul.f32 %v2531, %v2242
    %v2533 = vmul.f32 %v2532, %v2531
    %v2534 = vmul.f32 0.5, %v2533
    %v2535 = vsub.f32 1.5, %v2534
    %v2536 = vmul.f32 %v2531, %v2535
    %vm2537 = vweird.f32 %v2242
    %vm2538 = vweird.f32 %v2531
    %vm2539 = vmor %vm2537, %vm2538
    %v2540 = vsel %vm2539, %v2531, %v2536
    %v2541 = vrsqrt.pop %v2243
    %v2542 = vmul.f32 %v2541, %v2243
    %v2543 = vmul.f32 %v2542, %v2541
    %v2544 = vmul.f32 0.5, %v2543
    %v2545 = vsub.f32 1.5, %v2544
    %v2546 = vmul.f32 %v2541, %v2545
    %vm2547 = vweird.f32 %v2243
    %vm2548 = vweird.f32 %v2541
    %vm2549 = vmor %vm2547, %vm2548
    %v2550 = vsel %vm2549, %v2541, %v2546
    %v2551 = vrsqrt.pop %v2244
    %v2552 = vmul.f32 %v2551, %v2244
    %v2553 = vmul.f32 %v2552, %v2551
    %v2554 = vmul.f32 0.5, %v2553
    %v2555 = vsub.f32 1.5, %v2554
    %v2556 = vmul.f32 %v2551, %v2555
    %vm2557 = vweird.f32 %v2244
    %vm2558 = vweird.f32 %v2551
    %vm2559 = vmor %vm2557, %vm2558
    %v2560 = vsel %vm2559, %v2551, %v2556
    %v2561 = vrsqrt.pop %v2245
    %v2562 = vmul.f32 %v2561, %v2245
    %v2563 = vmul.f32 %v2562, %v2561
    %v2564 = vmul.f32 0.5, %v2563
    %v2565 = vsub.f32 1.5, %v2564
    %v2566 = vmul.f32 %v2561, %v2565
    %vm2567 = vweird.f32 %v2245
    %vm2568 = vweird.f32 %v2561
    %vm2569 = vmor %vm2567, %vm2568
    %v2570 = vsel %vm2569, %v2561, %v2566
    %v2571 = vrsqrt.pop %v2246
    %v2572 = vmul.f32 %v2571, %v2246
    %v2573 = vmul.f32 %v2572, %v2571
    %v2574 = vmul.f32 0.5, %v2573
    %v2575 = vsub.f32 1.5, %v2574
    %v2576 = vmul.f32 %v2571, %v2575
    %vm2577 = vweird.f32 %v2246
    %vm2578 = vweird.f32 %v2571
    %vm2579 = vmor %vm2577, %vm2578
    %v2580 = vsel %vm2579, %v2571, %v2576
    %v2581 = vrsqrt.pop %v2247
    %v2582 = vmul.f32 %v2581, %v2247
    %v2583 = vmul.f32 %v2582, %v2581
    %v2584 = vmul.f32 0.5, %v2583
    %v2585 = vsub.f32 1.5, %v2584
    %v2586 = vmul.f32 %v2581, %v2585
    %vm2587 = vweird.f32 %v2247
    %vm2588 = vweird.f32 %v2581
    %vm2589 = vmor %vm2587, %vm2588
    %v2590 = vsel %vm2589, %v2581, %v2586
    %v2591 = vrsqrt.pop %v2248
    %v2592 = vmul.f32 %v2591, %v2248
    %v2593 = vmul.f32 %v2592, %v2591
    %v2594 = vmul.f32 0.5, %v2593
    %v2595 = vsub.f32 1.5, %v2594
    %v2596 = vmul.f32 %v2591, %v2595
    %vm2597 = vweird.f32 %v2248
    %vm2598 = vweird.f32 %v2591
    %vm2599 = vmor %vm2597, %vm2598
    %v2600 = vsel %vm2599, %v2591, %v2596
    %v2601 = vrsqrt.pop %v2249
    %v2602 = vmul.f32 %v2601, %v2249
    %v2603 = vmul.f32 %v2602, %v2601
    %v2604 = vmul.f32 0.5, %v2603
    %v2605 = vsub.f32 1.5, %v2604
    %v2606 = vmul.f32 %v2601, %v2605
    %vm2607 = vweird.f32 %v2249
    %vm2608 = vweird.f32 %v2601
    %vm2609 = vmor %vm2607, %vm2608
    %v2610 = vsel %vm2609, %v2601, %v2606
    %v2611 = vrsqrt.pop %v2250
    %v2612 = vmul.f32 %v2611, %v2250
    %v2613 = vmul.f32 %v2612, %v2611
    %v2614 = vmul.f32 0.5, %v2613
    %v2615 = vsub.f32 1.5, %v2614
    %v2616 = vmul.f32 %v2611, %v2615
    %vm2617 = vweird.f32 %v2250
    %vm2618 = vweird.f32 %v2611
    %vm2619 = vmor %vm2617, %vm2618
    %v2620 = vsel %vm2619, %v2611, %v2616
    %v2621 = vrsqrt.pop %v2251
    %v2622 = vmul.f32 %v2621, %v2251
    %v2623 = vmul.f32 %v2622, %v2621
    %v2624 = vmul.f32 0.5, %v2623
    %v2625 = vsub.f32 1.5, %v2624
    %v2626 = vmul.f32 %v2621, %v2625
    %vm2627 = vweird.f32 %v2251
    %vm2628 = vweird.f32 %v2621
    %vm2629 = vmor %vm2627, %vm2628
    %v2630 = vsel %vm2629, %v2621, %v2626
    %v2631 = vrsqrt.pop %v2252
    %v2632 = vmul.f32 %v2631, %v2252
    %v2633 = vmul.f32 %v2632, %v2631
    %v2634 = vmul.f32 0.5, %v2633
    %v2635 = vsub.f32 1.5, %v2634
    %v2636 = vmul.f32 %v2631, %v2635
    %vm2637 = vweird.f32 %v2252
    %vm2638 = vweird.f32 %v2631
    %vm2639 = vmor %vm2637, %vm2638
    %v2640 = vsel %vm2639, %v2631, %v2636
    %v2641 = vrsqrt.pop %v2253
    %v2642 = vmul.f32 %v2641, %v2253
    %v2643 = vmul.f32 %v2642, %v2641
    %v2644 = vmul.f32 0.5, %v2643
    %v2645 = vsub.f32 1.5, %v2644
    %v2646 = vmul.f32 %v2641, %v2645
    %vm2647 = vweird.f32 %v2253
    %vm2648 = vweird.f32 %v2641
    %vm2649 = vmor %vm2647, %vm2648
    %v2650 = vsel %vm2649, %v2641, %v2646
    %v2651 = vrsqrt.pop %v2254
    %v2652 = vmul.f32 %v2651, %v2254
    %v2653 = vmul.f32 %v2652, %v2651
    %v2654 = vmul.f32 0.5, %v2653
    %v2655 = vsub.f32 1.5, %v2654
    %v2656 = vmul.f32 %v2651, %v2655
    %vm2657 = vweird.f32 %v2254
    %vm2658 = vweird.f32 %v2651
    %vm2659 = vmor %vm2657, %vm2658
    %v2660 = vsel %vm2659, %v2651, %v2656
    %v2661 = vrsqrt.pop %v2255
    %v2662 = vmul.f32 %v2661, %v2255
    %v2663 = vmul.f32 %v2662, %v2661
    %v2664 = vmul.f32 0.5, %v2663
    %v2665 = vsub.f32 1.5, %v2664
    %v2666 = vmul.f32 %v2661, %v2665
    %vm2667 = vweird.f32 %v2255
    %vm2668 = vweird.f32 %v2661
    %vm2669 = vmor %vm2667, %vm2668
    %v2670 = vsel %vm2669, %v2661, %v2666
    %v2671 = vrsqrt.pop %v2256
    %v2672 = vmul.f32 %v2671, %v2256
    %v2673 = vmul.f32 %v2672, %v2671
    %v2674 = vmul.f32 0.5, %v2673
    %v2675 = vsub.f32 1.5, %v2674
    %v2676 = vmul.f32 %v2671, %v2675
    %vm2677 = vweird.f32 %v2256
    %vm2678 = vweird.f32 %v2671
    %vm2679 = vmor %vm2677, %vm2678
    %v2680 = vsel %vm2679, %v2671, %v2676
    %v2681 = vrsqrt.pop %v2257
    %v2682 = vmul.f32 %v2681, %v2257
    %v2683 = vmul.f32 %v2682, %v2681
    %v2684 = vmul.f32 0.5, %v2683
    %v2685 = vsub.f32 1.5, %v2684
    %v2686 = vmul.f32 %v2681, %v2685
    %vm2687 = vweird.f32 %v2257
    %vm2688 = vweird.f32 %v2681
    %vm2689 = vmor %vm2687, %vm2688
    %v2690 = vsel %vm2689, %v2681, %v2686
    %v2691 = vrsqrt.pop %v2258
    %v2692 = vmul.f32 %v2691, %v2258
    %v2693 = vmul.f32 %v2692, %v2691
    %v2694 = vmul.f32 0.5, %v2693
    %v2695 = vsub.f32 1.5, %v2694
    %v2696 = vmul.f32 %v2691, %v2695
    %vm2697 = vweird.f32 %v2258
    %vm2698 = vweird.f32 %v2691
    %vm2699 = vmor %vm2697, %vm2698
    %v2700 = vsel %vm2699, %v2691, %v2696
    %v2701 = vrsqrt.pop %v2259
    %v2702 = vmul.f32 %v2701, %v2259
    %v2703 = vmul.f32 %v2702, %v2701
    %v2704 = vmul.f32 0.5, %v2703
    %v2705 = vsub.f32 1.5, %v2704
    %v2706 = vmul.f32 %v2701, %v2705
    %vm2707 = vweird.f32 %v2259
    %vm2708 = vweird.f32 %v2701
    %vm2709 = vmor %vm2707, %vm2708
    %v2710 = vsel %vm2709, %v2701, %v2706
    %v2711 = vrsqrt.pop %v2260
    %v2712 = vmul.f32 %v2711, %v2260
    %v2713 = vmul.f32 %v2712, %v2711
    %v2714 = vmul.f32 0.5, %v2713
    %v2715 = vsub.f32 1.5, %v2714
    %v2716 = vmul.f32 %v2711, %v2715
    %vm2717 = vweird.f32 %v2260
    %vm2718 = vweird.f32 %v2711
    %vm2719 = vmor %vm2717, %vm2718
    %v2720 = vsel %vm2719, %v2711, %v2716
    %v2721 = vrsqrt.pop %v2261
    %v2722 = vmul.f32 %v2721, %v2261
    %v2723 = vmul.f32 %v2722, %v2721
    %v2724 = vmul.f32 0.5, %v2723
    %v2725 = vsub.f32 1.5, %v2724
    %v2726 = vmul.f32 %v2721, %v2725
    %vm2727 = vweird.f32 %v2261
    %vm2728 = vweird.f32 %v2721
    %vm2729 = vmor %vm2727, %vm2728
    %v2730 = vsel %vm2729, %v2721, %v2726
    %v2731 = vrsqrt.pop %v2262
    %v2732 = vmul.f32 %v2731, %v2262
    %v2733 = vmul.f32 %v2732, %v2731
    %v2734 = vmul.f32 0.5, %v2733
    %v2735 = vsub.f32 1.5, %v2734
    %v2736 = vmul.f32 %v2731, %v2735
    %vm2737 = vweird.f32 %v2262
    %vm2738 = vweird.f32 %v2731
    %vm2739 = vmor %vm2737, %vm2738
    %v2740 = vsel %vm2739, %v2731, %v2736
    %v2741 = vrsqrt.pop %v2263
    %v2742 = vmul.f32 %v2741, %v2263
    %v2743 = vmul.f32 %v2742, %v2741
    %v2744 = vmul.f32 0.5, %v2743
    %v2745 = vsub.f32 1.5, %v2744
    %v2746 = vmul.f32 %v2741, %v2745
    %vm2747 = vweird.f32 %v2263
    %vm2748 = vweird.f32 %v2741
    %vm2749 = vmor %vm2747, %vm2748
    %v2750 = vsel %vm2749, %v2741, %v2746
    %v2751 = vrsqrt.pop %v2264
    %v2752 = vmul.f32 %v2751, %v2264
    %v2753 = vmul.f32 %v2752, %v2751
    %v2754 = vmul.f32 0.5, %v2753
    %v2755 = vsub.f32 1.5, %v2754
    %v2756 = vmul.f32 %v2751, %v2755
    %vm2757 = vweird.f32 %v2264
    %vm2758 = vweird.f32 %v2751
    %vm2759 = vmor %vm2757, %vm2758
    %v2760 = vsel %vm2759, %v2751, %v2756
    %v2761 = vrsqrt.pop %v2265
    %v2762 = vmul.f32 %v2761, %v2265
    %v2763 = vmul.f32 %v2762, %v2761
    %v2764 = vmul.f32 0.5, %v2763
    %v2765 = vsub.f32 1.5, %v2764
    %v2766 = vmul.f32 %v2761, %v2765
    %vm2767 = vweird.f32 %v2265
    %vm2768 = vweird.f32 %v2761
    %vm2769 = vmor %vm2767, %vm2768
    %v2770 = vsel %vm2769, %v2761, %v2766
    %v2771 = vrsqrt.pop %v2266
    %v2772 = vmul.f32 %v2771, %v2266
    %v2773 = vmul.f32 %v2772, %v2771
    %v2774 = vmul.f32 0.5, %v2773
    %v2775 = vsub.f32 1.5, %v2774
    %v2776 = vmul.f32 %v2771, %v2775
    %vm2777 = vweird.f32 %v2266
    %vm2778 = vweird.f32 %v2771
    %vm2779 = vmor %vm2777, %vm2778
    %v2780 = vsel %vm2779, %v2771, %v2776
    %v2781 = vrsqrt.pop %v2267
    %v2782 = vmul.f32 %v2781, %v2267
    %v2783 = vmul.f32 %v2782, %v2781
    %v2784 = vmul.f32 0.5, %v2783
    %v2785 = vsub.f32 1.5, %v2784
    %v2786 = vmul.f32 %v2781, %v2785
    %vm2787 = vweird.f32 %v2267
    %vm2788 = vweird.f32 %v2781
    %vm2789 = vmor %vm2787, %vm2788
    %v2790 = vsel %vm2789, %v2781, %v2786
    %v2791 = vrsqrt.pop %v2268
    %v2792 = vmul.f32 %v2791, %v2268
    %v2793 = vmul.f32 %v2792, %v2791
    %v2794 = vmul.f32 0.5, %v2793
    %v2795 = vsub.f32 1.5, %v2794
    %v2796 = vmul.f32 %v2791, %v2795
    %vm2797 = vweird.f32 %v2268
    %vm2798 = vweird.f32 %v2791
    %vm2799 = vmor %vm2797, %vm2798
    %v2800 = vsel %vm2799, %v2791, %v2796
    %v2801 = vrsqrt.pop %v2269
    %v2802 = vmul.f32 %v2801, %v2269
    %v2803 = vmul.f32 %v2802, %v2801
    %v2804 = vmul.f32 0.5, %v2803
    %v2805 = vsub.f32 1.5, %v2804
    %v2806 = vmul.f32 %v2801, %v2805
    %vm2807 = vweird.f32 %v2269
    %vm2808 = vweird.f32 %v2801
    %vm2809 = vmor %vm2807, %vm2808
    %v2810 = vsel %vm2809, %v2801, %v2806
    %v2811 = vrsqrt.pop %v2270
    %v2812 = vmul.f32 %v2811, %v2270
    %v2813 = vmul.f32 %v2812, %v2811
    %v2814 = vmul.f32 0.5, %v2813
    %v2815 = vsub.f32 1.5, %v2814
    %v2816 = vmul.f32 %v2811, %v2815
    %vm2817 = vweird.f32 %v2270
    %vm2818 = vweird.f32 %v2811
    %vm2819 = vmor %vm2817, %vm2818
    %v2820 = vsel %vm2819, %v2811, %v2816
    %v2821 = vrsqrt.pop %v2271
    %v2822 = vmul.f32 %v2821, %v2271
    %v2823 = vmul.f32 %v2822, %v2821
    %v2824 = vmul.f32 0.5, %v2823
    %v2825 = vsub.f32 1.5, %v2824
    %v2826 = vmul.f32 %v2821, %v2825
    %vm2827 = vweird.f32 %v2271
    %vm2828 = vweird.f32 %v2821
    %vm2829 = vmor %vm2827, %vm2828
    %v2830 = vsel %vm2829, %v2821, %v2826
    %v2831 = vrsqrt.pop %v2272
    %v2832 = vmul.f32 %v2831, %v2272
    %v2833 = vmul.f32 %v2832, %v2831
    %v2834 = vmul.f32 0.5, %v2833
    %v2835 = vsub.f32 1.5, %v2834
    %v2836 = vmul.f32 %v2831, %v2835
    %vm2837 = vweird.f32 %v2272
    %vm2838 = vweird.f32 %v2831
    %vm2839 = vmor %vm2837, %vm2838
    %v2840 = vsel %vm2839, %v2831, %v2836
    %v2841 = vrsqrt.pop %v2273
    %v2842 = vmul.f32 %v2841, %v2273
    %v2843 = vmul.f32 %v2842, %v2841
    %v2844 = vmul.f32 0.5, %v2843
    %v2845 = vsub.f32 1.5, %v2844
    %v2846 = vmul.f32 %v2841, %v2845
    %vm2847 = vweird.f32 %v2273
    %vm2848 = vweird.f32 %v2841
    %vm2849 = vmor %vm2847, %vm2848
    %v2850 = vsel %vm2849, %v2841, %v2846
    %v2851 = vrsqrt.pop %v2274
    %v2852 = vmul.f32 %v2851, %v2274
    %v2853 = vmul.f32 %v2852, %v2851
    %v2854 = vmul.f32 0.5, %v2853
    %v2855 = vsub.f32 1.5, %v2854
    %v2856 = vmul.f32 %v2851, %v2855
    %vm2857 = vweird.f32 %v2274
    %vm2858 = vweird.f32 %v2851
    %vm2859 = vmor %vm2857, %vm2858
    %v2860 = vsel %vm2859, %v2851, %v2856
    %v2861 = vrsqrt.pop %v2275
    %v2862 = vmul.f32 %v2861, %v2275
    %v2863 = vmul.f32 %v2862, %v2861
    %v2864 = vmul.f32 0.5, %v2863
    %v2865 = vsub.f32 1.5, %v2864
    %v2866 = vmul.f32 %v2861, %v2865
    %vm2867 = vweird.f32 %v2275
    %vm2868 = vweird.f32 %v2861
    %vm2869 = vmor %vm2867, %vm2868
    %v2870 = vsel %vm2869, %v2861, %v2866
    %v2871 = vrsqrt.pop %v2276
    %v2872 = vmul.f32 %v2871, %v2276
    %v2873 = vmul.f32 %v2872, %v2871
    %v2874 = vmul.f32 0.5, %v2873
    %v2875 = vsub.f32 1.5, %v2874
    %v2876 = vmul.f32 %v2871, %v2875
    %vm2877 = vweird.f32 %v2276
    %vm2878 = vweird.f32 %v2871
    %vm2879 = vmor %vm2877, %vm2878
    %v2880 = vsel %vm2879, %v2871, %v2876
    %v2881 = vrsqrt.pop %v2277
    %v2882 = vmul.f32 %v2881, %v2277
    %v2883 = vmul.f32 %v2882, %v2881
    %v2884 = vmul.f32 0.5, %v2883
    %v2885 = vsub.f32 1.5, %v2884
    %v2886 = vmul.f32 %v2881, %v2885
    %vm2887 = vweird.f32 %v2277
    %vm2888 = vweird.f32 %v2881
    %vm2889 = vmor %vm2887, %vm2888
    %v2890 = vsel %vm2889, %v2881, %v2886
    %v2891 = vrsqrt.pop %v2278
    %v2892 = vmul.f32 %v2891, %v2278
    %v2893 = vmul.f32 %v2892, %v2891
    %v2894 = vmul.f32 0.5, %v2893
    %v2895 = vsub.f32 1.5, %v2894
    %v2896 = vmul.f32 %v2891, %v2895
    %vm2897 = vweird.f32 %v2278
    %vm2898 = vweird.f32 %v2891
    %vm2899 = vmor %vm2897, %vm2898
    %v2900 = vsel %vm2899, %v2891, %v2896
    %v2901 = vrsqrt.pop %v2279
    %v2902 = vmul.f32 %v2901, %v2279
    %v2903 = vmul.f32 %v2902, %v2901
    %v2904 = vmul.f32 0.5, %v2903
    %v2905 = vsub.f32 1.5, %v2904
    %v2906 = vmul.f32 %v2901, %v2905
    %vm2907 = vweird.f32 %v2279
    %vm2908 = vweird.f32 %v2901
    %vm2909 = vmor %vm2907, %vm2908
    %v2910 = vsel %vm2909, %v2901, %v2906
    %v2911 = vrsqrt.pop %v2280
    %v2912 = vmul.f32 %v2911, %v2280
    %v2913 = vmul.f32 %v2912, %v2911
    %v2914 = vmul.f32 0.5, %v2913
    %v2915 = vsub.f32 1.5, %v2914
    %v2916 = vmul.f32 %v2911, %v2915
    %vm2917 = vweird.f32 %v2280
    %vm2918 = vweird.f32 %v2911
    %vm2919 = vmor %vm2917, %vm2918
    %v2920 = vsel %vm2919, %v2911, %v2916
    %v2921 = vmul.f32 %v1897, %v2290
    %v2922 = vmul.f32 %v1898, %v2300
    %v2923 = vmul.f32 %v1899, %v2310
    %v2924 = vmul.f32 %v1900, %v2320
    %v2925 = vmul.f32 %v1901, %v2330
    %v2926 = vmul.f32 %v1902, %v2340
    %v2927 = vmul.f32 %v1903, %v2350
    %v2928 = vmul.f32 %v1904, %v2360
    %v2929 = vmul.f32 %v1905, %v2370
    %v2930 = vmul.f32 %v1906, %v2380
    %v2931 = vmul.f32 %v1907, %v2390
    %v2932 = vmul.f32 %v1908, %v2400
    %v2933 = vmul.f32 %v1909, %v2410
    %v2934 = vmul.f32 %v1910, %v2420
    %v2935 = vmul.f32 %v1911, %v2430
    %v2936 = vmul.f32 %v1912, %v2440
    %v2937 = vmul.f32 %v1913, %v2450
    %v2938 = vmul.f32 %v1914, %v2460
    %v2939 = vmul.f32 %v1915, %v2470
    %v2940 = vmul.f32 %v1916, %v2480
    %v2941 = vmul.f32 %v1917, %v2490
    %v2942 = vmul.f32 %v1918, %v2500
    %v2943 = vmul.f32 %v1919, %v2510
    %v2944 = vmul.f32 %v1920, %v2520
    %v2945 = vmul.f32 %v1921, %v2530
    %v2946 = vmul.f32 %v1922, %v2540
    %v2947 = vmul.f32 %v1923, %v2550
    %v2948 = vmul.f32 %v1924, %v2560
    %v2949 = vmul.f32 %v1925, %v2570
    %v2950 = vmul.f32 %v1926, %v2580
    %v2951 = vmul.f32 %v1927, %v2590
    %v2952 = vmul.f32 %v1928, %v2600
    %v2953 = vmul.f32 %v1929, %v2610
    %v2954 = vmul.f32 %v1930, %v2620
    %v2955 = vmul.f32 %v1931, %v2630
    %v2956 = vmul.f32 %v1932, %v2640
    %v2957 = vmul.f32 %v1933, %v2650
    %v2958 = vmul.f32 %v1934, %v2660
    %v2959 = vmul.f32 %v1935, %v2670
    %v2960 = vmul.f32 %v1936, %v2680
    %v2961 = vmul.f32 %v1937, %v2690
    %v2962 = vmul.f32 %v1938, %v2700
    %v2963 = vmul.f32 %v1939, %v2710
    %v2964 = vmul.f32 %v1940, %v2720
    %v2965 = vmul.f32 %v1941, %v2730
    %v2966 = vmul.f32 %v1942, %v2740
    %v2967 = vmul.f32 %v1943, %v2750
    %v2968 = vmul.f32 %v1944, %v2760
    %v2969 = vmul.f32 %v1945, %v2770
    %v2970 = vmul.f32 %v1946, %v2780
    %v2971 = vmul.f32 %v1947, %v2790
    %v2972 = vmul.f32 %v1948, %v2800
    %v2973 = vmul.f32 %v1949, %v2810
    %v2974 = vmul.f32 %v1950, %v2820
    %v2975 = vmul.f32 %v1951, %v2830
    %v2976 = vmul.f32 %v1952, %v2840
    %v2977 = vmul.f32 %v1953, %v2850
    %v2978 = vmul.f32 %v1954, %v2860
    %v2979 = vmul.f32 %v1955, %v2870
    %v2980 = vmul.f32 %v1956, %v2880
    %v2981 = vmul.f32 %v1957, %v2890
    %v2982 = vmul.f32 %v1958, %v2900
    %v2983 = vmul.f32 %v1959, %v2910
    %v2984 = vmul.f32 %v1960, %v2920
    %v2985 = vperm.slane %v223, 2
    %v2986 = vmul.f32 %v2921, %v2985
    %v2987 = vmul.f32 %v2922, %v2985
    %v2988 = vmul.f32 %v2923, %v2985
    %v2989 = vmul.f32 %v2924, %v2985
    %v2990 = vmul.f32 %v2925, %v2985
    %v2991 = vmul.f32 %v2926, %v2985
    %v2992 = vmul.f32 %v2927, %v2985
    %v2993 = vmul.f32 %v2928, %v2985
    %v2994 = vmul.f32 %v2929, %v2985
    %v2995 = vmul.f32 %v2930, %v2985
    %v2996 = vmul.f32 %v2931, %v2985
    %v2997 = vmul.f32 %v2932, %v2985
    %v2998 = vmul.f32 %v2933, %v2985
    %v2999 = vmul.f32 %v2934, %v2985
    %v3000 = vmul.f32 %v2935, %v2985
    %v3001 = vmul.f32 %v2936, %v2985
    %v3002 = vmul.f32 %v2937, %v2985
    %v3003 = vmul.f32 %v2938, %v2985
    %v3004 = vmul.f32 %v2939, %v2985
    %v3005 = vmul.f32 %v2940, %v2985
    %v3006 = vmul.f32 %v2941, %v2985
    %v3007 = vmul.f32 %v2942, %v2985
    %v3008 = vmul.f32 %v2943, %v2985
    %v3009 = vmul.f32 %v2944, %v2985
    %v3010 = vmul.f32 %v2945, %v2985
    %v3011 = vmul.f32 %v2946, %v2985
    %v3012 = vmul.f32 %v2947, %v2985
    %v3013 = vmul.f32 %v2948, %v2985
    %v3014 = vmul.f32 %v2949, %v2985
    %v3015 = vmul.f32 %v2950, %v2985
    %v3016 = vmul.f32 %v2951, %v2985
    %v3017 = vmul.f32 %v2952, %v2985
    %v3018 = vmul.f32 %v2953, %v2985
    %v3019 = vmul.f32 %v2954, %v2985
    %v3020 = vmul.f32 %v2955, %v2985
    %v3021 = vmul.f32 %v2956, %v2985
    %v3022 = vmul.f32 %v2957, %v2985
    %v3023 = vmul.f32 %v2958, %v2985
    %v3024 = vmul.f32 %v2959, %v2985
    %v3025 = vmul.f32 %v2960, %v2985
    %v3026 = vmul.f32 %v2961, %v2985
    %v3027 = vmul.f32 %v2962, %v2985
    %v3028 = vmul.f32 %v2963, %v2985
    %v3029 = vmul.f32 %v2964, %v2985
    %v3030 = vmul.f32 %v2965, %v2985
    %v3031 = vmul.f32 %v2966, %v2985
    %v3032 = vmul.f32 %v2967, %v2985
    %v3033 = vmul.f32 %v2968, %v2985
    %v3034 = vmul.f32 %v2969, %v2985
    %v3035 = vmul.f32 %v2970, %v2985
    %v3036 = vmul.f32 %v2971, %v2985
    %v3037 = vmul.f32 %v2972, %v2985
    %v3038 = vmul.f32 %v2973, %v2985
    %v3039 = vmul.f32 %v2974, %v2985
    %v3040 = vmul.f32 %v2975, %v2985
    %v3041 = vmul.f32 %v2976, %v2985
    %v3042 = vmul.f32 %v2977, %v2985
    %v3043 = vmul.f32 %v2978, %v2985
    %v3044 = vmul.f32 %v2979, %v2985
    %v3045 = vmul.f32 %v2980, %v2985
    %v3046 = vmul.f32 %v2981, %v2985
    %v3047 = vmul.f32 %v2982, %v2985
    %v3048 = vmul.f32 %v2983, %v2985
    %v3049 = vmul.f32 %v2984, %v2985
    %v3050 = vperm.slane %v223, 3
    %v3051 = vadd.f32 %v2986, %v3050
    %v3052 = vadd.f32 %v2987, %v3050
    %v3053 = vadd.f32 %v2988, %v3050
    %v3054 = vadd.f32 %v2989, %v3050
    %v3055 = vadd.f32 %v2990, %v3050
    %v3056 = vadd.f32 %v2991, %v3050
    %v3057 = vadd.f32 %v2992, %v3050
    %v3058 = vadd.f32 %v2993, %v3050
    %v3059 = vadd.f32 %v2994, %v3050
    %v3060 = vadd.f32 %v2995, %v3050
    %v3061 = vadd.f32 %v2996, %v3050
    %v3062 = vadd.f32 %v2997, %v3050
    %v3063 = vadd.f32 %v2998, %v3050
    %v3064 = vadd.f32 %v2999, %v3050
    %v3065 = vadd.f32 %v3000, %v3050
    %v3066 = vadd.f32 %v3001, %v3050
    %v3067 = vadd.f32 %v3002, %v3050
    %v3068 = vadd.f32 %v3003, %v3050
    %v3069 = vadd.f32 %v3004, %v3050
    %v3070 = vadd.f32 %v3005, %v3050
    %v3071 = vadd.f32 %v3006, %v3050
    %v3072 = vadd.f32 %v3007, %v3050
    %v3073 = vadd.f32 %v3008, %v3050
    %v3074 = vadd.f32 %v3009, %v3050
    %v3075 = vadd.f32 %v3010, %v3050
    %v3076 = vadd.f32 %v3011, %v3050
    %v3077 = vadd.f32 %v3012, %v3050
    %v3078 = vadd.f32 %v3013, %v3050
    %v3079 = vadd.f32 %v3014, %v3050
    %v3080 = vadd.f32 %v3015, %v3050
    %v3081 = vadd.f32 %v3016, %v3050
    %v3082 = vadd.f32 %v3017, %v3050
    %v3083 = vadd.f32 %v3018, %v3050
    %v3084 = vadd.f32 %v3019, %v3050
    %v3085 = vadd.f32 %v3020, %v3050
    %v3086 = vadd.f32 %v3021, %v3050
    %v3087 = vadd.f32 %v3022, %v3050
    %v3088 = vadd.f32 %v3023, %v3050
    %v3089 = vadd.f32 %v3024, %v3050
    %v3090 = vadd.f32 %v3025, %v3050
    %v3091 = vadd.f32 %v3026, %v3050
    %v3092 = vadd.f32 %v3027, %v3050
    %v3093 = vadd.f32 %v3028, %v3050
    %v3094 = vadd.f32 %v3029, %v3050
    %v3095 = vadd.f32 %v3030, %v3050
    %v3096 = vadd.f32 %v3031, %v3050
    %v3097 = vadd.f32 %v3032, %v3050
    %v3098 = vadd.f32 %v3033, %v3050
    %v3099 = vadd.f32 %v3034, %v3050
    %v3100 = vadd.f32 %v3035, %v3050
    %v3101 = vadd.f32 %v3036, %v3050
    %v3102 = vadd.f32 %v3037, %v3050
    %v3103 = vadd.f32 %v3038, %v3050
    %v3104 = vadd.f32 %v3039, %v3050
    %v3105 = vadd.f32 %v3040, %v3050
    %v3106 = vadd.f32 %v3041, %v3050
    %v3107 = vadd.f32 %v3042, %v3050
    %v3108 = vadd.f32 %v3043, %v3050
    %v3109 = vadd.f32 %v3044, %v3050
    %v3110 = vadd.f32 %v3045, %v3050
    %v3111 = vadd.f32 %v3046, %v3050
    %v3112 = vadd.f32 %v3047, %v3050
    %v3113 = vadd.f32 %v3048, %v3050
    %v3114 = vadd.f32 %v3049, %v3050
    %v3115 = vpack.c.bf16 %v3052, %v3051
    %v3116 = vpack.c.bf16 %v3054, %v3053
    %v3117 = vpack.c.bf16 %v3056, %v3055
    %v3118 = vpack.c.bf16 %v3058, %v3057
    %v3119 = vpack.c.bf16 %v3060, %v3059
    %v3120 = vpack.c.bf16 %v3062, %v3061
    %v3121 = vpack.c.bf16 %v3064, %v3063
    %v3122 = vpack.c.bf16 %v3066, %v3065
    %v3123 = vpack.c.bf16 %v3068, %v3067
    %v3124 = vpack.c.bf16 %v3070, %v3069
    %v3125 = vpack.c.bf16 %v3072, %v3071
    %v3126 = vpack.c.bf16 %v3074, %v3073
    %v3127 = vpack.c.bf16 %v3076, %v3075
    %v3128 = vpack.c.bf16 %v3078, %v3077
    %v3129 = vpack.c.bf16 %v3080, %v3079
    %v3130 = vpack.c.bf16 %v3082, %v3081
    %v3131 = vpack.c.bf16 %v3084, %v3083
    %v3132 = vpack.c.bf16 %v3086, %v3085
    %v3133 = vpack.c.bf16 %v3088, %v3087
    %v3134 = vpack.c.bf16 %v3090, %v3089
    %v3135 = vpack.c.bf16 %v3092, %v3091
    %v3136 = vpack.c.bf16 %v3094, %v3093
    %v3137 = vpack.c.bf16 %v3096, %v3095
    %v3138 = vpack.c.bf16 %v3098, %v3097
    %v3139 = vpack.c.bf16 %v3100, %v3099
    %v3140 = vpack.c.bf16 %v3102, %v3101
    %v3141 = vpack.c.bf16 %v3104, %v3103
    %v3142 = vpack.c.bf16 %v3106, %v3105
    %v3143 = vpack.c.bf16 %v3108, %v3107
    %v3144 = vpack.c.bf16 %v3110, %v3109
    %v3145 = vpack.c.bf16 %v3112, %v3111
    %v3146 = vpack.c.bf16 %v3114, %v3113
    %v3147 = vperm.slane %v223, 4
    %v3148 = vadd.f32 %v1641, %v3147
    %v3149 = vadd.f32 %v1642, %v3147
    %v3150 = vadd.f32 %v1643, %v3147
    %v3151 = vadd.f32 %v1644, %v3147
    %v3152 = vadd.f32 %v1645, %v3147
    %v3153 = vadd.f32 %v1646, %v3147
    %v3154 = vadd.f32 %v1647, %v3147
    %v3155 = vadd.f32 %v1648, %v3147
    %v3156 = vadd.f32 %v1649, %v3147
    %v3157 = vadd.f32 %v1650, %v3147
    %v3158 = vadd.f32 %v1651, %v3147
    %v3159 = vadd.f32 %v1652, %v3147
    %v3160 = vadd.f32 %v1653, %v3147
    %v3161 = vadd.f32 %v1654, %v3147
    %v3162 = vadd.f32 %v1655, %v3147
    %v3163 = vadd.f32 %v1656, %v3147
    %v3164 = vadd.f32 %v1657, %v3147
    %v3165 = vadd.f32 %v1658, %v3147
    %v3166 = vadd.f32 %v1659, %v3147
    %v3167 = vadd.f32 %v1660, %v3147
    %v3168 = vadd.f32 %v1661, %v3147
    %v3169 = vadd.f32 %v1662, %v3147
    %v3170 = vadd.f32 %v1663, %v3147
    %v3171 = vadd.f32 %v1664, %v3147
    %v3172 = vadd.f32 %v1665, %v3147
    %v3173 = vadd.f32 %v1666, %v3147
    %v3174 = vadd.f32 %v1667, %v3147
    %v3175 = vadd.f32 %v1668, %v3147
    %v3176 = vadd.f32 %v1669, %v3147
    %v3177 = vadd.f32 %v1670, %v3147
    %v3178 = vadd.f32 %v1671, %v3147
    %v3179 = vadd.f32 %v1672, %v3147
    %v3180 = vadd.f32 %v1673, %v3147
    %v3181 = vadd.f32 %v1674, %v3147
    %v3182 = vadd.f32 %v1675, %v3147
    %v3183 = vadd.f32 %v1676, %v3147
    %v3184 = vadd.f32 %v1677, %v3147
    %v3185 = vadd.f32 %v1678, %v3147
    %v3186 = vadd.f32 %v1679, %v3147
    %v3187 = vadd.f32 %v1680, %v3147
    %v3188 = vadd.f32 %v1681, %v3147
    %v3189 = vadd.f32 %v1682, %v3147
    %v3190 = vadd.f32 %v1683, %v3147
    %v3191 = vadd.f32 %v1684, %v3147
    %v3192 = vadd.f32 %v1685, %v3147
    %v3193 = vadd.f32 %v1686, %v3147
    %v3194 = vadd.f32 %v1687, %v3147
    %v3195 = vadd.f32 %v1688, %v3147
    %v3196 = vadd.f32 %v1689, %v3147
    %v3197 = vadd.f32 %v1690, %v3147
    %v3198 = vadd.f32 %v1691, %v3147
    %v3199 = vadd.f32 %v1692, %v3147
    %v3200 = vadd.f32 %v1693, %v3147
    %v3201 = vadd.f32 %v1694, %v3147
    %v3202 = vadd.f32 %v1695, %v3147
    %v3203 = vadd.f32 %v1696, %v3147
    %v3204 = vadd.f32 %v1697, %v3147
    %v3205 = vadd.f32 %v1698, %v3147
    %v3206 = vadd.f32 %v1699, %v3147
    %v3207 = vadd.f32 %v1700, %v3147
    %v3208 = vadd.f32 %v1701, %v3147
    %v3209 = vadd.f32 %v1702, %v3147
    %v3210 = vadd.f32 %v1703, %v3147
    %v3211 = vadd.f32 %v1704, %v3147
    %3212 = vst [vmem:[#allocation2] sm:$0xff] %v3148
    %3213 = vst [vmem:[#allocation2 + $0x8] sm:$0xff] %v3149
    %3214 = vst [vmem:[#allocation2 + $0x10] sm:$0xff] %v3150
    %3215 = vst [vmem:[#allocation2 + $0x18] sm:$0xff] %v3151
    %3216 = vst [vmem:[#allocation2 + $0x20] sm:$0xff] %v3152
    %3217 = vst [vmem:[#allocation2 + $0x28] sm:$0xff] %v3153
    %3218 = vst [vmem:[#allocation2 + $0x30] sm:$0xff] %v3154
    %3219 = vst [vmem:[#allocation2 + $0x38] sm:$0xff] %v3155
    %3220 = vst [vmem:[#allocation2 + $0x40] sm:$0xff] %v3156
    %3221 = vst [vmem:[#allocation2 + $0x48] sm:$0xff] %v3157
    %3222 = vst [vmem:[#allocation2 + $0x50] sm:$0xff] %v3158
    %3223 = vst [vmem:[#allocation2 + $0x58] sm:$0xff] %v3159
    %3224 = vst [vmem:[#allocation2 + $0x60] sm:$0xff] %v3160
    %3225 = vst [vmem:[#allocation2 + $0x68] sm:$0xff] %v3161
    %3226 = vst [vmem:[#allocation2 + $0x70] sm:$0xff] %v3162
    %3227 = vst [vmem:[#allocation2 + $0x78] sm:$0xff] %v3163
    %3228 = vst [vmem:[#allocation2 + $0x80] sm:$0xff] %v3164
    %3229 = vst [vmem:[#allocation2 + $0x88] sm:$0xff] %v3165
    %3230 = vst [vmem:[#allocation2 + $0x90] sm:$0xff] %v3166
    %3231 = vst [vmem:[#allocation2 + $0x98] sm:$0xff] %v3167
    %3232 = vst [vmem:[#allocation2 + $0xa0] sm:$0xff] %v3168
    %3233 = vst [vmem:[#allocation2 + $0xa8] sm:$0xff] %v3169
    %3234 = vst [vmem:[#allocation2 + $0xb0] sm:$0xff] %v3170
    %3235 = vst [vmem:[#allocation2 + $0xb8] sm:$0xff] %v3171
    %3236 = vst [vmem:[#allocation2 + $0xc0] sm:$0xff] %v3172
    %3237 = vst [vmem:[#allocation2 + $0xc8] sm:$0xff] %v3173
    %3238 = vst [vmem:[#allocation2 + $0xd0] sm:$0xff] %v3174
    %3239 = vst [vmem:[#allocation2 + $0xd8] sm:$0xff] %v3175
    %3240 = vst [vmem:[#allocation2 + $0xe0] sm:$0xff] %v3176
    %3241 = vst [vmem:[#allocation2 + $0xe8] sm:$0xff] %v3177
    %3242 = vst [vmem:[#allocation2 + $0xf0] sm:$0xff] %v3178
    %3243 = vst [vmem:[#allocation2 + $0xf8] sm:$0xff] %v3179
    %3244 = vst [vmem:[#allocation2 + $0x100] sm:$0xff] %v3180
    %3245 = vst [vmem:[#allocation2 + $0x108] sm:$0xff] %v3181
    %3246 = vst [vmem:[#allocation2 + $0x110] sm:$0xff] %v3182
    %3247 = vst [vmem:[#allocation2 + $0x118] sm:$0xff] %v3183
    %3248 = vst [vmem:[#allocation2 + $0x120] sm:$0xff] %v3184
    %3249 = vst [vmem:[#allocation2 + $0x128] sm:$0xff] %v3185
    %3250 = vst [vmem:[#allocation2 + $0x130] sm:$0xff] %v3186
    %3251 = vst [vmem:[#allocation2 + $0x138] sm:$0xff] %v3187
    %3252 = vst [vmem:[#allocation2 + $0x140] sm:$0xff] %v3188
    %3253 = vst [vmem:[#allocation2 + $0x148] sm:$0xff] %v3189
    %3254 = vst [vmem:[#allocation2 + $0x150] sm:$0xff] %v3190
    %3255 = vst [vmem:[#allocation2 + $0x158] sm:$0xff] %v3191
    %3256 = vst [vmem:[#allocation2 + $0x160] sm:$0xff] %v3192
    %3257 = vst [vmem:[#allocation2 + $0x168] sm:$0xff] %v3193
    %3258 = vst [vmem:[#allocation2 + $0x170] sm:$0xff] %v3194
    %3259 = vst [vmem:[#allocation2 + $0x178] sm:$0xff] %v3195
    %3260 = vst [vmem:[#allocation2 + $0x180] sm:$0xff] %v3196
    %3261 = vst [vmem:[#allocation2 + $0x188] sm:$0xff] %v3197
    %3262 = vst [vmem:[#allocation2 + $0x190] sm:$0xff] %v3198
    %3263 = vst [vmem:[#allocation2 + $0x198] sm:$0xff] %v3199
    %3264 = vst [vmem:[#allocation2 + $0x1a0] sm:$0xff] %v3200
    %3265 = vst [vmem:[#allocation2 + $0x1a8] sm:$0xff] %v3201
    %3266 = vst [vmem:[#allocation2 + $0x1b0] sm:$0xff] %v3202
    %3267 = vst [vmem:[#allocation2 + $0x1b8] sm:$0xff] %v3203
    %3268 = vst [vmem:[#allocation2 + $0x1c0] sm:$0xff] %v3204
    %3269 = vst [vmem:[#allocation2 + $0x1c8] sm:$0xff] %v3205
    %3270 = vst [vmem:[#allocation2 + $0x1d0] sm:$0xff] %v3206
    %3271 = vst [vmem:[#allocation2 + $0x1d8] sm:$0xff] %v3207
    %3272 = vst [vmem:[#allocation2 + $0x1e0] sm:$0xff] %v3208
    %3273 = vst [vmem:[#allocation2 + $0x1e8] sm:$0xff] %v3209
    %3274 = vst [vmem:[#allocation2 + $0x1f0] sm:$0xff] %v3210
    %3275 = vst [vmem:[#allocation2 + $0x1f8] sm:$0xff] %v3211
    %v3276 = vld [vmem:[#allocation9] sm:$0xff]
    %v3277 = vld [vmem:[#allocation9 + $0x10] sm:$0xff]
    %v3278 = vld [vmem:[#allocation9 + $0x20] sm:$0xff]
    %v3279 = vld [vmem:[#allocation9 + $0x30] sm:$0xff]
    %v3280 = vld [vmem:[#allocation9 + $0x40] sm:$0xff]
    %v3281 = vld [vmem:[#allocation9 + $0x50] sm:$0xff]
    %v3282 = vld [vmem:[#allocation9 + $0x60] sm:$0xff]
    %v3283 = vld [vmem:[#allocation9 + $0x70] sm:$0xff]
    %v3284 = vld [vmem:[#allocation9 + $0x80] sm:$0xff]
    %v3285 = vld [vmem:[#allocation9 + $0x90] sm:$0xff]
    %v3286 = vld [vmem:[#allocation9 + $0xa0] sm:$0xff]
    %v3287 = vld [vmem:[#allocation9 + $0xb0] sm:$0xff]
    %v3288 = vld [vmem:[#allocation9 + $0xc0] sm:$0xff]
    %v3289 = vld [vmem:[#allocation9 + $0xd0] sm:$0xff]
    %v3290 = vld [vmem:[#allocation9 + $0xe0] sm:$0xff]
    %v3291 = vld [vmem:[#allocation9 + $0xf0] sm:$0xff]
    %v3292 = vld [vmem:[#allocation8] sm:$0x3]
    %v3294 = vperm.slane %v3292, 0
    %v3295 = vperm.slane %v3292, 1
    %v3314 = vunpack.c.l.b16 %v3276
    %v3315 = vunpack.c.h.b16 %v3276
    %v3316 = vunpack.c.l.b16 %v3277
    %v3317 = vunpack.c.h.b16 %v3277
    %v3318 = vunpack.c.l.b16 %v3278
    %v3319 = vunpack.c.h.b16 %v3278
    %v3320 = vunpack.c.l.b16 %v3279
    %v3321 = vunpack.c.h.b16 %v3279
    %v3322 = vunpack.c.l.b16 %v3280
    %v3323 = vunpack.c.h.b16 %v3280
    %v3324 = vunpack.c.l.b16 %v3281
    %v3325 = vunpack.c.h.b16 %v3281
    %v3326 = vunpack.c.l.b16 %v3282
    %v3327 = vunpack.c.h.b16 %v3282
    %v3328 = vunpack.c.l.b16 %v3283
    %v3329 = vunpack.c.h.b16 %v3283
    %v3330 = vunpack.c.l.b16 %v3284
    %v3331 = vunpack.c.h.b16 %v3284
    %v3332 = vunpack.c.l.b16 %v3285
    %v3333 = vunpack.c.h.b16 %v3285
    %v3334 = vunpack.c.l.b16 %v3286
    %v3335 = vunpack.c.h.b16 %v3286
    %v3336 = vunpack.c.l.b16 %v3287
    %v3337 = vunpack.c.h.b16 %v3287
    %v3338 = vunpack.c.l.b16 %v3288
    %v3339 = vunpack.c.h.b16 %v3288
    %v3340 = vunpack.c.l.b16 %v3289
    %v3341 = vunpack.c.h.b16 %v3289
    %v3342 = vunpack.c.l.b16 %v3290
    %v3343 = vunpack.c.h.b16 %v3290
    %v3344 = vunpack.c.l.b16 %v3291
    %v3345 = vunpack.c.h.b16 %v3291
    %v3346 = vpack.c.b16 %v3316, %v3314
    %v3347 = vpack.c.b16 %v3317, %v3315
    %v3348 = vpack.c.b16 %v3320, %v3318
    %v3349 = vpack.c.b16 %v3321, %v3319
    %v3350 = vpack.c.b16 %v3324, %v3322
    %v3351 = vpack.c.b16 %v3325, %v3323
    %v3352 = vpack.c.b16 %v3328, %v3326
    %v3353 = vpack.c.b16 %v3329, %v3327
    %v3354 = vpack.c.b16 %v3332, %v3330
    %v3355 = vpack.c.b16 %v3333, %v3331
    %v3356 = vpack.c.b16 %v3336, %v3334
    %v3357 = vpack.c.b16 %v3337, %v3335
    %v3358 = vpack.c.b16 %v3340, %v3338
    %v3359 = vpack.c.b16 %v3341, %v3339
    %v3360 = vpack.c.b16 %v3344, %v3342
    %v3361 = vpack.c.b16 %v3345, %v3343
    %3378 = vmatpush.bf16.msra.mxu0 %v3360
    %3379 = vmatpush.bf16.msra.mxu0 %v3358
    %3380 = vmatpush.bf16.msra.mxu0 %v3356
    %3381 = vmatpush.bf16.msra.mxu0 %v3354
    %3382 = vmatpush.bf16.msra.mxu0 %v3352
    %3383 = vmatpush.bf16.msra.mxu0 %v3350
    %3384 = vmatpush.bf16.msra.mxu0 %v3348
    %3385 = vmatpush.bf16.msra.mxu0 %v3346
    %3386 = vmatmul.bf16.gmra.mxu0 %v3115
    %v3387 = vpop.f32.mrf.mxu0
    %v3388 = vadd.f32 %v3294, %v3387
    %v3389 = vpop.f32.mrf.mxu0
    %v3390 = vadd.f32 %v3294, %v3389
    %3391 = vmatmul.bf16.gmra.mxu0 %v3116
    %v3392 = vpop.f32.mrf.mxu0
    %v3393 = vadd.f32 %v3294, %v3392
    %v3394 = vpop.f32.mrf.mxu0
    %v3395 = vadd.f32 %v3294, %v3394
    %3396 = vmatmul.bf16.gmra.mxu0 %v3117
    %v3397 = vpop.f32.mrf.mxu0
    %v3398 = vadd.f32 %v3294, %v3397
    %v3399 = vpop.f32.mrf.mxu0
    %v3400 = vadd.f32 %v3294, %v3399
    %3401 = vmatmul.bf16.gmra.mxu0 %v3118
    %v3402 = vpop.f32.mrf.mxu0
    %v3403 = vadd.f32 %v3294, %v3402
    %v3404 = vpop.f32.mrf.mxu0
    %v3405 = vadd.f32 %v3294, %v3404
    %3406 = vmatmul.bf16.gmra.mxu0 %v3119
    %v3407 = vpop.f32.mrf.mxu0
    %v3408 = vadd.f32 %v3294, %v3407
    %v3409 = vpop.f32.mrf.mxu0
    %v3410 = vadd.f32 %v3294, %v3409
    %3411 = vmatmul.bf16.gmra.mxu0 %v3120
    %v3412 = vpop.f32.mrf.mxu0
    %v3413 = vadd.f32 %v3294, %v3412
    %v3414 = vpop.f32.mrf.mxu0
    %v3415 = vadd.f32 %v3294, %v3414
    %3416 = vmatmul.bf16.gmra.mxu0 %v3121
    %v3417 = vpop.f32.mrf.mxu0
    %v3418 = vadd.f32 %v3294, %v3417
    %v3419 = vpop.f32.mrf.mxu0
    %v3420 = vadd.f32 %v3294, %v3419
    %3421 = vmatmul.bf16.gmra.mxu0 %v3122
    %v3422 = vpop.f32.mrf.mxu0
    %v3423 = vadd.f32 %v3294, %v3422
    %v3424 = vpop.f32.mrf.mxu0
    %v3425 = vadd.f32 %v3294, %v3424
    %3426 = vmatmul.bf16.gmra.mxu0 %v3123
    %v3427 = vpop.f32.mrf.mxu0
    %v3428 = vadd.f32 %v3294, %v3427
    %v3429 = vpop.f32.mrf.mxu0
    %v3430 = vadd.f32 %v3294, %v3429
    %3431 = vmatmul.bf16.gmra.mxu0 %v3124
    %v3432 = vpop.f32.mrf.mxu0
    %v3433 = vadd.f32 %v3294, %v3432
    %v3434 = vpop.f32.mrf.mxu0
    %v3435 = vadd.f32 %v3294, %v3434
    %3436 = vmatmul.bf16.gmra.mxu0 %v3125
    %v3437 = vpop.f32.mrf.mxu0
    %v3438 = vadd.f32 %v3294, %v3437
    %v3439 = vpop.f32.mrf.mxu0
    %v3440 = vadd.f32 %v3294, %v3439
    %3441 = vmatmul.bf16.gmra.mxu0 %v3126
    %v3442 = vpop.f32.mrf.mxu0
    %v3443 = vadd.f32 %v3294, %v3442
    %v3444 = vpop.f32.mrf.mxu0
    %v3445 = vadd.f32 %v3294, %v3444
    %3446 = vmatmul.bf16.gmra.mxu0 %v3127
    %v3447 = vpop.f32.mrf.mxu0
    %v3448 = vadd.f32 %v3294, %v3447
    %v3449 = vpop.f32.mrf.mxu0
    %v3450 = vadd.f32 %v3294, %v3449
    %3451 = vmatmul.bf16.gmra.mxu0 %v3128
    %v3452 = vpop.f32.mrf.mxu0
    %v3453 = vadd.f32 %v3294, %v3452
    %v3454 = vpop.f32.mrf.mxu0
    %v3455 = vadd.f32 %v3294, %v3454
    %3456 = vmatmul.bf16.gmra.mxu0 %v3129
    %v3457 = vpop.f32.mrf.mxu0
    %v3458 = vadd.f32 %v3294, %v3457
    %v3459 = vpop.f32.mrf.mxu0
    %v3460 = vadd.f32 %v3294, %v3459
    %3461 = vmatmul.bf16.gmra.mxu0 %v3130
    %v3462 = vpop.f32.mrf.mxu0
    %v3463 = vadd.f32 %v3294, %v3462
    %v3464 = vpop.f32.mrf.mxu0
    %v3465 = vadd.f32 %v3294, %v3464
    %3466 = vmatmul.bf16.gmra.mxu0 %v3131
    %v3467 = vpop.f32.mrf.mxu0
    %v3468 = vadd.f32 %v3294, %v3467
    %v3469 = vpop.f32.mrf.mxu0
    %v3470 = vadd.f32 %v3294, %v3469
    %3471 = vmatmul.bf16.gmra.mxu0 %v3132
    %v3472 = vpop.f32.mrf.mxu0
    %v3473 = vadd.f32 %v3294, %v3472
    %v3474 = vpop.f32.mrf.mxu0
    %v3475 = vadd.f32 %v3294, %v3474
    %3476 = vmatmul.bf16.gmra.mxu0 %v3133
    %v3477 = vpop.f32.mrf.mxu0
    %v3478 = vadd.f32 %v3294, %v3477
    %v3479 = vpop.f32.mrf.mxu0
    %v3480 = vadd.f32 %v3294, %v3479
    %3481 = vmatmul.bf16.gmra.mxu0 %v3134
    %v3482 = vpop.f32.mrf.mxu0
    %v3483 = vadd.f32 %v3294, %v3482
    %v3484 = vpop.f32.mrf.mxu0
    %v3485 = vadd.f32 %v3294, %v3484
    %3486 = vmatmul.bf16.gmra.mxu0 %v3135
    %v3487 = vpop.f32.mrf.mxu0
    %v3488 = vadd.f32 %v3294, %v3487
    %v3489 = vpop.f32.mrf.mxu0
    %v3490 = vadd.f32 %v3294, %v3489
    %3491 = vmatmul.bf16.gmra.mxu0 %v3136
    %v3492 = vpop.f32.mrf.mxu0
    %v3493 = vadd.f32 %v3294, %v3492
    %v3494 = vpop.f32.mrf.mxu0
    %v3495 = vadd.f32 %v3294, %v3494
    %3496 = vmatmul.bf16.gmra.mxu0 %v3137
    %v3497 = vpop.f32.mrf.mxu0
    %v3498 = vadd.f32 %v3294, %v3497
    %v3499 = vpop.f32.mrf.mxu0
    %v3500 = vadd.f32 %v3294, %v3499
    %3501 = vmatmul.bf16.gmra.mxu0 %v3138
    %v3502 = vpop.f32.mrf.mxu0
    %v3503 = vadd.f32 %v3294, %v3502
    %v3504 = vpop.f32.mrf.mxu0
    %v3505 = vadd.f32 %v3294, %v3504
    %3506 = vmatmul.bf16.gmra.mxu0 %v3139
    %v3507 = vpop.f32.mrf.mxu0
    %v3508 = vadd.f32 %v3294, %v3507
    %v3509 = vpop.f32.mrf.mxu0
    %v3510 = vadd.f32 %v3294, %v3509
    %3511 = vmatmul.bf16.gmra.mxu0 %v3140
    %v3512 = vpop.f32.mrf.mxu0
    %v3513 = vadd.f32 %v3294, %v3512
    %v3514 = vpop.f32.mrf.mxu0
    %v3515 = vadd.f32 %v3294, %v3514
    %3516 = vmatmul.bf16.gmra.mxu0 %v3141
    %v3517 = vpop.f32.mrf.mxu0
    %v3518 = vadd.f32 %v3294, %v3517
    %v3519 = vpop.f32.mrf.mxu0
    %v3520 = vadd.f32 %v3294, %v3519
    %3521 = vmatmul.bf16.gmra.mxu0 %v3142
    %v3522 = vpop.f32.mrf.mxu0
    %v3523 = vadd.f32 %v3294, %v3522
    %v3524 = vpop.f32.mrf.mxu0
    %v3525 = vadd.f32 %v3294, %v3524
    %3526 = vmatmul.bf16.gmra.mxu0 %v3143
    %v3527 = vpop.f32.mrf.mxu0
    %v3528 = vadd.f32 %v3294, %v3527
    %v3529 = vpop.f32.mrf.mxu0
    %v3530 = vadd.f32 %v3294, %v3529
    %3531 = vmatmul.bf16.gmra.mxu0 %v3144
    %v3532 = vpop.f32.mrf.mxu0
    %v3533 = vadd.f32 %v3294, %v3532
    %v3534 = vpop.f32.mrf.mxu0
    %v3535 = vadd.f32 %v3294, %v3534
    %3536 = vmatmul.bf16.gmra.mxu0 %v3145
    %v3537 = vpop.f32.mrf.mxu0
    %v3538 = vadd.f32 %v3294, %v3537
    %v3539 = vpop.f32.mrf.mxu0
    %v3540 = vadd.f32 %v3294, %v3539
    %3541 = vmatmul.bf16.gmra.mxu0 %v3146
    %v3542 = vpop.f32.mrf.mxu0
    %v3543 = vadd.f32 %v3294, %v3542
    %v3544 = vpop.f32.mrf.mxu0
    %v3545 = vadd.f32 %v3294, %v3544
    %3546 = vdwg.mxu0
    %3547 = vmatpush.bf16.msra.mxu0 %v3361
    %3548 = vmatpush.bf16.msra.mxu0 %v3359
    %3549 = vmatpush.bf16.msra.mxu0 %v3357
    %3550 = vmatpush.bf16.msra.mxu0 %v3355
    %3551 = vmatpush.bf16.msra.mxu0 %v3353
    %3552 = vmatpush.bf16.msra.mxu0 %v3351
    %3553 = vmatpush.bf16.msra.mxu0 %v3349
    %3554 = vmatpush.bf16.msra.mxu0 %v3347
    %3555 = vmatmul.bf16.gmra.mxu0 %v3115
    %v3556 = vpop.f32.mrf.mxu0
    %v3557 = vadd.f32 %v3295, %v3556
    %v3558 = vpop.f32.mrf.mxu0
    %v3559 = vadd.f32 %v3295, %v3558
    %3560 = vmatmul.bf16.gmra.mxu0 %v3116
    %v3561 = vpop.f32.mrf.mxu0
    %v3562 = vadd.f32 %v3295, %v3561
    %v3563 = vpop.f32.mrf.mxu0
    %v3564 = vadd.f32 %v3295, %v3563
    %3565 = vmatmul.bf16.gmra.mxu0 %v3117
    %v3566 = vpop.f32.mrf.mxu0
    %v3567 = vadd.f32 %v3295, %v3566
    %v3568 = vpop.f32.mrf.mxu0
    %v3569 = vadd.f32 %v3295, %v3568
    %3570 = vmatmul.bf16.gmra.mxu0 %v3118
    %v3571 = vpop.f32.mrf.mxu0
    %v3572 = vadd.f32 %v3295, %v3571
    %v3573 = vpop.f32.mrf.mxu0
    %v3574 = vadd.f32 %v3295, %v3573
    %3575 = vmatmul.bf16.gmra.mxu0 %v3119
    %v3576 = vpop.f32.mrf.mxu0
    %v3577 = vadd.f32 %v3295, %v3576
    %v3578 = vpop.f32.mrf.mxu0
    %v3579 = vadd.f32 %v3295, %v3578
    %3580 = vmatmul.bf16.gmra.mxu0 %v3120
    %v3581 = vpop.f32.mrf.mxu0
    %v3582 = vadd.f32 %v3295, %v3581
    %v3583 = vpop.f32.mrf.mxu0
    %v3584 = vadd.f32 %v3295, %v3583
    %3585 = vmatmul.bf16.gmra.mxu0 %v3121
    %v3586 = vpop.f32.mrf.mxu0
    %v3587 = vadd.f32 %v3295, %v3586
    %v3588 = vpop.f32.mrf.mxu0
    %v3589 = vadd.f32 %v3295, %v3588
    %3590 = vmatmul.bf16.gmra.mxu0 %v3122
    %v3591 = vpop.f32.mrf.mxu0
    %v3592 = vadd.f32 %v3295, %v3591
    %v3593 = vpop.f32.mrf.mxu0
    %v3594 = vadd.f32 %v3295, %v3593
    %3595 = vmatmul.bf16.gmra.mxu0 %v3123
    %v3596 = vpop.f32.mrf.mxu0
    %v3597 = vadd.f32 %v3295, %v3596
    %v3598 = vpop.f32.mrf.mxu0
    %v3599 = vadd.f32 %v3295, %v3598
    %3600 = vmatmul.bf16.gmra.mxu0 %v3124
    %v3601 = vpop.f32.mrf.mxu0
    %v3602 = vadd.f32 %v3295, %v3601
    %v3603 = vpop.f32.mrf.mxu0
    %v3604 = vadd.f32 %v3295, %v3603
    %3605 = vmatmul.bf16.gmra.mxu0 %v3125
    %v3606 = vpop.f32.mrf.mxu0
    %v3607 = vadd.f32 %v3295, %v3606
    %v3608 = vpop.f32.mrf.mxu0
    %v3609 = vadd.f32 %v3295, %v3608
    %3610 = vmatmul.bf16.gmra.mxu0 %v3126
    %v3611 = vpop.f32.mrf.mxu0
    %v3612 = vadd.f32 %v3295, %v3611
    %v3613 = vpop.f32.mrf.mxu0
    %v3614 = vadd.f32 %v3295, %v3613
    %3615 = vmatmul.bf16.gmra.mxu0 %v3127
    %v3616 = vpop.f32.mrf.mxu0
    %v3617 = vadd.f32 %v3295, %v3616
    %v3618 = vpop.f32.mrf.mxu0
    %v3619 = vadd.f32 %v3295, %v3618
    %3620 = vmatmul.bf16.gmra.mxu0 %v3128
    %v3621 = vpop.f32.mrf.mxu0
    %v3622 = vadd.f32 %v3295, %v3621
    %v3623 = vpop.f32.mrf.mxu0
    %v3624 = vadd.f32 %v3295, %v3623
    %3625 = vmatmul.bf16.gmra.mxu0 %v3129
    %v3626 = vpop.f32.mrf.mxu0
    %v3627 = vadd.f32 %v3295, %v3626
    %v3628 = vpop.f32.mrf.mxu0
    %v3629 = vadd.f32 %v3295, %v3628
    %3630 = vmatmul.bf16.gmra.mxu0 %v3130
    %v3631 = vpop.f32.mrf.mxu0
    %v3632 = vadd.f32 %v3295, %v3631
    %v3633 = vpop.f32.mrf.mxu0
    %v3634 = vadd.f32 %v3295, %v3633
    %3635 = vmatmul.bf16.gmra.mxu0 %v3131
    %v3636 = vpop.f32.mrf.mxu0
    %v3637 = vadd.f32 %v3295, %v3636
    %v3638 = vpop.f32.mrf.mxu0
    %v3639 = vadd.f32 %v3295, %v3638
    %3640 = vmatmul.bf16.gmra.mxu0 %v3132
    %v3641 = vpop.f32.mrf.mxu0
    %v3642 = vadd.f32 %v3295, %v3641
    %v3643 = vpop.f32.mrf.mxu0
    %v3644 = vadd.f32 %v3295, %v3643
    %3645 = vmatmul.bf16.gmra.mxu0 %v3133
    %v3646 = vpop.f32.mrf.mxu0
    %v3647 = vadd.f32 %v3295, %v3646
    %v3648 = vpop.f32.mrf.mxu0
    %v3649 = vadd.f32 %v3295, %v3648
    %3650 = vmatmul.bf16.gmra.mxu0 %v3134
    %v3651 = vpop.f32.mrf.mxu0
    %v3652 = vadd.f32 %v3295, %v3651
    %v3653 = vpop.f32.mrf.mxu0
    %v3654 = vadd.f32 %v3295, %v3653
    %3655 = vmatmul.bf16.gmra.mxu0 %v3135
    %v3656 = vpop.f32.mrf.mxu0
    %v3657 = vadd.f32 %v3295, %v3656
    %v3658 = vpop.f32.mrf.mxu0
    %v3659 = vadd.f32 %v3295, %v3658
    %3660 = vmatmul.bf16.gmra.mxu0 %v3136
    %v3661 = vpop.f32.mrf.mxu0
    %v3662 = vadd.f32 %v3295, %v3661
    %v3663 = vpop.f32.mrf.mxu0
    %v3664 = vadd.f32 %v3295, %v3663
    %3665 = vmatmul.bf16.gmra.mxu0 %v3137
    %v3666 = vpop.f32.mrf.mxu0
    %v3667 = vadd.f32 %v3295, %v3666
    %v3668 = vpop.f32.mrf.mxu0
    %v3669 = vadd.f32 %v3295, %v3668
    %3670 = vmatmul.bf16.gmra.mxu0 %v3138
    %v3671 = vpop.f32.mrf.mxu0
    %v3672 = vadd.f32 %v3295, %v3671
    %v3673 = vpop.f32.mrf.mxu0
    %v3674 = vadd.f32 %v3295, %v3673
    %3675 = vmatmul.bf16.gmra.mxu0 %v3139
    %v3676 = vpop.f32.mrf.mxu0
    %v3677 = vadd.f32 %v3295, %v3676
    %v3678 = vpop.f32.mrf.mxu0
    %v3679 = vadd.f32 %v3295, %v3678
    %3680 = vmatmul.bf16.gmra.mxu0 %v3140
    %v3681 = vpop.f32.mrf.mxu0
    %v3682 = vadd.f32 %v3295, %v3681
    %v3683 = vpop.f32.mrf.mxu0
    %v3684 = vadd.f32 %v3295, %v3683
    %3685 = vmatmul.bf16.gmra.mxu0 %v3141
    %v3686 = vpop.f32.mrf.mxu0
    %v3687 = vadd.f32 %v3295, %v3686
    %v3688 = vpop.f32.mrf.mxu0
    %v3689 = vadd.f32 %v3295, %v3688
    %3690 = vmatmul.bf16.gmra.mxu0 %v3142
    %v3691 = vpop.f32.mrf.mxu0
    %v3692 = vadd.f32 %v3295, %v3691
    %v3693 = vpop.f32.mrf.mxu0
    %v3694 = vadd.f32 %v3295, %v3693
    %3695 = vmatmul.bf16.gmra.mxu0 %v3143
    %v3696 = vpop.f32.mrf.mxu0
    %v3697 = vadd.f32 %v3295, %v3696
    %v3698 = vpop.f32.mrf.mxu0
    %v3699 = vadd.f32 %v3295, %v3698
    %3700 = vmatmul.bf16.gmra.mxu0 %v3144
    %v3701 = vpop.f32.mrf.mxu0
    %v3702 = vadd.f32 %v3295, %v3701
    %v3703 = vpop.f32.mrf.mxu0
    %v3704 = vadd.f32 %v3295, %v3703
    %3705 = vmatmul.bf16.gmra.mxu0 %v3145
    %v3706 = vpop.f32.mrf.mxu0
    %v3707 = vadd.f32 %v3295, %v3706
    %v3708 = vpop.f32.mrf.mxu0
    %v3709 = vadd.f32 %v3295, %v3708
    %3710 = vmatmul.bf16.gmra.mxu0 %v3146
    %v3711 = vpop.f32.mrf.mxu0
    %v3712 = vadd.f32 %v3295, %v3711
    %v3713 = vpop.f32.mrf.mxu0
    %v3714 = vadd.f32 %v3295, %v3713
    %3715 = vdwg.mxu0
    %v3716 = vmul.f32 %v3388, 0.5
    %v3717 = vmul.f32 %v3557, 0.5
    %v3718 = vmul.f32 %v3390, 0.5
    %v3719 = vmul.f32 %v3559, 0.5
    %v3720 = vmul.f32 %v3393, 0.5
    %v3721 = vmul.f32 %v3562, 0.5
    %v3722 = vmul.f32 %v3395, 0.5
    %v3723 = vmul.f32 %v3564, 0.5
    %v3724 = vmul.f32 %v3398, 0.5
    %v3725 = vmul.f32 %v3567, 0.5
    %v3726 = vmul.f32 %v3400, 0.5
    %v3727 = vmul.f32 %v3569, 0.5
    %v3728 = vmul.f32 %v3403, 0.5
    %v3729 = vmul.f32 %v3572, 0.5
    %v3730 = vmul.f32 %v3405, 0.5
    %v3731 = vmul.f32 %v3574, 0.5
    %v3732 = vmul.f32 %v3408, 0.5
    %v3733 = vmul.f32 %v3577, 0.5
    %v3734 = vmul.f32 %v3410, 0.5
    %v3735 = vmul.f32 %v3579, 0.5
    %v3736 = vmul.f32 %v3413, 0.5
    %v3737 = vmul.f32 %v3582, 0.5
    %v3738 = vmul.f32 %v3415, 0.5
    %v3739 = vmul.f32 %v3584, 0.5
    %v3740 = vmul.f32 %v3418, 0.5
    %v3741 = vmul.f32 %v3587, 0.5
    %v3742 = vmul.f32 %v3420, 0.5
    %v3743 = vmul.f32 %v3589, 0.5
    %v3744 = vmul.f32 %v3423, 0.5
    %v3745 = vmul.f32 %v3592, 0.5
    %v3746 = vmul.f32 %v3425, 0.5
    %v3747 = vmul.f32 %v3594, 0.5
    %v3748 = vmul.f32 %v3428, 0.5
    %v3749 = vmul.f32 %v3597, 0.5
    %v3750 = vmul.f32 %v3430, 0.5
    %v3751 = vmul.f32 %v3599, 0.5
    %v3752 = vmul.f32 %v3433, 0.5
    %v3753 = vmul.f32 %v3602, 0.5
    %v3754 = vmul.f32 %v3435, 0.5
    %v3755 = vmul.f32 %v3604, 0.5
    %v3756 = vmul.f32 %v3438, 0.5
    %v3757 = vmul.f32 %v3607, 0.5
    %v3758 = vmul.f32 %v3440, 0.5
    %v3759 = vmul.f32 %v3609, 0.5
    %v3760 = vmul.f32 %v3443, 0.5
    %v3761 = vmul.f32 %v3612, 0.5
    %v3762 = vmul.f32 %v3445, 0.5
    %v3763 = vmul.f32 %v3614, 0.5
    %v3764 = vmul.f32 %v3448, 0.5
    %v3765 = vmul.f32 %v3617, 0.5
    %v3766 = vmul.f32 %v3450, 0.5
    %v3767 = vmul.f32 %v3619, 0.5
    %v3768 = vmul.f32 %v3453, 0.5
    %v3769 = vmul.f32 %v3622, 0.5
    %v3770 = vmul.f32 %v3455, 0.5
    %v3771 = vmul.f32 %v3624, 0.5
    %v3772 = vmul.f32 %v3458, 0.5
    %v3773 = vmul.f32 %v3627, 0.5
    %v3774 = vmul.f32 %v3460, 0.5
    %v3775 = vmul.f32 %v3629, 0.5
    %v3776 = vmul.f32 %v3463, 0.5
    %v3777 = vmul.f32 %v3632, 0.5
    %v3778 = vmul.f32 %v3465, 0.5
    %v3779 = vmul.f32 %v3634, 0.5
    %v3780 = vmul.f32 %v3468, 0.5
    %v3781 = vmul.f32 %v3637, 0.5
    %v3782 = vmul.f32 %v3470, 0.5
    %v3783 = vmul.f32 %v3639, 0.5
    %v3784 = vmul.f32 %v3473, 0.5
    %v3785 = vmul.f32 %v3642, 0.5
    %v3786 = vmul.f32 %v3475, 0.5
    %v3787 = vmul.f32 %v3644, 0.5
    %v3788 = vmul.f32 %v3478, 0.5
    %v3789 = vmul.f32 %v3647, 0.5
    %v3790 = vmul.f32 %v3480, 0.5
    %v3791 = vmul.f32 %v3649, 0.5
    %v3792 = vmul.f32 %v3483, 0.5
    %v3793 = vmul.f32 %v3652, 0.5
    %v3794 = vmul.f32 %v3485, 0.5
    %v3795 = vmul.f32 %v3654, 0.5
    %v3796 = vmul.f32 %v3488, 0.5
    %v3797 = vmul.f32 %v3657, 0.5
    %v3798 = vmul.f32 %v3490, 0.5
    %v3799 = vmul.f32 %v3659, 0.5
    %v3800 = vmul.f32 %v3493, 0.5
    %v3801 = vmul.f32 %v3662, 0.5
    %v3802 = vmul.f32 %v3495, 0.5
    %v3803 = vmul.f32 %v3664, 0.5
    %v3804 = vmul.f32 %v3498, 0.5
    %v3805 = vmul.f32 %v3667, 0.5
    %v3806 = vmul.f32 %v3500, 0.5
    %v3807 = vmul.f32 %v3669, 0.5
    %v3808 = vmul.f32 %v3503, 0.5
    %v3809 = vmul.f32 %v3672, 0.5
    %v3810 = vmul.f32 %v3505, 0.5
    %v3811 = vmul.f32 %v3674, 0.5
    %v3812 = vmul.f32 %v3508, 0.5
    %v3813 = vmul.f32 %v3677, 0.5
    %v3814 = vmul.f32 %v3510, 0.5
    %v3815 = vmul.f32 %v3679, 0.5
    %v3816 = vmul.f32 %v3513, 0.5
    %v3817 = vmul.f32 %v3682, 0.5
    %v3818 = vmul.f32 %v3515, 0.5
    %v3819 = vmul.f32 %v3684, 0.5
    %v3820 = vmul.f32 %v3518, 0.5
    %v3821 = vmul.f32 %v3687, 0.5
    %v3822 = vmul.f32 %v3520, 0.5
    %v3823 = vmul.f32 %v3689, 0.5
    %v3824 = vmul.f32 %v3523, 0.5
    %v3825 = vmul.f32 %v3692, 0.5
    %v3826 = vmul.f32 %v3525, 0.5
    %v3827 = vmul.f32 %v3694, 0.5
    %v3828 = vmul.f32 %v3528, 0.5
    %v3829 = vmul.f32 %v3697, 0.5
    %v3830 = vmul.f32 %v3530, 0.5
    %v3831 = vmul.f32 %v3699, 0.5
    %v3832 = vmul.f32 %v3533, 0.5
    %v3833 = vmul.f32 %v3702, 0.5
    %v3834 = vmul.f32 %v3535, 0.5
    %v3835 = vmul.f32 %v3704, 0.5
    %v3836 = vmul.f32 %v3538, 0.5
    %v3837 = vmul.f32 %v3707, 0.5
    %v3838 = vmul.f32 %v3540, 0.5
    %v3839 = vmul.f32 %v3709, 0.5
    %v3840 = vmul.f32 %v3543, 0.5
    %v3841 = vmul.f32 %v3712, 0.5
    %v3842 = vmul.f32 %v3545, 0.5
    %v3843 = vmul.f32 %v3714, 0.5
    %v3844 = vmul.f32 %v3388, %v3388
    %v3845 = vmul.f32 %v3557, %v3557
    %v3846 = vmul.f32 %v3390, %v3390
    %v3847 = vmul.f32 %v3559, %v3559
    %v3848 = vmul.f32 %v3393, %v3393
    %v3849 = vmul.f32 %v3562, %v3562
    %v3850 = vmul.f32 %v3395, %v3395
    %v3851 = vmul.f32 %v3564, %v3564
    %v3852 = vmul.f32 %v3398, %v3398
    %v3853 = vmul.f32 %v3567, %v3567
    %v3854 = vmul.f32 %v3400, %v3400
    %v3855 = vmul.f32 %v3569, %v3569
    %v3856 = vmul.f32 %v3403, %v3403
    %v3857 = vmul.f32 %v3572, %v3572
    %v3858 = vmul.f32 %v3405, %v3405
    %v3859 = vmul.f32 %v3574, %v3574
    %v3860 = vmul.f32 %v3408, %v3408
    %v3861 = vmul.f32 %v3577, %v3577
    %v3862 = vmul.f32 %v3410, %v3410
    %v3863 = vmul.f32 %v3579, %v3579
    %v3864 = vmul.f32 %v3413, %v3413
    %v3865 = vmul.f32 %v3582, %v3582
    %v3866 = vmul.f32 %v3415, %v3415
    %v3867 = vmul.f32 %v3584, %v3584
    %v3868 = vmul.f32 %v3418, %v3418
    %v3869 = vmul.f32 %v3587, %v3587
    %v3870 = vmul.f32 %v3420, %v3420
    %v3871 = vmul.f32 %v3589, %v3589
    %v3872 = vmul.f32 %v3423, %v3423
    %v3873 = vmul.f32 %v3592, %v3592
    %v3874 = vmul.f32 %v3425, %v3425
    %v3875 = vmul.f32 %v3594, %v3594
    %v3876 = vmul.f32 %v3428, %v3428
    %v3877 = vmul.f32 %v3597, %v3597
    %v3878 = vmul.f32 %v3430, %v3430
    %v3879 = vmul.f32 %v3599, %v3599
    %v3880 = vmul.f32 %v3433, %v3433
    %v3881 = vmul.f32 %v3602, %v3602
    %v3882 = vmul.f32 %v3435, %v3435
    %v3883 = vmul.f32 %v3604, %v3604
    %v3884 = vmul.f32 %v3438, %v3438
    %v3885 = vmul.f32 %v3607, %v3607
    %v3886 = vmul.f32 %v3440, %v3440
    %v3887 = vmul.f32 %v3609, %v3609
    %v3888 = vmul.f32 %v3443, %v3443
    %v3889 = vmul.f32 %v3612, %v3612
    %v3890 = vmul.f32 %v3445, %v3445
    %v3891 = vmul.f32 %v3614, %v3614
    %v3892 = vmul.f32 %v3448, %v3448
    %v3893 = vmul.f32 %v3617, %v3617
    %v3894 = vmul.f32 %v3450, %v3450
    %v3895 = vmul.f32 %v3619, %v3619
    %v3896 = vmul.f32 %v3453, %v3453
    %v3897 = vmul.f32 %v3622, %v3622
    %v3898 = vmul.f32 %v3455, %v3455
    %v3899 = vmul.f32 %v3624, %v3624
    %v3900 = vmul.f32 %v3458, %v3458
    %v3901 = vmul.f32 %v3627, %v3627
    %v3902 = vmul.f32 %v3460, %v3460
    %v3903 = vmul.f32 %v3629, %v3629
    %v3904 = vmul.f32 %v3463, %v3463
    %v3905 = vmul.f32 %v3632, %v3632
    %v3906 = vmul.f32 %v3465, %v3465
    %v3907 = vmul.f32 %v3634, %v3634
    %v3908 = vmul.f32 %v3468, %v3468
    %v3909 = vmul.f32 %v3637, %v3637
    %v3910 = vmul.f32 %v3470, %v3470
    %v3911 = vmul.f32 %v3639, %v3639
    %v3912 = vmul.f32 %v3473, %v3473
    %v3913 = vmul.f32 %v3642, %v3642
    %v3914 = vmul.f32 %v3475, %v3475
    %v3915 = vmul.f32 %v3644, %v3644
    %v3916 = vmul.f32 %v3478, %v3478
    %v3917 = vmul.f32 %v3647, %v3647
    %v3918 = vmul.f32 %v3480, %v3480
    %v3919 = vmul.f32 %v3649, %v3649
    %v3920 = vmul.f32 %v3483, %v3483
    %v3921 = vmul.f32 %v3652, %v3652
    %v3922 = vmul.f32 %v3485, %v3485
    %v3923 = vmul.f32 %v3654, %v3654
    %v3924 = vmul.f32 %v3488, %v3488
    %v3925 = vmul.f32 %v3657, %v3657
    %v3926 = vmul.f32 %v3490, %v3490
    %v3927 = vmul.f32 %v3659, %v3659
    %v3928 = vmul.f32 %v3493, %v3493
    %v3929 = vmul.f32 %v3662, %v3662
    %v3930 = vmul.f32 %v3495, %v3495
    %v3931 = vmul.f32 %v3664, %v3664
    %v3932 = vmul.f32 %v3498, %v3498
    %v3933 = vmul.f32 %v3667, %v3667
    %v3934 = vmul.f32 %v3500, %v3500
    %v3935 = vmul.f32 %v3669, %v3669
    %v3936 = vmul.f32 %v3503, %v3503
    %v3937 = vmul.f32 %v3672, %v3672
    %v3938 = vmul.f32 %v3505, %v3505
    %v3939 = vmul.f32 %v3674, %v3674
    %v3940 = vmul.f32 %v3508, %v3508
    %v3941 = vmul.f32 %v3677, %v3677
    %v3942 = vmul.f32 %v3510, %v3510
    %v3943 = vmul.f32 %v3679, %v3679
    %v3944 = vmul.f32 %v3513, %v3513
    %v3945 = vmul.f32 %v3682, %v3682
    %v3946 = vmul.f32 %v3515, %v3515
    %v3947 = vmul.f32 %v3684, %v3684
    %v3948 = vmul.f32 %v3518, %v3518
    %v3949 = vmul.f32 %v3687, %v3687
    %v3950 = vmul.f32 %v3520, %v3520
    %v3951 = vmul.f32 %v3689, %v3689
    %v3952 = vmul.f32 %v3523, %v3523
    %v3953 = vmul.f32 %v3692, %v3692
    %v3954 = vmul.f32 %v3525, %v3525
    %v3955 = vmul.f32 %v3694, %v3694
    %v3956 = vmul.f32 %v3528, %v3528
    %v3957 = vmul.f32 %v3697, %v3697
    %v3958 = vmul.f32 %v3530, %v3530
    %v3959 = vmul.f32 %v3699, %v3699
    %v3960 = vmul.f32 %v3533, %v3533
    %v3961 = vmul.f32 %v3702, %v3702
    %v3962 = vmul.f32 %v3535, %v3535
    %v3963 = vmul.f32 %v3704, %v3704
    %v3964 = vmul.f32 %v3538, %v3538
    %v3965 = vmul.f32 %v3707, %v3707
    %v3966 = vmul.f32 %v3540, %v3540
    %v3967 = vmul.f32 %v3709, %v3709
    %v3968 = vmul.f32 %v3543, %v3543
    %v3969 = vmul.f32 %v3712, %v3712
    %v3970 = vmul.f32 %v3545, %v3545
    %v3971 = vmul.f32 %v3714, %v3714
    %v3972 = vmul.f32 %v3844, %v3388
    %v3973 = vmul.f32 %v3845, %v3557
    %v3974 = vmul.f32 %v3846, %v3390
    %v3975 = vmul.f32 %v3847, %v3559
    %v3976 = vmul.f32 %v3848, %v3393
    %v3977 = vmul.f32 %v3849, %v3562
    %v3978 = vmul.f32 %v3850, %v3395
    %v3979 = vmul.f32 %v3851, %v3564
    %v3980 = vmul.f32 %v3852, %v3398
    %v3981 = vmul.f32 %v3853, %v3567
    %v3982 = vmul.f32 %v3854, %v3400
    %v3983 = vmul.f32 %v3855, %v3569
    %v3984 = vmul.f32 %v3856, %v3403
    %v3985 = vmul.f32 %v3857, %v3572
    %v3986 = vmul.f32 %v3858, %v3405
    %v3987 = vmul.f32 %v3859, %v3574
    %v3988 = vmul.f32 %v3860, %v3408
    %v3989 = vmul.f32 %v3861, %v3577
    %v3990 = vmul.f32 %v3862, %v3410
    %v3991 = vmul.f32 %v3863, %v3579
    %v3992 = vmul.f32 %v3864, %v3413
    %v3993 = vmul.f32 %v3865, %v3582
    %v3994 = vmul.f32 %v3866, %v3415
    %v3995 = vmul.f32 %v3867, %v3584
    %v3996 = vmul.f32 %v3868, %v3418
    %v3997 = vmul.f32 %v3869, %v3587
    %v3998 = vmul.f32 %v3870, %v3420
    %v3999 = vmul.f32 %v3871, %v3589
    %v4000 = vmul.f32 %v3872, %v3423
    %v4001 = vmul.f32 %v3873, %v3592
    %v4002 = vmul.f32 %v3874, %v3425
    %v4003 = vmul.f32 %v3875, %v3594
    %v4004 = vmul.f32 %v3876, %v3428
    %v4005 = vmul.f32 %v3877, %v3597
    %v4006 = vmul.f32 %v3878, %v3430
    %v4007 = vmul.f32 %v3879, %v3599
    %v4008 = vmul.f32 %v3880, %v3433
    %v4009 = vmul.f32 %v3881, %v3602
    %v4010 = vmul.f32 %v3882, %v3435
    %v4011 = vmul.f32 %v3883, %v3604
    %v4012 = vmul.f32 %v3884, %v3438
    %v4013 = vmul.f32 %v3885, %v3607
    %v4014 = vmul.f32 %v3886, %v3440
    %v4015 = vmul.f32 %v3887, %v3609
    %v4016 = vmul.f32 %v3888, %v3443
    %v4017 = vmul.f32 %v3889, %v3612
    %v4018 = vmul.f32 %v3890, %v3445
    %v4019 = vmul.f32 %v3891, %v3614
    %v4020 = vmul.f32 %v3892, %v3448
    %v4021 = vmul.f32 %v3893, %v3617
    %v4022 = vmul.f32 %v3894, %v3450
    %v4023 = vmul.f32 %v3895, %v3619
    %v4024 = vmul.f32 %v3896, %v3453
    %v4025 = vmul.f32 %v3897, %v3622
    %v4026 = vmul.f32 %v3898, %v3455
    %v4027 = vmul.f32 %v3899, %v3624
    %v4028 = vmul.f32 %v3900, %v3458
    %v4029 = vmul.f32 %v3901, %v3627
    %v4030 = vmul.f32 %v3902, %v3460
    %v4031 = vmul.f32 %v3903, %v3629
    %v4032 = vmul.f32 %v3904, %v3463
    %v4033 = vmul.f32 %v3905, %v3632
    %v4034 = vmul.f32 %v3906, %v3465
    %v4035 = vmul.f32 %v3907, %v3634
    %v4036 = vmul.f32 %v3908, %v3468
    %v4037 = vmul.f32 %v3909, %v3637
    %v4038 = vmul.f32 %v3910, %v3470
    %v4039 = vmul.f32 %v3911, %v3639
    %v4040 = vmul.f32 %v3912, %v3473
    %v4041 = vmul.f32 %v3913, %v3642
    %v4042 = vmul.f32 %v3914, %v3475
    %v4043 = vmul.f32 %v3915, %v3644
    %v4044 = vmul.f32 %v3916, %v3478
    %v4045 = vmul.f32 %v3917, %v3647
    %v4046 = vmul.f32 %v3918, %v3480
    %v4047 = vmul.f32 %v3919, %v3649
    %v4048 = vmul.f32 %v3920, %v3483
    %v4049 = vmul.f32 %v3921, %v3652
    %v4050 = vmul.f32 %v3922, %v3485
    %v4051 = vmul.f32 %v3923, %v3654
    %v4052 = vmul.f32 %v3924, %v3488
    %v4053 = vmul.f32 %v3925, %v3657
    %v4054 = vmul.f32 %v3926, %v3490
    %v4055 = vmul.f32 %v3927, %v3659
    %v4056 = vmul.f32 %v3928, %v3493
    %v4057 = vmul.f32 %v3929, %v3662
    %v4058 = vmul.f32 %v3930, %v3495
    %v4059 = vmul.f32 %v3931, %v3664
    %v4060 = vmul.f32 %v3932, %v3498
    %v4061 = vmul.f32 %v3933, %v3667
    %v4062 = vmul.f32 %v3934, %v3500
    %v4063 = vmul.f32 %v3935, %v3669
    %v4064 = vmul.f32 %v3936, %v3503
    %v4065 = vmul.f32 %v3937, %v3672
    %v4066 = vmul.f32 %v3938, %v3505
    %v4067 = vmul.f32 %v3939, %v3674
    %v4068 = vmul.f32 %v3940, %v3508
    %v4069 = vmul.f32 %v3941, %v3677
    %v4070 = vmul.f32 %v3942, %v3510
    %v4071 = vmul.f32 %v3943, %v3679
    %v4072 = vmul.f32 %v3944, %v3513
    %v4073 = vmul.f32 %v3945, %v3682
    %v4074 = vmul.f32 %v3946, %v3515
    %v4075 = vmul.f32 %v3947, %v3684
    %v4076 = vmul.f32 %v3948, %v3518
    %v4077 = vmul.f32 %v3949, %v3687
    %v4078 = vmul.f32 %v3950, %v3520
    %v4079 = vmul.f32 %v3951, %v3689
    %v4080 = vmul.f32 %v3952, %v3523
    %v4081 = vmul.f32 %v3953, %v3692
    %v4082 = vmul.f32 %v3954, %v3525
    %v4083 = vmul.f32 %v3955, %v3694
    %v4084 = vmul.f32 %v3956, %v3528
    %v4085 = vmul.f32 %v3957, %v3697
    %v4086 = vmul.f32 %v3958, %v3530
    %v4087 = vmul.f32 %v3959, %v3699
    %v4088 = vmul.f32 %v3960, %v3533
    %v4089 = vmul.f32 %v3961, %v3702
    %v4090 = vmul.f32 %v3962, %v3535
    %v4091 = vmul.f32 %v3963, %v3704
    %v4092 = vmul.f32 %v3964, %v3538
    %v4093 = vmul.f32 %v3965, %v3707
    %v4094 = vmul.f32 %v3966, %v3540
    %v4095 = vmul.f32 %v3967, %v3709
    %v4096 = vmul.f32 %v3968, %v3543
    %v4097 = vmul.f32 %v3969, %v3712
    %v4098 = vmul.f32 %v3970, %v3545
    %v4099 = vmul.f32 %v3971, %v3714
    %v4100 = vmul.f32 %v3972, 0.044715
    %v4101 = vmul.f32 %v3973, 0.044715
    %v4102 = vmul.f32 %v3974, 0.044715
    %v4103 = vmul.f32 %v3975, 0.044715
    %v4104 = vmul.f32 %v3976, 0.044715
    %v4105 = vmul.f32 %v3977, 0.044715
    %v4106 = vmul.f32 %v3978, 0.044715
    %v4107 = vmul.f32 %v3979, 0.044715
    %v4108 = vmul.f32 %v3980, 0.044715
    %v4109 = vmul.f32 %v3981, 0.044715
    %v4110 = vmul.f32 %v3982, 0.044715
    %v4111 = vmul.f32 %v3983, 0.044715
    %v4112 = vmul.f32 %v3984, 0.044715
    %v4113 = vmul.f32 %v3985, 0.044715
    %v4114 = vmul.f32 %v3986, 0.044715
    %v4115 = vmul.f32 %v3987, 0.044715
    %v4116 = vmul.f32 %v3988, 0.044715
    %v4117 = vmul.f32 %v3989, 0.044715
    %v4118 = vmul.f32 %v3990, 0.044715
    %v4119 = vmul.f32 %v3991, 0.044715
    %v4120 = vmul.f32 %v3992, 0.044715
    %v4121 = vmul.f32 %v3993, 0.044715
    %v4122 = vmul.f32 %v3994, 0.044715
    %v4123 = vmul.f32 %v3995, 0.044715
    %v4124 = vmul.f32 %v3996, 0.044715
    %v4125 = vmul.f32 %v3997, 0.044715
    %v4126 = vmul.f32 %v3998, 0.044715
    %v4127 = vmul.f32 %v3999, 0.044715
    %v4128 = vmul.f32 %v4000, 0.044715
    %v4129 = vmul.f32 %v4001, 0.044715
    %v4130 = vmul.f32 %v4002, 0.044715
    %v4131 = vmul.f32 %v4003, 0.044715
    %v4132 = vmul.f32 %v4004, 0.044715
    %v4133 = vmul.f32 %v4005, 0.044715
    %v4134 = vmul.f32 %v4006, 0.044715
    %v4135 = vmul.f32 %v4007, 0.044715
    %v4136 = vmul.f32 %v4008, 0.044715
    %v4137 = vmul.f32 %v4009, 0.044715
    %v4138 = vmul.f32 %v4010, 0.044715
    %v4139 = vmul.f32 %v4011, 0.044715
    %v4140 = vmul.f32 %v4012, 0.044715
    %v4141 = vmul.f32 %v4013, 0.044715
    %v4142 = vmul.f32 %v4014, 0.044715
    %v4143 = vmul.f32 %v4015, 0.044715
    %v4144 = vmul.f32 %v4016, 0.044715
    %v4145 = vmul.f32 %v4017, 0.044715
    %v4146 = vmul.f32 %v4018, 0.044715
    %v4147 = vmul.f32 %v4019, 0.044715
    %v4148 = vmul.f32 %v4020, 0.044715
    %v4149 = vmul.f32 %v4021, 0.044715
    %v4150 = vmul.f32 %v4022, 0.044715
    %v4151 = vmul.f32 %v4023, 0.044715
    %v4152 = vmul.f32 %v4024, 0.044715
    %v4153 = vmul.f32 %v4025, 0.044715
    %v4154 = vmul.f32 %v4026, 0.044715
    %v4155 = vmul.f32 %v4027, 0.044715
    %v4156 = vmul.f32 %v4028, 0.044715
    %v4157 = vmul.f32 %v4029, 0.044715
    %v4158 = vmul.f32 %v4030, 0.044715
    %v4159 = vmul.f32 %v4031, 0.044715
    %v4160 = vmul.f32 %v4032, 0.044715
    %v4161 = vmul.f32 %v4033, 0.044715
    %v4162 = vmul.f32 %v4034, 0.044715
    %v4163 = vmul.f32 %v4035, 0.044715
    %v4164 = vmul.f32 %v4036, 0.044715
    %v4165 = vmul.f32 %v4037, 0.044715
    %v4166 = vmul.f32 %v4038, 0.044715
    %v4167 = vmul.f32 %v4039, 0.044715
    %v4168 = vmul.f32 %v4040, 0.044715
    %v4169 = vmul.f32 %v4041, 0.044715
    %v4170 = vmul.f32 %v4042, 0.044715
    %v4171 = vmul.f32 %v4043, 0.044715
    %v4172 = vmul.f32 %v4044, 0.044715
    %v4173 = vmul.f32 %v4045, 0.044715
    %v4174 = vmul.f32 %v4046, 0.044715
    %v4175 = vmul.f32 %v4047, 0.044715
    %v4176 = vmul.f32 %v4048, 0.044715
    %v4177 = vmul.f32 %v4049, 0.044715
    %v4178 = vmul.f32 %v4050, 0.044715
    %v4179 = vmul.f32 %v4051, 0.044715
    %v4180 = vmul.f32 %v4052, 0.044715
    %v4181 = vmul.f32 %v4053, 0.044715
    %v4182 = vmul.f32 %v4054, 0.044715
    %v4183 = vmul.f32 %v4055, 0.044715
    %v4184 = vmul.f32 %v4056, 0.044715
    %v4185 = vmul.f32 %v4057, 0.044715
    %v4186 = vmul.f32 %v4058, 0.044715
    %v4187 = vmul.f32 %v4059, 0.044715
    %v4188 = vmul.f32 %v4060, 0.044715
    %v4189 = vmul.f32 %v4061, 0.044715
    %v4190 = vmul.f32 %v4062, 0.044715
    %v4191 = vmul.f32 %v4063, 0.044715
    %v4192 = vmul.f32 %v4064, 0.044715
    %v4193 = vmul.f32 %v4065, 0.044715
    %v4194 = vmul.f32 %v4066, 0.044715
    %v4195 = vmul.f32 %v4067, 0.044715
    %v4196 = vmul.f32 %v4068, 0.044715
    %v4197 = vmul.f32 %v4069, 0.044715
    %v4198 = vmul.f32 %v4070, 0.044715
    %v4199 = vmul.f32 %v4071, 0.044715
    %v4200 = vmul.f32 %v4072, 0.044715
    %v4201 = vmul.f32 %v4073, 0.044715
    %v4202 = vmul.f32 %v4074, 0.044715
    %v4203 = vmul.f32 %v4075, 0.044715
    %v4204 = vmul.f32 %v4076, 0.044715
    %v4205 = vmul.f32 %v4077, 0.044715
    %v4206 = vmul.f32 %v4078, 0.044715
    %v4207 = vmul.f32 %v4079, 0.044715
    %v4208 = vmul.f32 %v4080, 0.044715
    %v4209 = vmul.f32 %v4081, 0.044715
    %v4210 = vmul.f32 %v4082, 0.044715
    %v4211 = vmul.f32 %v4083, 0.044715
    %v4212 = vmul.f32 %v4084, 0.044715
    %v4213 = vmul.f32 %v4085, 0.044715
    %v4214 = vmul.f32 %v4086, 0.044715
    %v4215 = vmul.f32 %v4087, 0.044715
    %v4216 = vmul.f32 %v4088, 0.044715
    %v4217 = vmul.f32 %v4089, 0.044715
    %v4218 = vmul.f32 %v4090, 0.044715
    %v4219 = vmul.f32 %v4091, 0.044715
    %v4220 = vmul.f32 %v4092, 0.044715
    %v4221 = vmul.f32 %v4093, 0.044715
    %v4222 = vmul.f32 %v4094, 0.044715
    %v4223 = vmul.f32 %v4095, 0.044715
    %v4224 = vmul.f32 %v4096, 0.044715
    %v4225 = vmul.f32 %v4097, 0.044715
    %v4226 = vmul.f32 %v4098, 0.044715
    %v4227 = vmul.f32 %v4099, 0.044715
    %v4228 = vadd.f32 %v3388, %v4100
    %v4229 = vadd.f32 %v3557, %v4101
    %v4230 = vadd.f32 %v3390, %v4102
    %v4231 = vadd.f32 %v3559, %v4103
    %v4232 = vadd.f32 %v3393, %v4104
    %v4233 = vadd.f32 %v3562, %v4105
    %v4234 = vadd.f32 %v3395, %v4106
    %v4235 = vadd.f32 %v3564, %v4107
    %v4236 = vadd.f32 %v3398, %v4108
    %v4237 = vadd.f32 %v3567, %v4109
    %v4238 = vadd.f32 %v3400, %v4110
    %v4239 = vadd.f32 %v3569, %v4111
    %v4240 = vadd.f32 %v3403, %v4112
    %v4241 = vadd.f32 %v3572, %v4113
    %v4242 = vadd.f32 %v3405, %v4114
    %v4243 = vadd.f32 %v3574, %v4115
    %v4244 = vadd.f32 %v3408, %v4116
    %v4245 = vadd.f32 %v3577, %v4117
    %v4246 = vadd.f32 %v3410, %v4118
    %v4247 = vadd.f32 %v3579, %v4119
    %v4248 = vadd.f32 %v3413, %v4120
    %v4249 = vadd.f32 %v3582, %v4121
    %v4250 = vadd.f32 %v3415, %v4122
    %v4251 = vadd.f32 %v3584, %v4123
    %v4252 = vadd.f32 %v3418, %v4124
    %v4253 = vadd.f32 %v3587, %v4125
    %v4254 = vadd.f32 %v3420, %v4126
    %v4255 = vadd.f32 %v3589, %v4127
    %v4256 = vadd.f32 %v3423, %v4128
    %v4257 = vadd.f32 %v3592, %v4129
    %v4258 = vadd.f32 %v3425, %v4130
    %v4259 = vadd.f32 %v3594, %v4131
    %v4260 = vadd.f32 %v3428, %v4132
    %v4261 = vadd.f32 %v3597, %v4133
    %v4262 = vadd.f32 %v3430, %v4134
    %v4263 = vadd.f32 %v3599, %v4135
    %v4264 = vadd.f32 %v3433, %v4136
    %v4265 = vadd.f32 %v3602, %v4137
    %v4266 = vadd.f32 %v3435, %v4138
    %v4267 = vadd.f32 %v3604, %v4139
    %v4268 = vadd.f32 %v3438, %v4140
    %v4269 = vadd.f32 %v3607, %v4141
    %v4270 = vadd.f32 %v3440, %v4142
    %v4271 = vadd.f32 %v3609, %v4143
    %v4272 = vadd.f32 %v3443, %v4144
    %v4273 = vadd.f32 %v3612, %v4145
    %v4274 = vadd.f32 %v3445, %v4146
    %v4275 = vadd.f32 %v3614, %v4147
    %v4276 = vadd.f32 %v3448, %v4148
    %v4277 = vadd.f32 %v3617, %v4149
    %v4278 = vadd.f32 %v3450, %v4150
    %v4279 = vadd.f32 %v3619, %v4151
    %v4280 = vadd.f32 %v3453, %v4152
    %v4281 = vadd.f32 %v3622, %v4153
    %v4282 = vadd.f32 %v3455, %v4154
    %v4283 = vadd.f32 %v3624, %v4155
    %v4284 = vadd.f32 %v3458, %v4156
    %v4285 = vadd.f32 %v3627, %v4157
    %v4286 = vadd.f32 %v3460, %v4158
    %v4287 = vadd.f32 %v3629, %v4159
    %v4288 = vadd.f32 %v3463, %v4160
    %v4289 = vadd.f32 %v3632, %v4161
    %v4290 = vadd.f32 %v3465, %v4162
    %v4291 = vadd.f32 %v3634, %v4163
    %v4292 = vadd.f32 %v3468, %v4164
    %v4293 = vadd.f32 %v3637, %v4165
    %v4294 = vadd.f32 %v3470, %v4166
    %v4295 = vadd.f32 %v3639, %v4167
    %v4296 = vadd.f32 %v3473, %v4168
    %v4297 = vadd.f32 %v3642, %v4169
    %v4298 = vadd.f32 %v3475, %v4170
    %v4299 = vadd.f32 %v3644, %v4171
    %v4300 = vadd.f32 %v3478, %v4172
    %v4301 = vadd.f32 %v3647, %v4173
    %v4302 = vadd.f32 %v3480, %v4174
    %v4303 = vadd.f32 %v3649, %v4175
    %v4304 = vadd.f32 %v3483, %v4176
    %v4305 = vadd.f32 %v3652, %v4177
    %v4306 = vadd.f32 %v3485, %v4178
    %v4307 = vadd.f32 %v3654, %v4179
    %v4308 = vadd.f32 %v3488, %v4180
    %v4309 = vadd.f32 %v3657, %v4181
    %v4310 = vadd.f32 %v3490, %v4182
    %v4311 = vadd.f32 %v3659, %v4183
    %v4312 = vadd.f32 %v3493, %v4184
    %v4313 = vadd.f32 %v3662, %v4185
    %v4314 = vadd.f32 %v3495, %v4186
    %v4315 = vadd.f32 %v3664, %v4187
    %v4316 = vadd.f32 %v3498, %v4188
    %v4317 = vadd.f32 %v3667, %v4189
    %v4318 = vadd.f32 %v3500, %v4190
    %v4319 = vadd.f32 %v3669, %v4191
    %v4320 = vadd.f32 %v3503, %v4192
    %v4321 = vadd.f32 %v3672, %v4193
    %v4322 = vadd.f32 %v3505, %v4194
    %v4323 = vadd.f32 %v3674, %v4195
    %v4324 = vadd.f32 %v3508, %v4196
    %v4325 = vadd.f32 %v3677, %v4197
    %v4326 = vadd.f32 %v3510, %v4198
    %v4327 = vadd.f32 %v3679, %v4199
    %v4328 = vadd.f32 %v3513, %v4200
    %v4329 = vadd.f32 %v3682, %v4201
    %v4330 = vadd.f32 %v3515, %v4202
    %v4331 = vadd.f32 %v3684, %v4203
    %v4332 = vadd.f32 %v3518, %v4204
    %v4333 = vadd.f32 %v3687, %v4205
    %v4334 = vadd.f32 %v3520, %v4206
    %v4335 = vadd.f32 %v3689, %v4207
    %v4336 = vadd.f32 %v3523, %v4208
    %v4337 = vadd.f32 %v3692, %v4209
    %v4338 = vadd.f32 %v3525, %v4210
    %v4339 = vadd.f32 %v3694, %v4211
    %v4340 = vadd.f32 %v3528, %v4212
    %v4341 = vadd.f32 %v3697, %v4213
    %v4342 = vadd.f32 %v3530, %v4214
    %v4343 = vadd.f32 %v3699, %v4215
    %v4344 = vadd.f32 %v3533, %v4216
    %v4345 = vadd.f32 %v3702, %v4217
    %v4346 = vadd.f32 %v3535, %v4218
    %v4347 = vadd.f32 %v3704, %v4219
    %v4348 = vadd.f32 %v3538, %v4220
    %v4349 = vadd.f32 %v3707, %v4221
    %v4350 = vadd.f32 %v3540, %v4222
    %v4351 = vadd.f32 %v3709, %v4223
    %v4352 = vadd.f32 %v3543, %v4224
    %v4353 = vadd.f32 %v3712, %v4225
    %v4354 = vadd.f32 %v3545, %v4226
    %v4355 = vadd.f32 %v3714, %v4227
    %v4356 = vmul.f32 %v4228, 0.7978846
    %v4357 = vmul.f32 %v4229, 0.7978846
    %v4358 = vmul.f32 %v4230, 0.7978846
    %v4359 = vmul.f32 %v4231, 0.7978846
    %v4360 = vmul.f32 %v4232, 0.7978846
    %v4361 = vmul.f32 %v4233, 0.7978846
    %v4362 = vmul.f32 %v4234, 0.7978846
    %v4363 = vmul.f32 %v4235, 0.7978846
    %v4364 = vmul.f32 %v4236, 0.7978846
    %v4365 = vmul.f32 %v4237, 0.7978846
    %v4366 = vmul.f32 %v4238, 0.7978846
    %v4367 = vmul.f32 %v4239, 0.7978846
    %v4368 = vmul.f32 %v4240, 0.7978846
    %v4369 = vmul.f32 %v4241, 0.7978846
    %v4370 = vmul.f32 %v4242, 0.7978846
    %v4371 = vmul.f32 %v4243, 0.7978846
    %v4372 = vmul.f32 %v4244, 0.7978846
    %v4373 = vmul.f32 %v4245, 0.7978846
    %v4374 = vmul.f32 %v4246, 0.7978846
    %v4375 = vmul.f32 %v4247, 0.7978846
    %v4376 = vmul.f32 %v4248, 0.7978846
    %v4377 = vmul.f32 %v4249, 0.7978846
    %v4378 = vmul.f32 %v4250, 0.7978846
    %v4379 = vmul.f32 %v4251, 0.7978846
    %v4380 = vmul.f32 %v4252, 0.7978846
    %v4381 = vmul.f32 %v4253, 0.7978846
    %v4382 = vmul.f32 %v4254, 0.7978846
    %v4383 = vmul.f32 %v4255, 0.7978846
    %v4384 = vmul.f32 %v4256, 0.7978846
    %v4385 = vmul.f32 %v4257, 0.7978846
    %v4386 = vmul.f32 %v4258, 0.7978846
    %v4387 = vmul.f32 %v4259, 0.7978846
    %v4388 = vmul.f32 %v4260, 0.7978846
    %v4389 = vmul.f32 %v4261, 0.7978846
    %v4390 = vmul.f32 %v4262, 0.7978846
    %v4391 = vmul.f32 %v4263, 0.7978846
    %v4392 = vmul.f32 %v4264, 0.7978846
    %v4393 = vmul.f32 %v4265, 0.7978846
    %v4394 = vmul.f32 %v4266, 0.7978846
    %v4395 = vmul.f32 %v4267, 0.7978846
    %v4396 = vmul.f32 %v4268, 0.7978846
    %v4397 = vmul.f32 %v4269, 0.7978846
    %v4398 = vmul.f32 %v4270, 0.7978846
    %v4399 = vmul.f32 %v4271, 0.7978846
    %v4400 = vmul.f32 %v4272, 0.7978846
    %v4401 = vmul.f32 %v4273, 0.7978846
    %v4402 = vmul.f32 %v4274, 0.7978846
    %v4403 = vmul.f32 %v4275, 0.7978846
    %v4404 = vmul.f32 %v4276, 0.7978846
    %v4405 = vmul.f32 %v4277, 0.7978846
    %v4406 = vmul.f32 %v4278, 0.7978846
    %v4407 = vmul.f32 %v4279, 0.7978846
    %v4408 = vmul.f32 %v4280, 0.7978846
    %v4409 = vmul.f32 %v4281, 0.7978846
    %v4410 = vmul.f32 %v4282, 0.7978846
    %v4411 = vmul.f32 %v4283, 0.7978846
    %v4412 = vmul.f32 %v4284, 0.7978846
    %v4413 = vmul.f32 %v4285, 0.7978846
    %v4414 = vmul.f32 %v4286, 0.7978846
    %v4415 = vmul.f32 %v4287, 0.7978846
    %v4416 = vmul.f32 %v4288, 0.7978846
    %v4417 = vmul.f32 %v4289, 0.7978846
    %v4418 = vmul.f32 %v4290, 0.7978846
    %v4419 = vmul.f32 %v4291, 0.7978846
    %v4420 = vmul.f32 %v4292, 0.7978846
    %v4421 = vmul.f32 %v4293, 0.7978846
    %v4422 = vmul.f32 %v4294, 0.7978846
    %v4423 = vmul.f32 %v4295, 0.7978846
    %v4424 = vmul.f32 %v4296, 0.7978846
    %v4425 = vmul.f32 %v4297, 0.7978846
    %v4426 = vmul.f32 %v4298, 0.7978846
    %v4427 = vmul.f32 %v4299, 0.7978846
    %v4428 = vmul.f32 %v4300, 0.7978846
    %v4429 = vmul.f32 %v4301, 0.7978846
    %v4430 = vmul.f32 %v4302, 0.7978846
    %v4431 = vmul.f32 %v4303, 0.7978846
    %v4432 = vmul.f32 %v4304, 0.7978846
    %v4433 = vmul.f32 %v4305, 0.7978846
    %v4434 = vmul.f32 %v4306, 0.7978846
    %v4435 = vmul.f32 %v4307, 0.7978846
    %v4436 = vmul.f32 %v4308, 0.7978846
    %v4437 = vmul.f32 %v4309, 0.7978846
    %v4438 = vmul.f32 %v4310, 0.7978846
    %v4439 = vmul.f32 %v4311, 0.7978846
    %v4440 = vmul.f32 %v4312, 0.7978846
    %v4441 = vmul.f32 %v4313, 0.7978846
    %v4442 = vmul.f32 %v4314, 0.7978846
    %v4443 = vmul.f32 %v4315, 0.7978846
    %v4444 = vmul.f32 %v4316, 0.7978846
    %v4445 = vmul.f32 %v4317, 0.7978846
    %v4446 = vmul.f32 %v4318, 0.7978846
    %v4447 = vmul.f32 %v4319, 0.7978846
    %v4448 = vmul.f32 %v4320, 0.7978846
    %v4449 = vmul.f32 %v4321, 0.7978846
    %v4450 = vmul.f32 %v4322, 0.7978846
    %v4451 = vmul.f32 %v4323, 0.7978846
    %v4452 = vmul.f32 %v4324, 0.7978846
    %v4453 = vmul.f32 %v4325, 0.7978846
    %v4454 = vmul.f32 %v4326, 0.7978846
    %v4455 = vmul.f32 %v4327, 0.7978846
    %v4456 = vmul.f32 %v4328, 0.7978846
    %v4457 = vmul.f32 %v4329, 0.7978846
    %v4458 = vmul.f32 %v4330, 0.7978846
    %v4459 = vmul.f32 %v4331, 0.7978846
    %v4460 = vmul.f32 %v4332, 0.7978846
    %v4461 = vmul.f32 %v4333, 0.7978846
    %v4462 = vmul.f32 %v4334, 0.7978846
    %v4463 = vmul.f32 %v4335, 0.7978846
    %v4464 = vmul.f32 %v4336, 0.7978846
    %v4465 = vmul.f32 %v4337, 0.7978846
    %v4466 = vmul.f32 %v4338, 0.7978846
    %v4467 = vmul.f32 %v4339, 0.7978846
    %v4468 = vmul.f32 %v4340, 0.7978846
    %v4469 = vmul.f32 %v4341, 0.7978846
    %v4470 = vmul.f32 %v4342, 0.7978846
    %v4471 = vmul.f32 %v4343, 0.7978846
    %v4472 = vmul.f32 %v4344, 0.7978846
    %v4473 = vmul.f32 %v4345, 0.7978846
    %v4474 = vmul.f32 %v4346, 0.7978846
    %v4475 = vmul.f32 %v4347, 0.7978846
    %v4476 = vmul.f32 %v4348, 0.7978846
    %v4477 = vmul.f32 %v4349, 0.7978846
    %v4478 = vmul.f32 %v4350, 0.7978846
    %v4479 = vmul.f32 %v4351, 0.7978846
    %v4480 = vmul.f32 %v4352, 0.7978846
    %v4481 = vmul.f32 %v4353, 0.7978846
    %v4482 = vmul.f32 %v4354, 0.7978846
    %v4483 = vmul.f32 %v4355, 0.7978846
    %v4484 = vtanh.pop %v4356
    %v4485 = vtanh.pop %v4357
    %v4486 = vtanh.pop %v4358
    %v4487 = vtanh.pop %v4359
    %v4488 = vtanh.pop %v4360
    %v4489 = vtanh.pop %v4361
    %v4490 = vtanh.pop %v4362
    %v4491 = vtanh.pop %v4363
    %v4492 = vtanh.pop %v4364
    %v4493 = vtanh.pop %v4365
    %v4494 = vtanh.pop %v4366
    %v4495 = vtanh.pop %v4367
    %v4496 = vtanh.pop %v4368
    %v4497 = vtanh.pop %v4369
    %v4498 = vtanh.pop %v4370
    %v4499 = vtanh.pop %v4371
    %v4500 = vtanh.pop %v4372
    %v4501 = vtanh.pop %v4373
    %v4502 = vtanh.pop %v4374
    %v4503 = vtanh.pop %v4375
    %v4504 = vtanh.pop %v4376
    %v4505 = vtanh.pop %v4377
    %v4506 = vtanh.pop %v4378
    %v4507 = vtanh.pop %v4379
    %v4508 = vtanh.pop %v4380
    %v4509 = vtanh.pop %v4381
    %v4510 = vtanh.pop %v4382
    %v4511 = vtanh.pop %v4383
    %v4512 = vtanh.pop %v4384
    %v4513 = vtanh.pop %v4385
    %v4514 = vtanh.pop %v4386
    %v4515 = vtanh.pop %v4387
    %v4516 = vtanh.pop %v4388
    %v4517 = vtanh.pop %v4389
    %v4518 = vtanh.pop %v4390
    %v4519 = vtanh.pop %v4391
    %v4520 = vtanh.pop %v4392
    %v4521 = vtanh.pop %v4393
    %v4522 = vtanh.pop %v4394
    %v4523 = vtanh.pop %v4395
    %v4524 = vtanh.pop %v4396
    %v4525 = vtanh.pop %v4397
    %v4526 = vtanh.pop %v4398
    %v4527 = vtanh.pop %v4399
    %v4528 = vtanh.pop %v4400
    %v4529 = vtanh.pop %v4401
    %v4530 = vtanh.pop %v4402
    %v4531 = vtanh.pop %v4403
    %v4532 = vtanh.pop %v4404
    %v4533 = vtanh.pop %v4405
    %v4534 = vtanh.pop %v4406
    %v4535 = vtanh.pop %v4407
    %v4536 = vtanh.pop %v4408
    %v4537 = vtanh.pop %v4409
    %v4538 = vtanh.pop %v4410
    %v4539 = vtanh.pop %v4411
    %v4540 = vtanh.pop %v4412
    %v4541 = vtanh.pop %v4413
    %v4542 = vtanh.pop %v4414
    %v4543 = vtanh.pop %v4415
    %v4544 = vtanh.pop %v4416
    %v4545 = vtanh.pop %v4417
    %v4546 = vtanh.pop %v4418
    %v4547 = vtanh.pop %v4419
    %v4548 = vtanh.pop %v4420
    %v4549 = vtanh.pop %v4421
    %v4550 = vtanh.pop %v4422
    %v4551 = vtanh.pop %v4423
    %v4552 = vtanh.pop %v4424
    %v4553 = vtanh.pop %v4425
    %v4554 = vtanh.pop %v4426
    %v4555 = vtanh.pop %v4427
    %v4556 = vtanh.pop %v4428
    %v4557 = vtanh.pop %v4429
    %v4558 = vtanh.pop %v4430
    %v4559 = vtanh.pop %v4431
    %v4560 = vtanh.pop %v4432
    %v4561 = vtanh.pop %v4433
    %v4562 = vtanh.pop %v4434
    %v4563 = vtanh.pop %v4435
    %v4564 = vtanh.pop %v4436
    %v4565 = vtanh.pop %v4437
    %v4566 = vtanh.pop %v4438
    %v4567 = vtanh.pop %v4439
    %v4568 = vtanh.pop %v4440
    %v4569 = vtanh.pop %v4441
    %v4570 = vtanh.pop %v4442
    %v4571 = vtanh.pop %v4443
    %v4572 = vtanh.pop %v4444
    %v4573 = vtanh.pop %v4445
    %v4574 = vtanh.pop %v4446
    %v4575 = vtanh.pop %v4447
    %v4576 = vtanh.pop %v4448
    %v4577 = vtanh.pop %v4449
    %v4578 = vtanh.pop %v4450
    %v4579 = vtanh.pop %v4451
    %v4580 = vtanh.pop %v4452
    %v4581 = vtanh.pop %v4453
    %v4582 = vtanh.pop %v4454
    %v4583 = vtanh.pop %v4455
    %v4584 = vtanh.pop %v4456
    %v4585 = vtanh.pop %v4457
    %v4586 = vtanh.pop %v4458
    %v4587 = vtanh.pop %v4459
    %v4588 = vtanh.pop %v4460
    %v4589 = vtanh.pop %v4461
    %v4590 = vtanh.pop %v4462
    %v4591 = vtanh.pop %v4463
    %v4592 = vtanh.pop %v4464
    %v4593 = vtanh.pop %v4465
    %v4594 = vtanh.pop %v4466
    %v4595 = vtanh.pop %v4467
    %v4596 = vtanh.pop %v4468
    %v4597 = vtanh.pop %v4469
    %v4598 = vtanh.pop %v4470
    %v4599 = vtanh.pop %v4471
    %v4600 = vtanh.pop %v4472
    %v4601 = vtanh.pop %v4473
    %v4602 = vtanh.pop %v4474
    %v4603 = vtanh.pop %v4475
    %v4604 = vtanh.pop %v4476
    %v4605 = vtanh.pop %v4477
    %v4606 = vtanh.pop %v4478
    %v4607 = vtanh.pop %v4479
    %v4608 = vtanh.pop %v4480
    %v4609 = vtanh.pop %v4481
    %v4610 = vtanh.pop %v4482
    %v4611 = vtanh.pop %v4483
    %v4612 = vadd.f32 %v4484, 1.0
    %v4613 = vadd.f32 %v4485, 1.0
    %v4614 = vadd.f32 %v4486, 1.0
    %v4615 = vadd.f32 %v4487, 1.0
    %v4616 = vadd.f32 %v4488, 1.0
    %v4617 = vadd.f32 %v4489, 1.0
    %v4618 = vadd.f32 %v4490, 1.0
    %v4619 = vadd.f32 %v4491, 1.0
    %v4620 = vadd.f32 %v4492, 1.0
    %v4621 = vadd.f32 %v4493, 1.0
    %v4622 = vadd.f32 %v4494, 1.0
    %v4623 = vadd.f32 %v4495, 1.0
    %v4624 = vadd.f32 %v4496, 1.0
    %v4625 = vadd.f32 %v4497, 1.0
    %v4626 = vadd.f32 %v4498, 1.0
    %v4627 = vadd.f32 %v4499, 1.0
    %v4628 = vadd.f32 %v4500, 1.0
    %v4629 = vadd.f32 %v4501, 1.0
    %v4630 = vadd.f32 %v4502, 1.0
    %v4631 = vadd.f32 %v4503, 1.0
    %v4632 = vadd.f32 %v4504, 1.0
    %v4633 = vadd.f32 %v4505, 1.0
    %v4634 = vadd.f32 %v4506, 1.0
    %v4635 = vadd.f32 %v4507, 1.0
    %v4636 = vadd.f32 %v4508, 1.0
    %v4637 = vadd.f32 %v4509, 1.0
    %v4638 = vadd.f32 %v4510, 1.0
    %v4639 = vadd.f32 %v4511, 1.0
    %v4640 = vadd.f32 %v4512, 1.0
    %v4641 = vadd.f32 %v4513, 1.0
    %v4642 = vadd.f32 %v4514, 1.0
    %v4643 = vadd.f32 %v4515, 1.0
    %v4644 = vadd.f32 %v4516, 1.0
    %v4645 = vadd.f32 %v4517, 1.0
    %v4646 = vadd.f32 %v4518, 1.0
    %v4647 = vadd.f32 %v4519, 1.0
    %v4648 = vadd.f32 %v4520, 1.0
    %v4649 = vadd.f32 %v4521, 1.0
    %v4650 = vadd.f32 %v4522, 1.0
    %v4651 = vadd.f32 %v4523, 1.0
    %v4652 = vadd.f32 %v4524, 1.0
    %v4653 = vadd.f32 %v4525, 1.0
    %v4654 = vadd.f32 %v4526, 1.0
    %v4655 = vadd.f32 %v4527, 1.0
    %v4656 = vadd.f32 %v4528, 1.0
    %v4657 = vadd.f32 %v4529, 1.0
    %v4658 = vadd.f32 %v4530, 1.0
    %v4659 = vadd.f32 %v4531, 1.0
    %v4660 = vadd.f32 %v4532, 1.0
    %v4661 = vadd.f32 %v4533, 1.0
    %v4662 = vadd.f32 %v4534, 1.0
    %v4663 = vadd.f32 %v4535, 1.0
    %v4664 = vadd.f32 %v4536, 1.0
    %v4665 = vadd.f32 %v4537, 1.0
    %v4666 = vadd.f32 %v4538, 1.0
    %v4667 = vadd.f32 %v4539, 1.0
    %v4668 = vadd.f32 %v4540, 1.0
    %v4669 = vadd.f32 %v4541, 1.0
    %v4670 = vadd.f32 %v4542, 1.0
    %v4671 = vadd.f32 %v4543, 1.0
    %v4672 = vadd.f32 %v4544, 1.0
    %v4673 = vadd.f32 %v4545, 1.0
    %v4674 = vadd.f32 %v4546, 1.0
    %v4675 = vadd.f32 %v4547, 1.0
    %v4676 = vadd.f32 %v4548, 1.0
    %v4677 = vadd.f32 %v4549, 1.0
    %v4678 = vadd.f32 %v4550, 1.0
    %v4679 = vadd.f32 %v4551, 1.0
    %v4680 = vadd.f32 %v4552, 1.0
    %v4681 = vadd.f32 %v4553, 1.0
    %v4682 = vadd.f32 %v4554, 1.0
    %v4683 = vadd.f32 %v4555, 1.0
    %v4684 = vadd.f32 %v4556, 1.0
    %v4685 = vadd.f32 %v4557, 1.0
    %v4686 = vadd.f32 %v4558, 1.0
    %v4687 = vadd.f32 %v4559, 1.0
    %v4688 = vadd.f32 %v4560, 1.0
    %v4689 = vadd.f32 %v4561, 1.0
    %v4690 = vadd.f32 %v4562, 1.0
    %v4691 = vadd.f32 %v4563, 1.0
    %v4692 = vadd.f32 %v4564, 1.0
    %v4693 = vadd.f32 %v4565, 1.0
    %v4694 = vadd.f32 %v4566, 1.0
    %v4695 = vadd.f32 %v4567, 1.0
    %v4696 = vadd.f32 %v4568, 1.0
    %v4697 = vadd.f32 %v4569, 1.0
    %v4698 = vadd.f32 %v4570, 1.0
    %v4699 = vadd.f32 %v4571, 1.0
    %v4700 = vadd.f32 %v4572, 1.0
    %v4701 = vadd.f32 %v4573, 1.0
    %v4702 = vadd.f32 %v4574, 1.0
    %v4703 = vadd.f32 %v4575, 1.0
    %v4704 = vadd.f32 %v4576, 1.0
    %v4705 = vadd.f32 %v4577, 1.0
    %v4706 = vadd.f32 %v4578, 1.0
    %v4707 = vadd.f32 %v4579, 1.0
    %v4708 = vadd.f32 %v4580, 1.0
    %v4709 = vadd.f32 %v4581, 1.0
    %v4710 = vadd.f32 %v4582, 1.0
    %v4711 = vadd.f32 %v4583, 1.0
    %v4712 = vadd.f32 %v4584, 1.0
    %v4713 = vadd.f32 %v4585, 1.0
    %v4714 = vadd.f32 %v4586, 1.0
    %v4715 = vadd.f32 %v4587, 1.0
    %v4716 = vadd.f32 %v4588, 1.0
    %v4717 = vadd.f32 %v4589, 1.0
    %v4718 = vadd.f32 %v4590, 1.0
    %v4719 = vadd.f32 %v4591, 1.0
    %v4720 = vadd.f32 %v4592, 1.0
    %v4721 = vadd.f32 %v4593, 1.0
    %v4722 = vadd.f32 %v4594, 1.0
    %v4723 = vadd.f32 %v4595, 1.0
    %v4724 = vadd.f32 %v4596, 1.0
    %v4725 = vadd.f32 %v4597, 1.0
    %v4726 = vadd.f32 %v4598, 1.0
    %v4727 = vadd.f32 %v4599, 1.0
    %v4728 = vadd.f32 %v4600, 1.0
    %v4729 = vadd.f32 %v4601, 1.0
    %v4730 = vadd.f32 %v4602, 1.0
    %v4731 = vadd.f32 %v4603, 1.0
    %v4732 = vadd.f32 %v4604, 1.0
    %v4733 = vadd.f32 %v4605, 1.0
    %v4734 = vadd.f32 %v4606, 1.0
    %v4735 = vadd.f32 %v4607, 1.0
    %v4736 = vadd.f32 %v4608, 1.0
    %v4737 = vadd.f32 %v4609, 1.0
    %v4738 = vadd.f32 %v4610, 1.0
    %v4739 = vadd.f32 %v4611, 1.0
    %v4740 = vmul.f32 %v3716, %v4612
    %v4741 = vmul.f32 %v3717, %v4613
    %v4742 = vmul.f32 %v3718, %v4614
    %v4743 = vmul.f32 %v3719, %v4615
    %v4744 = vmul.f32 %v3720, %v4616
    %v4745 = vmul.f32 %v3721, %v4617
    %v4746 = vmul.f32 %v3722, %v4618
    %v4747 = vmul.f32 %v3723, %v4619
    %v4748 = vmul.f32 %v3724, %v4620
    %v4749 = vmul.f32 %v3725, %v4621
    %v4750 = vmul.f32 %v3726, %v4622
    %v4751 = vmul.f32 %v3727, %v4623
    %v4752 = vmul.f32 %v3728, %v4624
    %v4753 = vmul.f32 %v3729, %v4625
    %v4754 = vmul.f32 %v3730, %v4626
    %v4755 = vmul.f32 %v3731, %v4627
    %v4756 = vmul.f32 %v3732, %v4628
    %v4757 = vmul.f32 %v3733, %v4629
    %v4758 = vmul.f32 %v3734, %v4630
    %v4759 = vmul.f32 %v3735, %v4631
    %v4760 = vmul.f32 %v3736, %v4632
    %v4761 = vmul.f32 %v3737, %v4633
    %v4762 = vmul.f32 %v3738, %v4634
    %v4763 = vmul.f32 %v3739, %v4635
    %v4764 = vmul.f32 %v3740, %v4636
    %v4765 = vmul.f32 %v3741, %v4637
    %v4766 = vmul.f32 %v3742, %v4638
    %v4767 = vmul.f32 %v3743, %v4639
    %v4768 = vmul.f32 %v3744, %v4640
    %v4769 = vmul.f32 %v3745, %v4641
    %v4770 = vmul.f32 %v3746, %v4642
    %v4771 = vmul.f32 %v3747, %v4643
    %v4772 = vmul.f32 %v3748, %v4644
    %v4773 = vmul.f32 %v3749, %v4645
    %v4774 = vmul.f32 %v3750, %v4646
    %v4775 = vmul.f32 %v3751, %v4647
    %v4776 = vmul.f32 %v3752, %v4648
    %v4777 = vmul.f32 %v3753, %v4649
    %v4778 = vmul.f32 %v3754, %v4650
    %v4779 = vmul.f32 %v3755, %v4651
    %v4780 = vmul.f32 %v3756, %v4652
    %v4781 = vmul.f32 %v3757, %v4653
    %v4782 = vmul.f32 %v3758, %v4654
    %v4783 = vmul.f32 %v3759, %v4655
    %v4784 = vmul.f32 %v3760, %v4656
    %v4785 = vmul.f32 %v3761, %v4657
    %v4786 = vmul.f32 %v3762, %v4658
    %v4787 = vmul.f32 %v3763, %v4659
    %v4788 = vmul.f32 %v3764, %v4660
    %v4789 = vmul.f32 %v3765, %v4661
    %v4790 = vmul.f32 %v3766, %v4662
    %v4791 = vmul.f32 %v3767, %v4663
    %v4792 = vmul.f32 %v3768, %v4664
    %v4793 = vmul.f32 %v3769, %v4665
    %v4794 = vmul.f32 %v3770, %v4666
    %v4795 = vmul.f32 %v3771, %v4667
    %v4796 = vmul.f32 %v3772, %v4668
    %v4797 = vmul.f32 %v3773, %v4669
    %v4798 = vmul.f32 %v3774, %v4670
    %v4799 = vmul.f32 %v3775, %v4671
    %v4800 = vmul.f32 %v3776, %v4672
    %v4801 = vmul.f32 %v3777, %v4673
    %v4802 = vmul.f32 %v3778, %v4674
    %v4803 = vmul.f32 %v3779, %v4675
    %v4804 = vmul.f32 %v3780, %v4676
    %v4805 = vmul.f32 %v3781, %v4677
    %v4806 = vmul.f32 %v3782, %v4678
    %v4807 = vmul.f32 %v3783, %v4679
    %v4808 = vmul.f32 %v3784, %v4680
    %v4809 = vmul.f32 %v3785, %v4681
    %v4810 = vmul.f32 %v3786, %v4682
    %v4811 = vmul.f32 %v3787, %v4683
    %v4812 = vmul.f32 %v3788, %v4684
    %v4813 = vmul.f32 %v3789, %v4685
    %v4814 = vmul.f32 %v3790, %v4686
    %v4815 = vmul.f32 %v3791, %v4687
    %v4816 = vmul.f32 %v3792, %v4688
    %v4817 = vmul.f32 %v3793, %v4689
    %v4818 = vmul.f32 %v3794, %v4690
    %v4819 = vmul.f32 %v3795, %v4691
    %v4820 = vmul.f32 %v3796, %v4692
    %v4821 = vmul.f32 %v3797, %v4693
    %v4822 = vmul.f32 %v3798, %v4694
    %v4823 = vmul.f32 %v3799, %v4695
    %v4824 = vmul.f32 %v3800, %v4696
    %v4825 = vmul.f32 %v3801, %v4697
    %v4826 = vmul.f32 %v3802, %v4698
    %v4827 = vmul.f32 %v3803, %v4699
    %v4828 = vmul.f32 %v3804, %v4700
    %v4829 = vmul.f32 %v3805, %v4701
    %v4830 = vmul.f32 %v3806, %v4702
    %v4831 = vmul.f32 %v3807, %v4703
    %v4832 = vmul.f32 %v3808, %v4704
    %v4833 = vmul.f32 %v3809, %v4705
    %v4834 = vmul.f32 %v3810, %v4706
    %v4835 = vmul.f32 %v3811, %v4707
    %v4836 = vmul.f32 %v3812, %v4708
    %v4837 = vmul.f32 %v3813, %v4709
    %v4838 = vmul.f32 %v3814, %v4710
    %v4839 = vmul.f32 %v3815, %v4711
    %v4840 = vmul.f32 %v3816, %v4712
    %v4841 = vmul.f32 %v3817, %v4713
    %v4842 = vmul.f32 %v3818, %v4714
    %v4843 = vmul.f32 %v3819, %v4715
    %v4844 = vmul.f32 %v3820, %v4716
    %v4845 = vmul.f32 %v3821, %v4717
    %v4846 = vmul.f32 %v3822, %v4718
    %v4847 = vmul.f32 %v3823, %v4719
    %v4848 = vmul.f32 %v3824, %v4720
    %v4849 = vmul.f32 %v3825, %v4721
    %v4850 = vmul.f32 %v3826, %v4722
    %v4851 = vmul.f32 %v3827, %v4723
    %v4852 = vmul.f32 %v3828, %v4724
    %v4853 = vmul.f32 %v3829, %v4725
    %v4854 = vmul.f32 %v3830, %v4726
    %v4855 = vmul.f32 %v3831, %v4727
    %v4856 = vmul.f32 %v3832, %v4728
    %v4857 = vmul.f32 %v3833, %v4729
    %v4858 = vmul.f32 %v3834, %v4730
    %v4859 = vmul.f32 %v3835, %v4731
    %v4860 = vmul.f32 %v3836, %v4732
    %v4861 = vmul.f32 %v3837, %v4733
    %v4862 = vmul.f32 %v3838, %v4734
    %v4863 = vmul.f32 %v3839, %v4735
    %v4864 = vmul.f32 %v3840, %v4736
    %v4865 = vmul.f32 %v3841, %v4737
    %v4866 = vmul.f32 %v3842, %v4738
    %v4867 = vmul.f32 %v3843, %v4739
    %v4868 = vld [vmem:[#allocation2] sm:$0xff]
    %v4869 = vld [vmem:[#allocation2 + $0x8] sm:$0xff]
    %v4870 = vld [vmem:[#allocation2 + $0x10] sm:$0xff]
    %v4871 = vld [vmem:[#allocation2 + $0x18] sm:$0xff]
    %v4872 = vld [vmem:[#allocation2 + $0x20] sm:$0xff]
    %v4873 = vld [vmem:[#allocation2 + $0x28] sm:$0xff]
    %v4874 = vld [vmem:[#allocation2 + $0x30] sm:$0xff]
    %v4875 = vld [vmem:[#allocation2 + $0x38] sm:$0xff]
    %v4876 = vld [vmem:[#allocation2 + $0x40] sm:$0xff]
    %v4877 = vld [vmem:[#allocation2 + $0x48] sm:$0xff]
    %v4878 = vld [vmem:[#allocation2 + $0x50] sm:$0xff]
    %v4879 = vld [vmem:[#allocation2 + $0x58] sm:$0xff]
    %v4880 = vld [vmem:[#allocation2 + $0x60] sm:$0xff]
    %v4881 = vld [vmem:[#allocation2 + $0x68] sm:$0xff]
    %v4882 = vld [vmem:[#allocation2 + $0x70] sm:$0xff]
    %v4883 = vld [vmem:[#allocation2 + $0x78] sm:$0xff]
    %v4884 = vld [vmem:[#allocation2 + $0x80] sm:$0xff]
    %v4885 = vld [vmem:[#allocation2 + $0x88] sm:$0xff]
    %v4886 = vld [vmem:[#allocation2 + $0x90] sm:$0xff]
    %v4887 = vld [vmem:[#allocation2 + $0x98] sm:$0xff]
    %v4888 = vld [vmem:[#allocation2 + $0xa0] sm:$0xff]
    %v4889 = vld [vmem:[#allocation2 + $0xa8] sm:$0xff]
    %v4890 = vld [vmem:[#allocation2 + $0xb0] sm:$0xff]
    %v4891 = vld [vmem:[#allocation2 + $0xb8] sm:$0xff]
    %v4892 = vld [vmem:[#allocation2 + $0xc0] sm:$0xff]
    %v4893 = vld [vmem:[#allocation2 + $0xc8] sm:$0xff]
    %v4894 = vld [vmem:[#allocation2 + $0xd0] sm:$0xff]
    %v4895 = vld [vmem:[#allocation2 + $0xd8] sm:$0xff]
    %v4896 = vld [vmem:[#allocation2 + $0xe0] sm:$0xff]
    %v4897 = vld [vmem:[#allocation2 + $0xe8] sm:$0xff]
    %v4898 = vld [vmem:[#allocation2 + $0xf0] sm:$0xff]
    %v4899 = vld [vmem:[#allocation2 + $0xf8] sm:$0xff]
    %v4900 = vld [vmem:[#allocation2 + $0x100] sm:$0xff]
    %v4901 = vld [vmem:[#allocation2 + $0x108] sm:$0xff]
    %v4902 = vld [vmem:[#allocation2 + $0x110] sm:$0xff]
    %v4903 = vld [vmem:[#allocation2 + $0x118] sm:$0xff]
    %v4904 = vld [vmem:[#allocation2 + $0x120] sm:$0xff]
    %v4905 = vld [vmem:[#allocation2 + $0x128] sm:$0xff]
    %v4906 = vld [vmem:[#allocation2 + $0x130] sm:$0xff]
    %v4907 = vld [vmem:[#allocation2 + $0x138] sm:$0xff]
    %v4908 = vld [vmem:[#allocation2 + $0x140] sm:$0xff]
    %v4909 = vld [vmem:[#allocation2 + $0x148] sm:$0xff]
    %v4910 = vld [vmem:[#allocation2 + $0x150] sm:$0xff]
    %v4911 = vld [vmem:[#allocation2 + $0x158] sm:$0xff]
    %v4912 = vld [vmem:[#allocation2 + $0x160] sm:$0xff]
    %v4913 = vld [vmem:[#allocation2 + $0x168] sm:$0xff]
    %v4914 = vld [vmem:[#allocation2 + $0x170] sm:$0xff]
    %v4915 = vld [vmem:[#allocation2 + $0x178] sm:$0xff]
    %v4916 = vld [vmem:[#allocation2 + $0x180] sm:$0xff]
    %v4917 = vld [vmem:[#allocation2 + $0x188] sm:$0xff]
    %v4918 = vld [vmem:[#allocation2 + $0x190] sm:$0xff]
    %v4919 = vld [vmem:[#allocation2 + $0x198] sm:$0xff]
    %v4920 = vld [vmem:[#allocation2 + $0x1a0] sm:$0xff]
    %v4921 = vld [vmem:[#allocation2 + $0x1a8] sm:$0xff]
    %v4922 = vld [vmem:[#allocation2 + $0x1b0] sm:$0xff]
    %v4923 = vld [vmem:[#allocation2 + $0x1b8] sm:$0xff]
    %v4924 = vld [vmem:[#allocation2 + $0x1c0] sm:$0xff]
    %v4925 = vld [vmem:[#allocation2 + $0x1c8] sm:$0xff]
    %v4926 = vld [vmem:[#allocation2 + $0x1d0] sm:$0xff]
    %v4927 = vld [vmem:[#allocation2 + $0x1d8] sm:$0xff]
    %v4928 = vld [vmem:[#allocation2 + $0x1e0] sm:$0xff]
    %v4929 = vld [vmem:[#allocation2 + $0x1e8] sm:$0xff]
    %v4930 = vld [vmem:[#allocation2 + $0x1f0] sm:$0xff]
    %v4931 = vld [vmem:[#allocation2 + $0x1f8] sm:$0xff]
    %v4932 = vpack.c.bf16 %v4742, %v4740
    %v4933 = vpack.c.bf16 %v4743, %v4741
    %v4934 = vpack.c.bf16 %v4746, %v4744
    %v4935 = vpack.c.bf16 %v4747, %v4745
    %v4936 = vpack.c.bf16 %v4750, %v4748
    %v4937 = vpack.c.bf16 %v4751, %v4749
    %v4938 = vpack.c.bf16 %v4754, %v4752
    %v4939 = vpack.c.bf16 %v4755, %v4753
    %v4940 = vpack.c.bf16 %v4758, %v4756
    %v4941 = vpack.c.bf16 %v4759, %v4757
    %v4942 = vpack.c.bf16 %v4762, %v4760
    %v4943 = vpack.c.bf16 %v4763, %v4761
    %v4944 = vpack.c.bf16 %v4766, %v4764
    %v4945 = vpack.c.bf16 %v4767, %v4765
    %v4946 = vpack.c.bf16 %v4770, %v4768
    %v4947 = vpack.c.bf16 %v4771, %v4769
    %v4948 = vpack.c.bf16 %v4774, %v4772
    %v4949 = vpack.c.bf16 %v4775, %v4773
    %v4950 = vpack.c.bf16 %v4778, %v4776
    %v4951 = vpack.c.bf16 %v4779, %v4777
    %v4952 = vpack.c.bf16 %v4782, %v4780
    %v4953 = vpack.c.bf16 %v4783, %v4781
    %v4954 = vpack.c.bf16 %v4786, %v4784
    %v4955 = vpack.c.bf16 %v4787, %v4785
    %v4956 = vpack.c.bf16 %v4790, %v4788
    %v4957 = vpack.c.bf16 %v4791, %v4789
    %v4958 = vpack.c.bf16 %v4794, %v4792
    %v4959 = vpack.c.bf16 %v4795, %v4793
    %v4960 = vpack.c.bf16 %v4798, %v4796
    %v4961 = vpack.c.bf16 %v4799, %v4797
    %v4962 = vpack.c.bf16 %v4802, %v4800
    %v4963 = vpack.c.bf16 %v4803, %v4801
    %v4964 = vpack.c.bf16 %v4806, %v4804
    %v4965 = vpack.c.bf16 %v4807, %v4805
    %v4966 = vpack.c.bf16 %v4810, %v4808
    %v4967 = vpack.c.bf16 %v4811, %v4809
    %v4968 = vpack.c.bf16 %v4814, %v4812
    %v4969 = vpack.c.bf16 %v4815, %v4813
    %v4970 = vpack.c.bf16 %v4818, %v4816
    %v4971 = vpack.c.bf16 %v4819, %v4817
    %v4972 = vpack.c.bf16 %v4822, %v4820
    %v4973 = vpack.c.bf16 %v4823, %v4821
    %v4974 = vpack.c.bf16 %v4826, %v4824
    %v4975 = vpack.c.bf16 %v4827, %v4825
    %v4976 = vpack.c.bf16 %v4830, %v4828
    %v4977 = vpack.c.bf16 %v4831, %v4829
    %v4978 = vpack.c.bf16 %v4834, %v4832
    %v4979 = vpack.c.bf16 %v4835, %v4833
    %v4980 = vpack.c.bf16 %v4838, %v4836
    %v4981 = vpack.c.bf16 %v4839, %v4837
    %v4982 = vpack.c.bf16 %v4842, %v4840
    %v4983 = vpack.c.bf16 %v4843, %v4841
    %v4984 = vpack.c.bf16 %v4846, %v4844
    %v4985 = vpack.c.bf16 %v4847, %v4845
    %v4986 = vpack.c.bf16 %v4850, %v4848
    %v4987 = vpack.c.bf16 %v4851, %v4849
    %v4988 = vpack.c.bf16 %v4854, %v4852
    %v4989 = vpack.c.bf16 %v4855, %v4853
    %v4990 = vpack.c.bf16 %v4858, %v4856
    %v4991 = vpack.c.bf16 %v4859, %v4857
    %v4992 = vpack.c.bf16 %v4862, %v4860
    %v4993 = vpack.c.bf16 %v4863, %v4861
    %v4994 = vpack.c.bf16 %v4866, %v4864
    %v4995 = vpack.c.bf16 %v4867, %v4865
    %v4996 = vld [vmem:[#allocation11] sm:$0xf]
    %v4997 = vld [vmem:[#allocation11 + $0x4] sm:$0xf]
    %v4998 = vld [vmem:[#allocation11 + $0x8] sm:$0xf]
    %v4999 = vld [vmem:[#allocation11 + $0xc] sm:$0xf]
    %v5000 = vld [vmem:[#allocation11 + $0x10] sm:$0xf]
    %v5001 = vld [vmem:[#allocation11 + $0x14] sm:$0xf]
    %v5002 = vld [vmem:[#allocation11 + $0x18] sm:$0xf]
    %v5003 = vld [vmem:[#allocation11 + $0x1c] sm:$0xf]
    %v5004 = vld [vmem:[#allocation11 + $0x20] sm:$0xf]
    %v5005 = vld [vmem:[#allocation11 + $0x24] sm:$0xf]
    %v5006 = vld [vmem:[#allocation11 + $0x28] sm:$0xf]
    %v5007 = vld [vmem:[#allocation11 + $0x2c] sm:$0xf]
    %v5008 = vld [vmem:[#allocation11 + $0x30] sm:$0xf]
    %v5009 = vld [vmem:[#allocation11 + $0x34] sm:$0xf]
    %v5010 = vld [vmem:[#allocation11 + $0x38] sm:$0xf]
    %v5011 = vld [vmem:[#allocation11 + $0x3c] sm:$0xf]
    %v5012 = vld [vmem:[#allocation11 + $0x40] sm:$0xf]
    %v5013 = vld [vmem:[#allocation11 + $0x44] sm:$0xf]
    %v5014 = vld [vmem:[#allocation11 + $0x48] sm:$0xf]
    %v5015 = vld [vmem:[#allocation11 + $0x4c] sm:$0xf]
    %v5016 = vld [vmem:[#allocation11 + $0x50] sm:$0xf]
    %v5017 = vld [vmem:[#allocation11 + $0x54] sm:$0xf]
    %v5018 = vld [vmem:[#allocation11 + $0x58] sm:$0xf]
    %v5019 = vld [vmem:[#allocation11 + $0x5c] sm:$0xf]
    %v5020 = vld [vmem:[#allocation11 + $0x60] sm:$0xf]
    %v5021 = vld [vmem:[#allocation11 + $0x64] sm:$0xf]
    %v5022 = vld [vmem:[#allocation11 + $0x68] sm:$0xf]
    %v5023 = vld [vmem:[#allocation11 + $0x6c] sm:$0xf]
    %v5024 = vld [vmem:[#allocation11 + $0x70] sm:$0xf]
    %v5025 = vld [vmem:[#allocation11 + $0x74] sm:$0xf]
    %v5026 = vld [vmem:[#allocation11 + $0x78] sm:$0xf]
    %v5027 = vld [vmem:[#allocation11 + $0x7c] sm:$0xf]
    %v5060 = vunpack.c.l.b16 %v4996
    %v5061 = vunpack.c.l.b16 %v4997
    %v5062 = vunpack.c.l.b16 %v4998
    %v5063 = vunpack.c.l.b16 %v4999
    %v5064 = vunpack.c.l.b16 %v5000
    %v5065 = vunpack.c.l.b16 %v5001
    %v5066 = vunpack.c.l.b16 %v5002
    %v5067 = vunpack.c.l.b16 %v5003
    %v5068 = vunpack.c.l.b16 %v5004
    %v5069 = vunpack.c.l.b16 %v5005
    %v5070 = vunpack.c.l.b16 %v5006
    %v5071 = vunpack.c.l.b16 %v5007
    %v5072 = vunpack.c.l.b16 %v5008
    %v5073 = vunpack.c.l.b16 %v5009
    %v5074 = vunpack.c.l.b16 %v5010
    %v5075 = vunpack.c.l.b16 %v5011
    %v5076 = vunpack.c.l.b16 %v5012
    %v5077 = vunpack.c.l.b16 %v5013
    %v5078 = vunpack.c.l.b16 %v5014
    %v5079 = vunpack.c.l.b16 %v5015
    %v5080 = vunpack.c.l.b16 %v5016
    %v5081 = vunpack.c.l.b16 %v5017
    %v5082 = vunpack.c.l.b16 %v5018
    %v5083 = vunpack.c.l.b16 %v5019
    %v5084 = vunpack.c.l.b16 %v5020
    %v5085 = vunpack.c.l.b16 %v5021
    %v5086 = vunpack.c.l.b16 %v5022
    %v5087 = vunpack.c.l.b16 %v5023
    %v5088 = vunpack.c.l.b16 %v5024
    %v5089 = vunpack.c.l.b16 %v5025
    %v5090 = vunpack.c.l.b16 %v5026
    %v5091 = vunpack.c.l.b16 %v5027
    %v5092 = vpack.c.b16 %v5061, %v5060
    %v5093 = vpack.c.b16 %v5063, %v5062
    %v5094 = vpack.c.b16 %v5065, %v5064
    %v5095 = vpack.c.b16 %v5067, %v5066
    %v5096 = vpack.c.b16 %v5069, %v5068
    %v5097 = vpack.c.b16 %v5071, %v5070
    %v5098 = vpack.c.b16 %v5073, %v5072
    %v5099 = vpack.c.b16 %v5075, %v5074
    %v5100 = vpack.c.b16 %v5077, %v5076
    %v5101 = vpack.c.b16 %v5079, %v5078
    %v5102 = vpack.c.b16 %v5081, %v5080
    %v5103 = vpack.c.b16 %v5083, %v5082
    %v5104 = vpack.c.b16 %v5085, %v5084
    %v5105 = vpack.c.b16 %v5087, %v5086
    %v5106 = vpack.c.b16 %v5089, %v5088
    %v5107 = vpack.c.b16 %v5091, %v5090
    %5124 = vmatpush.bf16.msra.mxu0 %v5099
    %5125 = vmatpush.bf16.msra.mxu0 %v5098
    %5126 = vmatpush.bf16.msra.mxu0 %v5097
    %5127 = vmatpush.bf16.msra.mxu0 %v5096
    %5128 = vmatpush.bf16.msra.mxu0 %v5095
    %5129 = vmatpush.bf16.msra.mxu0 %v5094
    %5130 = vmatpush.bf16.msra.mxu0 %v5093
    %5131 = vmatpush.bf16.msra.mxu0 %v5092
    %5132 = vmatmul.bf16.gmra.mxu0 %v4932
    %v5133 = vpop.f32.mrf.mxu0
    %v5134 = vadd.f32 0.0, %v5133
    %v5135 = vpop.f32.mrf.mxu0
    %v5136 = vadd.f32 0.0, %v5135
    %5137 = vmatmul.bf16.gmra.mxu0 %v4934
    %v5138 = vpop.f32.mrf.mxu0
    %v5139 = vadd.f32 0.0, %v5138
    %v5140 = vpop.f32.mrf.mxu0
    %v5141 = vadd.f32 0.0, %v5140
    %5142 = vmatmul.bf16.gmra.mxu0 %v4936
    %v5143 = vpop.f32.mrf.mxu0
    %v5144 = vadd.f32 0.0, %v5143
    %v5145 = vpop.f32.mrf.mxu0
    %v5146 = vadd.f32 0.0, %v5145
    %5147 = vmatmul.bf16.gmra.mxu0 %v4938
    %v5148 = vpop.f32.mrf.mxu0
    %v5149 = vadd.f32 0.0, %v5148
    %v5150 = vpop.f32.mrf.mxu0
    %v5151 = vadd.f32 0.0, %v5150
    %5152 = vmatmul.bf16.gmra.mxu0 %v4940
    %v5153 = vpop.f32.mrf.mxu0
    %v5154 = vadd.f32 0.0, %v5153
    %v5155 = vpop.f32.mrf.mxu0
    %v5156 = vadd.f32 0.0, %v5155
    %5157 = vmatmul.bf16.gmra.mxu0 %v4942
    %v5158 = vpop.f32.mrf.mxu0
    %v5159 = vadd.f32 0.0, %v5158
    %v5160 = vpop.f32.mrf.mxu0
    %v5161 = vadd.f32 0.0, %v5160
    %5162 = vmatmul.bf16.gmra.mxu0 %v4944
    %v5163 = vpop.f32.mrf.mxu0
    %v5164 = vadd.f32 0.0, %v5163
    %v5165 = vpop.f32.mrf.mxu0
    %v5166 = vadd.f32 0.0, %v5165
    %5167 = vmatmul.bf16.gmra.mxu0 %v4946
    %v5168 = vpop.f32.mrf.mxu0
    %v5169 = vadd.f32 0.0, %v5168
    %v5170 = vpop.f32.mrf.mxu0
    %v5171 = vadd.f32 0.0, %v5170
    %5172 = vmatmul.bf16.gmra.mxu0 %v4948
    %v5173 = vpop.f32.mrf.mxu0
    %v5174 = vadd.f32 0.0, %v5173
    %v5175 = vpop.f32.mrf.mxu0
    %v5176 = vadd.f32 0.0, %v5175
    %5177 = vmatmul.bf16.gmra.mxu0 %v4950
    %v5178 = vpop.f32.mrf.mxu0
    %v5179 = vadd.f32 0.0, %v5178
    %v5180 = vpop.f32.mrf.mxu0
    %v5181 = vadd.f32 0.0, %v5180
    %5182 = vmatmul.bf16.gmra.mxu0 %v4952
    %v5183 = vpop.f32.mrf.mxu0
    %v5184 = vadd.f32 0.0, %v5183
    %v5185 = vpop.f32.mrf.mxu0
    %v5186 = vadd.f32 0.0, %v5185
    %5187 = vmatmul.bf16.gmra.mxu0 %v4954
    %v5188 = vpop.f32.mrf.mxu0
    %v5189 = vadd.f32 0.0, %v5188
    %v5190 = vpop.f32.mrf.mxu0
    %v5191 = vadd.f32 0.0, %v5190
    %5192 = vmatmul.bf16.gmra.mxu0 %v4956
    %v5193 = vpop.f32.mrf.mxu0
    %v5194 = vadd.f32 0.0, %v5193
    %v5195 = vpop.f32.mrf.mxu0
    %v5196 = vadd.f32 0.0, %v5195
    %5197 = vmatmul.bf16.gmra.mxu0 %v4958
    %v5198 = vpop.f32.mrf.mxu0
    %v5199 = vadd.f32 0.0, %v5198
    %v5200 = vpop.f32.mrf.mxu0
    %v5201 = vadd.f32 0.0, %v5200
    %5202 = vmatmul.bf16.gmra.mxu0 %v4960
    %v5203 = vpop.f32.mrf.mxu0
    %v5204 = vadd.f32 0.0, %v5203
    %v5205 = vpop.f32.mrf.mxu0
    %v5206 = vadd.f32 0.0, %v5205
    %5207 = vmatmul.bf16.gmra.mxu0 %v4962
    %v5208 = vpop.f32.mrf.mxu0
    %v5209 = vadd.f32 0.0, %v5208
    %v5210 = vpop.f32.mrf.mxu0
    %v5211 = vadd.f32 0.0, %v5210
    %5212 = vmatmul.bf16.gmra.mxu0 %v4964
    %v5213 = vpop.f32.mrf.mxu0
    %v5214 = vadd.f32 0.0, %v5213
    %v5215 = vpop.f32.mrf.mxu0
    %v5216 = vadd.f32 0.0, %v5215
    %5217 = vmatmul.bf16.gmra.mxu0 %v4966
    %v5218 = vpop.f32.mrf.mxu0
    %v5219 = vadd.f32 0.0, %v5218
    %v5220 = vpop.f32.mrf.mxu0
    %v5221 = vadd.f32 0.0, %v5220
    %5222 = vmatmul.bf16.gmra.mxu0 %v4968
    %v5223 = vpop.f32.mrf.mxu0
    %v5224 = vadd.f32 0.0, %v5223
    %v5225 = vpop.f32.mrf.mxu0
    %v5226 = vadd.f32 0.0, %v5225
    %5227 = vmatmul.bf16.gmra.mxu0 %v4970
    %v5228 = vpop.f32.mrf.mxu0
    %v5229 = vadd.f32 0.0, %v5228
    %v5230 = vpop.f32.mrf.mxu0
    %v5231 = vadd.f32 0.0, %v5230
    %5232 = vmatmul.bf16.gmra.mxu0 %v4972
    %v5233 = vpop.f32.mrf.mxu0
    %v5234 = vadd.f32 0.0, %v5233
    %v5235 = vpop.f32.mrf.mxu0
    %v5236 = vadd.f32 0.0, %v5235
    %5237 = vmatmul.bf16.gmra.mxu0 %v4974
    %v5238 = vpop.f32.mrf.mxu0
    %v5239 = vadd.f32 0.0, %v5238
    %v5240 = vpop.f32.mrf.mxu0
    %v5241 = vadd.f32 0.0, %v5240
    %5242 = vmatmul.bf16.gmra.mxu0 %v4976
    %v5243 = vpop.f32.mrf.mxu0
    %v5244 = vadd.f32 0.0, %v5243
    %v5245 = vpop.f32.mrf.mxu0
    %v5246 = vadd.f32 0.0, %v5245
    %5247 = vmatmul.bf16.gmra.mxu0 %v4978
    %v5248 = vpop.f32.mrf.mxu0
    %v5249 = vadd.f32 0.0, %v5248
    %v5250 = vpop.f32.mrf.mxu0
    %v5251 = vadd.f32 0.0, %v5250
    %5252 = vmatmul.bf16.gmra.mxu0 %v4980
    %v5253 = vpop.f32.mrf.mxu0
    %v5254 = vadd.f32 0.0, %v5253
    %v5255 = vpop.f32.mrf.mxu0
    %v5256 = vadd.f32 0.0, %v5255
    %5257 = vmatmul.bf16.gmra.mxu0 %v4982
    %v5258 = vpop.f32.mrf.mxu0
    %v5259 = vadd.f32 0.0, %v5258
    %v5260 = vpop.f32.mrf.mxu0
    %v5261 = vadd.f32 0.0, %v5260
    %5262 = vmatmul.bf16.gmra.mxu0 %v4984
    %v5263 = vpop.f32.mrf.mxu0
    %v5264 = vadd.f32 0.0, %v5263
    %v5265 = vpop.f32.mrf.mxu0
    %v5266 = vadd.f32 0.0, %v5265
    %5267 = vmatmul.bf16.gmra.mxu0 %v4986
    %v5268 = vpop.f32.mrf.mxu0
    %v5269 = vadd.f32 0.0, %v5268
    %v5270 = vpop.f32.mrf.mxu0
    %v5271 = vadd.f32 0.0, %v5270
    %5272 = vmatmul.bf16.gmra.mxu0 %v4988
    %v5273 = vpop.f32.mrf.mxu0
    %v5274 = vadd.f32 0.0, %v5273
    %v5275 = vpop.f32.mrf.mxu0
    %v5276 = vadd.f32 0.0, %v5275
    %5277 = vmatmul.bf16.gmra.mxu0 %v4990
    %v5278 = vpop.f32.mrf.mxu0
    %v5279 = vadd.f32 0.0, %v5278
    %v5280 = vpop.f32.mrf.mxu0
    %v5281 = vadd.f32 0.0, %v5280
    %5282 = vmatmul.bf16.gmra.mxu0 %v4992
    %v5283 = vpop.f32.mrf.mxu0
    %v5284 = vadd.f32 0.0, %v5283
    %v5285 = vpop.f32.mrf.mxu0
    %v5286 = vadd.f32 0.0, %v5285
    %5287 = vmatmul.bf16.gmra.mxu0 %v4994
    %v5288 = vpop.f32.mrf.mxu0
    %v5289 = vadd.f32 0.0, %v5288
    %v5290 = vpop.f32.mrf.mxu0
    %v5291 = vadd.f32 0.0, %v5290
    %5292 = vdwg.mxu0
    %5293 = vmatpush.bf16.msra.mxu0 %v5107
    %5294 = vmatpush.bf16.msra.mxu0 %v5106
    %5295 = vmatpush.bf16.msra.mxu0 %v5105
    %5296 = vmatpush.bf16.msra.mxu0 %v5104
    %5297 = vmatpush.bf16.msra.mxu0 %v5103
    %5298 = vmatpush.bf16.msra.mxu0 %v5102
    %5299 = vmatpush.bf16.msra.mxu0 %v5101
    %5300 = vmatpush.bf16.msra.mxu0 %v5100
    %5301 = vmatmul.bf16.gmra.mxu0 %v4933
    %v5302 = vpop.f32.mrf.mxu0
    %v5303 = vadd.f32 %v5134, %v5302
    %v5304 = vpop.f32.mrf.mxu0
    %v5305 = vadd.f32 %v5136, %v5304
    %5306 = vmatmul.bf16.gmra.mxu0 %v4935
    %v5307 = vpop.f32.mrf.mxu0
    %v5308 = vadd.f32 %v5139, %v5307
    %v5309 = vpop.f32.mrf.mxu0
    %v5310 = vadd.f32 %v5141, %v5309
    %5311 = vmatmul.bf16.gmra.mxu0 %v4937
    %v5312 = vpop.f32.mrf.mxu0
    %v5313 = vadd.f32 %v5144, %v5312
    %v5314 = vpop.f32.mrf.mxu0
    %v5315 = vadd.f32 %v5146, %v5314
    %5316 = vmatmul.bf16.gmra.mxu0 %v4939
    %v5317 = vpop.f32.mrf.mxu0
    %v5318 = vadd.f32 %v5149, %v5317
    %v5319 = vpop.f32.mrf.mxu0
    %v5320 = vadd.f32 %v5151, %v5319
    %5321 = vmatmul.bf16.gmra.mxu0 %v4941
    %v5322 = vpop.f32.mrf.mxu0
    %v5323 = vadd.f32 %v5154, %v5322
    %v5324 = vpop.f32.mrf.mxu0
    %v5325 = vadd.f32 %v5156, %v5324
    %5326 = vmatmul.bf16.gmra.mxu0 %v4943
    %v5327 = vpop.f32.mrf.mxu0
    %v5328 = vadd.f32 %v5159, %v5327
    %v5329 = vpop.f32.mrf.mxu0
    %v5330 = vadd.f32 %v5161, %v5329
    %5331 = vmatmul.bf16.gmra.mxu0 %v4945
    %v5332 = vpop.f32.mrf.mxu0
    %v5333 = vadd.f32 %v5164, %v5332
    %v5334 = vpop.f32.mrf.mxu0
    %v5335 = vadd.f32 %v5166, %v5334
    %5336 = vmatmul.bf16.gmra.mxu0 %v4947
    %v5337 = vpop.f32.mrf.mxu0
    %v5338 = vadd.f32 %v5169, %v5337
    %v5339 = vpop.f32.mrf.mxu0
    %v5340 = vadd.f32 %v5171, %v5339
    %5341 = vmatmul.bf16.gmra.mxu0 %v4949
    %v5342 = vpop.f32.mrf.mxu0
    %v5343 = vadd.f32 %v5174, %v5342
    %v5344 = vpop.f32.mrf.mxu0
    %v5345 = vadd.f32 %v5176, %v5344
    %5346 = vmatmul.bf16.gmra.mxu0 %v4951
    %v5347 = vpop.f32.mrf.mxu0
    %v5348 = vadd.f32 %v5179, %v5347
    %v5349 = vpop.f32.mrf.mxu0
    %v5350 = vadd.f32 %v5181, %v5349
    %5351 = vmatmul.bf16.gmra.mxu0 %v4953
    %v5352 = vpop.f32.mrf.mxu0
    %v5353 = vadd.f32 %v5184, %v5352
    %v5354 = vpop.f32.mrf.mxu0
    %v5355 = vadd.f32 %v5186, %v5354
    %5356 = vmatmul.bf16.gmra.mxu0 %v4955
    %v5357 = vpop.f32.mrf.mxu0
    %v5358 = vadd.f32 %v5189, %v5357
    %v5359 = vpop.f32.mrf.mxu0
    %v5360 = vadd.f32 %v5191, %v5359
    %5361 = vmatmul.bf16.gmra.mxu0 %v4957
    %v5362 = vpop.f32.mrf.mxu0
    %v5363 = vadd.f32 %v5194, %v5362
    %v5364 = vpop.f32.mrf.mxu0
    %v5365 = vadd.f32 %v5196, %v5364
    %5366 = vmatmul.bf16.gmra.mxu0 %v4959
    %v5367 = vpop.f32.mrf.mxu0
    %v5368 = vadd.f32 %v5199, %v5367
    %v5369 = vpop.f32.mrf.mxu0
    %v5370 = vadd.f32 %v5201, %v5369
    %5371 = vmatmul.bf16.gmra.mxu0 %v4961
    %v5372 = vpop.f32.mrf.mxu0
    %v5373 = vadd.f32 %v5204, %v5372
    %v5374 = vpop.f32.mrf.mxu0
    %v5375 = vadd.f32 %v5206, %v5374
    %5376 = vmatmul.bf16.gmra.mxu0 %v4963
    %v5377 = vpop.f32.mrf.mxu0
    %v5378 = vadd.f32 %v5209, %v5377
    %v5379 = vpop.f32.mrf.mxu0
    %v5380 = vadd.f32 %v5211, %v5379
    %5381 = vmatmul.bf16.gmra.mxu0 %v4965
    %v5382 = vpop.f32.mrf.mxu0
    %v5383 = vadd.f32 %v5214, %v5382
    %v5384 = vpop.f32.mrf.mxu0
    %v5385 = vadd.f32 %v5216, %v5384
    %5386 = vmatmul.bf16.gmra.mxu0 %v4967
    %v5387 = vpop.f32.mrf.mxu0
    %v5388 = vadd.f32 %v5219, %v5387
    %v5389 = vpop.f32.mrf.mxu0
    %v5390 = vadd.f32 %v5221, %v5389
    %5391 = vmatmul.bf16.gmra.mxu0 %v4969
    %v5392 = vpop.f32.mrf.mxu0
    %v5393 = vadd.f32 %v5224, %v5392
    %v5394 = vpop.f32.mrf.mxu0
    %v5395 = vadd.f32 %v5226, %v5394
    %5396 = vmatmul.bf16.gmra.mxu0 %v4971
    %v5397 = vpop.f32.mrf.mxu0
    %v5398 = vadd.f32 %v5229, %v5397
    %v5399 = vpop.f32.mrf.mxu0
    %v5400 = vadd.f32 %v5231, %v5399
    %5401 = vmatmul.bf16.gmra.mxu0 %v4973
    %v5402 = vpop.f32.mrf.mxu0
    %v5403 = vadd.f32 %v5234, %v5402
    %v5404 = vpop.f32.mrf.mxu0
    %v5405 = vadd.f32 %v5236, %v5404
    %5406 = vmatmul.bf16.gmra.mxu0 %v4975
    %v5407 = vpop.f32.mrf.mxu0
    %v5408 = vadd.f32 %v5239, %v5407
    %v5409 = vpop.f32.mrf.mxu0
    %v5410 = vadd.f32 %v5241, %v5409
    %5411 = vmatmul.bf16.gmra.mxu0 %v4977
    %v5412 = vpop.f32.mrf.mxu0
    %v5413 = vadd.f32 %v5244, %v5412
    %v5414 = vpop.f32.mrf.mxu0
    %v5415 = vadd.f32 %v5246, %v5414
    %5416 = vmatmul.bf16.gmra.mxu0 %v4979
    %v5417 = vpop.f32.mrf.mxu0
    %v5418 = vadd.f32 %v5249, %v5417
    %v5419 = vpop.f32.mrf.mxu0
    %v5420 = vadd.f32 %v5251, %v5419
    %5421 = vmatmul.bf16.gmra.mxu0 %v4981
    %v5422 = vpop.f32.mrf.mxu0
    %v5423 = vadd.f32 %v5254, %v5422
    %v5424 = vpop.f32.mrf.mxu0
    %v5425 = vadd.f32 %v5256, %v5424
    %5426 = vmatmul.bf16.gmra.mxu0 %v4983
    %v5427 = vpop.f32.mrf.mxu0
    %v5428 = vadd.f32 %v5259, %v5427
    %v5429 = vpop.f32.mrf.mxu0
    %v5430 = vadd.f32 %v5261, %v5429
    %5431 = vmatmul.bf16.gmra.mxu0 %v4985
    %v5432 = vpop.f32.mrf.mxu0
    %v5433 = vadd.f32 %v5264, %v5432
    %v5434 = vpop.f32.mrf.mxu0
    %v5435 = vadd.f32 %v5266, %v5434
    %5436 = vmatmul.bf16.gmra.mxu0 %v4987
    %v5437 = vpop.f32.mrf.mxu0
    %v5438 = vadd.f32 %v5269, %v5437
    %v5439 = vpop.f32.mrf.mxu0
    %v5440 = vadd.f32 %v5271, %v5439
    %5441 = vmatmul.bf16.gmra.mxu0 %v4989
    %v5442 = vpop.f32.mrf.mxu0
    %v5443 = vadd.f32 %v5274, %v5442
    %v5444 = vpop.f32.mrf.mxu0
    %v5445 = vadd.f32 %v5276, %v5444
    %5446 = vmatmul.bf16.gmra.mxu0 %v4991
    %v5447 = vpop.f32.mrf.mxu0
    %v5448 = vadd.f32 %v5279, %v5447
    %v5449 = vpop.f32.mrf.mxu0
    %v5450 = vadd.f32 %v5281, %v5449
    %5451 = vmatmul.bf16.gmra.mxu0 %v4993
    %v5452 = vpop.f32.mrf.mxu0
    %v5453 = vadd.f32 %v5284, %v5452
    %v5454 = vpop.f32.mrf.mxu0
    %v5455 = vadd.f32 %v5286, %v5454
    %5456 = vmatmul.bf16.gmra.mxu0 %v4995
    %v5457 = vpop.f32.mrf.mxu0
    %v5458 = vadd.f32 %v5289, %v5457
    %v5459 = vpop.f32.mrf.mxu0
    %v5460 = vadd.f32 %v5291, %v5459
    %5461 = vdwg.mxu0
    %v5462 = vadd.f32 %v4868, %v5303
    %v5463 = vadd.f32 %v4869, %v5305
    %v5464 = vadd.f32 %v4870, %v5308
    %v5465 = vadd.f32 %v4871, %v5310
    %v5466 = vadd.f32 %v4872, %v5313
    %v5467 = vadd.f32 %v4873, %v5315
    %v5468 = vadd.f32 %v4874, %v5318
    %v5469 = vadd.f32 %v4875, %v5320
    %v5470 = vadd.f32 %v4876, %v5323
    %v5471 = vadd.f32 %v4877, %v5325
    %v5472 = vadd.f32 %v4878, %v5328
    %v5473 = vadd.f32 %v4879, %v5330
    %v5474 = vadd.f32 %v4880, %v5333
    %v5475 = vadd.f32 %v4881, %v5335
    %v5476 = vadd.f32 %v4882, %v5338
    %v5477 = vadd.f32 %v4883, %v5340
    %v5478 = vadd.f32 %v4884, %v5343
    %v5479 = vadd.f32 %v4885, %v5345
    %v5480 = vadd.f32 %v4886, %v5348
    %v5481 = vadd.f32 %v4887, %v5350
    %v5482 = vadd.f32 %v4888, %v5353
    %v5483 = vadd.f32 %v4889, %v5355
    %v5484 = vadd.f32 %v4890, %v5358
    %v5485 = vadd.f32 %v4891, %v5360
    %v5486 = vadd.f32 %v4892, %v5363
    %v5487 = vadd.f32 %v4893, %v5365
    %v5488 = vadd.f32 %v4894, %v5368
    %v5489 = vadd.f32 %v4895, %v5370
    %v5490 = vadd.f32 %v4896, %v5373
    %v5491 = vadd.f32 %v4897, %v5375
    %v5492 = vadd.f32 %v4898, %v5378
    %v5493 = vadd.f32 %v4899, %v5380
    %v5494 = vadd.f32 %v4900, %v5383
    %v5495 = vadd.f32 %v4901, %v5385
    %v5496 = vadd.f32 %v4902, %v5388
    %v5497 = vadd.f32 %v4903, %v5390
    %v5498 = vadd.f32 %v4904, %v5393
    %v5499 = vadd.f32 %v4905, %v5395
    %v5500 = vadd.f32 %v4906, %v5398
    %v5501 = vadd.f32 %v4907, %v5400
    %v5502 = vadd.f32 %v4908, %v5403
    %v5503 = vadd.f32 %v4909, %v5405
    %v5504 = vadd.f32 %v4910, %v5408
    %v5505 = vadd.f32 %v4911, %v5410
    %v5506 = vadd.f32 %v4912, %v5413
    %v5507 = vadd.f32 %v4913, %v5415
    %v5508 = vadd.f32 %v4914, %v5418
    %v5509 = vadd.f32 %v4915, %v5420
    %v5510 = vadd.f32 %v4916, %v5423
    %v5511 = vadd.f32 %v4917, %v5425
    %v5512 = vadd.f32 %v4918, %v5428
    %v5513 = vadd.f32 %v4919, %v5430
    %v5514 = vadd.f32 %v4920, %v5433
    %v5515 = vadd.f32 %v4921, %v5435
    %v5516 = vadd.f32 %v4922, %v5438
    %v5517 = vadd.f32 %v4923, %v5440
    %v5518 = vadd.f32 %v4924, %v5443
    %v5519 = vadd.f32 %v4925, %v5445
    %v5520 = vadd.f32 %v4926, %v5448
    %v5521 = vadd.f32 %v4927, %v5450
    %v5522 = vadd.f32 %v4928, %v5453
    %v5523 = vadd.f32 %v4929, %v5455
    %v5524 = vadd.f32 %v4930, %v5458
    %v5525 = vadd.f32 %v4931, %v5460
    %5526 = vst [vmem:[#allocation2] sm:$0xff] %v5462
    %5527 = vst [vmem:[#allocation2 + $0x8] sm:$0xff] %v5463
    %5528 = vst [vmem:[#allocation2 + $0x10] sm:$0xff] %v5464
    %5529 = vst [vmem:[#allocation2 + $0x18] sm:$0xff] %v5465
    %5530 = vst [vmem:[#allocation2 + $0x20] sm:$0xff] %v5466
    %5531 = vst [vmem:[#allocation2 + $0x28] sm:$0xff] %v5467
    %5532 = vst [vmem:[#allocation2 + $0x30] sm:$0xff] %v5468
    %5533 = vst [vmem:[#allocation2 + $0x38] sm:$0xff] %v5469
    %5534 = vst [vmem:[#allocation2 + $0x40] sm:$0xff] %v5470
    %5535 = vst [vmem:[#allocation2 + $0x48] sm:$0xff] %v5471
    %5536 = vst [vmem:[#allocation2 + $0x50] sm:$0xff] %v5472
    %5537 = vst [vmem:[#allocation2 + $0x58] sm:$0xff] %v5473
    %5538 = vst [vmem:[#allocation2 + $0x60] sm:$0xff] %v5474
    %5539 = vst [vmem:[#allocation2 + $0x68] sm:$0xff] %v5475
    %5540 = vst [vmem:[#allocation2 + $0x70] sm:$0xff] %v5476
    %5541 = vst [vmem:[#allocation2 + $0x78] sm:$0xff] %v5477
    %5542 = vst [vmem:[#allocation2 + $0x80] sm:$0xff] %v5478
    %5543 = vst [vmem:[#allocation2 + $0x88] sm:$0xff] %v5479
    %5544 = vst [vmem:[#allocation2 + $0x90] sm:$0xff] %v5480
    %5545 = vst [vmem:[#allocation2 + $0x98] sm:$0xff] %v5481
    %5546 = vst [vmem:[#allocation2 + $0xa0] sm:$0xff] %v5482
    %5547 = vst [vmem:[#allocation2 + $0xa8] sm:$0xff] %v5483
    %5548 = vst [vmem:[#allocation2 + $0xb0] sm:$0xff] %v5484
    %5549 = vst [vmem:[#allocation2 + $0xb8] sm:$0xff] %v5485
    %5550 = vst [vmem:[#allocation2 + $0xc0] sm:$0xff] %v5486
    %5551 = vst [vmem:[#allocation2 + $0xc8] sm:$0xff] %v5487
    %5552 = vst [vmem:[#allocation2 + $0xd0] sm:$0xff] %v5488
    %5553 = vst [vmem:[#allocation2 + $0xd8] sm:$0xff] %v5489
    %5554 = vst [vmem:[#allocation2 + $0xe0] sm:$0xff] %v5490
    %5555 = vst [vmem:[#allocation2 + $0xe8] sm:$0xff] %v5491
    %5556 = vst [vmem:[#allocation2 + $0xf0] sm:$0xff] %v5492
    %5557 = vst [vmem:[#allocation2 + $0xf8] sm:$0xff] %v5493
    %5558 = vst [vmem:[#allocation2 + $0x100] sm:$0xff] %v5494
    %5559 = vst [vmem:[#allocation2 + $0x108] sm:$0xff] %v5495
    %5560 = vst [vmem:[#allocation2 + $0x110] sm:$0xff] %v5496
    %5561 = vst [vmem:[#allocation2 + $0x118] sm:$0xff] %v5497
    %5562 = vst [vmem:[#allocation2 + $0x120] sm:$0xff] %v5498
    %5563 = vst [vmem:[#allocation2 + $0x128] sm:$0xff] %v5499
    %5564 = vst [vmem:[#allocation2 + $0x130] sm:$0xff] %v5500
    %5565 = vst [vmem:[#allocation2 + $0x138] sm:$0xff] %v5501
    %5566 = vst [vmem:[#allocation2 + $0x140] sm:$0xff] %v5502
    %5567 = vst [vmem:[#allocation2 + $0x148] sm:$0xff] %v5503
    %5568 = vst [vmem:[#allocation2 + $0x150] sm:$0xff] %v5504
    %5569 = vst [vmem:[#allocation2 + $0x158] sm:$0xff] %v5505
    %5570 = vst [vmem:[#allocation2 + $0x160] sm:$0xff] %v5506
    %5571 = vst [vmem:[#allocation2 + $0x168] sm:$0xff] %v5507
    %5572 = vst [vmem:[#allocation2 + $0x170] sm:$0xff] %v5508
    %5573 = vst [vmem:[#allocation2 + $0x178] sm:$0xff] %v5509
    %5574 = vst [vmem:[#allocation2 + $0x180] sm:$0xff] %v5510
    %5575 = vst [vmem:[#allocation2 + $0x188] sm:$0xff] %v5511
    %5576 = vst [vmem:[#allocation2 + $0x190] sm:$0xff] %v5512
    %5577 = vst [vmem:[#allocation2 + $0x198] sm:$0xff] %v5513
    %5578 = vst [vmem:[#allocation2 + $0x1a0] sm:$0xff] %v5514
    %5579 = vst [vmem:[#allocation2 + $0x1a8] sm:$0xff] %v5515
    %5580 = vst [vmem:[#allocation2 + $0x1b0] sm:$0xff] %v5516
    %5581 = vst [vmem:[#allocation2 + $0x1b8] sm:$0xff] %v5517
    %5582 = vst [vmem:[#allocation2 + $0x1c0] sm:$0xff] %v5518
    %5583 = vst [vmem:[#allocation2 + $0x1c8] sm:$0xff] %v5519
    %5584 = vst [vmem:[#allocation2 + $0x1d0] sm:$0xff] %v5520
    %5585 = vst [vmem:[#allocation2 + $0x1d8] sm:$0xff] %v5521
    %5586 = vst [vmem:[#allocation2 + $0x1e0] sm:$0xff] %v5522
    %5587 = vst [vmem:[#allocation2 + $0x1e8] sm:$0xff] %v5523
    %5588 = vst [vmem:[#allocation2 + $0x1f0] sm:$0xff] %v5524
    %5589 = vst [vmem:[#allocation2 + $0x1f8] sm:$0xff] %v5525
    %v5590 = vld [vmem:[#allocation9 + $0x8] sm:$0xff]
    %v5591 = vld [vmem:[#allocation9 + $0x18] sm:$0xff]
    %v5592 = vld [vmem:[#allocation9 + $0x28] sm:$0xff]
    %v5593 = vld [vmem:[#allocation9 + $0x38] sm:$0xff]
    %v5594 = vld [vmem:[#allocation9 + $0x48] sm:$0xff]
    %v5595 = vld [vmem:[#allocation9 + $0x58] sm:$0xff]
    %v5596 = vld [vmem:[#allocation9 + $0x68] sm:$0xff]
    %v5597 = vld [vmem:[#allocation9 + $0x78] sm:$0xff]
    %v5598 = vld [vmem:[#allocation9 + $0x88] sm:$0xff]
    %v5599 = vld [vmem:[#allocation9 + $0x98] sm:$0xff]
    %v5600 = vld [vmem:[#allocation9 + $0xa8] sm:$0xff]
    %v5601 = vld [vmem:[#allocation9 + $0xb8] sm:$0xff]
    %v5602 = vld [vmem:[#allocation9 + $0xc8] sm:$0xff]
    %v5603 = vld [vmem:[#allocation9 + $0xd8] sm:$0xff]
    %v5604 = vld [vmem:[#allocation9 + $0xe8] sm:$0xff]
    %v5605 = vld [vmem:[#allocation9 + $0xf8] sm:$0xff]
    %v5606 = vld [vmem:[#allocation8 + $0x2] sm:$0x3]
    %v5608 = vperm.slane %v5606, 0
    %v5609 = vperm.slane %v5606, 1
    %v5628 = vunpack.c.l.b16 %v5590
    %v5629 = vunpack.c.h.b16 %v5590
    %v5630 = vunpack.c.l.b16 %v5591
    %v5631 = vunpack.c.h.b16 %v5591
    %v5632 = vunpack.c.l.b16 %v5592
    %v5633 = vunpack.c.h.b16 %v5592
    %v5634 = vunpack.c.l.b16 %v5593
    %v5635 = vunpack.c.h.b16 %v5593
    %v5636 = vunpack.c.l.b16 %v5594
    %v5637 = vunpack.c.h.b16 %v5594
    %v5638 = vunpack.c.l.b16 %v5595
    %v5639 = vunpack.c.h.b16 %v5595
    %v5640 = vunpack.c.l.b16 %v5596
    %v5641 = vunpack.c.h.b16 %v5596
    %v5642 = vunpack.c.l.b16 %v5597
    %v5643 = vunpack.c.h.b16 %v5597
    %v5644 = vunpack.c.l.b16 %v5598
    %v5645 = vunpack.c.h.b16 %v5598
    %v5646 = vunpack.c.l.b16 %v5599
    %v5647 = vunpack.c.h.b16 %v5599
    %v5648 = vunpack.c.l.b16 %v5600
    %v5649 = vunpack.c.h.b16 %v5600
    %v5650 = vunpack.c.l.b16 %v5601
    %v5651 = vunpack.c.h.b16 %v5601
    %v5652 = vunpack.c.l.b16 %v5602
    %v5653 = vunpack.c.h.b16 %v5602
    %v5654 = vunpack.c.l.b16 %v5603
    %v5655 = vunpack.c.h.b16 %v5603
    %v5656 = vunpack.c.l.b16 %v5604
    %v5657 = vunpack.c.h.b16 %v5604
    %v5658 = vunpack.c.l.b16 %v5605
    %v5659 = vunpack.c.h.b16 %v5605
    %v5660 = vpack.c.b16 %v5630, %v5628
    %v5661 = vpack.c.b16 %v5631, %v5629
    %v5662 = vpack.c.b16 %v5634, %v5632
    %v5663 = vpack.c.b16 %v5635, %v5633
    %v5664 = vpack.c.b16 %v5638, %v5636
    %v5665 = vpack.c.b16 %v5639, %v5637
    %v5666 = vpack.c.b16 %v5642, %v5640
    %v5667 = vpack.c.b16 %v5643, %v5641
    %v5668 = vpack.c.b16 %v5646, %v5644
    %v5669 = vpack.c.b16 %v5647, %v5645
    %v5670 = vpack.c.b16 %v5650, %v5648
    %v5671 = vpack.c.b16 %v5651, %v5649
    %v5672 = vpack.c.b16 %v5654, %v5652
    %v5673 = vpack.c.b16 %v5655, %v5653
    %v5674 = vpack.c.b16 %v5658, %v5656
    %v5675 = vpack.c.b16 %v5659, %v5657
    %5692 = vmatpush.bf16.msra.mxu0 %v5674
    %5693 = vmatpush.bf16.msra.mxu0 %v5672
    %5694 = vmatpush.bf16.msra.mxu0 %v5670
    %5695 = vmatpush.bf16.msra.mxu0 %v5668
    %5696 = vmatpush.bf16.msra.mxu0 %v5666
    %5697 = vmatpush.bf16.msra.mxu0 %v5664
    %5698 = vmatpush.bf16.msra.mxu0 %v5662
    %5699 = vmatpush.bf16.msra.mxu0 %v5660
    %5700 = vmatmul.bf16.gmra.mxu0 %v3115
    %v5701 = vpop.f32.mrf.mxu0
    %v5702 = vadd.f32 %v5608, %v5701
    %v5703 = vpop.f32.mrf.mxu0
    %v5704 = vadd.f32 %v5608, %v5703
    %5705 = vmatmul.bf16.gmra.mxu0 %v3116
    %v5706 = vpop.f32.mrf.mxu0
    %v5707 = vadd.f32 %v5608, %v5706
    %v5708 = vpop.f32.mrf.mxu0
    %v5709 = vadd.f32 %v5608, %v5708
    %5710 = vmatmul.bf16.gmra.mxu0 %v3117
    %v5711 = vpop.f32.mrf.mxu0
    %v5712 = vadd.f32 %v5608, %v5711
    %v5713 = vpop.f32.mrf.mxu0
    %v5714 = vadd.f32 %v5608, %v5713
    %5715 = vmatmul.bf16.gmra.mxu0 %v3118
    %v5716 = vpop.f32.mrf.mxu0
    %v5717 = vadd.f32 %v5608, %v5716
    %v5718 = vpop.f32.mrf.mxu0
    %v5719 = vadd.f32 %v5608, %v5718
    %5720 = vmatmul.bf16.gmra.mxu0 %v3119
    %v5721 = vpop.f32.mrf.mxu0
    %v5722 = vadd.f32 %v5608, %v5721
    %v5723 = vpop.f32.mrf.mxu0
    %v5724 = vadd.f32 %v5608, %v5723
    %5725 = vmatmul.bf16.gmra.mxu0 %v3120
    %v5726 = vpop.f32.mrf.mxu0
    %v5727 = vadd.f32 %v5608, %v5726
    %v5728 = vpop.f32.mrf.mxu0
    %v5729 = vadd.f32 %v5608, %v5728
    %5730 = vmatmul.bf16.gmra.mxu0 %v3121
    %v5731 = vpop.f32.mrf.mxu0
    %v5732 = vadd.f32 %v5608, %v5731
    %v5733 = vpop.f32.mrf.mxu0
    %v5734 = vadd.f32 %v5608, %v5733
    %5735 = vmatmul.bf16.gmra.mxu0 %v3122
    %v5736 = vpop.f32.mrf.mxu0
    %v5737 = vadd.f32 %v5608, %v5736
    %v5738 = vpop.f32.mrf.mxu0
    %v5739 = vadd.f32 %v5608, %v5738
    %5740 = vmatmul.bf16.gmra.mxu0 %v3123
    %v5741 = vpop.f32.mrf.mxu0
    %v5742 = vadd.f32 %v5608, %v5741
    %v5743 = vpop.f32.mrf.mxu0
    %v5744 = vadd.f32 %v5608, %v5743
    %5745 = vmatmul.bf16.gmra.mxu0 %v3124
    %v5746 = vpop.f32.mrf.mxu0
    %v5747 = vadd.f32 %v5608, %v5746
    %v5748 = vpop.f32.mrf.mxu0
    %v5749 = vadd.f32 %v5608, %v5748
    %5750 = vmatmul.bf16.gmra.mxu0 %v3125
    %v5751 = vpop.f32.mrf.mxu0
    %v5752 = vadd.f32 %v5608, %v5751
    %v5753 = vpop.f32.mrf.mxu0
    %v5754 = vadd.f32 %v5608, %v5753
    %5755 = vmatmul.bf16.gmra.mxu0 %v3126
    %v5756 = vpop.f32.mrf.mxu0
    %v5757 = vadd.f32 %v5608, %v5756
    %v5758 = vpop.f32.mrf.mxu0
    %v5759 = vadd.f32 %v5608, %v5758
    %5760 = vmatmul.bf16.gmra.mxu0 %v3127
    %v5761 = vpop.f32.mrf.mxu0
    %v5762 = vadd.f32 %v5608, %v5761
    %v5763 = vpop.f32.mrf.mxu0
    %v5764 = vadd.f32 %v5608, %v5763
    %5765 = vmatmul.bf16.gmra.mxu0 %v3128
    %v5766 = vpop.f32.mrf.mxu0
    %v5767 = vadd.f32 %v5608, %v5766
    %v5768 = vpop.f32.mrf.mxu0
    %v5769 = vadd.f32 %v5608, %v5768
    %5770 = vmatmul.bf16.gmra.mxu0 %v3129
    %v5771 = vpop.f32.mrf.mxu0
    %v5772 = vadd.f32 %v5608, %v5771
    %v5773 = vpop.f32.mrf.mxu0
    %v5774 = vadd.f32 %v5608, %v5773
    %5775 = vmatmul.bf16.gmra.mxu0 %v3130
    %v5776 = vpop.f32.mrf.mxu0
    %v5777 = vadd.f32 %v5608, %v5776
    %v5778 = vpop.f32.mrf.mxu0
    %v5779 = vadd.f32 %v5608, %v5778
    %5780 = vmatmul.bf16.gmra.mxu0 %v3131
    %v5781 = vpop.f32.mrf.mxu0
    %v5782 = vadd.f32 %v5608, %v5781
    %v5783 = vpop.f32.mrf.mxu0
    %v5784 = vadd.f32 %v5608, %v5783
    %5785 = vmatmul.bf16.gmra.mxu0 %v3132
    %v5786 = vpop.f32.mrf.mxu0
    %v5787 = vadd.f32 %v5608, %v5786
    %v5788 = vpop.f32.mrf.mxu0
    %v5789 = vadd.f32 %v5608, %v5788
    %5790 = vmatmul.bf16.gmra.mxu0 %v3133
    %v5791 = vpop.f32.mrf.mxu0
    %v5792 = vadd.f32 %v5608, %v5791
    %v5793 = vpop.f32.mrf.mxu0
    %v5794 = vadd.f32 %v5608, %v5793
    %5795 = vmatmul.bf16.gmra.mxu0 %v3134
    %v5796 = vpop.f32.mrf.mxu0
    %v5797 = vadd.f32 %v5608, %v5796
    %v5798 = vpop.f32.mrf.mxu0
    %v5799 = vadd.f32 %v5608, %v5798
    %5800 = vmatmul.bf16.gmra.mxu0 %v3135
    %v5801 = vpop.f32.mrf.mxu0
    %v5802 = vadd.f32 %v5608, %v5801
    %v5803 = vpop.f32.mrf.mxu0
    %v5804 = vadd.f32 %v5608, %v5803
    %5805 = vmatmul.bf16.gmra.mxu0 %v3136
    %v5806 = vpop.f32.mrf.mxu0
    %v5807 = vadd.f32 %v5608, %v5806
    %v5808 = vpop.f32.mrf.mxu0
    %v5809 = vadd.f32 %v5608, %v5808
    %5810 = vmatmul.bf16.gmra.mxu0 %v3137
    %v5811 = vpop.f32.mrf.mxu0
    %v5812 = vadd.f32 %v5608, %v5811
    %v5813 = vpop.f32.mrf.mxu0
    %v5814 = vadd.f32 %v5608, %v5813
    %5815 = vmatmul.bf16.gmra.mxu0 %v3138
    %v5816 = vpop.f32.mrf.mxu0
    %v5817 = vadd.f32 %v5608, %v5816
    %v5818 = vpop.f32.mrf.mxu0
    %v5819 = vadd.f32 %v5608, %v5818
    %5820 = vmatmul.bf16.gmra.mxu0 %v3139
    %v5821 = vpop.f32.mrf.mxu0
    %v5822 = vadd.f32 %v5608, %v5821
    %v5823 = vpop.f32.mrf.mxu0
    %v5824 = vadd.f32 %v5608, %v5823
    %5825 = vmatmul.bf16.gmra.mxu0 %v3140
    %v5826 = vpop.f32.mrf.mxu0
    %v5827 = vadd.f32 %v5608, %v5826
    %v5828 = vpop.f32.mrf.mxu0
    %v5829 = vadd.f32 %v5608, %v5828
    %5830 = vmatmul.bf16.gmra.mxu0 %v3141
    %v5831 = vpop.f32.mrf.mxu0
    %v5832 = vadd.f32 %v5608, %v5831
    %v5833 = vpop.f32.mrf.mxu0
    %v5834 = vadd.f32 %v5608, %v5833
    %5835 = vmatmul.bf16.gmra.mxu0 %v3142
    %v5836 = vpop.f32.mrf.mxu0
    %v5837 = vadd.f32 %v5608, %v5836
    %v5838 = vpop.f32.mrf.mxu0
    %v5839 = vadd.f32 %v5608, %v5838
    %5840 = vmatmul.bf16.gmra.mxu0 %v3143
    %v5841 = vpop.f32.mrf.mxu0
    %v5842 = vadd.f32 %v5608, %v5841
    %v5843 = vpop.f32.mrf.mxu0
    %v5844 = vadd.f32 %v5608, %v5843
    %5845 = vmatmul.bf16.gmra.mxu0 %v3144
    %v5846 = vpop.f32.mrf.mxu0
    %v5847 = vadd.f32 %v5608, %v5846
    %v5848 = vpop.f32.mrf.mxu0
    %v5849 = vadd.f32 %v5608, %v5848
    %5850 = vmatmul.bf16.gmra.mxu0 %v3145
    %v5851 = vpop.f32.mrf.mxu0
    %v5852 = vadd.f32 %v5608, %v5851
    %v5853 = vpop.f32.mrf.mxu0
    %v5854 = vadd.f32 %v5608, %v5853
    %5855 = vmatmul.bf16.gmra.mxu0 %v3146
    %v5856 = vpop.f32.mrf.mxu0
    %v5857 = vadd.f32 %v5608, %v5856
    %v5858 = vpop.f32.mrf.mxu0
    %v5859 = vadd.f32 %v5608, %v5858
    %5860 = vdwg.mxu0
    %5861 = vmatpush.bf16.msra.mxu0 %v5675
    %5862 = vmatpush.bf16.msra.mxu0 %v5673
    %5863 = vmatpush.bf16.msra.mxu0 %v5671
    %5864 = vmatpush.bf16.msra.mxu0 %v5669
    %5865 = vmatpush.bf16.msra.mxu0 %v5667
    %5866 = vmatpush.bf16.msra.mxu0 %v5665
    %5867 = vmatpush.bf16.msra.mxu0 %v5663
    %5868 = vmatpush.bf16.msra.mxu0 %v5661
    %5869 = vmatmul.bf16.gmra.mxu0 %v3115
    %v5870 = vpop.f32.mrf.mxu0
    %v5871 = vadd.f32 %v5609, %v5870
    %v5872 = vpop.f32.mrf.mxu0
    %v5873 = vadd.f32 %v5609, %v5872
    %5874 = vmatmul.bf16.gmra.mxu0 %v3116
    %v5875 = vpop.f32.mrf.mxu0
    %v5876 = vadd.f32 %v5609, %v5875
    %v5877 = vpop.f32.mrf.mxu0
    %v5878 = vadd.f32 %v5609, %v5877
    %5879 = vmatmul.bf16.gmra.mxu0 %v3117
    %v5880 = vpop.f32.mrf.mxu0
    %v5881 = vadd.f32 %v5609, %v5880
    %v5882 = vpop.f32.mrf.mxu0
    %v5883 = vadd.f32 %v5609, %v5882
    %5884 = vmatmul.bf16.gmra.mxu0 %v3118
    %v5885 = vpop.f32.mrf.mxu0
    %v5886 = vadd.f32 %v5609, %v5885
    %v5887 = vpop.f32.mrf.mxu0
    %v5888 = vadd.f32 %v5609, %v5887
    %5889 = vmatmul.bf16.gmra.mxu0 %v3119
    %v5890 = vpop.f32.mrf.mxu0
    %v5891 = vadd.f32 %v5609, %v5890
    %v5892 = vpop.f32.mrf.mxu0
    %v5893 = vadd.f32 %v5609, %v5892
    %5894 = vmatmul.bf16.gmra.mxu0 %v3120
    %v5895 = vpop.f32.mrf.mxu0
    %v5896 = vadd.f32 %v5609, %v5895
    %v5897 = vpop.f32.mrf.mxu0
    %v5898 = vadd.f32 %v5609, %v5897
    %5899 = vmatmul.bf16.gmra.mxu0 %v3121
    %v5900 = vpop.f32.mrf.mxu0
    %v5901 = vadd.f32 %v5609, %v5900
    %v5902 = vpop.f32.mrf.mxu0
    %v5903 = vadd.f32 %v5609, %v5902
    %5904 = vmatmul.bf16.gmra.mxu0 %v3122
    %v5905 = vpop.f32.mrf.mxu0
    %v5906 = vadd.f32 %v5609, %v5905
    %v5907 = vpop.f32.mrf.mxu0
    %v5908 = vadd.f32 %v5609, %v5907
    %5909 = vmatmul.bf16.gmra.mxu0 %v3123
    %v5910 = vpop.f32.mrf.mxu0
    %v5911 = vadd.f32 %v5609, %v5910
    %v5912 = vpop.f32.mrf.mxu0
    %v5913 = vadd.f32 %v5609, %v5912
    %5914 = vmatmul.bf16.gmra.mxu0 %v3124
    %v5915 = vpop.f32.mrf.mxu0
    %v5916 = vadd.f32 %v5609, %v5915
    %v5917 = vpop.f32.mrf.mxu0
    %v5918 = vadd.f32 %v5609, %v5917
    %5919 = vmatmul.bf16.gmra.mxu0 %v3125
    %v5920 = vpop.f32.mrf.mxu0
    %v5921 = vadd.f32 %v5609, %v5920
    %v5922 = vpop.f32.mrf.mxu0
    %v5923 = vadd.f32 %v5609, %v5922
    %5924 = vmatmul.bf16.gmra.mxu0 %v3126
    %v5925 = vpop.f32.mrf.mxu0
    %v5926 = vadd.f32 %v5609, %v5925
    %v5927 = vpop.f32.mrf.mxu0
    %v5928 = vadd.f32 %v5609, %v5927
    %5929 = vmatmul.bf16.gmra.mxu0 %v3127
    %v5930 = vpop.f32.mrf.mxu0
    %v5931 = vadd.f32 %v5609, %v5930
    %v5932 = vpop.f32.mrf.mxu0
    %v5933 = vadd.f32 %v5609, %v5932
    %5934 = vmatmul.bf16.gmra.mxu0 %v3128
    %v5935 = vpop.f32.mrf.mxu0
    %v5936 = vadd.f32 %v5609, %v5935
    %v5937 = vpop.f32.mrf.mxu0
    %v5938 = vadd.f32 %v5609, %v5937
    %5939 = vmatmul.bf16.gmra.mxu0 %v3129
    %v5940 = vpop.f32.mrf.mxu0
    %v5941 = vadd.f32 %v5609, %v5940
    %v5942 = vpop.f32.mrf.mxu0
    %v5943 = vadd.f32 %v5609, %v5942
    %5944 = vmatmul.bf16.gmra.mxu0 %v3130
    %v5945 = vpop.f32.mrf.mxu0
    %v5946 = vadd.f32 %v5609, %v5945
    %v5947 = vpop.f32.mrf.mxu0
    %v5948 = vadd.f32 %v5609, %v5947
    %5949 = vmatmul.bf16.gmra.mxu0 %v3131
    %v5950 = vpop.f32.mrf.mxu0
    %v5951 = vadd.f32 %v5609, %v5950
    %v5952 = vpop.f32.mrf.mxu0
    %v5953 = vadd.f32 %v5609, %v5952
    %5954 = vmatmul.bf16.gmra.mxu0 %v3132
    %v5955 = vpop.f32.mrf.mxu0
    %v5956 = vadd.f32 %v5609, %v5955
    %v5957 = vpop.f32.mrf.mxu0
    %v5958 = vadd.f32 %v5609, %v5957
    %5959 = vmatmul.bf16.gmra.mxu0 %v3133
    %v5960 = vpop.f32.mrf.mxu0
    %v5961 = vadd.f32 %v5609, %v5960
    %v5962 = vpop.f32.mrf.mxu0
    %v5963 = vadd.f32 %v5609, %v5962
    %5964 = vmatmul.bf16.gmra.mxu0 %v3134
    %v5965 = vpop.f32.mrf.mxu0
    %v5966 = vadd.f32 %v5609, %v5965
    %v5967 = vpop.f32.mrf.mxu0
    %v5968 = vadd.f32 %v5609, %v5967
    %5969 = vmatmul.bf16.gmra.mxu0 %v3135
    %v5970 = vpop.f32.mrf.mxu0
    %v5971 = vadd.f32 %v5609, %v5970
    %v5972 = vpop.f32.mrf.mxu0
    %v5973 = vadd.f32 %v5609, %v5972
    %5974 = vmatmul.bf16.gmra.mxu0 %v3136
    %v5975 = vpop.f32.mrf.mxu0
    %v5976 = vadd.f32 %v5609, %v5975
    %v5977 = vpop.f32.mrf.mxu0
    %v5978 = vadd.f32 %v5609, %v5977
    %5979 = vmatmul.bf16.gmra.mxu0 %v3137
    %v5980 = vpop.f32.mrf.mxu0
    %v5981 = vadd.f32 %v5609, %v5980
    %v5982 = vpop.f32.mrf.mxu0
    %v5983 = vadd.f32 %v5609, %v5982
    %5984 = vmatmul.bf16.gmra.mxu0 %v3138
    %v5985 = vpop.f32.mrf.mxu0
    %v5986 = vadd.f32 %v5609, %v5985
    %v5987 = vpop.f32.mrf.mxu0
    %v5988 = vadd.f32 %v5609, %v5987
    %5989 = vmatmul.bf16.gmra.mxu0 %v3139
    %v5990 = vpop.f32.mrf.mxu0
    %v5991 = vadd.f32 %v5609, %v5990
    %v5992 = vpop.f32.mrf.mxu0
    %v5993 = vadd.f32 %v5609, %v5992
    %5994 = vmatmul.bf16.gmra.mxu0 %v3140
    %v5995 = vpop.f32.mrf.mxu0
    %v5996 = vadd.f32 %v5609, %v5995
    %v5997 = vpop.f32.mrf.mxu0
    %v5998 = vadd.f32 %v5609, %v5997
    %5999 = vmatmul.bf16.gmra.mxu0 %v3141
    %v6000 = vpop.f32.mrf.mxu0
    %v6001 = vadd.f32 %v5609, %v6000
    %v6002 = vpop.f32.mrf.mxu0
    %v6003 = vadd.f32 %v5609, %v6002
    %6004 = vmatmul.bf16.gmra.mxu0 %v3142
    %v6005 = vpop.f32.mrf.mxu0
    %v6006 = vadd.f32 %v5609, %v6005
    %v6007 = vpop.f32.mrf.mxu0
    %v6008 = vadd.f32 %v5609, %v6007
    %6009 = vmatmul.bf16.gmra.mxu0 %v3143
    %v6010 = vpop.f32.mrf.mxu0
    %v6011 = vadd.f32 %v5609, %v6010
    %v6012 = vpop.f32.mrf.mxu0
    %v6013 = vadd.f32 %v5609, %v6012
    %6014 = vmatmul.bf16.gmra.mxu0 %v3144
    %v6015 = vpop.f32.mrf.mxu0
    %v6016 = vadd.f32 %v5609, %v6015
    %v6017 = vpop.f32.mrf.mxu0
    %v6018 = vadd.f32 %v5609, %v6017
    %6019 = vmatmul.bf16.gmra.mxu0 %v3145
    %v6020 = vpop.f32.mrf.mxu0
    %v6021 = vadd.f32 %v5609, %v6020
    %v6022 = vpop.f32.mrf.mxu0
    %v6023 = vadd.f32 %v5609, %v6022
    %6024 = vmatmul.bf16.gmra.mxu0 %v3146
    %v6025 = vpop.f32.mrf.mxu0
    %v6026 = vadd.f32 %v5609, %v6025
    %v6027 = vpop.f32.mrf.mxu0
    %v6028 = vadd.f32 %v5609, %v6027
    %6029 = vdwg.mxu0
    %v6030 = vmul.f32 %v5702, 0.5
    %v6031 = vmul.f32 %v5871, 0.5
    %v6032 = vmul.f32 %v5704, 0.5
    %v6033 = vmul.f32 %v5873, 0.5
    %v6034 = vmul.f32 %v5707, 0.5
    %v6035 = vmul.f32 %v5876, 0.5
    %v6036 = vmul.f32 %v5709, 0.5
    %v6037 = vmul.f32 %v5878, 0.5
    %v6038 = vmul.f32 %v5712, 0.5
    %v6039 = vmul.f32 %v5881, 0.5
    %v6040 = vmul.f32 %v5714, 0.5
    %v6041 = vmul.f32 %v5883, 0.5
    %v6042 = vmul.f32 %v5717, 0.5
    %v6043 = vmul.f32 %v5886, 0.5
    %v6044 = vmul.f32 %v5719, 0.5
    %v6045 = vmul.f32 %v5888, 0.5
    %v6046 = vmul.f32 %v5722, 0.5
    %v6047 = vmul.f32 %v5891, 0.5
    %v6048 = vmul.f32 %v5724, 0.5
    %v6049 = vmul.f32 %v5893, 0.5
    %v6050 = vmul.f32 %v5727, 0.5
    %v6051 = vmul.f32 %v5896, 0.5
    %v6052 = vmul.f32 %v5729, 0.5
    %v6053 = vmul.f32 %v5898, 0.5
    %v6054 = vmul.f32 %v5732, 0.5
    %v6055 = vmul.f32 %v5901, 0.5
    %v6056 = vmul.f32 %v5734, 0.5
    %v6057 = vmul.f32 %v5903, 0.5
    %v6058 = vmul.f32 %v5737, 0.5
    %v6059 = vmul.f32 %v5906, 0.5
    %v6060 = vmul.f32 %v5739, 0.5
    %v6061 = vmul.f32 %v5908, 0.5
    %v6062 = vmul.f32 %v5742, 0.5
    %v6063 = vmul.f32 %v5911, 0.5
    %v6064 = vmul.f32 %v5744, 0.5
    %v6065 = vmul.f32 %v5913, 0.5
    %v6066 = vmul.f32 %v5747, 0.5
    %v6067 = vmul.f32 %v5916, 0.5
    %v6068 = vmul.f32 %v5749, 0.5
    %v6069 = vmul.f32 %v5918, 0.5
    %v6070 = vmul.f32 %v5752, 0.5
    %v6071 = vmul.f32 %v5921, 0.5
    %v6072 = vmul.f32 %v5754, 0.5
    %v6073 = vmul.f32 %v5923, 0.5
    %v6074 = vmul.f32 %v5757, 0.5
    %v6075 = vmul.f32 %v5926, 0.5
    %v6076 = vmul.f32 %v5759, 0.5
    %v6077 = vmul.f32 %v5928, 0.5
    %v6078 = vmul.f32 %v5762, 0.5
    %v6079 = vmul.f32 %v5931, 0.5
    %v6080 = vmul.f32 %v5764, 0.5
    %v6081 = vmul.f32 %v5933, 0.5
    %v6082 = vmul.f32 %v5767, 0.5
    %v6083 = vmul.f32 %v5936, 0.5
    %v6084 = vmul.f32 %v5769, 0.5
    %v6085 = vmul.f32 %v5938, 0.5
    %v6086 = vmul.f32 %v5772, 0.5
    %v6087 = vmul.f32 %v5941, 0.5
    %v6088 = vmul.f32 %v5774, 0.5
    %v6089 = vmul.f32 %v5943, 0.5
    %v6090 = vmul.f32 %v5777, 0.5
    %v6091 = vmul.f32 %v5946, 0.5
    %v6092 = vmul.f32 %v5779, 0.5
    %v6093 = vmul.f32 %v5948, 0.5
    %v6094 = vmul.f32 %v5782, 0.5
    %v6095 = vmul.f32 %v5951, 0.5
    %v6096 = vmul.f32 %v5784, 0.5
    %v6097 = vmul.f32 %v5953, 0.5
    %v6098 = vmul.f32 %v5787, 0.5
    %v6099 = vmul.f32 %v5956, 0.5
    %v6100 = vmul.f32 %v5789, 0.5
    %v6101 = vmul.f32 %v5958, 0.5
    %v6102 = vmul.f32 %v5792, 0.5
    %v6103 = vmul.f32 %v5961, 0.5
    %v6104 = vmul.f32 %v5794, 0.5
    %v6105 = vmul.f32 %v5963, 0.5
    %v6106 = vmul.f32 %v5797, 0.5
    %v6107 = vmul.f32 %v5966, 0.5
    %v6108 = vmul.f32 %v5799, 0.5
    %v6109 = vmul.f32 %v5968, 0.5
    %v6110 = vmul.f32 %v5802, 0.5
    %v6111 = vmul.f32 %v5971, 0.5
    %v6112 = vmul.f32 %v5804, 0.5
    %v6113 = vmul.f32 %v5973, 0.5
    %v6114 = vmul.f32 %v5807, 0.5
    %v6115 = vmul.f32 %v5976, 0.5
    %v6116 = vmul.f32 %v5809, 0.5
    %v6117 = vmul.f32 %v5978, 0.5
    %v6118 = vmul.f32 %v5812, 0.5
    %v6119 = vmul.f32 %v5981, 0.5
    %v6120 = vmul.f32 %v5814, 0.5
    %v6121 = vmul.f32 %v5983, 0.5
    %v6122 = vmul.f32 %v5817, 0.5
    %v6123 = vmul.f32 %v5986, 0.5
    %v6124 = vmul.f32 %v5819, 0.5
    %v6125 = vmul.f32 %v5988, 0.5
    %v6126 = vmul.f32 %v5822, 0.5
    %v6127 = vmul.f32 %v5991, 0.5
    %v6128 = vmul.f32 %v5824, 0.5
    %v6129 = vmul.f32 %v5993, 0.5
    %v6130 = vmul.f32 %v5827, 0.5
    %v6131 = vmul.f32 %v5996, 0.5
    %v6132 = vmul.f32 %v5829, 0.5
    %v6133 = vmul.f32 %v5998, 0.5
    %v6134 = vmul.f32 %v5832, 0.5
    %v6135 = vmul.f32 %v6001, 0.5
    %v6136 = vmul.f32 %v5834, 0.5
    %v6137 = vmul.f32 %v6003, 0.5
    %v6138 = vmul.f32 %v5837, 0.5
    %v6139 = vmul.f32 %v6006, 0.5
    %v6140 = vmul.f32 %v5839, 0.5
    %v6141 = vmul.f32 %v6008, 0.5
    %v6142 = vmul.f32 %v5842, 0.5
    %v6143 = vmul.f32 %v6011, 0.5
    %v6144 = vmul.f32 %v5844, 0.5
    %v6145 = vmul.f32 %v6013, 0.5
    %v6146 = vmul.f32 %v5847, 0.5
    %v6147 = vmul.f32 %v6016, 0.5
    %v6148 = vmul.f32 %v5849, 0.5
    %v6149 = vmul.f32 %v6018, 0.5
    %v6150 = vmul.f32 %v5852, 0.5
    %v6151 = vmul.f32 %v6021, 0.5
    %v6152 = vmul.f32 %v5854, 0.5
    %v6153 = vmul.f32 %v6023, 0.5
    %v6154 = vmul.f32 %v5857, 0.5
    %v6155 = vmul.f32 %v6026, 0.5
    %v6156 = vmul.f32 %v5859, 0.5
    %v6157 = vmul.f32 %v6028, 0.5
    %v6158 = vmul.f32 %v5702, %v5702
    %v6159 = vmul.f32 %v5871, %v5871
    %v6160 = vmul.f32 %v5704, %v5704
    %v6161 = vmul.f32 %v5873, %v5873
    %v6162 = vmul.f32 %v5707, %v5707
    %v6163 = vmul.f32 %v5876, %v5876
    %v6164 = vmul.f32 %v5709, %v5709
    %v6165 = vmul.f32 %v5878, %v5878
    %v6166 = vmul.f32 %v5712, %v5712
    %v6167 = vmul.f32 %v5881, %v5881
    %v6168 = vmul.f32 %v5714, %v5714
    %v6169 = vmul.f32 %v5883, %v5883
    %v6170 = vmul.f32 %v5717, %v5717
    %v6171 = vmul.f32 %v5886, %v5886
    %v6172 = vmul.f32 %v5719, %v5719
    %v6173 = vmul.f32 %v5888, %v5888
    %v6174 = vmul.f32 %v5722, %v5722
    %v6175 = vmul.f32 %v5891, %v5891
    %v6176 = vmul.f32 %v5724, %v5724
    %v6177 = vmul.f32 %v5893, %v5893
    %v6178 = vmul.f32 %v5727, %v5727
    %v6179 = vmul.f32 %v5896, %v5896
    %v6180 = vmul.f32 %v5729, %v5729
    %v6181 = vmul.f32 %v5898, %v5898
    %v6182 = vmul.f32 %v5732, %v5732
    %v6183 = vmul.f32 %v5901, %v5901
    %v6184 = vmul.f32 %v5734, %v5734
    %v6185 = vmul.f32 %v5903, %v5903
    %v6186 = vmul.f32 %v5737, %v5737
    %v6187 = vmul.f32 %v5906, %v5906
    %v6188 = vmul.f32 %v5739, %v5739
    %v6189 = vmul.f32 %v5908, %v5908
    %v6190 = vmul.f32 %v5742, %v5742
    %v6191 = vmul.f32 %v5911, %v5911
    %v6192 = vmul.f32 %v5744, %v5744
    %v6193 = vmul.f32 %v5913, %v5913
    %v6194 = vmul.f32 %v5747, %v5747
    %v6195 = vmul.f32 %v5916, %v5916
    %v6196 = vmul.f32 %v5749, %v5749
    %v6197 = vmul.f32 %v5918, %v5918
    %v6198 = vmul.f32 %v5752, %v5752
    %v6199 = vmul.f32 %v5921, %v5921
    %v6200 = vmul.f32 %v5754, %v5754
    %v6201 = vmul.f32 %v5923, %v5923
    %v6202 = vmul.f32 %v5757, %v5757
    %v6203 = vmul.f32 %v5926, %v5926
    %v6204 = vmul.f32 %v5759, %v5759
    %v6205 = vmul.f32 %v5928, %v5928
    %v6206 = vmul.f32 %v5762, %v5762
    %v6207 = vmul.f32 %v5931, %v5931
    %v6208 = vmul.f32 %v5764, %v5764
    %v6209 = vmul.f32 %v5933, %v5933
    %v6210 = vmul.f32 %v5767, %v5767
    %v6211 = vmul.f32 %v5936, %v5936
    %v6212 = vmul.f32 %v5769, %v5769
    %v6213 = vmul.f32 %v5938, %v5938
    %v6214 = vmul.f32 %v5772, %v5772
    %v6215 = vmul.f32 %v5941, %v5941
    %v6216 = vmul.f32 %v5774, %v5774
    %v6217 = vmul.f32 %v5943, %v5943
    %v6218 = vmul.f32 %v5777, %v5777
    %v6219 = vmul.f32 %v5946, %v5946
    %v6220 = vmul.f32 %v5779, %v5779
    %v6221 = vmul.f32 %v5948, %v5948
    %v6222 = vmul.f32 %v5782, %v5782
    %v6223 = vmul.f32 %v5951, %v5951
    %v6224 = vmul.f32 %v5784, %v5784
    %v6225 = vmul.f32 %v5953, %v5953
    %v6226 = vmul.f32 %v5787, %v5787
    %v6227 = vmul.f32 %v5956, %v5956
    %v6228 = vmul.f32 %v5789, %v5789
    %v6229 = vmul.f32 %v5958, %v5958
    %v6230 = vmul.f32 %v5792, %v5792
    %v6231 = vmul.f32 %v5961, %v5961
    %v6232 = vmul.f32 %v5794, %v5794
    %v6233 = vmul.f32 %v5963, %v5963
    %v6234 = vmul.f32 %v5797, %v5797
    %v6235 = vmul.f32 %v5966, %v5966
    %v6236 = vmul.f32 %v5799, %v5799
    %v6237 = vmul.f32 %v5968, %v5968
    %v6238 = vmul.f32 %v5802, %v5802
    %v6239 = vmul.f32 %v5971, %v5971
    %v6240 = vmul.f32 %v5804, %v5804
    %v6241 = vmul.f32 %v5973, %v5973
    %v6242 = vmul.f32 %v5807, %v5807
    %v6243 = vmul.f32 %v5976, %v5976
    %v6244 = vmul.f32 %v5809, %v5809
    %v6245 = vmul.f32 %v5978, %v5978
    %v6246 = vmul.f32 %v5812, %v5812
    %v6247 = vmul.f32 %v5981, %v5981
    %v6248 = vmul.f32 %v5814, %v5814
    %v6249 = vmul.f32 %v5983, %v5983
    %v6250 = vmul.f32 %v5817, %v5817
    %v6251 = vmul.f32 %v5986, %v5986
    %v6252 = vmul.f32 %v5819, %v5819
    %v6253 = vmul.f32 %v5988, %v5988
    %v6254 = vmul.f32 %v5822, %v5822
    %v6255 = vmul.f32 %v5991, %v5991
    %v6256 = vmul.f32 %v5824, %v5824
    %v6257 = vmul.f32 %v5993, %v5993
    %v6258 = vmul.f32 %v5827, %v5827
    %v6259 = vmul.f32 %v5996, %v5996
    %v6260 = vmul.f32 %v5829, %v5829
    %v6261 = vmul.f32 %v5998, %v5998
    %v6262 = vmul.f32 %v5832, %v5832
    %v6263 = vmul.f32 %v6001, %v6001
    %v6264 = vmul.f32 %v5834, %v5834
    %v6265 = vmul.f32 %v6003, %v6003
    %v6266 = vmul.f32 %v5837, %v5837
    %v6267 = vmul.f32 %v6006, %v6006
    %v6268 = vmul.f32 %v5839, %v5839
    %v6269 = vmul.f32 %v6008, %v6008
    %v6270 = vmul.f32 %v5842, %v5842
    %v6271 = vmul.f32 %v6011, %v6011
    %v6272 = vmul.f32 %v5844, %v5844
    %v6273 = vmul.f32 %v6013, %v6013
    %v6274 = vmul.f32 %v5847, %v5847
    %v6275 = vmul.f32 %v6016, %v6016
    %v6276 = vmul.f32 %v5849, %v5849
    %v6277 = vmul.f32 %v6018, %v6018
    %v6278 = vmul.f32 %v5852, %v5852
    %v6279 = vmul.f32 %v6021, %v6021
    %v6280 = vmul.f32 %v5854, %v5854
    %v6281 = vmul.f32 %v6023, %v6023
    %v6282 = vmul.f32 %v5857, %v5857
    %v6283 = vmul.f32 %v6026, %v6026
    %v6284 = vmul.f32 %v5859, %v5859
    %v6285 = vmul.f32 %v6028, %v6028
    %v6286 = vmul.f32 %v6158, %v5702
    %v6287 = vmul.f32 %v6159, %v5871
    %v6288 = vmul.f32 %v6160, %v5704
    %v6289 = vmul.f32 %v6161, %v5873
    %v6290 = vmul.f32 %v6162, %v5707
    %v6291 = vmul.f32 %v6163, %v5876
    %v6292 = vmul.f32 %v6164, %v5709
    %v6293 = vmul.f32 %v6165, %v5878
    %v6294 = vmul.f32 %v6166, %v5712
    %v6295 = vmul.f32 %v6167, %v5881
    %v6296 = vmul.f32 %v6168, %v5714
    %v6297 = vmul.f32 %v6169, %v5883
    %v6298 = vmul.f32 %v6170, %v5717
    %v6299 = vmul.f32 %v6171, %v5886
    %v6300 = vmul.f32 %v6172, %v5719
    %v6301 = vmul.f32 %v6173, %v5888
    %v6302 = vmul.f32 %v6174, %v5722
    %v6303 = vmul.f32 %v6175, %v5891
    %v6304 = vmul.f32 %v6176, %v5724
    %v6305 = vmul.f32 %v6177, %v5893
    %v6306 = vmul.f32 %v6178, %v5727
    %v6307 = vmul.f32 %v6179, %v5896
    %v6308 = vmul.f32 %v6180, %v5729
    %v6309 = vmul.f32 %v6181, %v5898
    %v6310 = vmul.f32 %v6182, %v5732
    %v6311 = vmul.f32 %v6183, %v5901
    %v6312 = vmul.f32 %v6184, %v5734
    %v6313 = vmul.f32 %v6185, %v5903
    %v6314 = vmul.f32 %v6186, %v5737
    %v6315 = vmul.f32 %v6187, %v5906
    %v6316 = vmul.f32 %v6188, %v5739
    %v6317 = vmul.f32 %v6189, %v5908
    %v6318 = vmul.f32 %v6190, %v5742
    %v6319 = vmul.f32 %v6191, %v5911
    %v6320 = vmul.f32 %v6192, %v5744
    %v6321 = vmul.f32 %v6193, %v5913
    %v6322 = vmul.f32 %v6194, %v5747
    %v6323 = vmul.f32 %v6195, %v5916
    %v6324 = vmul.f32 %v6196, %v5749
    %v6325 = vmul.f32 %v6197, %v5918
    %v6326 = vmul.f32 %v6198, %v5752
    %v6327 = vmul.f32 %v6199, %v5921
    %v6328 = vmul.f32 %v6200, %v5754
    %v6329 = vmul.f32 %v6201, %v5923
    %v6330 = vmul.f32 %v6202, %v5757
    %v6331 = vmul.f32 %v6203, %v5926
    %v6332 = vmul.f32 %v6204, %v5759
    %v6333 = vmul.f32 %v6205, %v5928
    %v6334 = vmul.f32 %v6206, %v5762
    %v6335 = vmul.f32 %v6207, %v5931
    %v6336 = vmul.f32 %v6208, %v5764
    %v6337 = vmul.f32 %v6209, %v5933
    %v6338 = vmul.f32 %v6210, %v5767
    %v6339 = vmul.f32 %v6211, %v5936
    %v6340 = vmul.f32 %v6212, %v5769
    %v6341 = vmul.f32 %v6213, %v5938
    %v6342 = vmul.f32 %v6214, %v5772
    %v6343 = vmul.f32 %v6215, %v5941
    %v6344 = vmul.f32 %v6216, %v5774
    %v6345 = vmul.f32 %v6217, %v5943
    %v6346 = vmul.f32 %v6218, %v5777
    %v6347 = vmul.f32 %v6219, %v5946
    %v6348 = vmul.f32 %v6220, %v5779
    %v6349 = vmul.f32 %v6221, %v5948
    %v6350 = vmul.f32 %v6222, %v5782
    %v6351 = vmul.f32 %v6223, %v5951
    %v6352 = vmul.f32 %v6224, %v5784
    %v6353 = vmul.f32 %v6225, %v5953
    %v6354 = vmul.f32 %v6226, %v5787
    %v6355 = vmul.f32 %v6227, %v5956
    %v6356 = vmul.f32 %v6228, %v5789
    %v6357 = vmul.f32 %v6229, %v5958
    %v6358 = vmul.f32 %v6230, %v5792
    %v6359 = vmul.f32 %v6231, %v5961
    %v6360 = vmul.f32 %v6232, %v5794
    %v6361 = vmul.f32 %v6233, %v5963
    %v6362 = vmul.f32 %v6234, %v5797
    %v6363 = vmul.f32 %v6235, %v5966
    %v6364 = vmul.f32 %v6236, %v5799
    %v6365 = vmul.f32 %v6237, %v5968
    %v6366 = vmul.f32 %v6238, %v5802
    %v6367 = vmul.f32 %v6239, %v5971
    %v6368 = vmul.f32 %v6240, %v5804
    %v6369 = vmul.f32 %v6241, %v5973
    %v6370 = vmul.f32 %v6242, %v5807
    %v6371 = vmul.f32 %v6243, %v5976
    %v6372 = vmul.f32 %v6244, %v5809
    %v6373 = vmul.f32 %v6245, %v5978
    %v6374 = vmul.f32 %v6246, %v5812
    %v6375 = vmul.f32 %v6247, %v5981
    %v6376 = vmul.f32 %v6248, %v5814
    %v6377 = vmul.f32 %v6249, %v5983
    %v6378 = vmul.f32 %v6250, %v5817
    %v6379 = vmul.f32 %v6251, %v5986
    %v6380 = vmul.f32 %v6252, %v5819
    %v6381 = vmul.f32 %v6253, %v5988
    %v6382 = vmul.f32 %v6254, %v5822
    %v6383 = vmul.f32 %v6255, %v5991
    %v6384 = vmul.f32 %v6256, %v5824
    %v6385 = vmul.f32 %v6257, %v5993
    %v6386 = vmul.f32 %v6258, %v5827
    %v6387 = vmul.f32 %v6259, %v5996
    %v6388 = vmul.f32 %v6260, %v5829
    %v6389 = vmul.f32 %v6261, %v5998
    %v6390 = vmul.f32 %v6262, %v5832
    %v6391 = vmul.f32 %v6263, %v6001
    %v6392 = vmul.f32 %v6264, %v5834
    %v6393 = vmul.f32 %v6265, %v6003
    %v6394 = vmul.f32 %v6266, %v5837
    %v6395 = vmul.f32 %v6267, %v6006
    %v6396 = vmul.f32 %v6268, %v5839
    %v6397 = vmul.f32 %v6269, %v6008
    %v6398 = vmul.f32 %v6270, %v5842
    %v6399 = vmul.f32 %v6271, %v6011
    %v6400 = vmul.f32 %v6272, %v5844
    %v6401 = vmul.f32 %v6273, %v6013
    %v6402 = vmul.f32 %v6274, %v5847
    %v6403 = vmul.f32 %v6275, %v6016
    %v6404 = vmul.f32 %v6276, %v5849
    %v6405 = vmul.f32 %v6277, %v6018
    %v6406 = vmul.f32 %v6278, %v5852
    %v6407 = vmul.f32 %v6279, %v6021
    %v6408 = vmul.f32 %v6280, %v5854
    %v6409 = vmul.f32 %v6281, %v6023
    %v6410 = vmul.f32 %v6282, %v5857
    %v6411 = vmul.f32 %v6283, %v6026
    %v6412 = vmul.f32 %v6284, %v5859
    %v6413 = vmul.f32 %v6285, %v6028
    %v6414 = vmul.f32 %v6286, 0.044715
    %v6415 = vmul.f32 %v6287, 0.044715
    %v6416 = vmul.f32 %v6288, 0.044715
    %v6417 = vmul.f32 %v6289, 0.044715
    %v6418 = vmul.f32 %v6290, 0.044715
    %v6419 = vmul.f32 %v6291, 0.044715
    %v6420 = vmul.f32 %v6292, 0.044715
    %v6421 = vmul.f32 %v6293, 0.044715
    %v6422 = vmul.f32 %v6294, 0.044715
    %v6423 = vmul.f32 %v6295, 0.044715
    %v6424 = vmul.f32 %v6296, 0.044715
    %v6425 = vmul.f32 %v6297, 0.044715
    %v6426 = vmul.f32 %v6298, 0.044715
    %v6427 = vmul.f32 %v6299, 0.044715
    %v6428 = vmul.f32 %v6300, 0.044715
    %v6429 = vmul.f32 %v6301, 0.044715
    %v6430 = vmul.f32 %v6302, 0.044715
    %v6431 = vmul.f32 %v6303, 0.044715
    %v6432 = vmul.f32 %v6304, 0.044715
    %v6433 = vmul.f32 %v6305, 0.044715
    %v6434 = vmul.f32 %v6306, 0.044715
    %v6435 = vmul.f32 %v6307, 0.044715
    %v6436 = vmul.f32 %v6308, 0.044715
    %v6437 = vmul.f32 %v6309, 0.044715
    %v6438 = vmul.f32 %v6310, 0.044715
    %v6439 = vmul.f32 %v6311, 0.044715
    %v6440 = vmul.f32 %v6312, 0.044715
    %v6441 = vmul.f32 %v6313, 0.044715
    %v6442 = vmul.f32 %v6314, 0.044715
    %v6443 = vmul.f32 %v6315, 0.044715
    %v6444 = vmul.f32 %v6316, 0.044715
    %v6445 = vmul.f32 %v6317, 0.044715
    %v6446 = vmul.f32 %v6318, 0.044715
    %v6447 = vmul.f32 %v6319, 0.044715
    %v6448 = vmul.f32 %v6320, 0.044715
    %v6449 = vmul.f32 %v6321, 0.044715
    %v6450 = vmul.f32 %v6322, 0.044715
    %v6451 = vmul.f32 %v6323, 0.044715
    %v6452 = vmul.f32 %v6324, 0.044715
    %v6453 = vmul.f32 %v6325, 0.044715
    %v6454 = vmul.f32 %v6326, 0.044715
    %v6455 = vmul.f32 %v6327, 0.044715
    %v6456 = vmul.f32 %v6328, 0.044715
    %v6457 = vmul.f32 %v6329, 0.044715
    %v6458 = vmul.f32 %v6330, 0.044715
    %v6459 = vmul.f32 %v6331, 0.044715
    %v6460 = vmul.f32 %v6332, 0.044715
    %v6461 = vmul.f32 %v6333, 0.044715
    %v6462 = vmul.f32 %v6334, 0.044715
    %v6463 = vmul.f32 %v6335, 0.044715
    %v6464 = vmul.f32 %v6336, 0.044715
    %v6465 = vmul.f32 %v6337, 0.044715
    %v6466 = vmul.f32 %v6338, 0.044715
    %v6467 = vmul.f32 %v6339, 0.044715
    %v6468 = vmul.f32 %v6340, 0.044715
    %v6469 = vmul.f32 %v6341, 0.044715
    %v6470 = vmul.f32 %v6342, 0.044715
    %v6471 = vmul.f32 %v6343, 0.044715
    %v6472 = vmul.f32 %v6344, 0.044715
    %v6473 = vmul.f32 %v6345, 0.044715
    %v6474 = vmul.f32 %v6346, 0.044715
    %v6475 = vmul.f32 %v6347, 0.044715
    %v6476 = vmul.f32 %v6348, 0.044715
    %v6477 = vmul.f32 %v6349, 0.044715
    %v6478 = vmul.f32 %v6350, 0.044715
    %v6479 = vmul.f32 %v6351, 0.044715
    %v6480 = vmul.f32 %v6352, 0.044715
    %v6481 = vmul.f32 %v6353, 0.044715
    %v6482 = vmul.f32 %v6354, 0.044715
    %v6483 = vmul.f32 %v6355, 0.044715
    %v6484 = vmul.f32 %v6356, 0.044715
    %v6485 = vmul.f32 %v6357, 0.044715
    %v6486 = vmul.f32 %v6358, 0.044715
    %v6487 = vmul.f32 %v6359, 0.044715
    %v6488 = vmul.f32 %v6360, 0.044715
    %v6489 = vmul.f32 %v6361, 0.044715
    %v6490 = vmul.f32 %v6362, 0.044715
    %v6491 = vmul.f32 %v6363, 0.044715
    %v6492 = vmul.f32 %v6364, 0.044715
    %v6493 = vmul.f32 %v6365, 0.044715
    %v6494 = vmul.f32 %v6366, 0.044715
    %v6495 = vmul.f32 %v6367, 0.044715
    %v6496 = vmul.f32 %v6368, 0.044715
    %v6497 = vmul.f32 %v6369, 0.044715
    %v6498 = vmul.f32 %v6370, 0.044715
    %v6499 = vmul.f32 %v6371, 0.044715
    %v6500 = vmul.f32 %v6372, 0.044715
    %v6501 = vmul.f32 %v6373, 0.044715
    %v6502 = vmul.f32 %v6374, 0.044715
    %v6503 = vmul.f32 %v6375, 0.044715
    %v6504 = vmul.f32 %v6376, 0.044715
    %v6505 = vmul.f32 %v6377, 0.044715
    %v6506 = vmul.f32 %v6378, 0.044715
    %v6507 = vmul.f32 %v6379, 0.044715
    %v6508 = vmul.f32 %v6380, 0.044715
    %v6509 = vmul.f32 %v6381, 0.044715
    %v6510 = vmul.f32 %v6382, 0.044715
    %v6511 = vmul.f32 %v6383, 0.044715
    %v6512 = vmul.f32 %v6384, 0.044715
    %v6513 = vmul.f32 %v6385, 0.044715
    %v6514 = vmul.f32 %v6386, 0.044715
    %v6515 = vmul.f32 %v6387, 0.044715
    %v6516 = vmul.f32 %v6388, 0.044715
    %v6517 = vmul.f32 %v6389, 0.044715
    %v6518 = vmul.f32 %v6390, 0.044715
    %v6519 = vmul.f32 %v6391, 0.044715
    %v6520 = vmul.f32 %v6392, 0.044715
    %v6521 = vmul.f32 %v6393, 0.044715
    %v6522 = vmul.f32 %v6394, 0.044715
    %v6523 = vmul.f32 %v6395, 0.044715
    %v6524 = vmul.f32 %v6396, 0.044715
    %v6525 = vmul.f32 %v6397, 0.044715
    %v6526 = vmul.f32 %v6398, 0.044715
    %v6527 = vmul.f32 %v6399, 0.044715
    %v6528 = vmul.f32 %v6400, 0.044715
    %v6529 = vmul.f32 %v6401, 0.044715
    %v6530 = vmul.f32 %v6402, 0.044715
    %v6531 = vmul.f32 %v6403, 0.044715
    %v6532 = vmul.f32 %v6404, 0.044715
    %v6533 = vmul.f32 %v6405, 0.044715
    %v6534 = vmul.f32 %v6406, 0.044715
    %v6535 = vmul.f32 %v6407, 0.044715
    %v6536 = vmul.f32 %v6408, 0.044715
    %v6537 = vmul.f32 %v6409, 0.044715
    %v6538 = vmul.f32 %v6410, 0.044715
    %v6539 = vmul.f32 %v6411, 0.044715
    %v6540 = vmul.f32 %v6412, 0.044715
    %v6541 = vmul.f32 %v6413, 0.044715
    %v6542 = vadd.f32 %v5702, %v6414
    %v6543 = vadd.f32 %v5871, %v6415
    %v6544 = vadd.f32 %v5704, %v6416
    %v6545 = vadd.f32 %v5873, %v6417
    %v6546 = vadd.f32 %v5707, %v6418
    %v6547 = vadd.f32 %v5876, %v6419
    %v6548 = vadd.f32 %v5709, %v6420
    %v6549 = vadd.f32 %v5878, %v6421
    %v6550 = vadd.f32 %v5712, %v6422
    %v6551 = vadd.f32 %v5881, %v6423
    %v6552 = vadd.f32 %v5714, %v6424
    %v6553 = vadd.f32 %v5883, %v6425
    %v6554 = vadd.f32 %v5717, %v6426
    %v6555 = vadd.f32 %v5886, %v6427
    %v6556 = vadd.f32 %v5719, %v6428
    %v6557 = vadd.f32 %v5888, %v6429
    %v6558 = vadd.f32 %v5722, %v6430
    %v6559 = vadd.f32 %v5891, %v6431
    %v6560 = vadd.f32 %v5724, %v6432
    %v6561 = vadd.f32 %v5893, %v6433
    %v6562 = vadd.f32 %v5727, %v6434
    %v6563 = vadd.f32 %v5896, %v6435
    %v6564 = vadd.f32 %v5729, %v6436
    %v6565 = vadd.f32 %v5898, %v6437
    %v6566 = vadd.f32 %v5732, %v6438
    %v6567 = vadd.f32 %v5901, %v6439
    %v6568 = vadd.f32 %v5734, %v6440
    %v6569 = vadd.f32 %v5903, %v6441
    %v6570 = vadd.f32 %v5737, %v6442
    %v6571 = vadd.f32 %v5906, %v6443
    %v6572 = vadd.f32 %v5739, %v6444
    %v6573 = vadd.f32 %v5908, %v6445
    %v6574 = vadd.f32 %v5742, %v6446
    %v6575 = vadd.f32 %v5911, %v6447
    %v6576 = vadd.f32 %v5744, %v6448
    %v6577 = vadd.f32 %v5913, %v6449
    %v6578 = vadd.f32 %v5747, %v6450
    %v6579 = vadd.f32 %v5916, %v6451
    %v6580 = vadd.f32 %v5749, %v6452
    %v6581 = vadd.f32 %v5918, %v6453
    %v6582 = vadd.f32 %v5752, %v6454
    %v6583 = vadd.f32 %v5921, %v6455
    %v6584 = vadd.f32 %v5754, %v6456
    %v6585 = vadd.f32 %v5923, %v6457
    %v6586 = vadd.f32 %v5757, %v6458
    %v6587 = vadd.f32 %v5926, %v6459
    %v6588 = vadd.f32 %v5759, %v6460
    %v6589 = vadd.f32 %v5928, %v6461
    %v6590 = vadd.f32 %v5762, %v6462
    %v6591 = vadd.f32 %v5931, %v6463
    %v6592 = vadd.f32 %v5764, %v6464
    %v6593 = vadd.f32 %v5933, %v6465
    %v6594 = vadd.f32 %v5767, %v6466
    %v6595 = vadd.f32 %v5936, %v6467
    %v6596 = vadd.f32 %v5769, %v6468
    %v6597 = vadd.f32 %v5938, %v6469
    %v6598 = vadd.f32 %v5772, %v6470
    %v6599 = vadd.f32 %v5941, %v6471
    %v6600 = vadd.f32 %v5774, %v6472
    %v6601 = vadd.f32 %v5943, %v6473
    %v6602 = vadd.f32 %v5777, %v6474
    %v6603 = vadd.f32 %v5946, %v6475
    %v6604 = vadd.f32 %v5779, %v6476
    %v6605 = vadd.f32 %v5948, %v6477
    %v6606 = vadd.f32 %v5782, %v6478
    %v6607 = vadd.f32 %v5951, %v6479
    %v6608 = vadd.f32 %v5784, %v6480
    %v6609 = vadd.f32 %v5953, %v6481
    %v6610 = vadd.f32 %v5787, %v6482
    %v6611 = vadd.f32 %v5956, %v6483
    %v6612 = vadd.f32 %v5789, %v6484
    %v6613 = vadd.f32 %v5958, %v6485
    %v6614 = vadd.f32 %v5792, %v6486
    %v6615 = vadd.f32 %v5961, %v6487
    %v6616 = vadd.f32 %v5794, %v6488
    %v6617 = vadd.f32 %v5963, %v6489
    %v6618 = vadd.f32 %v5797, %v6490
    %v6619 = vadd.f32 %v5966, %v6491
    %v6620 = vadd.f32 %v5799, %v6492
    %v6621 = vadd.f32 %v5968, %v6493
    %v6622 = vadd.f32 %v5802, %v6494
    %v6623 = vadd.f32 %v5971, %v6495
    %v6624 = vadd.f32 %v5804, %v6496
    %v6625 = vadd.f32 %v5973, %v6497
    %v6626 = vadd.f32 %v5807, %v6498
    %v6627 = vadd.f32 %v5976, %v6499
    %v6628 = vadd.f32 %v5809, %v6500
    %v6629 = vadd.f32 %v5978, %v6501
    %v6630 = vadd.f32 %v5812, %v6502
    %v6631 = vadd.f32 %v5981, %v6503
    %v6632 = vadd.f32 %v5814, %v6504
    %v6633 = vadd.f32 %v5983, %v6505
    %v6634 = vadd.f32 %v5817, %v6506
    %v6635 = vadd.f32 %v5986, %v6507
    %v6636 = vadd.f32 %v5819, %v6508
    %v6637 = vadd.f32 %v5988, %v6509
    %v6638 = vadd.f32 %v5822, %v6510
    %v6639 = vadd.f32 %v5991, %v6511
    %v6640 = vadd.f32 %v5824, %v6512
    %v6641 = vadd.f32 %v5993, %v6513
    %v6642 = vadd.f32 %v5827, %v6514
    %v6643 = vadd.f32 %v5996, %v6515
    %v6644 = vadd.f32 %v5829, %v6516
    %v6645 = vadd.f32 %v5998, %v6517
    %v6646 = vadd.f32 %v5832, %v6518
    %v6647 = vadd.f32 %v6001, %v6519
    %v6648 = vadd.f32 %v5834, %v6520
    %v6649 = vadd.f32 %v6003, %v6521
    %v6650 = vadd.f32 %v5837, %v6522
    %v6651 = vadd.f32 %v6006, %v6523
    %v6652 = vadd.f32 %v5839, %v6524
    %v6653 = vadd.f32 %v6008, %v6525
    %v6654 = vadd.f32 %v5842, %v6526
    %v6655 = vadd.f32 %v6011, %v6527
    %v6656 = vadd.f32 %v5844, %v6528
    %v6657 = vadd.f32 %v6013, %v6529
    %v6658 = vadd.f32 %v5847, %v6530
    %v6659 = vadd.f32 %v6016, %v6531
    %v6660 = vadd.f32 %v5849, %v6532
    %v6661 = vadd.f32 %v6018, %v6533
    %v6662 = vadd.f32 %v5852, %v6534
    %v6663 = vadd.f32 %v6021, %v6535
    %v6664 = vadd.f32 %v5854, %v6536
    %v6665 = vadd.f32 %v6023, %v6537
    %v6666 = vadd.f32 %v5857, %v6538
    %v6667 = vadd.f32 %v6026, %v6539
    %v6668 = vadd.f32 %v5859, %v6540
    %v6669 = vadd.f32 %v6028, %v6541
    %v6670 = vmul.f32 %v6542, 0.7978846
    %v6671 = vmul.f32 %v6543, 0.7978846
    %v6672 = vmul.f32 %v6544, 0.7978846
    %v6673 = vmul.f32 %v6545, 0.7978846
    %v6674 = vmul.f32 %v6546, 0.7978846
    %v6675 = vmul.f32 %v6547, 0.7978846
    %v6676 = vmul.f32 %v6548, 0.7978846
    %v6677 = vmul.f32 %v6549, 0.7978846
    %v6678 = vmul.f32 %v6550, 0.7978846
    %v6679 = vmul.f32 %v6551, 0.7978846
    %v6680 = vmul.f32 %v6552, 0.7978846
    %v6681 = vmul.f32 %v6553, 0.7978846
    %v6682 = vmul.f32 %v6554, 0.7978846
    %v6683 = vmul.f32 %v6555, 0.7978846
    %v6684 = vmul.f32 %v6556, 0.7978846
    %v6685 = vmul.f32 %v6557, 0.7978846
    %v6686 = vmul.f32 %v6558, 0.7978846
    %v6687 = vmul.f32 %v6559, 0.7978846
    %v6688 = vmul.f32 %v6560, 0.7978846
    %v6689 = vmul.f32 %v6561, 0.7978846
    %v6690 = vmul.f32 %v6562, 0.7978846
    %v6691 = vmul.f32 %v6563, 0.7978846
    %v6692 = vmul.f32 %v6564, 0.7978846
    %v6693 = vmul.f32 %v6565, 0.7978846
    %v6694 = vmul.f32 %v6566, 0.7978846
    %v6695 = vmul.f32 %v6567, 0.7978846
    %v6696 = vmul.f32 %v6568, 0.7978846
    %v6697 = vmul.f32 %v6569, 0.7978846
    %v6698 = vmul.f32 %v6570, 0.7978846
    %v6699 = vmul.f32 %v6571, 0.7978846
    %v6700 = vmul.f32 %v6572, 0.7978846
    %v6701 = vmul.f32 %v6573, 0.7978846
    %v6702 = vmul.f32 %v6574, 0.7978846
    %v6703 = vmul.f32 %v6575, 0.7978846
    %v6704 = vmul.f32 %v6576, 0.7978846
    %v6705 = vmul.f32 %v6577, 0.7978846
    %v6706 = vmul.f32 %v6578, 0.7978846
    %v6707 = vmul.f32 %v6579, 0.7978846
    %v6708 = vmul.f32 %v6580, 0.7978846
    %v6709 = vmul.f32 %v6581, 0.7978846
    %v6710 = vmul.f32 %v6582, 0.7978846
    %v6711 = vmul.f32 %v6583, 0.7978846
    %v6712 = vmul.f32 %v6584, 0.7978846
    %v6713 = vmul.f32 %v6585, 0.7978846
    %v6714 = vmul.f32 %v6586, 0.7978846
    %v6715 = vmul.f32 %v6587, 0.7978846
    %v6716 = vmul.f32 %v6588, 0.7978846
    %v6717 = vmul.f32 %v6589, 0.7978846
    %v6718 = vmul.f32 %v6590, 0.7978846
    %v6719 = vmul.f32 %v6591, 0.7978846
    %v6720 = vmul.f32 %v6592, 0.7978846
    %v6721 = vmul.f32 %v6593, 0.7978846
    %v6722 = vmul.f32 %v6594, 0.7978846
    %v6723 = vmul.f32 %v6595, 0.7978846
    %v6724 = vmul.f32 %v6596, 0.7978846
    %v6725 = vmul.f32 %v6597, 0.7978846
    %v6726 = vmul.f32 %v6598, 0.7978846
    %v6727 = vmul.f32 %v6599, 0.7978846
    %v6728 = vmul.f32 %v6600, 0.7978846
    %v6729 = vmul.f32 %v6601, 0.7978846
    %v6730 = vmul.f32 %v6602, 0.7978846
    %v6731 = vmul.f32 %v6603, 0.7978846
    %v6732 = vmul.f32 %v6604, 0.7978846
    %v6733 = vmul.f32 %v6605, 0.7978846
    %v6734 = vmul.f32 %v6606, 0.7978846
    %v6735 = vmul.f32 %v6607, 0.7978846
    %v6736 = vmul.f32 %v6608, 0.7978846
    %v6737 = vmul.f32 %v6609, 0.7978846
    %v6738 = vmul.f32 %v6610, 0.7978846
    %v6739 = vmul.f32 %v6611, 0.7978846
    %v6740 = vmul.f32 %v6612, 0.7978846
    %v6741 = vmul.f32 %v6613, 0.7978846
    %v6742 = vmul.f32 %v6614, 0.7978846
    %v6743 = vmul.f32 %v6615, 0.7978846
    %v6744 = vmul.f32 %v6616, 0.7978846
    %v6745 = vmul.f32 %v6617, 0.7978846
    %v6746 = vmul.f32 %v6618, 0.7978846
    %v6747 = vmul.f32 %v6619, 0.7978846
    %v6748 = vmul.f32 %v6620, 0.7978846
    %v6749 = vmul.f32 %v6621, 0.7978846
    %v6750 = vmul.f32 %v6622, 0.7978846
    %v6751 = vmul.f32 %v6623, 0.7978846
    %v6752 = vmul.f32 %v6624, 0.7978846
    %v6753 = vmul.f32 %v6625, 0.7978846
    %v6754 = vmul.f32 %v6626, 0.7978846
    %v6755 = vmul.f32 %v6627, 0.7978846
    %v6756 = vmul.f32 %v6628, 0.7978846
    %v6757 = vmul.f32 %v6629, 0.7978846
    %v6758 = vmul.f32 %v6630, 0.7978846
    %v6759 = vmul.f32 %v6631, 0.7978846
    %v6760 = vmul.f32 %v6632, 0.7978846
    %v6761 = vmul.f32 %v6633, 0.7978846
    %v6762 = vmul.f32 %v6634, 0.7978846
    %v6763 = vmul.f32 %v6635, 0.7978846
    %v6764 = vmul.f32 %v6636, 0.7978846
    %v6765 = vmul.f32 %v6637, 0.7978846
    %v6766 = vmul.f32 %v6638, 0.7978846
    %v6767 = vmul.f32 %v6639, 0.7978846
    %v6768 = vmul.f32 %v6640, 0.7978846
    %v6769 = vmul.f32 %v6641, 0.7978846
    %v6770 = vmul.f32 %v6642, 0.7978846
    %v6771 = vmul.f32 %v6643, 0.7978846
    %v6772 = vmul.f32 %v6644, 0.7978846
    %v6773 = vmul.f32 %v6645, 0.7978846
    %v6774 = vmul.f32 %v6646, 0.7978846
    %v6775 = vmul.f32 %v6647, 0.7978846
    %v6776 = vmul.f32 %v6648, 0.7978846
    %v6777 = vmul.f32 %v6649, 0.7978846
    %v6778 = vmul.f32 %v6650, 0.7978846
    %v6779 = vmul.f32 %v6651, 0.7978846
    %v6780 = vmul.f32 %v6652, 0.7978846
    %v6781 = vmul.f32 %v6653, 0.7978846
    %v6782 = vmul.f32 %v6654, 0.7978846
    %v6783 = vmul.f32 %v6655, 0.7978846
    %v6784 = vmul.f32 %v6656, 0.7978846
    %v6785 = vmul.f32 %v6657, 0.7978846
    %v6786 = vmul.f32 %v6658, 0.7978846
    %v6787 = vmul.f32 %v6659, 0.7978846
    %v6788 = vmul.f32 %v6660, 0.7978846
    %v6789 = vmul.f32 %v6661, 0.7978846
    %v6790 = vmul.f32 %v6662, 0.7978846
    %v6791 = vmul.f32 %v6663, 0.7978846
    %v6792 = vmul.f32 %v6664, 0.7978846
    %v6793 = vmul.f32 %v6665, 0.7978846
    %v6794 = vmul.f32 %v6666, 0.7978846
    %v6795 = vmul.f32 %v6667, 0.7978846
    %v6796 = vmul.f32 %v6668, 0.7978846
    %v6797 = vmul.f32 %v6669, 0.7978846
    %v6798 = vtanh.pop %v6670
    %v6799 = vtanh.pop %v6671
    %v6800 = vtanh.pop %v6672
    %v6801 = vtanh.pop %v6673
    %v6802 = vtanh.pop %v6674
    %v6803 = vtanh.pop %v6675
    %v6804 = vtanh.pop %v6676
    %v6805 = vtanh.pop %v6677
    %v6806 = vtanh.pop %v6678
    %v6807 = vtanh.pop %v6679
    %v6808 = vtanh.pop %v6680
    %v6809 = vtanh.pop %v6681
    %v6810 = vtanh.pop %v6682
    %v6811 = vtanh.pop %v6683
    %v6812 = vtanh.pop %v6684
    %v6813 = vtanh.pop %v6685
    %v6814 = vtanh.pop %v6686
    %v6815 = vtanh.pop %v6687
    %v6816 = vtanh.pop %v6688
    %v6817 = vtanh.pop %v6689
    %v6818 = vtanh.pop %v6690
    %v6819 = vtanh.pop %v6691
    %v6820 = vtanh.pop %v6692
    %v6821 = vtanh.pop %v6693
    %v6822 = vtanh.pop %v6694
    %v6823 = vtanh.pop %v6695
    %v6824 = vtanh.pop %v6696
    %v6825 = vtanh.pop %v6697
    %v6826 = vtanh.pop %v6698
    %v6827 = vtanh.pop %v6699
    %v6828 = vtanh.pop %v6700
    %v6829 = vtanh.pop %v6701
    %v6830 = vtanh.pop %v6702
    %v6831 = vtanh.pop %v6703
    %v6832 = vtanh.pop %v6704
    %v6833 = vtanh.pop %v6705
    %v6834 = vtanh.pop %v6706
    %v6835 = vtanh.pop %v6707
    %v6836 = vtanh.pop %v6708
    %v6837 = vtanh.pop %v6709
    %v6838 = vtanh.pop %v6710
    %v6839 = vtanh.pop %v6711
    %v6840 = vtanh.pop %v6712
    %v6841 = vtanh.pop %v6713
    %v6842 = vtanh.pop %v6714
    %v6843 = vtanh.pop %v6715
    %v6844 = vtanh.pop %v6716
    %v6845 = vtanh.pop %v6717
    %v6846 = vtanh.pop %v6718
    %v6847 = vtanh.pop %v6719
    %v6848 = vtanh.pop %v6720
    %v6849 = vtanh.pop %v6721
    %v6850 = vtanh.pop %v6722
    %v6851 = vtanh.pop %v6723
    %v6852 = vtanh.pop %v6724
    %v6853 = vtanh.pop %v6725
    %v6854 = vtanh.pop %v6726
    %v6855 = vtanh.pop %v6727
    %v6856 = vtanh.pop %v6728
    %v6857 = vtanh.pop %v6729
    %v6858 = vtanh.pop %v6730
    %v6859 = vtanh.pop %v6731
    %v6860 = vtanh.pop %v6732
    %v6861 = vtanh.pop %v6733
    %v6862 = vtanh.pop %v6734
    %v6863 = vtanh.pop %v6735
    %v6864 = vtanh.pop %v6736
    %v6865 = vtanh.pop %v6737
    %v6866 = vtanh.pop %v6738
    %v6867 = vtanh.pop %v6739
    %v6868 = vtanh.pop %v6740
    %v6869 = vtanh.pop %v6741
    %v6870 = vtanh.pop %v6742
    %v6871 = vtanh.pop %v6743
    %v6872 = vtanh.pop %v6744
    %v6873 = vtanh.pop %v6745
    %v6874 = vtanh.pop %v6746
    %v6875 = vtanh.pop %v6747
    %v6876 = vtanh.pop %v6748
    %v6877 = vtanh.pop %v6749
    %v6878 = vtanh.pop %v6750
    %v6879 = vtanh.pop %v6751
    %v6880 = vtanh.pop %v6752
    %v6881 = vtanh.pop %v6753
    %v6882 = vtanh.pop %v6754
    %v6883 = vtanh.pop %v6755
    %v6884 = vtanh.pop %v6756
    %v6885 = vtanh.pop %v6757
    %v6886 = vtanh.pop %v6758
    %v6887 = vtanh.pop %v6759
    %v6888 = vtanh.pop %v6760
    %v6889 = vtanh.pop %v6761
    %v6890 = vtanh.pop %v6762
    %v6891 = vtanh.pop %v6763
    %v6892 = vtanh.pop %v6764
    %v6893 = vtanh.pop %v6765
    %v6894 = vtanh.pop %v6766
    %v6895 = vtanh.pop %v6767
    %v6896 = vtanh.pop %v6768
    %v6897 = vtanh.pop %v6769
    %v6898 = vtanh.pop %v6770
    %v6899 = vtanh.pop %v6771
    %v6900 = vtanh.pop %v6772
    %v6901 = vtanh.pop %v6773
    %v6902 = vtanh.pop %v6774
    %v6903 = vtanh.pop %v6775
    %v6904 = vtanh.pop %v6776
    %v6905 = vtanh.pop %v6777
    %v6906 = vtanh.pop %v6778
    %v6907 = vtanh.pop %v6779
    %v6908 = vtanh.pop %v6780
    %v6909 = vtanh.pop %v6781
    %v6910 = vtanh.pop %v6782
    %v6911 = vtanh.pop %v6783
    %v6912 = vtanh.pop %v6784
    %v6913 = vtanh.pop %v6785
    %v6914 = vtanh.pop %v6786
    %v6915 = vtanh.pop %v6787
    %v6916 = vtanh.pop %v6788
    %v6917 = vtanh.pop %v6789
    %v6918 = vtanh.pop %v6790
    %v6919 = vtanh.pop %v6791
    %v6920 = vtanh.pop %v6792
    %v6921 = vtanh.pop %v6793
    %v6922 = vtanh.pop %v6794
    %v6923 = vtanh.pop %v6795
    %v6924 = vtanh.pop %v6796
    %v6925 = vtanh.pop %v6797
    %v6926 = vadd.f32 %v6798, 1.0
    %v6927 = vadd.f32 %v6799, 1.0
    %v6928 = vadd.f32 %v6800, 1.0
    %v6929 = vadd.f32 %v6801, 1.0
    %v6930 = vadd.f32 %v6802, 1.0
    %v6931 = vadd.f32 %v6803, 1.0
    %v6932 = vadd.f32 %v6804, 1.0
    %v6933 = vadd.f32 %v6805, 1.0
    %v6934 = vadd.f32 %v6806, 1.0
    %v6935 = vadd.f32 %v6807, 1.0
    %v6936 = vadd.f32 %v6808, 1.0
    %v6937 = vadd.f32 %v6809, 1.0
    %v6938 = vadd.f32 %v6810, 1.0
    %v6939 = vadd.f32 %v6811, 1.0
    %v6940 = vadd.f32 %v6812, 1.0
    %v6941 = vadd.f32 %v6813, 1.0
    %v6942 = vadd.f32 %v6814, 1.0
    %v6943 = vadd.f32 %v6815, 1.0
    %v6944 = vadd.f32 %v6816, 1.0
    %v6945 = vadd.f32 %v6817, 1.0
    %v6946 = vadd.f32 %v6818, 1.0
    %v6947 = vadd.f32 %v6819, 1.0
    %v6948 = vadd.f32 %v6820, 1.0
    %v6949 = vadd.f32 %v6821, 1.0
    %v6950 = vadd.f32 %v6822, 1.0
    %v6951 = vadd.f32 %v6823, 1.0
    %v6952 = vadd.f32 %v6824, 1.0
    %v6953 = vadd.f32 %v6825, 1.0
    %v6954 = vadd.f32 %v6826, 1.0
    %v6955 = vadd.f32 %v6827, 1.0
    %v6956 = vadd.f32 %v6828, 1.0
    %v6957 = vadd.f32 %v6829, 1.0
    %v6958 = vadd.f32 %v6830, 1.0
    %v6959 = vadd.f32 %v6831, 1.0
    %v6960 = vadd.f32 %v6832, 1.0
    %v6961 = vadd.f32 %v6833, 1.0
    %v6962 = vadd.f32 %v6834, 1.0
    %v6963 = vadd.f32 %v6835, 1.0
    %v6964 = vadd.f32 %v6836, 1.0
    %v6965 = vadd.f32 %v6837, 1.0
    %v6966 = vadd.f32 %v6838, 1.0
    %v6967 = vadd.f32 %v6839, 1.0
    %v6968 = vadd.f32 %v6840, 1.0
    %v6969 = vadd.f32 %v6841, 1.0
    %v6970 = vadd.f32 %v6842, 1.0
    %v6971 = vadd.f32 %v6843, 1.0
    %v6972 = vadd.f32 %v6844, 1.0
    %v6973 = vadd.f32 %v6845, 1.0
    %v6974 = vadd.f32 %v6846, 1.0
    %v6975 = vadd.f32 %v6847, 1.0
    %v6976 = vadd.f32 %v6848, 1.0
    %v6977 = vadd.f32 %v6849, 1.0
    %v6978 = vadd.f32 %v6850, 1.0
    %v6979 = vadd.f32 %v6851, 1.0
    %v6980 = vadd.f32 %v6852, 1.0
    %v6981 = vadd.f32 %v6853, 1.0
    %v6982 = vadd.f32 %v6854, 1.0
    %v6983 = vadd.f32 %v6855, 1.0
    %v6984 = vadd.f32 %v6856, 1.0
    %v6985 = vadd.f32 %v6857, 1.0
    %v6986 = vadd.f32 %v6858, 1.0
    %v6987 = vadd.f32 %v6859, 1.0
    %v6988 = vadd.f32 %v6860, 1.0
    %v6989 = vadd.f32 %v6861, 1.0
    %v6990 = vadd.f32 %v6862, 1.0
    %v6991 = vadd.f32 %v6863, 1.0
    %v6992 = vadd.f32 %v6864, 1.0
    %v6993 = vadd.f32 %v6865, 1.0
    %v6994 = vadd.f32 %v6866, 1.0
    %v6995 = vadd.f32 %v6867, 1.0
    %v6996 = vadd.f32 %v6868, 1.0
    %v6997 = vadd.f32 %v6869, 1.0
    %v6998 = vadd.f32 %v6870, 1.0
    %v6999 = vadd.f32 %v6871, 1.0
    %v7000 = vadd.f32 %v6872, 1.0
    %v7001 = vadd.f32 %v6873, 1.0
    %v7002 = vadd.f32 %v6874, 1.0
    %v7003 = vadd.f32 %v6875, 1.0
    %v7004 = vadd.f32 %v6876, 1.0
    %v7005 = vadd.f32 %v6877, 1.0
    %v7006 = vadd.f32 %v6878, 1.0
    %v7007 = vadd.f32 %v6879, 1.0
    %v7008 = vadd.f32 %v6880, 1.0
    %v7009 = vadd.f32 %v6881, 1.0
    %v7010 = vadd.f32 %v6882, 1.0
    %v7011 = vadd.f32 %v6883, 1.0
    %v7012 = vadd.f32 %v6884, 1.0
    %v7013 = vadd.f32 %v6885, 1.0
    %v7014 = vadd.f32 %v6886, 1.0
    %v7015 = vadd.f32 %v6887, 1.0
    %v7016 = vadd.f32 %v6888, 1.0
    %v7017 = vadd.f32 %v6889, 1.0
    %v7018 = vadd.f32 %v6890, 1.0
    %v7019 = vadd.f32 %v6891, 1.0
    %v7020 = vadd.f32 %v6892, 1.0
    %v7021 = vadd.f32 %v6893, 1.0
    %v7022 = vadd.f32 %v6894, 1.0
    %v7023 = vadd.f32 %v6895, 1.0
    %v7024 = vadd.f32 %v6896, 1.0
    %v7025 = vadd.f32 %v6897, 1.0
    %v7026 = vadd.f32 %v6898, 1.0
    %v7027 = vadd.f32 %v6899, 1.0
    %v7028 = vadd.f32 %v6900, 1.0
    %v7029 = vadd.f32 %v6901, 1.0
    %v7030 = vadd.f32 %v6902, 1.0
    %v7031 = vadd.f32 %v6903, 1.0
    %v7032 = vadd.f32 %v6904, 1.0
    %v7033 = vadd.f32 %v6905, 1.0
    %v7034 = vadd.f32 %v6906, 1.0
    %v7035 = vadd.f32 %v6907, 1.0
    %v7036 = vadd.f32 %v6908, 1.0
    %v7037 = vadd.f32 %v6909, 1.0
    %v7038 = vadd.f32 %v6910, 1.0
    %v7039 = vadd.f32 %v6911, 1.0
    %v7040 = vadd.f32 %v6912, 1.0
    %v7041 = vadd.f32 %v6913, 1.0
    %v7042 = vadd.f32 %v6914, 1.0
    %v7043 = vadd.f32 %v6915, 1.0
    %v7044 = vadd.f32 %v6916, 1.0
    %v7045 = vadd.f32 %v6917, 1.0
    %v7046 = vadd.f32 %v6918, 1.0
    %v7047 = vadd.f32 %v6919, 1.0
    %v7048 = vadd.f32 %v6920, 1.0
    %v7049 = vadd.f32 %v6921, 1.0
    %v7050 = vadd.f32 %v6922, 1.0
    %v7051 = vadd.f32 %v6923, 1.0
    %v7052 = vadd.f32 %v6924, 1.0
    %v7053 = vadd.f32 %v6925, 1.0
    %v7054 = vmul.f32 %v6030, %v6926
    %v7055 = vmul.f32 %v6031, %v6927
    %v7056 = vmul.f32 %v6032, %v6928
    %v7057 = vmul.f32 %v6033, %v6929
    %v7058 = vmul.f32 %v6034, %v6930
    %v7059 = vmul.f32 %v6035, %v6931
    %v7060 = vmul.f32 %v6036, %v6932
    %v7061 = vmul.f32 %v6037, %v6933
    %v7062 = vmul.f32 %v6038, %v6934
    %v7063 = vmul.f32 %v6039, %v6935
    %v7064 = vmul.f32 %v6040, %v6936
    %v7065 = vmul.f32 %v6041, %v6937
    %v7066 = vmul.f32 %v6042, %v6938
    %v7067 = vmul.f32 %v6043, %v6939
    %v7068 = vmul.f32 %v6044, %v6940
    %v7069 = vmul.f32 %v6045, %v6941
    %v7070 = vmul.f32 %v6046, %v6942
    %v7071 = vmul.f32 %v6047, %v6943
    %v7072 = vmul.f32 %v6048, %v6944
    %v7073 = vmul.f32 %v6049, %v6945
    %v7074 = vmul.f32 %v6050, %v6946
    %v7075 = vmul.f32 %v6051, %v6947
    %v7076 = vmul.f32 %v6052, %v6948
    %v7077 = vmul.f32 %v6053, %v6949
    %v7078 = vmul.f32 %v6054, %v6950
    %v7079 = vmul.f32 %v6055, %v6951
    %v7080 = vmul.f32 %v6056, %v6952
    %v7081 = vmul.f32 %v6057, %v6953
    %v7082 = vmul.f32 %v6058, %v6954
    %v7083 = vmul.f32 %v6059, %v6955
    %v7084 = vmul.f32 %v6060, %v6956
    %v7085 = vmul.f32 %v6061, %v6957
    %v7086 = vmul.f32 %v6062, %v6958
    %v7087 = vmul.f32 %v6063, %v6959
    %v7088 = vmul.f32 %v6064, %v6960
    %v7089 = vmul.f32 %v6065, %v6961
    %v7090 = vmul.f32 %v6066, %v6962
    %v7091 = vmul.f32 %v6067, %v6963
    %v7092 = vmul.f32 %v6068, %v6964
    %v7093 = vmul.f32 %v6069, %v6965
    %v7094 = vmul.f32 %v6070, %v6966
    %v7095 = vmul.f32 %v6071, %v6967
    %v7096 = vmul.f32 %v6072, %v6968
    %v7097 = vmul.f32 %v6073, %v6969
    %v7098 = vmul.f32 %v6074, %v6970
    %v7099 = vmul.f32 %v6075, %v6971
    %v7100 = vmul.f32 %v6076, %v6972
    %v7101 = vmul.f32 %v6077, %v6973
    %v7102 = vmul.f32 %v6078, %v6974
    %v7103 = vmul.f32 %v6079, %v6975
    %v7104 = vmul.f32 %v6080, %v6976
    %v7105 = vmul.f32 %v6081, %v6977
    %v7106 = vmul.f32 %v6082, %v6978
    %v7107 = vmul.f32 %v6083, %v6979
    %v7108 = vmul.f32 %v6084, %v6980
    %v7109 = vmul.f32 %v6085, %v6981
    %v7110 = vmul.f32 %v6086, %v6982
    %v7111 = vmul.f32 %v6087, %v6983
    %v7112 = vmul.f32 %v6088, %v6984
    %v7113 = vmul.f32 %v6089, %v6985
    %v7114 = vmul.f32 %v6090, %v6986
    %v7115 = vmul.f32 %v6091, %v6987
    %v7116 = vmul.f32 %v6092, %v6988
    %v7117 = vmul.f32 %v6093, %v6989
    %v7118 = vmul.f32 %v6094, %v6990
    %v7119 = vmul.f32 %v6095, %v6991
    %v7120 = vmul.f32 %v6096, %v6992
    %v7121 = vmul.f32 %v6097, %v6993
    %v7122 = vmul.f32 %v6098, %v6994
    %v7123 = vmul.f32 %v6099, %v6995
    %v7124 = vmul.f32 %v6100, %v6996
    %v7125 = vmul.f32 %v6101, %v6997
    %v7126 = vmul.f32 %v6102, %v6998
    %v7127 = vmul.f32 %v6103, %v6999
    %v7128 = vmul.f32 %v6104, %v7000
    %v7129 = vmul.f32 %v6105, %v7001
    %v7130 = vmul.f32 %v6106, %v7002
    %v7131 = vmul.f32 %v6107, %v7003
    %v7132 = vmul.f32 %v6108, %v7004
    %v7133 = vmul.f32 %v6109, %v7005
    %v7134 = vmul.f32 %v6110, %v7006
    %v7135 = vmul.f32 %v6111, %v7007
    %v7136 = vmul.f32 %v6112, %v7008
    %v7137 = vmul.f32 %v6113, %v7009
    %v7138 = vmul.f32 %v6114, %v7010
    %v7139 = vmul.f32 %v6115, %v7011
    %v7140 = vmul.f32 %v6116, %v7012
    %v7141 = vmul.f32 %v6117, %v7013
    %v7142 = vmul.f32 %v6118, %v7014
    %v7143 = vmul.f32 %v6119, %v7015
    %v7144 = vmul.f32 %v6120, %v7016
    %v7145 = vmul.f32 %v6121, %v7017
    %v7146 = vmul.f32 %v6122, %v7018
    %v7147 = vmul.f32 %v6123, %v7019
    %v7148 = vmul.f32 %v6124, %v7020
    %v7149 = vmul.f32 %v6125, %v7021
    %v7150 = vmul.f32 %v6126, %v7022
    %v7151 = vmul.f32 %v6127, %v7023
    %v7152 = vmul.f32 %v6128, %v7024
    %v7153 = vmul.f32 %v6129, %v7025
    %v7154 = vmul.f32 %v6130, %v7026
    %v7155 = vmul.f32 %v6131, %v7027
    %v7156 = vmul.f32 %v6132, %v7028
    %v7157 = vmul.f32 %v6133, %v7029
    %v7158 = vmul.f32 %v6134, %v7030
    %v7159 = vmul.f32 %v6135, %v7031
    %v7160 = vmul.f32 %v6136, %v7032
    %v7161 = vmul.f32 %v6137, %v7033
    %v7162 = vmul.f32 %v6138, %v7034
    %v7163 = vmul.f32 %v6139, %v7035
    %v7164 = vmul.f32 %v6140, %v7036
    %v7165 = vmul.f32 %v6141, %v7037
    %v7166 = vmul.f32 %v6142, %v7038
    %v7167 = vmul.f32 %v6143, %v7039
    %v7168 = vmul.f32 %v6144, %v7040
    %v7169 = vmul.f32 %v6145, %v7041
    %v7170 = vmul.f32 %v6146, %v7042
    %v7171 = vmul.f32 %v6147, %v7043
    %v7172 = vmul.f32 %v6148, %v7044
    %v7173 = vmul.f32 %v6149, %v7045
    %v7174 = vmul.f32 %v6150, %v7046
    %v7175 = vmul.f32 %v6151, %v7047
    %v7176 = vmul.f32 %v6152, %v7048
    %v7177 = vmul.f32 %v6153, %v7049
    %v7178 = vmul.f32 %v6154, %v7050
    %v7179 = vmul.f32 %v6155, %v7051
    %v7180 = vmul.f32 %v6156, %v7052
    %v7181 = vmul.f32 %v6157, %v7053
    %v7182 = vld [vmem:[#allocation2] sm:$0xff]
    %v7183 = vld [vmem:[#allocation2 + $0x8] sm:$0xff]
    %v7184 = vld [vmem:[#allocation2 + $0x10] sm:$0xff]
    %v7185 = vld [vmem:[#allocation2 + $0x18] sm:$0xff]
    %v7186 = vld [vmem:[#allocation2 + $0x20] sm:$0xff]
    %v7187 = vld [vmem:[#allocation2 + $0x28] sm:$0xff]
    %v7188 = vld [vmem:[#allocation2 + $0x30] sm:$0xff]
    %v7189 = vld [vmem:[#allocation2 + $0x38] sm:$0xff]
    %v7190 = vld [vmem:[#allocation2 + $0x40] sm:$0xff]
    %v7191 = vld [vmem:[#allocation2 + $0x48] sm:$0xff]
    %v7192 = vld [vmem:[#allocation2 + $0x50] sm:$0xff]
    %v7193 = vld [vmem:[#allocation2 + $0x58] sm:$0xff]
    %v7194 = vld [vmem:[#allocation2 + $0x60] sm:$0xff]
    %v7195 = vld [vmem:[#allocation2 + $0x68] sm:$0xff]
    %v7196 = vld [vmem:[#allocation2 + $0x70] sm:$0xff]
    %v7197 = vld [vmem:[#allocation2 + $0x78] sm:$0xff]
    %v7198 = vld [vmem:[#allocation2 + $0x80] sm:$0xff]
    %v7199 = vld [vmem:[#allocation2 + $0x88] sm:$0xff]
    %v7200 = vld [vmem:[#allocation2 + $0x90] sm:$0xff]
    %v7201 = vld [vmem:[#allocation2 + $0x98] sm:$0xff]
    %v7202 = vld [vmem:[#allocation2 + $0xa0] sm:$0xff]
    %v7203 = vld [vmem:[#allocation2 + $0xa8] sm:$0xff]
    %v7204 = vld [vmem:[#allocation2 + $0xb0] sm:$0xff]
    %v7205 = vld [vmem:[#allocation2 + $0xb8] sm:$0xff]
    %v7206 = vld [vmem:[#allocation2 + $0xc0] sm:$0xff]
    %v7207 = vld [vmem:[#allocation2 + $0xc8] sm:$0xff]
    %v7208 = vld [vmem:[#allocation2 + $0xd0] sm:$0xff]
    %v7209 = vld [vmem:[#allocation2 + $0xd8] sm:$0xff]
    %v7210 = vld [vmem:[#allocation2 + $0xe0] sm:$0xff]
    %v7211 = vld [vmem:[#allocation2 + $0xe8] sm:$0xff]
    %v7212 = vld [vmem:[#allocation2 + $0xf0] sm:$0xff]
    %v7213 = vld [vmem:[#allocation2 + $0xf8] sm:$0xff]
    %v7214 = vld [vmem:[#allocation2 + $0x100] sm:$0xff]
    %v7215 = vld [vmem:[#allocation2 + $0x108] sm:$0xff]
    %v7216 = vld [vmem:[#allocation2 + $0x110] sm:$0xff]
    %v7217 = vld [vmem:[#allocation2 + $0x118] sm:$0xff]
    %v7218 = vld [vmem:[#allocation2 + $0x120] sm:$0xff]
    %v7219 = vld [vmem:[#allocation2 + $0x128] sm:$0xff]
    %v7220 = vld [vmem:[#allocation2 + $0x130] sm:$0xff]
    %v7221 = vld [vmem:[#allocation2 + $0x138] sm:$0xff]
    %v7222 = vld [vmem:[#allocation2 + $0x140] sm:$0xff]
    %v7223 = vld [vmem:[#allocation2 + $0x148] sm:$0xff]
    %v7224 = vld [vmem:[#allocation2 + $0x150] sm:$0xff]
    %v7225 = vld [vmem:[#allocation2 + $0x158] sm:$0xff]
    %v7226 = vld [vmem:[#allocation2 + $0x160] sm:$0xff]
    %v7227 = vld [vmem:[#allocation2 + $0x168] sm:$0xff]
    %v7228 = vld [vmem:[#allocation2 + $0x170] sm:$0xff]
    %v7229 = vld [vmem:[#allocation2 + $0x178] sm:$0xff]
    %v7230 = vld [vmem:[#allocation2 + $0x180] sm:$0xff]
    %v7231 = vld [vmem:[#allocation2 + $0x188] sm:$0xff]
    %v7232 = vld [vmem:[#allocation2 + $0x190] sm:$0xff]
    %v7233 = vld [vmem:[#allocation2 + $0x198] sm:$0xff]
    %v7234 = vld [vmem:[#allocation2 + $0x1a0] sm:$0xff]
    %v7235 = vld [vmem:[#allocation2 + $0x1a8] sm:$0xff]
    %v7236 = vld [vmem:[#allocation2 + $0x1b0] sm:$0xff]
    %v7237 = vld [vmem:[#allocation2 + $0x1b8] sm:$0xff]
    %v7238 = vld [vmem:[#allocation2 + $0x1c0] sm:$0xff]
    %v7239 = vld [vmem:[#allocation2 + $0x1c8] sm:$0xff]
    %v7240 = vld [vmem:[#allocation2 + $0x1d0] sm:$0xff]
    %v7241 = vld [vmem:[#allocation2 + $0x1d8] sm:$0xff]
    %v7242 = vld [vmem:[#allocation2 + $0x1e0] sm:$0xff]
    %v7243 = vld [vmem:[#allocation2 + $0x1e8] sm:$0xff]
    %v7244 = vld [vmem:[#allocation2 + $0x1f0] sm:$0xff]
    %v7245 = vld [vmem:[#allocation2 + $0x1f8] sm:$0xff]
    %v7246 = vpack.c.bf16 %v7056, %v7054
    %v7247 = vpack.c.bf16 %v7057, %v7055
    %v7248 = vpack.c.bf16 %v7060, %v7058
    %v7249 = vpack.c.bf16 %v7061, %v7059
    %v7250 = vpack.c.bf16 %v7064, %v7062
    %v7251 = vpack.c.bf16 %v7065, %v7063
    %v7252 = vpack.c.bf16 %v7068, %v7066
    %v7253 = vpack.c.bf16 %v7069, %v7067
    %v7254 = vpack.c.bf16 %v7072, %v7070
    %v7255 = vpack.c.bf16 %v7073, %v7071
    %v7256 = vpack.c.bf16 %v7076, %v7074
    %v7257 = vpack.c.bf16 %v7077, %v7075
    %v7258 = vpack.c.bf16 %v7080, %v7078
    %v7259 = vpack.c.bf16 %v7081, %v7079
    %v7260 = vpack.c.bf16 %v7084, %v7082
    %v7261 = vpack.c.bf16 %v7085, %v7083
    %v7262 = vpack.c.bf16 %v7088, %v7086
    %v7263 = vpack.c.bf16 %v7089, %v7087
    %v7264 = vpack.c.bf16 %v7092, %v7090
    %v7265 = vpack.c.bf16 %v7093, %v7091
    %v7266 = vpack.c.bf16 %v7096, %v7094
    %v7267 = vpack.c.bf16 %v7097, %v7095
    %v7268 = vpack.c.bf16 %v7100, %v7098
    %v7269 = vpack.c.bf16 %v7101, %v7099
    %v7270 = vpack.c.bf16 %v7104, %v7102
    %v7271 = vpack.c.bf16 %v7105, %v7103
    %v7272 = vpack.c.bf16 %v7108, %v7106
    %v7273 = vpack.c.bf16 %v7109, %v7107
    %v7274 = vpack.c.bf16 %v7112, %v7110
    %v7275 = vpack.c.bf16 %v7113, %v7111
    %v7276 = vpack.c.bf16 %v7116, %v7114
    %v7277 = vpack.c.bf16 %v7117, %v7115
    %v7278 = vpack.c.bf16 %v7120, %v7118
    %v7279 = vpack.c.bf16 %v7121, %v7119
    %v7280 = vpack.c.bf16 %v7124, %v7122
    %v7281 = vpack.c.bf16 %v7125, %v7123
    %v7282 = vpack.c.bf16 %v7128, %v7126
    %v7283 = vpack.c.bf16 %v7129, %v7127
    %v7284 = vpack.c.bf16 %v7132, %v7130
    %v7285 = vpack.c.bf16 %v7133, %v7131
    %v7286 = vpack.c.bf16 %v7136, %v7134
    %v7287 = vpack.c.bf16 %v7137, %v7135
    %v7288 = vpack.c.bf16 %v7140, %v7138
    %v7289 = vpack.c.bf16 %v7141, %v7139
    %v7290 = vpack.c.bf16 %v7144, %v7142
    %v7291 = vpack.c.bf16 %v7145, %v7143
    %v7292 = vpack.c.bf16 %v7148, %v7146
    %v7293 = vpack.c.bf16 %v7149, %v7147
    %v7294 = vpack.c.bf16 %v7152, %v7150
    %v7295 = vpack.c.bf16 %v7153, %v7151
    %v7296 = vpack.c.bf16 %v7156, %v7154
    %v7297 = vpack.c.bf16 %v7157, %v7155
    %v7298 = vpack.c.bf16 %v7160, %v7158
    %v7299 = vpack.c.bf16 %v7161, %v7159
    %v7300 = vpack.c.bf16 %v7164, %v7162
    %v7301 = vpack.c.bf16 %v7165, %v7163
    %v7302 = vpack.c.bf16 %v7168, %v7166
    %v7303 = vpack.c.bf16 %v7169, %v7167
    %v7304 = vpack.c.bf16 %v7172, %v7170
    %v7305 = vpack.c.bf16 %v7173, %v7171
    %v7306 = vpack.c.bf16 %v7176, %v7174
    %v7307 = vpack.c.bf16 %v7177, %v7175
    %v7308 = vpack.c.bf16 %v7180, %v7178
    %v7309 = vpack.c.bf16 %v7181, %v7179
    %v7310 = vld [vmem:[#allocation11 + $0x80] sm:$0xf]
    %v7311 = vld [vmem:[#allocation11 + $0x84] sm:$0xf]
    %v7312 = vld [vmem:[#allocation11 + $0x88] sm:$0xf]
    %v7313 = vld [vmem:[#allocation11 + $0x8c] sm:$0xf]
    %v7314 = vld [vmem:[#allocation11 + $0x90] sm:$0xf]
    %v7315 = vld [vmem:[#allocation11 + $0x94] sm:$0xf]
    %v7316 = vld [vmem:[#allocation11 + $0x98] sm:$0xf]
    %v7317 = vld [vmem:[#allocation11 + $0x9c] sm:$0xf]
    %v7318 = vld [vmem:[#allocation11 + $0xa0] sm:$0xf]
    %v7319 = vld [vmem:[#allocation11 + $0xa4] sm:$0xf]
    %v7320 = vld [vmem:[#allocation11 + $0xa8] sm:$0xf]
    %v7321 = vld [vmem:[#allocation11 + $0xac] sm:$0xf]
    %v7322 = vld [vmem:[#allocation11 + $0xb0] sm:$0xf]
    %v7323 = vld [vmem:[#allocation11 + $0xb4] sm:$0xf]
    %v7324 = vld [vmem:[#allocation11 + $0xb8] sm:$0xf]
    %v7325 = vld [vmem:[#allocation11 + $0xbc] sm:$0xf]
    %v7326 = vld [vmem:[#allocation11 + $0xc0] sm:$0xf]
    %v7327 = vld [vmem:[#allocation11 + $0xc4] sm:$0xf]
    %v7328 = vld [vmem:[#allocation11 + $0xc8] sm:$0xf]
    %v7329 = vld [vmem:[#allocation11 + $0xcc] sm:$0xf]
    %v7330 = vld [vmem:[#allocation11 + $0xd0] sm:$0xf]
    %v7331 = vld [vmem:[#allocation11 + $0xd4] sm:$0xf]
    %v7332 = vld [vmem:[#allocation11 + $0xd8] sm:$0xf]
    %v7333 = vld [vmem:[#allocation11 + $0xdc] sm:$0xf]
    %v7334 = vld [vmem:[#allocation11 + $0xe0] sm:$0xf]
    %v7335 = vld [vmem:[#allocation11 + $0xe4] sm:$0xf]
    %v7336 = vld [vmem:[#allocation11 + $0xe8] sm:$0xf]
    %v7337 = vld [vmem:[#allocation11 + $0xec] sm:$0xf]
    %v7338 = vld [vmem:[#allocation11 + $0xf0] sm:$0xf]
    %v7339 = vld [vmem:[#allocation11 + $0xf4] sm:$0xf]
    %v7340 = vld [vmem:[#allocation11 + $0xf8] sm:$0xf]
    %v7341 = vld [vmem:[#allocation11 + $0xfc] sm:$0xf]
    %v7374 = vunpack.c.l.b16 %v7310
    %v7375 = vunpack.c.l.b16 %v7311
    %v7376 = vunpack.c.l.b16 %v7312
    %v7377 = vunpack.c.l.b16 %v7313
    %v7378 = vunpack.c.l.b16 %v7314
    %v7379 = vunpack.c.l.b16 %v7315
    %v7380 = vunpack.c.l.b16 %v7316
    %v7381 = vunpack.c.l.b16 %v7317
    %v7382 = vunpack.c.l.b16 %v7318
    %v7383 = vunpack.c.l.b16 %v7319
    %v7384 = vunpack.c.l.b16 %v7320
    %v7385 = vunpack.c.l.b16 %v7321
    %v7386 = vunpack.c.l.b16 %v7322
    %v7387 = vunpack.c.l.b16 %v7323
    %v7388 = vunpack.c.l.b16 %v7324
    %v7389 = vunpack.c.l.b16 %v7325
    %v7390 = vunpack.c.l.b16 %v7326
    %v7391 = vunpack.c.l.b16 %v7327
    %v7392 = vunpack.c.l.b16 %v7328
    %v7393 = vunpack.c.l.b16 %v7329
    %v7394 = vunpack.c.l.b16 %v7330
    %v7395 = vunpack.c.l.b16 %v7331
    %v7396 = vunpack.c.l.b16 %v7332
    %v7397 = vunpack.c.l.b16 %v7333
    %v7398 = vunpack.c.l.b16 %v7334
    %v7399 = vunpack.c.l.b16 %v7335
    %v7400 = vunpack.c.l.b16 %v7336
    %v7401 = vunpack.c.l.b16 %v7337
    %v7402 = vunpack.c.l.b16 %v7338
    %v7403 = vunpack.c.l.b16 %v7339
    %v7404 = vunpack.c.l.b16 %v7340
    %v7405 = vunpack.c.l.b16 %v7341
    %v7406 = vpack.c.b16 %v7375, %v7374
    %v7407 = vpack.c.b16 %v7377, %v7376
    %v7408 = vpack.c.b16 %v7379, %v7378
    %v7409 = vpack.c.b16 %v7381, %v7380
    %v7410 = vpack.c.b16 %v7383, %v7382
    %v7411 = vpack.c.b16 %v7385, %v7384
    %v7412 = vpack.c.b16 %v7387, %v7386
    %v7413 = vpack.c.b16 %v7389, %v7388
    %v7414 = vpack.c.b16 %v7391, %v7390
    %v7415 = vpack.c.b16 %v7393, %v7392
    %v7416 = vpack.c.b16 %v7395, %v7394
    %v7417 = vpack.c.b16 %v7397, %v7396
    %v7418 = vpack.c.b16 %v7399, %v7398
    %v7419 = vpack.c.b16 %v7401, %v7400
    %v7420 = vpack.c.b16 %v7403, %v7402
    %v7421 = vpack.c.b16 %v7405, %v7404
    %7438 = vmatpush.bf16.msra.mxu0 %v7413
    %7439 = vmatpush.bf16.msra.mxu0 %v7412
    %7440 = vmatpush.bf16.msra.mxu0 %v7411
    %7441 = vmatpush.bf16.msra.mxu0 %v7410
    %7442 = vmatpush.bf16.msra.mxu0 %v7409
    %7443 = vmatpush.bf16.msra.mxu0 %v7408
    %7444 = vmatpush.bf16.msra.mxu0 %v7407
    %7445 = vmatpush.bf16.msra.mxu0 %v7406
    %7446 = vmatmul.bf16.gmra.mxu0 %v7246
    %v7447 = vpop.f32.mrf.mxu0
    %v7448 = vadd.f32 0.0, %v7447
    %v7449 = vpop.f32.mrf.mxu0
    %v7450 = vadd.f32 0.0, %v7449
    %7451 = vmatmul.bf16.gmra.mxu0 %v7248
    %v7452 = vpop.f32.mrf.mxu0
    %v7453 = vadd.f32 0.0, %v7452
    %v7454 = vpop.f32.mrf.mxu0
    %v7455 = vadd.f32 0.0, %v7454
    %7456 = vmatmul.bf16.gmra.mxu0 %v7250
    %v7457 = vpop.f32.mrf.mxu0
    %v7458 = vadd.f32 0.0, %v7457
    %v7459 = vpop.f32.mrf.mxu0
    %v7460 = vadd.f32 0.0, %v7459
    %7461 = vmatmul.bf16.gmra.mxu0 %v7252
    %v7462 = vpop.f32.mrf.mxu0
    %v7463 = vadd.f32 0.0, %v7462
    %v7464 = vpop.f32.mrf.mxu0
    %v7465 = vadd.f32 0.0, %v7464
    %7466 = vmatmul.bf16.gmra.mxu0 %v7254
    %v7467 = vpop.f32.mrf.mxu0
    %v7468 = vadd.f32 0.0, %v7467
    %v7469 = vpop.f32.mrf.mxu0
    %v7470 = vadd.f32 0.0, %v7469
    %7471 = vmatmul.bf16.gmra.mxu0 %v7256
    %v7472 = vpop.f32.mrf.mxu0
    %v7473 = vadd.f32 0.0, %v7472
    %v7474 = vpop.f32.mrf.mxu0
    %v7475 = vadd.f32 0.0, %v7474
    %7476 = vmatmul.bf16.gmra.mxu0 %v7258
    %v7477 = vpop.f32.mrf.mxu0
    %v7478 = vadd.f32 0.0, %v7477
    %v7479 = vpop.f32.mrf.mxu0
    %v7480 = vadd.f32 0.0, %v7479
    %7481 = vmatmul.bf16.gmra.mxu0 %v7260
    %v7482 = vpop.f32.mrf.mxu0
    %v7483 = vadd.f32 0.0, %v7482
    %v7484 = vpop.f32.mrf.mxu0
    %v7485 = vadd.f32 0.0, %v7484
    %7486 = vmatmul.bf16.gmra.mxu0 %v7262
    %v7487 = vpop.f32.mrf.mxu0
    %v7488 = vadd.f32 0.0, %v7487
    %v7489 = vpop.f32.mrf.mxu0
    %v7490 = vadd.f32 0.0, %v7489
    %7491 = vmatmul.bf16.gmra.mxu0 %v7264
    %v7492 = vpop.f32.mrf.mxu0
    %v7493 = vadd.f32 0.0, %v7492
    %v7494 = vpop.f32.mrf.mxu0
    %v7495 = vadd.f32 0.0, %v7494
    %7496 = vmatmul.bf16.gmra.mxu0 %v7266
    %v7497 = vpop.f32.mrf.mxu0
    %v7498 = vadd.f32 0.0, %v7497
    %v7499 = vpop.f32.mrf.mxu0
    %v7500 = vadd.f32 0.0, %v7499
    %7501 = vmatmul.bf16.gmra.mxu0 %v7268
    %v7502 = vpop.f32.mrf.mxu0
    %v7503 = vadd.f32 0.0, %v7502
    %v7504 = vpop.f32.mrf.mxu0
    %v7505 = vadd.f32 0.0, %v7504
    %7506 = vmatmul.bf16.gmra.mxu0 %v7270
    %v7507 = vpop.f32.mrf.mxu0
    %v7508 = vadd.f32 0.0, %v7507
    %v7509 = vpop.f32.mrf.mxu0
    %v7510 = vadd.f32 0.0, %v7509
    %7511 = vmatmul.bf16.gmra.mxu0 %v7272
    %v7512 = vpop.f32.mrf.mxu0
    %v7513 = vadd.f32 0.0, %v7512
    %v7514 = vpop.f32.mrf.mxu0
    %v7515 = vadd.f32 0.0, %v7514
    %7516 = vmatmul.bf16.gmra.mxu0 %v7274
    %v7517 = vpop.f32.mrf.mxu0
    %v7518 = vadd.f32 0.0, %v7517
    %v7519 = vpop.f32.mrf.mxu0
    %v7520 = vadd.f32 0.0, %v7519
    %7521 = vmatmul.bf16.gmra.mxu0 %v7276
    %v7522 = vpop.f32.mrf.mxu0
    %v7523 = vadd.f32 0.0, %v7522
    %v7524 = vpop.f32.mrf.mxu0
    %v7525 = vadd.f32 0.0, %v7524
    %7526 = vmatmul.bf16.gmra.mxu0 %v7278
    %v7527 = vpop.f32.mrf.mxu0
    %v7528 = vadd.f32 0.0, %v7527
    %v7529 = vpop.f32.mrf.mxu0
    %v7530 = vadd.f32 0.0, %v7529
    %7531 = vmatmul.bf16.gmra.mxu0 %v7280
    %v7532 = vpop.f32.mrf.mxu0
    %v7533 = vadd.f32 0.0, %v7532
    %v7534 = vpop.f32.mrf.mxu0
    %v7535 = vadd.f32 0.0, %v7534
    %7536 = vmatmul.bf16.gmra.mxu0 %v7282
    %v7537 = vpop.f32.mrf.mxu0
    %v7538 = vadd.f32 0.0, %v7537
    %v7539 = vpop.f32.mrf.mxu0
    %v7540 = vadd.f32 0.0, %v7539
    %7541 = vmatmul.bf16.gmra.mxu0 %v7284
    %v7542 = vpop.f32.mrf.mxu0
    %v7543 = vadd.f32 0.0, %v7542
    %v7544 = vpop.f32.mrf.mxu0
    %v7545 = vadd.f32 0.0, %v7544
    %7546 = vmatmul.bf16.gmra.mxu0 %v7286
    %v7547 = vpop.f32.mrf.mxu0
    %v7548 = vadd.f32 0.0, %v7547
    %v7549 = vpop.f32.mrf.mxu0
    %v7550 = vadd.f32 0.0, %v7549
    %7551 = vmatmul.bf16.gmra.mxu0 %v7288
    %v7552 = vpop.f32.mrf.mxu0
    %v7553 = vadd.f32 0.0, %v7552
    %v7554 = vpop.f32.mrf.mxu0
    %v7555 = vadd.f32 0.0, %v7554
    %7556 = vmatmul.bf16.gmra.mxu0 %v7290
    %v7557 = vpop.f32.mrf.mxu0
    %v7558 = vadd.f32 0.0, %v7557
    %v7559 = vpop.f32.mrf.mxu0
    %v7560 = vadd.f32 0.0, %v7559
    %7561 = vmatmul.bf16.gmra.mxu0 %v7292
    %v7562 = vpop.f32.mrf.mxu0
    %v7563 = vadd.f32 0.0, %v7562
    %v7564 = vpop.f32.mrf.mxu0
    %v7565 = vadd.f32 0.0, %v7564
    %7566 = vmatmul.bf16.gmra.mxu0 %v7294
    %v7567 = vpop.f32.mrf.mxu0
    %v7568 = vadd.f32 0.0, %v7567
    %v7569 = vpop.f32.mrf.mxu0
    %v7570 = vadd.f32 0.0, %v7569
    %7571 = vmatmul.bf16.gmra.mxu0 %v7296
    %v7572 = vpop.f32.mrf.mxu0
    %v7573 = vadd.f32 0.0, %v7572
    %v7574 = vpop.f32.mrf.mxu0
    %v7575 = vadd.f32 0.0, %v7574
    %7576 = vmatmul.bf16.gmra.mxu0 %v7298
    %v7577 = vpop.f32.mrf.mxu0
    %v7578 = vadd.f32 0.0, %v7577
    %v7579 = vpop.f32.mrf.mxu0
    %v7580 = vadd.f32 0.0, %v7579
    %7581 = vmatmul.bf16.gmra.mxu0 %v7300
    %v7582 = vpop.f32.mrf.mxu0
    %v7583 = vadd.f32 0.0, %v7582
    %v7584 = vpop.f32.mrf.mxu0
    %v7585 = vadd.f32 0.0, %v7584
    %7586 = vmatmul.bf16.gmra.mxu0 %v7302
    %v7587 = vpop.f32.mrf.mxu0
    %v7588 = vadd.f32 0.0, %v7587
    %v7589 = vpop.f32.mrf.mxu0
    %v7590 = vadd.f32 0.0, %v7589
    %7591 = vmatmul.bf16.gmra.mxu0 %v7304
    %v7592 = vpop.f32.mrf.mxu0
    %v7593 = vadd.f32 0.0, %v7592
    %v7594 = vpop.f32.mrf.mxu0
    %v7595 = vadd.f32 0.0, %v7594
    %7596 = vmatmul.bf16.gmra.mxu0 %v7306
    %v7597 = vpop.f32.mrf.mxu0
    %v7598 = vadd.f32 0.0, %v7597
    %v7599 = vpop.f32.mrf.mxu0
    %v7600 = vadd.f32 0.0, %v7599
    %7601 = vmatmul.bf16.gmra.mxu0 %v7308
    %v7602 = vpop.f32.mrf.mxu0
    %v7603 = vadd.f32 0.0, %v7602
    %v7604 = vpop.f32.mrf.mxu0
    %v7605 = vadd.f32 0.0, %v7604
    %7606 = vdwg.mxu0
    %7607 = vmatpush.bf16.msra.mxu0 %v7421
    %7608 = vmatpush.bf16.msra.mxu0 %v7420
    %7609 = vmatpush.bf16.msra.mxu0 %v7419
    %7610 = vmatpush.bf16.msra.mxu0 %v7418
    %7611 = vmatpush.bf16.msra.mxu0 %v7417
    %7612 = vmatpush.bf16.msra.mxu0 %v7416
    %7613 = vmatpush.bf16.msra.mxu0 %v7415
    %7614 = vmatpush.bf16.msra.mxu0 %v7414
    %7615 = vmatmul.bf16.gmra.mxu0 %v7247
    %v7616 = vpop.f32.mrf.mxu0
    %v7617 = vadd.f32 %v7448, %v7616
    %v7618 = vpop.f32.mrf.mxu0
    %v7619 = vadd.f32 %v7450, %v7618
    %7620 = vmatmul.bf16.gmra.mxu0 %v7249
    %v7621 = vpop.f32.mrf.mxu0
    %v7622 = vadd.f32 %v7453, %v7621
    %v7623 = vpop.f32.mrf.mxu0
    %v7624 = vadd.f32 %v7455, %v7623
    %7625 = vmatmul.bf16.gmra.mxu0 %v7251
    %v7626 = vpop.f32.mrf.mxu0
    %v7627 = vadd.f32 %v7458, %v7626
    %v7628 = vpop.f32.mrf.mxu0
    %v7629 = vadd.f32 %v7460, %v7628
    %7630 = vmatmul.bf16.gmra.mxu0 %v7253
    %v7631 = vpop.f32.mrf.mxu0
    %v7632 = vadd.f32 %v7463, %v7631
    %v7633 = vpop.f32.mrf.mxu0
    %v7634 = vadd.f32 %v7465, %v7633
    %7635 = vmatmul.bf16.gmra.mxu0 %v7255
    %v7636 = vpop.f32.mrf.mxu0
    %v7637 = vadd.f32 %v7468, %v7636
    %v7638 = vpop.f32.mrf.mxu0
    %v7639 = vadd.f32 %v7470, %v7638
    %7640 = vmatmul.bf16.gmra.mxu0 %v7257
    %v7641 = vpop.f32.mrf.mxu0
    %v7642 = vadd.f32 %v7473, %v7641
    %v7643 = vpop.f32.mrf.mxu0
    %v7644 = vadd.f32 %v7475, %v7643
    %7645 = vmatmul.bf16.gmra.mxu0 %v7259
    %v7646 = vpop.f32.mrf.mxu0
    %v7647 = vadd.f32 %v7478, %v7646
    %v7648 = vpop.f32.mrf.mxu0
    %v7649 = vadd.f32 %v7480, %v7648
    %7650 = vmatmul.bf16.gmra.mxu0 %v7261
    %v7651 = vpop.f32.mrf.mxu0
    %v7652 = vadd.f32 %v7483, %v7651
    %v7653 = vpop.f32.mrf.mxu0
    %v7654 = vadd.f32 %v7485, %v7653
    %7655 = vmatmul.bf16.gmra.mxu0 %v7263
    %v7656 = vpop.f32.mrf.mxu0
    %v7657 = vadd.f32 %v7488, %v7656
    %v7658 = vpop.f32.mrf.mxu0
    %v7659 = vadd.f32 %v7490, %v7658
    %7660 = vmatmul.bf16.gmra.mxu0 %v7265
    %v7661 = vpop.f32.mrf.mxu0
    %v7662 = vadd.f32 %v7493, %v7661
    %v7663 = vpop.f32.mrf.mxu0
    %v7664 = vadd.f32 %v7495, %v7663
    %7665 = vmatmul.bf16.gmra.mxu0 %v7267
    %v7666 = vpop.f32.mrf.mxu0
    %v7667 = vadd.f32 %v7498, %v7666
    %v7668 = vpop.f32.mrf.mxu0
    %v7669 = vadd.f32 %v7500, %v7668
    %7670 = vmatmul.bf16.gmra.mxu0 %v7269
    %v7671 = vpop.f32.mrf.mxu0
    %v7672 = vadd.f32 %v7503, %v7671
    %v7673 = vpop.f32.mrf.mxu0
    %v7674 = vadd.f32 %v7505, %v7673
    %7675 = vmatmul.bf16.gmra.mxu0 %v7271
    %v7676 = vpop.f32.mrf.mxu0
    %v7677 = vadd.f32 %v7508, %v7676
    %v7678 = vpop.f32.mrf.mxu0
    %v7679 = vadd.f32 %v7510, %v7678
    %7680 = vmatmul.bf16.gmra.mxu0 %v7273
    %v7681 = vpop.f32.mrf.mxu0
    %v7682 = vadd.f32 %v7513, %v7681
    %v7683 = vpop.f32.mrf.mxu0
    %v7684 = vadd.f32 %v7515, %v7683
    %7685 = vmatmul.bf16.gmra.mxu0 %v7275
    %v7686 = vpop.f32.mrf.mxu0
    %v7687 = vadd.f32 %v7518, %v7686
    %v7688 = vpop.f32.mrf.mxu0
    %v7689 = vadd.f32 %v7520, %v7688
    %7690 = vmatmul.bf16.gmra.mxu0 %v7277
    %v7691 = vpop.f32.mrf.mxu0
    %v7692 = vadd.f32 %v7523, %v7691
    %v7693 = vpop.f32.mrf.mxu0
    %v7694 = vadd.f32 %v7525, %v7693
    %7695 = vmatmul.bf16.gmra.mxu0 %v7279
    %v7696 = vpop.f32.mrf.mxu0
    %v7697 = vadd.f32 %v7528, %v7696
    %v7698 = vpop.f32.mrf.mxu0
    %v7699 = vadd.f32 %v7530, %v7698
    %7700 = vmatmul.bf16.gmra.mxu0 %v7281
    %v7701 = vpop.f32.mrf.mxu0
    %v7702 = vadd.f32 %v7533, %v7701
    %v7703 = vpop.f32.mrf.mxu0
    %v7704 = vadd.f32 %v7535, %v7703
    %7705 = vmatmul.bf16.gmra.mxu0 %v7283
    %v7706 = vpop.f32.mrf.mxu0
    %v7707 = vadd.f32 %v7538, %v7706
    %v7708 = vpop.f32.mrf.mxu0
    %v7709 = vadd.f32 %v7540, %v7708
    %7710 = vmatmul.bf16.gmra.mxu0 %v7285
    %v7711 = vpop.f32.mrf.mxu0
    %v7712 = vadd.f32 %v7543, %v7711
    %v7713 = vpop.f32.mrf.mxu0
    %v7714 = vadd.f32 %v7545, %v7713
    %7715 = vmatmul.bf16.gmra.mxu0 %v7287
    %v7716 = vpop.f32.mrf.mxu0
    %v7717 = vadd.f32 %v7548, %v7716
    %v7718 = vpop.f32.mrf.mxu0
    %v7719 = vadd.f32 %v7550, %v7718
    %7720 = vmatmul.bf16.gmra.mxu0 %v7289
    %v7721 = vpop.f32.mrf.mxu0
    %v7722 = vadd.f32 %v7553, %v7721
    %v7723 = vpop.f32.mrf.mxu0
    %v7724 = vadd.f32 %v7555, %v7723
    %7725 = vmatmul.bf16.gmra.mxu0 %v7291
    %v7726 = vpop.f32.mrf.mxu0
    %v7727 = vadd.f32 %v7558, %v7726
    %v7728 = vpop.f32.mrf.mxu0
    %v7729 = vadd.f32 %v7560, %v7728
    %7730 = vmatmul.bf16.gmra.mxu0 %v7293
    %v7731 = vpop.f32.mrf.mxu0
    %v7732 = vadd.f32 %v7563, %v7731
    %v7733 = vpop.f32.mrf.mxu0
    %v7734 = vadd.f32 %v7565, %v7733
    %7735 = vmatmul.bf16.gmra.mxu0 %v7295
    %v7736 = vpop.f32.mrf.mxu0
    %v7737 = vadd.f32 %v7568, %v7736
    %v7738 = vpop.f32.mrf.mxu0
    %v7739 = vadd.f32 %v7570, %v7738
    %7740 = vmatmul.bf16.gmra.mxu0 %v7297
    %v7741 = vpop.f32.mrf.mxu0
    %v7742 = vadd.f32 %v7573, %v7741
    %v7743 = vpop.f32.mrf.mxu0
    %v7744 = vadd.f32 %v7575, %v7743
    %7745 = vmatmul.bf16.gmra.mxu0 %v7299
    %v7746 = vpop.f32.mrf.mxu0
    %v7747 = vadd.f32 %v7578, %v7746
    %v7748 = vpop.f32.mrf.mxu0
    %v7749 = vadd.f32 %v7580, %v7748
    %7750 = vmatmul.bf16.gmra.mxu0 %v7301
    %v7751 = vpop.f32.mrf.mxu0
    %v7752 = vadd.f32 %v7583, %v7751
    %v7753 = vpop.f32.mrf.mxu0
    %v7754 = vadd.f32 %v7585, %v7753
    %7755 = vmatmul.bf16.gmra.mxu0 %v7303
    %v7756 = vpop.f32.mrf.mxu0
    %v7757 = vadd.f32 %v7588, %v7756
    %v7758 = vpop.f32.mrf.mxu0
    %v7759 = vadd.f32 %v7590, %v7758
    %7760 = vmatmul.bf16.gmra.mxu0 %v7305
    %v7761 = vpop.f32.mrf.mxu0
    %v7762 = vadd.f32 %v7593, %v7761
    %v7763 = vpop.f32.mrf.mxu0
    %v7764 = vadd.f32 %v7595, %v7763
    %7765 = vmatmul.bf16.gmra.mxu0 %v7307
    %v7766 = vpop.f32.mrf.mxu0
    %v7767 = vadd.f32 %v7598, %v7766
    %v7768 = vpop.f32.mrf.mxu0
    %v7769 = vadd.f32 %v7600, %v7768
    %7770 = vmatmul.bf16.gmra.mxu0 %v7309
    %v7771 = vpop.f32.mrf.mxu0
    %v7772 = vadd.f32 %v7603, %v7771
    %v7773 = vpop.f32.mrf.mxu0
    %v7774 = vadd.f32 %v7605, %v7773
    %7775 = vdwg.mxu0
    %v7776 = vadd.f32 %v7182, %v7617
    %v7777 = vadd.f32 %v7183, %v7619
    %v7778 = vadd.f32 %v7184, %v7622
    %v7779 = vadd.f32 %v7185, %v7624
    %v7780 = vadd.f32 %v7186, %v7627
    %v7781 = vadd.f32 %v7187, %v7629
    %v7782 = vadd.f32 %v7188, %v7632
    %v7783 = vadd.f32 %v7189, %v7634
    %v7784 = vadd.f32 %v7190, %v7637
    %v7785 = vadd.f32 %v7191, %v7639
    %v7786 = vadd.f32 %v7192, %v7642
    %v7787 = vadd.f32 %v7193, %v7644
    %v7788 = vadd.f32 %v7194, %v7647
    %v7789 = vadd.f32 %v7195, %v7649
    %v7790 = vadd.f32 %v7196, %v7652
    %v7791 = vadd.f32 %v7197, %v7654
    %v7792 = vadd.f32 %v7198, %v7657
    %v7793 = vadd.f32 %v7199, %v7659
    %v7794 = vadd.f32 %v7200, %v7662
    %v7795 = vadd.f32 %v7201, %v7664
    %v7796 = vadd.f32 %v7202, %v7667
    %v7797 = vadd.f32 %v7203, %v7669
    %v7798 = vadd.f32 %v7204, %v7672
    %v7799 = vadd.f32 %v7205, %v7674
    %v7800 = vadd.f32 %v7206, %v7677
    %v7801 = vadd.f32 %v7207, %v7679
    %v7802 = vadd.f32 %v7208, %v7682
    %v7803 = vadd.f32 %v7209, %v7684
    %v7804 = vadd.f32 %v7210, %v7687
    %v7805 = vadd.f32 %v7211, %v7689
    %v7806 = vadd.f32 %v7212, %v7692
    %v7807 = vadd.f32 %v7213, %v7694
    %v7808 = vadd.f32 %v7214, %v7697
    %v7809 = vadd.f32 %v7215, %v7699
    %v7810 = vadd.f32 %v7216, %v7702
    %v7811 = vadd.f32 %v7217, %v7704
    %v7812 = vadd.f32 %v7218, %v7707
    %v7813 = vadd.f32 %v7219, %v7709
    %v7814 = vadd.f32 %v7220, %v7712
    %v7815 = vadd.f32 %v7221, %v7714
    %v7816 = vadd.f32 %v7222, %v7717
    %v7817 = vadd.f32 %v7223, %v7719
    %v7818 = vadd.f32 %v7224, %v7722
    %v7819 = vadd.f32 %v7225, %v7724
    %v7820 = vadd.f32 %v7226, %v7727
    %v7821 = vadd.f32 %v7227, %v7729
    %v7822 = vadd.f32 %v7228, %v7732
    %v7823 = vadd.f32 %v7229, %v7734
    %v7824 = vadd.f32 %v7230, %v7737
    %v7825 = vadd.f32 %v7231, %v7739
    %v7826 = vadd.f32 %v7232, %v7742
    %v7827 = vadd.f32 %v7233, %v7744
    %v7828 = vadd.f32 %v7234, %v7747
    %v7829 = vadd.f32 %v7235, %v7749
    %v7830 = vadd.f32 %v7236, %v7752
    %v7831 = vadd.f32 %v7237, %v7754
    %v7832 = vadd.f32 %v7238, %v7757
    %v7833 = vadd.f32 %v7239, %v7759
    %v7834 = vadd.f32 %v7240, %v7762
    %v7835 = vadd.f32 %v7241, %v7764
    %v7836 = vadd.f32 %v7242, %v7767
    %v7837 = vadd.f32 %v7243, %v7769
    %v7838 = vadd.f32 %v7244, %v7772
    %v7839 = vadd.f32 %v7245, %v7774
    %7840 = vst [vmem:[#allocation2] sm:$0xff] %v7776
    %7841 = vst [vmem:[#allocation2 + $0x8] sm:$0xff] %v7777
    %7842 = vst [vmem:[#allocation2 + $0x10] sm:$0xff] %v7778
    %7843 = vst [vmem:[#allocation2 + $0x18] sm:$0xff] %v7779
    %7844 = vst [vmem:[#allocation2 + $0x20] sm:$0xff] %v7780
    %7845 = vst [vmem:[#allocation2 + $0x28] sm:$0xff] %v7781
    %7846 = vst [vmem:[#allocation2 + $0x30] sm:$0xff] %v7782
    %7847 = vst [vmem:[#allocation2 + $0x38] sm:$0xff] %v7783
    %7848 = vst [vmem:[#allocation2 + $0x40] sm:$0xff] %v7784
    %7849 = vst [vmem:[#allocation2 + $0x48] sm:$0xff] %v7785
    %7850 = vst [vmem:[#allocation2 + $0x50] sm:$0xff] %v7786
    %7851 = vst [vmem:[#allocation2 + $0x58] sm:$0xff] %v7787
    %7852 = vst [vmem:[#allocation2 + $0x60] sm:$0xff] %v7788
    %7853 = vst [vmem:[#allocation2 + $0x68] sm:$0xff] %v7789
    %7854 = vst [vmem:[#allocation2 + $0x70] sm:$0xff] %v7790
    %7855 = vst [vmem:[#allocation2 + $0x78] sm:$0xff] %v7791
    %7856 = vst [vmem:[#allocation2 + $0x80] sm:$0xff] %v7792
    %7857 = vst [vmem:[#allocation2 + $0x88] sm:$0xff] %v7793
    %7858 = vst [vmem:[#allocation2 + $0x90] sm:$0xff] %v7794
    %7859 = vst [vmem:[#allocation2 + $0x98] sm:$0xff] %v7795
    %7860 = vst [vmem:[#allocation2 + $0xa0] sm:$0xff] %v7796
    %7861 = vst [vmem:[#allocation2 + $0xa8] sm:$0xff] %v7797
    %7862 = vst [vmem:[#allocation2 + $0xb0] sm:$0xff] %v7798
    %7863 = vst [vmem:[#allocation2 + $0xb8] sm:$0xff] %v7799
    %7864 = vst [vmem:[#allocation2 + $0xc0] sm:$0xff] %v7800
    %7865 = vst [vmem:[#allocation2 + $0xc8] sm:$0xff] %v7801
    %7866 = vst [vmem:[#allocation2 + $0xd0] sm:$0xff] %v7802
    %7867 = vst [vmem:[#allocation2 + $0xd8] sm:$0xff] %v7803
    %7868 = vst [vmem:[#allocation2 + $0xe0] sm:$0xff] %v7804
    %7869 = vst [vmem:[#allocation2 + $0xe8] sm:$0xff] %v7805
    %7870 = vst [vmem:[#allocation2 + $0xf0] sm:$0xff] %v7806
    %7871 = vst [vmem:[#allocation2 + $0xf8] sm:$0xff] %v7807
    %7872 = vst [vmem:[#allocation2 + $0x100] sm:$0xff] %v7808
    %7873 = vst [vmem:[#allocation2 + $0x108] sm:$0xff] %v7809
    %7874 = vst [vmem:[#allocation2 + $0x110] sm:$0xff] %v7810
    %7875 = vst [vmem:[#allocation2 + $0x118] sm:$0xff] %v7811
    %7876 = vst [vmem:[#allocation2 + $0x120] sm:$0xff] %v7812
    %7877 = vst [vmem:[#allocation2 + $0x128] sm:$0xff] %v7813
    %7878 = vst [vmem:[#allocation2 + $0x130] sm:$0xff] %v7814
    %7879 = vst [vmem:[#allocation2 + $0x138] sm:$0xff] %v7815
    %7880 = vst [vmem:[#allocation2 + $0x140] sm:$0xff] %v7816
    %7881 = vst [vmem:[#allocation2 + $0x148] sm:$0xff] %v7817
    %7882 = vst [vmem:[#allocation2 + $0x150] sm:$0xff] %v7818
    %7883 = vst [vmem:[#allocation2 + $0x158] sm:$0xff] %v7819
    %7884 = vst [vmem:[#allocation2 + $0x160] sm:$0xff] %v7820
    %7885 = vst [vmem:[#allocation2 + $0x168] sm:$0xff] %v7821
    %7886 = vst [vmem:[#allocation2 + $0x170] sm:$0xff] %v7822
    %7887 = vst [vmem:[#allocation2 + $0x178] sm:$0xff] %v7823
    %7888 = vst [vmem:[#allocation2 + $0x180] sm:$0xff] %v7824
    %7889 = vst [vmem:[#allocation2 + $0x188] sm:$0xff] %v7825
    %7890 = vst [vmem:[#allocation2 + $0x190] sm:$0xff] %v7826
    %7891 = vst [vmem:[#allocation2 + $0x198] sm:$0xff] %v7827
    %7892 = vst [vmem:[#allocation2 + $0x1a0] sm:$0xff] %v7828
    %7893 = vst [vmem:[#allocation2 + $0x1a8] sm:$0xff] %v7829
    %7894 = vst [vmem:[#allocation2 + $0x1b0] sm:$0xff] %v7830
    %7895 = vst [vmem:[#allocation2 + $0x1b8] sm:$0xff] %v7831
    %7896 = vst [vmem:[#allocation2 + $0x1c0] sm:$0xff] %v7832
    %7897 = vst [vmem:[#allocation2 + $0x1c8] sm:$0xff] %v7833
    %7898 = vst [vmem:[#allocation2 + $0x1d0] sm:$0xff] %v7834
    %7899 = vst [vmem:[#allocation2 + $0x1d8] sm:$0xff] %v7835
    %7900 = vst [vmem:[#allocation2 + $0x1e0] sm:$0xff] %v7836
    %7901 = vst [vmem:[#allocation2 + $0x1e8] sm:$0xff] %v7837
    %7902 = vst [vmem:[#allocation2 + $0x1f0] sm:$0xff] %v7838
    %7903 = vst [vmem:[#allocation2 + $0x1f8] sm:$0xff] %v7839
    %v7904 = vld [vmem:[#allocation2] sm:$0xff]
    %v7905 = vld [vmem:[#allocation2 + $0x8] sm:$0xff]
    %v7906 = vld [vmem:[#allocation2 + $0x10] sm:$0xff]
    %v7907 = vld [vmem:[#allocation2 + $0x18] sm:$0xff]
    %v7908 = vld [vmem:[#allocation2 + $0x20] sm:$0xff]
    %v7909 = vld [vmem:[#allocation2 + $0x28] sm:$0xff]
    %v7910 = vld [vmem:[#allocation2 + $0x30] sm:$0xff]
    %v7911 = vld [vmem:[#allocation2 + $0x38] sm:$0xff]
    %v7912 = vld [vmem:[#allocation2 + $0x40] sm:$0xff]
    %v7913 = vld [vmem:[#allocation2 + $0x48] sm:$0xff]
    %v7914 = vld [vmem:[#allocation2 + $0x50] sm:$0xff]
    %v7915 = vld [vmem:[#allocation2 + $0x58] sm:$0xff]
    %v7916 = vld [vmem:[#allocation2 + $0x60] sm:$0xff]
    %v7917 = vld [vmem:[#allocation2 + $0x68] sm:$0xff]
    %v7918 = vld [vmem:[#allocation2 + $0x70] sm:$0xff]
    %v7919 = vld [vmem:[#allocation2 + $0x78] sm:$0xff]
    %v7920 = vld [vmem:[#allocation2 + $0x80] sm:$0xff]
    %v7921 = vld [vmem:[#allocation2 + $0x88] sm:$0xff]
    %v7922 = vld [vmem:[#allocation2 + $0x90] sm:$0xff]
    %v7923 = vld [vmem:[#allocation2 + $0x98] sm:$0xff]
    %v7924 = vld [vmem:[#allocation2 + $0xa0] sm:$0xff]
    %v7925 = vld [vmem:[#allocation2 + $0xa8] sm:$0xff]
    %v7926 = vld [vmem:[#allocation2 + $0xb0] sm:$0xff]
    %v7927 = vld [vmem:[#allocation2 + $0xb8] sm:$0xff]
    %v7928 = vld [vmem:[#allocation2 + $0xc0] sm:$0xff]
    %v7929 = vld [vmem:[#allocation2 + $0xc8] sm:$0xff]
    %v7930 = vld [vmem:[#allocation2 + $0xd0] sm:$0xff]
    %v7931 = vld [vmem:[#allocation2 + $0xd8] sm:$0xff]
    %v7932 = vld [vmem:[#allocation2 + $0xe0] sm:$0xff]
    %v7933 = vld [vmem:[#allocation2 + $0xe8] sm:$0xff]
    %v7934 = vld [vmem:[#allocation2 + $0xf0] sm:$0xff]
    %v7935 = vld [vmem:[#allocation2 + $0xf8] sm:$0xff]
    %v7936 = vld [vmem:[#allocation2 + $0x100] sm:$0xff]
    %v7937 = vld [vmem:[#allocation2 + $0x108] sm:$0xff]
    %v7938 = vld [vmem:[#allocation2 + $0x110] sm:$0xff]
    %v7939 = vld [vmem:[#allocation2 + $0x118] sm:$0xff]
    %v7940 = vld [vmem:[#allocation2 + $0x120] sm:$0xff]
    %v7941 = vld [vmem:[#allocation2 + $0x128] sm:$0xff]
    %v7942 = vld [vmem:[#allocation2 + $0x130] sm:$0xff]
    %v7943 = vld [vmem:[#allocation2 + $0x138] sm:$0xff]
    %v7944 = vld [vmem:[#allocation2 + $0x140] sm:$0xff]
    %v7945 = vld [vmem:[#allocation2 + $0x148] sm:$0xff]
    %v7946 = vld [vmem:[#allocation2 + $0x150] sm:$0xff]
    %v7947 = vld [vmem:[#allocation2 + $0x158] sm:$0xff]
    %v7948 = vld [vmem:[#allocation2 + $0x160] sm:$0xff]
    %v7949 = vld [vmem:[#allocation2 + $0x168] sm:$0xff]
    %v7950 = vld [vmem:[#allocation2 + $0x170] sm:$0xff]
    %v7951 = vld [vmem:[#allocation2 + $0x178] sm:$0xff]
    %v7952 = vld [vmem:[#allocation2 + $0x180] sm:$0xff]
    %v7953 = vld [vmem:[#allocation2 + $0x188] sm:$0xff]
    %v7954 = vld [vmem:[#allocation2 + $0x190] sm:$0xff]
    %v7955 = vld [vmem:[#allocation2 + $0x198] sm:$0xff]
    %v7956 = vld [vmem:[#allocation2 + $0x1a0] sm:$0xff]
    %v7957 = vld [vmem:[#allocation2 + $0x1a8] sm:$0xff]
    %v7958 = vld [vmem:[#allocation2 + $0x1b0] sm:$0xff]
    %v7959 = vld [vmem:[#allocation2 + $0x1b8] sm:$0xff]
    %v7960 = vld [vmem:[#allocation2 + $0x1c0] sm:$0xff]
    %v7961 = vld [vmem:[#allocation2 + $0x1c8] sm:$0xff]
    %v7962 = vld [vmem:[#allocation2 + $0x1d0] sm:$0xff]
    %v7963 = vld [vmem:[#allocation2 + $0x1d8] sm:$0xff]
    %v7964 = vld [vmem:[#allocation2 + $0x1e0] sm:$0xff]
    %v7965 = vld [vmem:[#allocation2 + $0x1e8] sm:$0xff]
    %v7966 = vld [vmem:[#allocation2 + $0x1f0] sm:$0xff]
    %v7967 = vld [vmem:[#allocation2 + $0x1f8] sm:$0xff]
    %v7968 = vpack.c.bf16 %v7904, %v7904
    %v7969 = vpack.c.bf16 %v7905, %v7905
    %v7970 = vpack.c.bf16 %v7906, %v7906
    %v7971 = vpack.c.bf16 %v7907, %v7907
    %v7972 = vpack.c.bf16 %v7908, %v7908
    %v7973 = vpack.c.bf16 %v7909, %v7909
    %v7974 = vpack.c.bf16 %v7910, %v7910
    %v7975 = vpack.c.bf16 %v7911, %v7911
    %v7976 = vpack.c.bf16 %v7912, %v7912
    %v7977 = vpack.c.bf16 %v7913, %v7913
    %v7978 = vpack.c.bf16 %v7914, %v7914
    %v7979 = vpack.c.bf16 %v7915, %v7915
    %v7980 = vpack.c.bf16 %v7916, %v7916
    %v7981 = vpack.c.bf16 %v7917, %v7917
    %v7982 = vpack.c.bf16 %v7918, %v7918
    %v7983 = vpack.c.bf16 %v7919, %v7919
    %v7984 = vpack.c.bf16 %v7920, %v7920
    %v7985 = vpack.c.bf16 %v7921, %v7921
    %v7986 = vpack.c.bf16 %v7922, %v7922
    %v7987 = vpack.c.bf16 %v7923, %v7923
    %v7988 = vpack.c.bf16 %v7924, %v7924
    %v7989 = vpack.c.bf16 %v7925, %v7925
    %v7990 = vpack.c.bf16 %v7926, %v7926
    %v7991 = vpack.c.bf16 %v7927, %v7927
    %v7992 = vpack.c.bf16 %v7928, %v7928
    %v7993 = vpack.c.bf16 %v7929, %v7929
    %v7994 = vpack.c.bf16 %v7930, %v7930
    %v7995 = vpack.c.bf16 %v7931, %v7931
    %v7996 = vpack.c.bf16 %v7932, %v7932
    %v7997 = vpack.c.bf16 %v7933, %v7933
    %v7998 = vpack.c.bf16 %v7934, %v7934
    %v7999 = vpack.c.bf16 %v7935, %v7935
    %v8000 = vpack.c.bf16 %v7936, %v7936
    %v8001 = vpack.c.bf16 %v7937, %v7937
    %v8002 = vpack.c.bf16 %v7938, %v7938
    %v8003 = vpack.c.bf16 %v7939, %v7939
    %v8004 = vpack.c.bf16 %v7940, %v7940
    %v8005 = vpack.c.bf16 %v7941, %v7941
    %v8006 = vpack.c.bf16 %v7942, %v7942
    %v8007 = vpack.c.bf16 %v7943, %v7943
    %v8008 = vpack.c.bf16 %v7944, %v7944
    %v8009 = vpack.c.bf16 %v7945, %v7945
    %v8010 = vpack.c.bf16 %v7946, %v7946
    %v8011 = vpack.c.bf16 %v7947, %v7947
    %v8012 = vpack.c.bf16 %v7948, %v7948
    %v8013 = vpack.c.bf16 %v7949, %v7949
    %v8014 = vpack.c.bf16 %v7950, %v7950
    %v8015 = vpack.c.bf16 %v7951, %v7951
    %v8016 = vpack.c.bf16 %v7952, %v7952
    %v8017 = vpack.c.bf16 %v7953, %v7953
    %v8018 = vpack.c.bf16 %v7954, %v7954
    %v8019 = vpack.c.bf16 %v7955, %v7955
    %v8020 = vpack.c.bf16 %v7956, %v7956
    %v8021 = vpack.c.bf16 %v7957, %v7957
    %v8022 = vpack.c.bf16 %v7958, %v7958
    %v8023 = vpack.c.bf16 %v7959, %v7959
    %v8024 = vpack.c.bf16 %v7960, %v7960
    %v8025 = vpack.c.bf16 %v7961, %v7961
    %v8026 = vpack.c.bf16 %v7962, %v7962
    %v8027 = vpack.c.bf16 %v7963, %v7963
    %v8028 = vpack.c.bf16 %v7964, %v7964
    %v8029 = vpack.c.bf16 %v7965, %v7965
    %v8030 = vpack.c.bf16 %v7966, %v7966
    %v8031 = vpack.c.bf16 %v7967, %v7967
    %8032 = vst [vmem:[#allocation12] sm:$0xf] %v7968
    %8033 = vst [vmem:[#allocation12 + $0x4] sm:$0xf] %v7969
    %8034 = vst [vmem:[#allocation12 + $0x8] sm:$0xf] %v7970
    %8035 = vst [vmem:[#allocation12 + $0xc] sm:$0xf] %v7971
    %8036 = vst [vmem:[#allocation12 + $0x10] sm:$0xf] %v7972
    %8037 = vst [vmem:[#allocation12 + $0x14] sm:$0xf] %v7973
    %8038 = vst [vmem:[#allocation12 + $0x18] sm:$0xf] %v7974
    %8039 = vst [vmem:[#allocation12 + $0x1c] sm:$0xf] %v7975
    %8040 = vst [vmem:[#allocation12 + $0x20] sm:$0xf] %v7976
    %8041 = vst [vmem:[#allocation12 + $0x24] sm:$0xf] %v7977
    %8042 = vst [vmem:[#allocation12 + $0x28] sm:$0xf] %v7978
    %8043 = vst [vmem:[#allocation12 + $0x2c] sm:$0xf] %v7979
    %8044 = vst [vmem:[#allocation12 + $0x30] sm:$0xf] %v7980
    %8045 = vst [vmem:[#allocation12 + $0x34] sm:$0xf] %v7981
    %8046 = vst [vmem:[#allocation12 + $0x38] sm:$0xf] %v7982
    %8047 = vst [vmem:[#allocation12 + $0x3c] sm:$0xf] %v7983
    %8048 = vst [vmem:[#allocation12 + $0x40] sm:$0xf] %v7984
    %8049 = vst [vmem:[#allocation12 + $0x44] sm:$0xf] %v7985
    %8050 = vst [vmem:[#allocation12 + $0x48] sm:$0xf] %v7986
    %8051 = vst [vmem:[#allocation12 + $0x4c] sm:$0xf] %v7987
    %8052 = vst [vmem:[#allocation12 + $0x50] sm:$0xf] %v7988
    %8053 = vst [vmem:[#allocation12 + $0x54] sm:$0xf] %v7989
    %8054 = vst [vmem:[#allocation12 + $0x58] sm:$0xf] %v7990
    %8055 = vst [vmem:[#allocation12 + $0x5c] sm:$0xf] %v7991
    %8056 = vst [vmem:[#allocation12 + $0x60] sm:$0xf] %v7992
    %8057 = vst [vmem:[#allocation12 + $0x64] sm:$0xf] %v7993
    %8058 = vst [vmem:[#allocation12 + $0x68] sm:$0xf] %v7994
    %8059 = vst [vmem:[#allocation12 + $0x6c] sm:$0xf] %v7995
    %8060 = vst [vmem:[#allocation12 + $0x70] sm:$0xf] %v7996
    %8061 = vst [vmem:[#allocation12 + $0x74] sm:$0xf] %v7997
    %8062 = vst [vmem:[#allocation12 + $0x78] sm:$0xf] %v7998
    %8063 = vst [vmem:[#allocation12 + $0x7c] sm:$0xf] %v7999
    %8064 = vst [vmem:[#allocation12 + $0x80] sm:$0xf] %v8000
    %8065 = vst [vmem:[#allocation12 + $0x84] sm:$0xf] %v8001
    %8066 = vst [vmem:[#allocation12 + $0x88] sm:$0xf] %v8002
    %8067 = vst [vmem:[#allocation12 + $0x8c] sm:$0xf] %v8003
    %8068 = vst [vmem:[#allocation12 + $0x90] sm:$0xf] %v8004
    %8069 = vst [vmem:[#allocation12 + $0x94] sm:$0xf] %v8005
    %8070 = vst [vmem:[#allocation12 + $0x98] sm:$0xf] %v8006
    %8071 = vst [vmem:[#allocation12 + $0x9c] sm:$0xf] %v8007
    %8072 = vst [vmem:[#allocation12 + $0xa0] sm:$0xf] %v8008
    %8073 = vst [vmem:[#allocation12 + $0xa4] sm:$0xf] %v8009
    %8074 = vst [vmem:[#allocation12 + $0xa8] sm:$0xf] %v8010
    %8075 = vst [vmem:[#allocation12 + $0xac] sm:$0xf] %v8011
    %8076 = vst [vmem:[#allocation12 + $0xb0] sm:$0xf] %v8012
    %8077 = vst [vmem:[#allocation12 + $0xb4] sm:$0xf] %v8013
    %8078 = vst [vmem:[#allocation12 + $0xb8] sm:$0xf] %v8014
    %8079 = vst [vmem:[#allocation12 + $0xbc] sm:$0xf] %v8015
    %8080 = vst [vmem:[#allocation12 + $0xc0] sm:$0xf] %v8016
    %8081 = vst [vmem:[#allocation12 + $0xc4] sm:$0xf] %v8017
    %8082 = vst [vmem:[#allocation12 + $0xc8] sm:$0xf] %v8018
    %8083 = vst [vmem:[#allocation12 + $0xcc] sm:$0xf] %v8019
    %8084 = vst [vmem:[#allocation12 + $0xd0] sm:$0xf] %v8020
    %8085 = vst [vmem:[#allocation12 + $0xd4] sm:$0xf] %v8021
    %8086 = vst [vmem:[#allocation12 + $0xd8] sm:$0xf] %v8022
    %8087 = vst [vmem:[#allocation12 + $0xdc] sm:$0xf] %v8023
    %8088 = vst [vmem:[#allocation12 + $0xe0] sm:$0xf] %v8024
    %8089 = vst [vmem:[#allocation12 + $0xe4] sm:$0xf] %v8025
    %8090 = vst [vmem:[#allocation12 + $0xe8] sm:$0xf] %v8026
    %8091 = vst [vmem:[#allocation12 + $0xec] sm:$0xf] %v8027
    %8092 = vst [vmem:[#allocation12 + $0xf0] sm:$0xf] %v8028
    %8093 = vst [vmem:[#allocation12 + $0xf4] sm:$0xf] %v8029
    %8094 = vst [vmem:[#allocation12 + $0xf8] sm:$0xf] %v8030
    %8095 = vst [vmem:[#allocation12 + $0xfc] sm:$0xf] %v8031
    // Predicated region
    $region42: #{intern_image_layer.1} parent=1 // pred_check
      _
    $region43: #{intern_image_layer.1} parent=1 // pred_check_branch
      %8097 = sbr.rel (0) target = $region45
    $region44: #{intern_image_layer.1} parent=1 // pred_region
      %8099 = vsyncadd [#allocation5], 0
      %s8100 = sshll.u32 [#allocation12], 4
      %s8101 = int_to_ptr.vmem [resolvable:$true] %s8100
      %s8102 = sshll.u32 %s5, 4
      %s8103 = int_to_ptr.hbm [resolvable:$true] %s8102
      %8108 = dma.vmem_to_hbm [thread:$0]  %s8101, 4096, %s8103, [#allocation5], 64, 64, 4
    $region45: #{intern_image_layer.1} parent=1 // pred_fallthru
      _
    // Predicated region
    $region46: #{intern_image_layer.1} parent=1 // pred_check
      _
    $region47: #{intern_image_layer.1} parent=1 // pred_check_branch
      %8110 = sbr.rel (0) target = $region49
    $region48: #{intern_image_layer.1} parent=1 // pred_region
      %8112 = dma.done [#allocation5], 4096
    $region49: #{intern_image_layer.1} parent=1 // pred_fallthru
      _
    %8113 = vsyncpa [#allocation4], 1
    %8114 = vsyncpa [#allocation7], 1
    %8115 = vsyncpa [#allocation10], 1
    %8116 = vsyncpa [#allocation5], 1

</llo_original>
